<compile_context>
chip_gen: v7x
topology: tpu7x:2x2x1
jax: 0.10.0
libtpu: 0.0.40
codegen_flags: <defaults>
</compile_context>

<pallas_src>
import jax
import jax.numpy as jnp
from jax.experimental import pallas as pl
from jax.experimental.pallas import tpu as pltpu


# ------------------------------ small helpers -------------------------------

def _round_up(x, m):
    return (x + m - 1) // m * m


def _vmem_limit(*block_nbytes):
    # double-buffered blocks + slack, clamped so v5e (16 MiB scoped default) and
    # v7x (64 MiB physical) are both respected.
    need = 2 * sum(int(b) for b in block_nbytes) + (4 << 20)
    return int(min(max(need, 16 << 20), 48 << 20))


# ---------------- fused conv(matmul) + bias + ReLU + 2x2 max-pool ------------

def _conv_pool_kernel(cols_ref, w_ref, b_ref, o_ref):
    # cols_ref: (4, tm, K) bf16   -- 4 pooling phases of im2col rows
    # w_ref:    (K, N)     bf16   -- resident across all grid steps
    # b_ref:    (1, N)     f32
    # o_ref:    (tm, N)           -- pooled + ReLU'd rows, lane-dense N = 128
    w = w_ref[...]
    m = jnp.dot(cols_ref[0], w, preferred_element_type=jnp.float32)
    for q in range(1, 4):
        m = jnp.maximum(m, jnp.dot(cols_ref[q], w,
                                   preferred_element_type=jnp.float32))
    # pool(relu(x_q + b)) == relu(max_q(x_q) + b): ReLU is monotone, b is shared.
    o_ref[...] = jnp.maximum(m + b_ref[...], 0.0).astype(o_ref.dtype)


def conv_relu_pool(cols, w, b, *, tm=512, out_dtype=jnp.bfloat16):
    """cols: (4, M, K) bf16; w: (K, N) bf16; b: (1, N) f32; N % 128 == 0."""
    _, M, K = cols.shape
    K2, N = w.shape
    assert K == K2 and N % 128 == 0
    if M <= tm:
        tm_eff, Mpad = M, M            # single full block (no per-step overhead)
    else:
        tm_eff, Mpad = tm, _round_up(M, tm)
    if Mpad != M:
        cols = jnp.pad(cols, ((0, 0), (0, Mpad - M), (0, 0)))
    grid = (Mpad // tm_eff,)
    out = pl.pallas_call(
        _conv_pool_kernel,
        out_shape=jax.ShapeDtypeStruct((Mpad, N), out_dtype),
        grid_spec=pltpu.PrefetchScalarGridSpec(
            num_scalar_prefetch=0,
            grid=grid,
            in_specs=[
                pl.BlockSpec((4, tm_eff, K), lambda i: (0, i, 0)),
                pl.BlockSpec((K, N), lambda i: (0, 0)),
                pl.BlockSpec((1, N), lambda i: (0, 0)),
            ],
            out_specs=pl.BlockSpec((tm_eff, N), lambda i: (i, 0)),
        ),
        compiler_params=pltpu.CompilerParams(
            dimension_semantics=("parallel",),
            vmem_limit_bytes=_vmem_limit(
                4 * tm_eff * K * cols.dtype.itemsize,
                K * N * w.dtype.itemsize,
                N * 4,
                tm_eff * N * jnp.dtype(out_dtype).itemsize)),
    )(cols, w, b)
    return out[:M]


# ------------------------- fused fc1+relu+fc2+relu ---------------------------

def _fc_tail_kernel(x_ref, w1_ref, b1_ref, w2_ref, b2_ref, o_ref):
    h = jnp.dot(x_ref[...], w1_ref[...], preferred_element_type=jnp.float32)
    h = jnp.maximum(h + b1_ref[...], 0.0).astype(w2_ref.dtype)   # f32 epilogue, bf16 for MXU
    o = jnp.dot(h, w2_ref[...], preferred_element_type=jnp.float32)
    o_ref[...] = jnp.maximum(o + b2_ref[...], 0.0).astype(o_ref.dtype)


def fc_tail(x, w1, b1, w2, b2, *, tm=512):
    M, K = x.shape
    K1, H = w1.shape
    H2, N = w2.shape
    assert K == K1 and H == H2 and N % 128 == 0
    if M <= tm:
        tm_eff, Mpad = M, M
    else:
        tm_eff, Mpad = tm, _round_up(M, tm)
    if Mpad != M:
        x = jnp.pad(x, ((0, Mpad - M), (0, 0)))
    grid = (Mpad // tm_eff,)
    out = pl.pallas_call(
        _fc_tail_kernel,
        out_shape=jax.ShapeDtypeStruct((Mpad, N), jnp.float32),
        grid_spec=pltpu.PrefetchScalarGridSpec(
            num_scalar_prefetch=0,
            grid=grid,
            in_specs=[
                pl.BlockSpec((tm_eff, K), lambda i: (i, 0)),
                pl.BlockSpec((K, H), lambda i: (0, 0)),
                pl.BlockSpec((1, H), lambda i: (0, 0)),
                pl.BlockSpec((H, N), lambda i: (0, 0)),
                pl.BlockSpec((1, N), lambda i: (0, 0)),
            ],
            out_specs=pl.BlockSpec((tm_eff, N), lambda i: (i, 0)),
        ),
        compiler_params=pltpu.CompilerParams(
            dimension_semantics=("parallel",),
            vmem_limit_bytes=_vmem_limit(
                tm_eff * K * x.dtype.itemsize,
                K * H * w1.dtype.itemsize,
                H * N * w2.dtype.itemsize,
                (H + N) * 4,
                tm_eff * N * 4)),
    )(x, w1, b1, w2, b2)
    return out[:M]


# --------------------------- im2col (XLA-side glue) --------------------------
# TODO(synk): fold the patch extraction itself into the conv kernel (halo /
# pl.Element windows) to also remove the im2col HBM expansion.

def _im2col_pooled(x, kh, kw, k_pad=None):
    """NHWC 'valid' conv patches regrouped by 2x2 pooling phase.

    Returns cols of shape (4, B*Hp*Wp, kh*kw*C [+pad]); cols[2*dh+dw, (b,hp,wp), :]
    is the im2col row of conv-output pixel (2*hp+dh, 2*wp+dw), so the 2x2 max-pool
    becomes a max over the leading phase axis inside the Pallas kernel.
    """
    B, H, W, C = x.shape
    Ho, Wo = H - kh + 1, W - kw + 1
    assert Ho % 2 == 0 and Wo % 2 == 0
    Hp, Wp = Ho // 2, Wo // 2
    patches = jnp.concatenate(
        [x[:, i:i + Ho, j:j + Wo, :] for i in range(kh) for j in range(kw)], axis=-1)
    K = kh * kw * C
    phases = [patches[:, dh:Ho:2, dw:Wo:2, :].reshape(B * Hp * Wp, K)
              for dh in (0, 1) for dw in (0, 1)]
    cols = jnp.stack(phases, axis=0)                     # (4, B*Hp*Wp, K)
    if k_pad is not None and k_pad > K:
        cols = jnp.pad(cols, ((0, 0), (0, 0), (0, k_pad - K)))
    return cols, (Hp, Wp)


# --------------------------------- forward -----------------------------------

@jax.jit
def cnn_cifar_global_forward(x_nchw, pk):
    B = x_nchw.shape[0]
    x = jnp.transpose(x_nchw, (0, 2, 3, 1)).astype(jnp.bfloat16)      # NHWC bf16

    # conv1 + ReLU + 2x2 pool (fused), channels padded 64 -> 128
    cols1, (hp1, wp1) = _im2col_pooled(x, 5, 5, k_pad=128)
    a1 = conv_relu_pool(cols1, pk["w1"], pk["b1"])                    # (B*14*14, 128) bf16
    a1 = a1.reshape(B, hp1, wp1, 128)[..., :64]                       # drop zero pad channels

    # conv2 + ReLU + 2x2 pool (fused)
    cols2, (hp2, wp2) = _im2col_pooled(a1, 5, 5)
    a2 = conv_relu_pool(cols2, pk["w2"], pk["b2"])                    # (B*5*5, 128) bf16

    # flatten stays in NHWC-padded order; the NCHW permutation of torch's
    # x.view(-1, 64*5*5) is folded into pk["fw1"] at packing time.
    xf = a2.reshape(B, hp2 * wp2 * 128)                               # (B, 3200)

    out = fc_tail(xf, pk["fw1"], pk["fb1"], pk["fw2"], pk["fb2"])     # (B, 128) f32
    return out[:, :64]


# ------------------------------ parameter packing ----------------------------

def init_params(key):
    ks = jax.random.split(key, 8)

    def u(k, shape, fan_in):
        bound = float(fan_in) ** -0.5
        return jax.random.uniform(k, shape, jnp.float32, -bound, bound)

    return {
        "conv1_w": u(ks[0], (64, 3, 5, 5), 3 * 5 * 5),
        "conv1_b": u(ks[1], (64,), 3 * 5 * 5),
        "conv2_w": u(ks[2], (64, 64, 5, 5), 64 * 5 * 5),
        "conv2_b": u(ks[3], (64,), 64 * 5 * 5),
        "fc1_w": u(ks[4], (120, 64 * 5 * 5), 64 * 5 * 5),
        "fc1_b": u(ks[5], (120,), 64 * 5 * 5),
        "fc2_w": u(ks[6], (64, 120), 120),
        "fc2_b": u(ks[7], (64,), 120),
    }


def pack_params(p):
    """One-time weight packing (outside jit): transpose, pad K/N to 128, bf16,
    and fold the NCHW-flatten permutation into fc1's weight."""
    bf16 = jnp.bfloat16

    def pack_conv_w(w_t, k_pad=None):
        o, c, kh, kw = w_t.shape
        wmat = jnp.transpose(w_t, (2, 3, 1, 0)).reshape(kh * kw * c, o)  # (K, O)
        k = wmat.shape[0]
        kp = k_pad if (k_pad is not None and k_pad > k) else k
        return jnp.zeros((kp, 128), jnp.float32).at[:k, :o].set(wmat).astype(bf16)

    def pack_bias(b):
        return jnp.zeros((1, 128), jnp.float32).at[0, :b.shape[0]].set(b)

    # fc1: rows reordered from torch's (c, h, w) flatten to our (h, w, c_pad)
    # flatten, with zero rows for the padded channels and N padded 120 -> 128.
    w1 = p["fc1_w"].reshape(120, 64, 5, 5)               # (n, c, h, w)
    w1 = jnp.transpose(w1, (2, 3, 1, 0))                 # (h, w, c, n)
    w1 = jnp.pad(w1, ((0, 0), (0, 0), (0, 64), (0, 8)))  # c -> 128, n -> 128
    fw1 = w1.reshape(5 * 5 * 128, 128).astype(bf16)

    fw2 = (jnp.zeros((128, 128), jnp.float32)
           .at[:120, :64].set(p["fc2_w"].T).astype(bf16))

    return {
        "w1": pack_conv_w(p["conv1_w"], k_pad=128), "b1": pack_bias(p["conv1_b"]),
        "w2": pack_conv_w(p["conv2_w"]),            "b2": pack_bias(p["conv2_b"]),
        "fw1": fw1, "fb1": pack_bias(p["fc1_b"]),
        "fw2": fw2, "fb2": pack_bias(p["fc2_b"]),
    }


# ------------------------- pure-JAX f32 reference ----------------------------

def reference_forward(x_nchw, p):
    x = jnp.transpose(x_nchw, (0, 2, 3, 1))

    def conv(x, w_t, b):
        w = jnp.transpose(w_t, (2, 3, 1, 0))  # OIHW -> HWIO
        y = jax.lax.conv_general_dilated(
            x, w, (1, 1), "VALID",
            dimension_numbers=("NHWC", "HWIO", "NHWC"))
        return jnp.maximum(y + b, 0.0)

    def pool(x):
        return jax.lax.reduce_window(x, -jnp.inf, jax.lax.max,
                                     (1, 2, 2, 1), (1, 2, 2, 1), "VALID")

    x = pool(conv(x, p["conv1_w"], p["conv1_b"]))
    x = pool(conv(x, p["conv2_w"], p["conv2_b"]))
    B = x.shape[0]
    x = jnp.transpose(x, (0, 3, 1, 2)).reshape(B, 64 * 5 * 5)
    x = jnp.maximum(x @ p["fc1_w"].T + p["fc1_b"], 0.0)
    x = jnp.maximum(x @ p["fc2_w"].T + p["fc2_b"], 0.0)
    return x


# ----------------------------------- main ------------------------------------

if __name__ == "__main__":
    key = jax.random.PRNGKey(0)
    k_x, k_p = jax.random.split(key)

    # CIFAR-shaped input (32x32 is required by fc1's 64*5*5 input); B=4 so the
    # conv1 matmul exercises the tiled-grid (M > tm is not hit, grid split is).
    x = jax.random.normal(k_x, (4, 3, 32, 32), dtype=jnp.float32)
    params = init_params(k_p)
    packed = pack_params(params)          # packed once, outside the jitted forward

    out = cnn_cifar_global_forward(x, packed)
    out = jax.block_until_ready(out)

    assert out.shape == (4, 64), out.shape
    assert bool(jnp.all(jnp.isfinite(out)))

    ref = reference_forward(x, params)
    assert bool(jnp.allclose(out, ref, rtol=5e-2, atol=3e-2)), (
        float(jnp.max(jnp.abs(out - ref))))

    print("KERNEL_OK")
</pallas_src>

<mosaic_0001>
module attributes {stable_mosaic.version = 11 : i64} {
  func.func @_conv_pool_kernel(%arg0: i32, %arg1: memref<4x512x128xbf16, #tpu.memory_space<vmem>>, %arg2: memref<128x128xbf16, #tpu.memory_space<vmem>>, %arg3: memref<1x128xf32, #tpu.memory_space<vmem>>, %arg4: memref<512x128xbf16, #tpu.memory_space<vmem>>) attributes {dimension_semantics = [#tpu.dimension_semantics<parallel>], iteration_bounds = array<i64: 2>, scalar_prefetch = 0 : i64, scratch_operands = 0 : i64, tpu.core_type = #tpu.core_type<tc>, window_params = [{transform_indices = @transform_0, window_bounds = array<i64: 4, 512, 128>}, {pipeline_mode = #tpu.pipeline_mode<synchronous>, transform_indices = @transform_1, window_bounds = array<i64: 128, 128>}, {pipeline_mode = #tpu.pipeline_mode<synchronous>, transform_indices = @transform_2, window_bounds = array<i64: 1, 128>}, {transform_indices = @transform_3, window_bounds = array<i64: 512, 128>}]} {
    %c0 = arith.constant 0 : index
    %c0_0 = arith.constant 0 : index
    %0 = vector.load %arg2[%c0, %c0_0] : memref<128x128xbf16, #tpu.memory_space<vmem>>, vector<128x128xbf16>
    %c0_1 = arith.constant 0 : index
    %c0_2 = arith.constant 0 : index
    %c0_3 = arith.constant 0 : index
    %1 = vector.load %arg1[%c0_1, %c0_2, %c0_3] : memref<4x512x128xbf16, #tpu.memory_space<vmem>>, vector<1x512x128xbf16>
    %2 = vector.shape_cast %1 : vector<1x512x128xbf16> to vector<512x128xbf16>
    %cst = arith.constant dense<0.000000e+00> : vector<512x128xf32>
    %3 = tpu.matmul %2, %0, %cst {dimension_numbers = #tpu.dot_dimension_numbers<[1], [0], [0], [1], [0, 0, 1, 1], [], []>} : vector<512x128xbf16>, vector<128x128xbf16>, vector<512x128xf32> -> vector<512x128xf32>
    %c1 = arith.constant 1 : index
    %c0_4 = arith.constant 0 : index
    %c0_5 = arith.constant 0 : index
    %4 = vector.load %arg1[%c1, %c0_4, %c0_5] : memref<4x512x128xbf16, #tpu.memory_space<vmem>>, vector<1x512x128xbf16>
    %5 = vector.shape_cast %4 : vector<1x512x128xbf16> to vector<512x128xbf16>
    %cst_6 = arith.constant dense<0.000000e+00> : vector<512x128xf32>
    %6 = tpu.matmul %5, %0, %cst_6 {dimension_numbers = #tpu.dot_dimension_numbers<[1], [0], [0], [1], [0, 0, 1, 1], [], []>} : vector<512x128xbf16>, vector<128x128xbf16>, vector<512x128xf32> -> vector<512x128xf32>
    %7 = arith.maximumf %3, %6 : vector<512x128xf32>
    %c2 = arith.constant 2 : index
    %c0_7 = arith.constant 0 : index
    %c0_8 = arith.constant 0 : index
    %8 = vector.load %arg1[%c2, %c0_7, %c0_8] : memref<4x512x128xbf16, #tpu.memory_space<vmem>>, vector<1x512x128xbf16>
    %9 = vector.shape_cast %8 : vector<1x512x128xbf16> to vector<512x128xbf16>
    %cst_9 = arith.constant dense<0.000000e+00> : vector<512x128xf32>
    %10 = tpu.matmul %9, %0, %cst_9 {dimension_numbers = #tpu.dot_dimension_numbers<[1], [0], [0], [1], [0, 0, 1, 1], [], []>} : vector<512x128xbf16>, vector<128x128xbf16>, vector<512x128xf32> -> vector<512x128xf32>
    %11 = arith.maximumf %7, %10 : vector<512x128xf32>
    %c3 = arith.constant 3 : index
    %c0_10 = arith.constant 0 : index
    %c0_11 = arith.constant 0 : index
    %12 = vector.load %arg1[%c3, %c0_10, %c0_11] : memref<4x512x128xbf16, #tpu.memory_space<vmem>>, vector<1x512x128xbf16>
    %13 = vector.shape_cast %12 : vector<1x512x128xbf16> to vector<512x128xbf16>
    %cst_12 = arith.constant dense<0.000000e+00> : vector<512x128xf32>
    %14 = tpu.matmul %13, %0, %cst_12 {dimension_numbers = #tpu.dot_dimension_numbers<[1], [0], [0], [1], [0, 0, 1, 1], [], []>} : vector<512x128xbf16>, vector<128x128xbf16>, vector<512x128xf32> -> vector<512x128xf32>
    %15 = arith.maximumf %11, %14 : vector<512x128xf32>
    %c0_13 = arith.constant 0 : index
    %c0_14 = arith.constant 0 : index
    %16 = vector.load %arg3[%c0_13, %c0_14] : memref<1x128xf32, #tpu.memory_space<vmem>>, vector<1x128xf32>
    %17 = vector.broadcast %16 : vector<1x128xf32> to vector<512x128xf32>
    %18 = arith.addf %15, %17 : vector<512x128xf32>
    %cst_15 = arith.constant 0.000000e+00 : f32
    %19 = vector.broadcast %cst_15 : f32 to vector<512x128xf32>
    %20 = arith.maximumf %18, %19 : vector<512x128xf32>
    %21 = arith.truncf %20 : vector<512x128xf32> to vector<512x128xbf16>
    %c0_16 = arith.constant 0 : index
    %c0_17 = arith.constant 0 : index
    %22 = vector.load %arg4[%c0_16, %c0_17] : memref<512x128xbf16, #tpu.memory_space<vmem>>, vector<512x128xbf16>
    tpu.vector_store %arg4[%c0_16, %c0_17], %21 {strides = array<i32>} : memref<512x128xbf16, #tpu.memory_space<vmem>>, vector<512x128xbf16>,
    return
  }
  func.func @transform_0(%arg0: i32) -> (i32, i32, i32) {
    %c0_i32 = arith.constant 0 : i32
    %c0_i32_0 = arith.constant 0 : i32
    %c0_i32_1 = arith.constant 0 : i32
    return %c0_i32, %arg0, %c0_i32_0 : i32, i32, i32
  }
  func.func @transform_1(%arg0: i32) -> (i32, i32) {
    %c0_i32 = arith.constant 0 : i32
    %c0_i32_0 = arith.constant 0 : i32
    %c0_i32_1 = arith.constant 0 : i32
    return %c0_i32, %c0_i32_0 : i32, i32
  }
  func.func @transform_2(%arg0: i32) -> (i32, i32) {
    %c0_i32 = arith.constant 0 : i32
    %c0_i32_0 = arith.constant 0 : i32
    %c0_i32_1 = arith.constant 0 : i32
    return %c0_i32, %c0_i32_0 : i32, i32
  }
  func.func @transform_3(%arg0: i32) -> (i32, i32) {
    %c0_i32 = arith.constant 0 : i32
    %c0_i32_0 = arith.constant 0 : i32
    return %arg0, %c0_i32 : i32, i32
  }
}

module attributes {stable_mosaic.version = 11 : i64} {
  func.func @_conv_pool_kernel(%arg0: i32, %arg1: memref<4x100x1600xbf16, #tpu.memory_space<vmem>>, %arg2: memref<1600x128xbf16, #tpu.memory_space<vmem>>, %arg3: memref<1x128xf32, #tpu.memory_space<vmem>>, %arg4: memref<100x128xbf16, #tpu.memory_space<vmem>>) attributes {dimension_semantics = [#tpu.dimension_semantics<parallel>], iteration_bounds = array<i64: 1>, scalar_prefetch = 0 : i64, scratch_operands = 0 : i64, tpu.core_type = #tpu.core_type<tc>, window_params = [{transform_indices = @transform_0, window_bounds = array<i64: 4, 100, 1600>}, {pipeline_mode = #tpu.pipeline_mode<synchronous>, transform_indices = @transform_1, window_bounds = array<i64: 1600, 128>}, {pipeline_mode = #tpu.pipeline_mode<synchronous>, transform_indices = @transform_2, window_bounds = array<i64: 1, 128>}, {transform_indices = @transform_3, window_bounds = array<i64: 100, 128>}]} {
    %c0 = arith.constant 0 : index
    %c0_0 = arith.constant 0 : index
    %0 = vector.load %arg2[%c0, %c0_0] : memref<1600x128xbf16, #tpu.memory_space<vmem>>, vector<1600x128xbf16>
    %c0_1 = arith.constant 0 : index
    %c0_2 = arith.constant 0 : index
    %c0_3 = arith.constant 0 : index
    %1 = vector.load %arg1[%c0_1, %c0_2, %c0_3] : memref<4x100x1600xbf16, #tpu.memory_space<vmem>>, vector<1x100x1600xbf16>
    %2 = vector.shape_cast %1 : vector<1x100x1600xbf16> to vector<100x1600xbf16>
    %cst = arith.constant dense<0.000000e+00> : vector<100x128xf32>
    %3 = tpu.matmul %2, %0, %cst {dimension_numbers = #tpu.dot_dimension_numbers<[1], [0], [0], [1], [0, 0, 1, 1], [], []>} : vector<100x1600xbf16>, vector<1600x128xbf16>, vector<100x128xf32> -> vector<100x128xf32>
    %c1 = arith.constant 1 : index
    %c0_4 = arith.constant 0 : index
    %c0_5 = arith.constant 0 : index
    %4 = vector.load %arg1[%c1, %c0_4, %c0_5] : memref<4x100x1600xbf16, #tpu.memory_space<vmem>>, vector<1x100x1600xbf16>
    %5 = vector.shape_cast %4 : vector<1x100x1600xbf16> to vector<100x1600xbf16>
    %cst_6 = arith.constant dense<0.000000e+00> : vector<100x128xf32>
    %6 = tpu.matmul %5, %0, %cst_6 {dimension_numbers = #tpu.dot_dimension_numbers<[1], [0], [0], [1], [0, 0, 1, 1], [], []>} : vector<100x1600xbf16>, vector<1600x128xbf16>, vector<100x128xf32> -> vector<100x128xf32>
    %7 = arith.maximumf %3, %6 : vector<100x128xf32>
    %c2 = arith.constant 2 : index
    %c0_7 = arith.constant 0 : index
    %c0_8 = arith.constant 0 : index
    %8 = vector.load %arg1[%c2, %c0_7, %c0_8] : memref<4x100x1600xbf16, #tpu.memory_space<vmem>>, vector<1x100x1600xbf16>
    %9 = vector.shape_cast %8 : vector<1x100x1600xbf16> to vector<100x1600xbf16>
    %cst_9 = arith.constant dense<0.000000e+00> : vector<100x128xf32>
    %10 = tpu.matmul %9, %0, %cst_9 {dimension_numbers = #tpu.dot_dimension_numbers<[1], [0], [0], [1], [0, 0, 1, 1], [], []>} : vector<100x1600xbf16>, vector<1600x128xbf16>, vector<100x128xf32> -> vector<100x128xf32>
    %11 = arith.maximumf %7, %10 : vector<100x128xf32>
    %c3 = arith.constant 3 : index
    %c0_10 = arith.constant 0 : index
    %c0_11 = arith.constant 0 : index
    %12 = vector.load %arg1[%c3, %c0_10, %c0_11] : memref<4x100x1600xbf16, #tpu.memory_space<vmem>>, vector<1x100x1600xbf16>
    %13 = vector.shape_cast %12 : vector<1x100x1600xbf16> to vector<100x1600xbf16>
    %cst_12 = arith.constant dense<0.000000e+00> : vector<100x128xf32>
    %14 = tpu.matmul %13, %0, %cst_12 {dimension_numbers = #tpu.dot_dimension_numbers<[1], [0], [0], [1], [0, 0, 1, 1], [], []>} : vector<100x1600xbf16>, vector<1600x128xbf16>, vector<100x128xf32> -> vector<100x128xf32>
    %15 = arith.maximumf %11, %14 : vector<100x128xf32>
    %c0_13 = arith.constant 0 : index
    %c0_14 = arith.constant 0 : index
    %16 = vector.load %arg3[%c0_13, %c0_14] : memref<1x128xf32, #tpu.memory_space<vmem>>, vector<1x128xf32>
    %17 = vector.broadcast %16 : vector<1x128xf32> to vector<100x128xf32>
    %18 = arith.addf %15, %17 : vector<100x128xf32>
    %cst_15 = arith.constant 0.000000e+00 : f32
    %19 = vector.broadcast %cst_15 : f32 to vector<100x128xf32>
    %20 = arith.maximumf %18, %19 : vector<100x128xf32>
    %21 = arith.truncf %20 : vector<100x128xf32> to vector<100x128xbf16>
    %c0_16 = arith.constant 0 : index
    %c0_17 = arith.constant 0 : index
    %22 = vector.load %arg4[%c0_16, %c0_17] : memref<100x128xbf16, #tpu.memory_space<vmem>>, vector<100x128xbf16>
    tpu.vector_store %arg4[%c0_16, %c0_17], %21 {strides = array<i32>} : memref<100x128xbf16, #tpu.memory_space<vmem>>, vector<100x128xbf16>,
    return
  }
  func.func @transform_0(%arg0: i32) -> (i32, i32, i32) {
    %c0_i32 = arith.constant 0 : i32
    %c0_i32_0 = arith.constant 0 : i32
    %c0_i32_1 = arith.constant 0 : i32
    return %c0_i32, %arg0, %c0_i32_0 : i32, i32, i32
  }
  func.func @transform_1(%arg0: i32) -> (i32, i32) {
    %c0_i32 = arith.constant 0 : i32
    %c0_i32_0 = arith.constant 0 : i32
    %c0_i32_1 = arith.constant 0 : i32
    return %c0_i32, %c0_i32_0 : i32, i32
  }
  func.func @transform_2(%arg0: i32) -> (i32, i32) {
    %c0_i32 = arith.constant 0 : i32
    %c0_i32_0 = arith.constant 0 : i32
    %c0_i32_1 = arith.constant 0 : i32
    return %c0_i32, %c0_i32_0 : i32, i32
  }
  func.func @transform_3(%arg0: i32) -> (i32, i32) {
    %c0_i32 = arith.constant 0 : i32
    %c0_i32_0 = arith.constant 0 : i32
    return %arg0, %c0_i32 : i32, i32
  }
}

module attributes {stable_mosaic.version = 11 : i64} {
  func.func @_fc_tail_kernel(%arg0: i32, %arg1: memref<4x3200xbf16, #tpu.memory_space<vmem>>, %arg2: memref<3200x128xbf16, #tpu.memory_space<vmem>>, %arg3: memref<1x128xf32, #tpu.memory_space<vmem>>, %arg4: memref<128x128xbf16, #tpu.memory_space<vmem>>, %arg5: memref<1x128xf32, #tpu.memory_space<vmem>>, %arg6: memref<4x128xf32, #tpu.memory_space<vmem>>) attributes {dimension_semantics = [#tpu.dimension_semantics<parallel>], iteration_bounds = array<i64: 1>, scalar_prefetch = 0 : i64, scratch_operands = 0 : i64, tpu.core_type = #tpu.core_type<tc>, window_params = [{transform_indices = @transform_0, window_bounds = array<i64: 4, 3200>}, {pipeline_mode = #tpu.pipeline_mode<synchronous>, transform_indices = @transform_1, window_bounds = array<i64: 3200, 128>}, {pipeline_mode = #tpu.pipeline_mode<synchronous>, transform_indices = @transform_2, window_bounds = array<i64: 1, 128>}, {pipeline_mode = #tpu.pipeline_mode<synchronous>, transform_indices = @transform_3, window_bounds = array<i64: 128, 128>}, {pipeline_mode = #tpu.pipeline_mode<synchronous>, transform_indices = @transform_4, window_bounds = array<i64: 1, 128>}, {transform_indices = @transform_5, window_bounds = array<i64: 4, 128>}]} {
    %c0 = arith.constant 0 : index
    %c0_0 = arith.constant 0 : index
    %0 = vector.load %arg1[%c0, %c0_0] : memref<4x3200xbf16, #tpu.memory_space<vmem>>, vector<4x3200xbf16>
    %c0_1 = arith.constant 0 : index
    %c0_2 = arith.constant 0 : index
    %1 = vector.load %arg2[%c0_1, %c0_2] : memref<3200x128xbf16, #tpu.memory_space<vmem>>, vector<3200x128xbf16>
    %cst = arith.constant dense<0.000000e+00> : vector<4x128xf32>
    %2 = tpu.matmul %0, %1, %cst {dimension_numbers = #tpu.dot_dimension_numbers<[1], [0], [0], [1], [0, 0, 1, 1], [], []>} : vector<4x3200xbf16>, vector<3200x128xbf16>, vector<4x128xf32> -> vector<4x128xf32>
    %c0_3 = arith.constant 0 : index
    %c0_4 = arith.constant 0 : index
    %3 = vector.load %arg3[%c0_3, %c0_4] : memref<1x128xf32, #tpu.memory_space<vmem>>, vector<1x128xf32>
    %4 = vector.broadcast %3 : vector<1x128xf32> to vector<4x128xf32>
    %5 = arith.addf %2, %4 : vector<4x128xf32>
    %cst_5 = arith.constant 0.000000e+00 : f32
    %6 = vector.broadcast %cst_5 : f32 to vector<4x128xf32>
    %7 = arith.maximumf %5, %6 : vector<4x128xf32>
    %8 = arith.truncf %7 : vector<4x128xf32> to vector<4x128xbf16>
    %c0_6 = arith.constant 0 : index
    %c0_7 = arith.constant 0 : index
    %9 = vector.load %arg4[%c0_6, %c0_7] : memref<128x128xbf16, #tpu.memory_space<vmem>>, vector<128x128xbf16>
    %cst_8 = arith.constant dense<0.000000e+00> : vector<4x128xf32>
    %10 = tpu.matmul %8, %9, %cst_8 {dimension_numbers = #tpu.dot_dimension_numbers<[1], [0], [0], [1], [0, 0, 1, 1], [], []>} : vector<4x128xbf16>, vector<128x128xbf16>, vector<4x128xf32> -> vector<4x128xf32>
    %c0_9 = arith.constant 0 : index
    %c0_10 = arith.constant 0 : index
    %11 = vector.load %arg5[%c0_9, %c0_10] : memref<1x128xf32, #tpu.memory_space<vmem>>, vector<1x128xf32>
    %12 = vector.broadcast %11 : vector<1x128xf32> to vector<4x128xf32>
    %13 = arith.addf %10, %12 : vector<4x128xf32>
    %cst_11 = arith.constant 0.000000e+00 : f32
    %14 = vector.broadcast %cst_11 : f32 to vector<4x128xf32>
    %15 = arith.maximumf %13, %14 : vector<4x128xf32>
    %c0_12 = arith.constant 0 : index
    %c0_13 = arith.constant 0 : index
    %16 = vector.load %arg6[%c0_12, %c0_13] : memref<4x128xf32, #tpu.memory_space<vmem>>, vector<4x128xf32>
    tpu.vector_store %arg6[%c0_12, %c0_13], %15 {strides = array<i32>} : memref<4x128xf32, #tpu.memory_space<vmem>>, vector<4x128xf32>,
    return
  }
  func.func @transform_0(%arg0: i32) -> (i32, i32) {
    %c0_i32 = arith.constant 0 : i32
    %c0_i32_0 = arith.constant 0 : i32
    return %arg0, %c0_i32 : i32, i32
  }
  func.func @transform_1(%arg0: i32) -> (i32, i32) {
    %c0_i32 = arith.constant 0 : i32
    %c0_i32_0 = arith.constant 0 : i32
    %c0_i32_1 = arith.constant 0 : i32
    return %c0_i32, %c0_i32_0 : i32, i32
  }
  func.func @transform_2(%arg0: i32) -> (i32, i32) {
    %c0_i32 = arith.constant 0 : i32
    %c0_i32_0 = arith.constant 0 : i32
    %c0_i32_1 = arith.constant 0 : i32
    return %c0_i32, %c0_i32_0 : i32, i32
  }
  func.func @transform_3(%arg0: i32) -> (i32, i32) {
    %c0_i32 = arith.constant 0 : i32
    %c0_i32_0 = arith.constant 0 : i32
    %c0_i32_1 = arith.constant 0 : i32
    return %c0_i32, %c0_i32_0 : i32, i32
  }
  func.func @transform_4(%arg0: i32) -> (i32, i32) {
    %c0_i32 = arith.constant 0 : i32
    %c0_i32_0 = arith.constant 0 : i32
    %c0_i32_1 = arith.constant 0 : i32
    return %c0_i32, %c0_i32_0 : i32, i32
  }
  func.func @transform_5(%arg0: i32) -> (i32, i32) {
    %c0_i32 = arith.constant 0 : i32
    %c0_i32_0 = arith.constant 0 : i32
    return %arg0, %c0_i32 : i32, i32
  }
}

</mosaic_0001>

<llo_original>
// kernel: cnn_cifar_global_forward.3
$region0: #{cnn_cifar_global_forward.3}
  #allocation0 [shape = 'u32[]', space=smem, size = 0x4, offset = 0x4, fixed_abs, tag = 'smem constant byte address 0x4 - core index']
  #allocation1 [shape = 'u32[144,128]{1,0:T(1,128)}', space=vmem, size = 0x12000, scoped, tag = 'internal scratch']
  %s0 = inlined_call_operand.vmem [shape: bf16[4,1024,128], index: 0, kind: input, shape index: {}]
  %s1 = inlined_call_operand.vmem [shape: bf16[128,128], index: 1, kind: input, shape index: {}]
  %s2 = inlined_call_operand.vmem [shape: f32[1,128], index: 2, kind: input, shape index: {}]
  %s3 = inlined_call_operand.vmem [shape: bf16[1024,128], index: 3, kind: output, shape index: {}]
  %s4 = sld [smem:[#allocation0]]
  $region86: #{cnn_cifar_global_forward.3} parent=0
    _
  %s6 = ssub.s32 1, %s4
  %s7 = scalar_select 0, %s6, %s4
  $region1: #{cnn_cifar_global_forward.3} parent=0
    #allocation2 [shape = 'u8[1048576]{0}', space=vmem, size = 0x100000, scoped, tag = 'input window, operand 0']
    loop: start=0, step=1, limit=4
    $region2: #{cnn_cifar_global_forward.3} parent=1 // loop_pre_header
      _
    $region3: #{cnn_cifar_global_forward.3} parent=1 // loop_header
      %s9 = sphi 0, %s13
      %p10 = scmp.ge.s32.totalorder %s9, 4
      %s19 = sphi 0, %s21
      %s22 = sphi 0, %s19
      %s23 = sphi 0, %s22
      %s39 = sphi 0, %s23
      %s43 = sphi 0, %s43
      %s45 = sphi 0, %s43
      %s46 = sphi 0, %s45
      %s60 = sphi 0, %s46
      %s64 = sphi 0, %s64
      %s66 = sphi 0, %s64
      %s67 = sphi 0, %s66
      %s81 = sphi 0, %s67
      %s87 = sphi 0, %s89
      %s90 = sphi 0, %s87
      %s91 = sphi 0, %s90
      %s107 = sphi 0, %s91
    $region4: #{cnn_cifar_global_forward.3} parent=1 // loop_header_branch
      %12 = sbr.rel (%p10) target = $region8
    $region5: #{cnn_cifar_global_forward.3} parent=1 // loop_body
      %s14 = ssub.s32 %s9, 1
      %s15 = ssub.s32 %s9, 2
      %s16 = sadd.s32 %s9, 1
      %s17 = ssub.s32 %s9, %s16
      %p18 = scmp.eq.s32.totalorder %s17, 0
      %s20 = sadd.s32 %s19, 1
      %s21 = scalar_select %p18, %s19, %s20
      %p24 = pneg %p18
      %p25 = scmp.eq.s32.totalorder %s9, 1
      %p26 = por %p24, %p25
      %p27 = scmp.ne.s32.totalorder %s19, %s22
      %p28 = scmp.eq.s32.totalorder %s9, 0
      %p29 = por %p27, %p28
      %p30 = scmp.ne.s32.totalorder %s19, %s22
      %p31 = scmp.eq.s32.totalorder %s14, 1
      %p32 = por %p30, %p31
      %p33 = scmp.ne.s32.totalorder %s22, %s23
      %p34 = scmp.eq.s32.totalorder %s14, 0
      %p35 = por %p33, %p34
      %p36 = scmp.ne.s32.totalorder %s22, %s23
      %p37 = scmp.eq.s32.totalorder %s15, 1
      %p38 = por %p36, %p37
      %p40 = scmp.ne.s32.totalorder %s23, %s39
      %p41 = scmp.eq.s32.totalorder %s15, 0
      %p42 = por %p40, %p41
      %s44 = sadd.s32 %s43, 1
      %p47 = scmp.eq.s32.totalorder %s9, 1
      %p48 = scmp.ne.s32.totalorder %s43, %s45
      %p49 = scmp.eq.s32.totalorder %s9, 0
      %p50 = por %p48, %p49
      %p51 = scmp.ne.s32.totalorder %s43, %s45
      %p52 = scmp.eq.s32.totalorder %s14, 1
      %p53 = por %p51, %p52
      %p54 = scmp.ne.s32.totalorder %s45, %s46
      %p55 = scmp.eq.s32.totalorder %s14, 0
      %p56 = por %p54, %p55
      %p57 = scmp.ne.s32.totalorder %s45, %s46
      %p58 = scmp.eq.s32.totalorder %s15, 1
      %p59 = por %p57, %p58
      %p61 = scmp.ne.s32.totalorder %s46, %s60
      %p62 = scmp.eq.s32.totalorder %s15, 0
      %p63 = por %p61, %p62
      %s65 = sadd.s32 %s64, 1
      %p68 = scmp.eq.s32.totalorder %s9, 1
      %p69 = scmp.ne.s32.totalorder %s64, %s66
      %p70 = scmp.eq.s32.totalorder %s9, 0
      %p71 = por %p69, %p70
      %p72 = scmp.ne.s32.totalorder %s64, %s66
      %p73 = scmp.eq.s32.totalorder %s14, 1
      %p74 = por %p72, %p73
      %p75 = scmp.ne.s32.totalorder %s66, %s67
      %p76 = scmp.eq.s32.totalorder %s14, 0
      %p77 = por %p75, %p76
      %p78 = scmp.ne.s32.totalorder %s66, %s67
      %p79 = scmp.eq.s32.totalorder %s15, 1
      %p80 = por %p78, %p79
      %p82 = scmp.ne.s32.totalorder %s67, %s81
      %p83 = scmp.eq.s32.totalorder %s15, 0
      %p84 = por %p82, %p83
      %s85 = ssub.s32 %s9, %s16
      %p86 = scmp.eq.s32.totalorder %s85, 0
      %s88 = sadd.s32 %s87, 1
      %s89 = scalar_select %p86, %s87, %s88
      %p92 = pneg %p86
      %p93 = scmp.eq.s32.totalorder %s9, 1
      %p94 = por %p92, %p93
      %p95 = scmp.ne.s32.totalorder %s87, %s90
      %p96 = scmp.eq.s32.totalorder %s9, 0
      %p97 = por %p95, %p96
      %p98 = scmp.ne.s32.totalorder %s87, %s90
      %p99 = scmp.eq.s32.totalorder %s14, 1
      %p100 = por %p98, %p99
      %p101 = scmp.ne.s32.totalorder %s90, %s91
      %p102 = scmp.eq.s32.totalorder %s14, 0
      %p103 = por %p101, %p102
      %p104 = scmp.ne.s32.totalorder %s90, %s91
      %p105 = scmp.eq.s32.totalorder %s15, 1
      %p106 = por %p104, %p105
      %p108 = scmp.ne.s32.totalorder %s91, %s107
      %p109 = scmp.eq.s32.totalorder %s15, 0
      %p110 = por %p108, %p109
      %p111 = scmp.le.s32.totalorder 1, %s9
      %p112 = scmp.lt.s32.totalorder %s9, 3
      %p113 = pnand %p111, %p112
      %p114 = pneg %p113
      // Predicated region
      $region9: #{cnn_cifar_global_forward.3} parent=5 // pred_check
        _
      $region10: #{cnn_cifar_global_forward.3} parent=5 // pred_check_branch
        %116 = sbr.rel (%p113) target = $region12
      $region11: #{cnn_cifar_global_forward.3} parent=5 // pred_region
        %s117 = ssub.s32 %s9, 1
        // Predicated region
        $region13: #{cnn_cifar_global_forward.3} parent=11 // pred_check
          %p118 = pneg %p56
        $region14: #{cnn_cifar_global_forward.3} parent=11 // pred_check_branch
          %120 = sbr.rel (%p118) target = $region16
        $region15: #{cnn_cifar_global_forward.3} parent=11 // pred_region
          _
        $region16: #{cnn_cifar_global_forward.3} parent=11 // pred_fallthru
          _
        // Predicated region
        $region17: #{cnn_cifar_global_forward.3} parent=11 // pred_check
          %p121 = pneg %p77
        $region18: #{cnn_cifar_global_forward.3} parent=11 // pred_check_branch
          %123 = sbr.rel (%p121) target = $region20
        $region19: #{cnn_cifar_global_forward.3} parent=11 // pred_region
          _
        $region20: #{cnn_cifar_global_forward.3} parent=11 // pred_fallthru
          _
      $region12: #{cnn_cifar_global_forward.3} parent=5 // pred_fallthru
        _
      %p124 = scmp.lt.s32.totalorder %s9, 2
      // Predicated region
      $region21: #{cnn_cifar_global_forward.3} parent=5 // pred_check
        %p125 = pneg %p124
      $region22: #{cnn_cifar_global_forward.3} parent=5 // pred_check_branch
        %127 = sbr.rel (%p125) target = $region24
      $region23: #{cnn_cifar_global_forward.3} parent=5 // pred_region
        // Predicated region
        $region25: #{cnn_cifar_global_forward.3} parent=23 // pred_check
          %p128 = pneg %p29
        $region26: #{cnn_cifar_global_forward.3} parent=23 // pred_check_branch
          %130 = sbr.rel (%p128) target = $region28
        $region27: #{cnn_cifar_global_forward.3} parent=23 // pred_region
          %s131 = sand.u32 %s19, 1
          %s132 = sand.u32 %s19, 1
          %s133 = smul.addr %s132, 1024
          %s134 = scalar_lea.vmem [#allocation2], %s133
          %s135 = smul.u32 64, %s9
          %s136 = smul.addr %s135, 4
          %s137 = scalar_lea.vmem %s0, %s136
          // Predicated region
          $region29: #{cnn_cifar_global_forward.3} parent=27 // pred_check
            _
          $region30: #{cnn_cifar_global_forward.3} parent=27 // pred_check_branch
            %139 = sbr.rel (0) target = $region32
          $region31: #{cnn_cifar_global_forward.3} parent=27 // pred_region
            // Predicated region
            $region33: #{cnn_cifar_global_forward.3} parent=31 // pred_check
              _
            $region34: #{cnn_cifar_global_forward.3} parent=31 // pred_check_branch
              %141 = sbr.rel target = $region36
            $region35: #{cnn_cifar_global_forward.3} parent=31 // pred_region
              // Predicated region
              $region48: #{cnn_cifar_global_forward.3} parent=35 // pred_check
                _
              $region49: #{cnn_cifar_global_forward.3} parent=35 // pred_check_branch
                %666 = sbr.rel (0) target = $region51
              $region50: #{cnn_cifar_global_forward.3} parent=35 // pred_region
                loop: start=0, step=1, limit=1
                $region52: #{cnn_cifar_global_forward.3} parent=50 // loop_pre_header
                  _
                $region53: #{cnn_cifar_global_forward.3} parent=50 // loop_header
                  %s668 = sphi 0, %s672
                  %p669 = scmp.ge.s32.totalorder %s668, 1
                  %s673 = sphi %s137, %s137
                  %s674 = sphi %s134, %s134
                $region54: #{cnn_cifar_global_forward.3} parent=50 // loop_header_branch
                  %671 = sbr.rel (%p669) target = $region58
                $region55: #{cnn_cifar_global_forward.3} parent=50 // loop_body
                  _
                $region56: #{cnn_cifar_global_forward.3} parent=50 // loop_footer
                  %s672 = sadd.s32 1, %s668
                $region57: #{cnn_cifar_global_forward.3} parent=50 // loop_footer_branch
                  %667 = sbr.rel target = $region53
                $region58: #{cnn_cifar_global_forward.3} parent=50 // loop_exit
                  _
                loop: start=0, step=1, limit=1
                $region59: #{cnn_cifar_global_forward.3} parent=50 // loop_pre_header
                  _
                $region60: #{cnn_cifar_global_forward.3} parent=50 // loop_header
                  %s677 = sphi 0, %s681
                  %p678 = scmp.ge.s32.totalorder %s677, 1
                  %s682 = sphi %s137, %s137
                  %s683 = sphi %s134, %s134
                $region61: #{cnn_cifar_global_forward.3} parent=50 // loop_header_branch
                  %680 = sbr.rel (%p678) target = $region65
                $region62: #{cnn_cifar_global_forward.3} parent=50 // loop_body
                  %v684 = vld [vmem:[%s682] sm:$0xf]
                  %685 = vst [vmem:[%s683] sm:$0xf] %v684
                  %v686 = vld [vmem:[%s682 + $0x4] sm:$0xf]
                  %687 = vst [vmem:[%s683 + $0x4] sm:$0xf] %v686
                  %v688 = vld [vmem:[%s682 + $0x8] sm:$0xf]
                  %689 = vst [vmem:[%s683 + $0x8] sm:$0xf] %v688
                  %v690 = vld [vmem:[%s682 + $0xc] sm:$0xf]
                  %691 = vst [vmem:[%s683 + $0xc] sm:$0xf] %v690
                  %v692 = vld [vmem:[%s682 + $0x10] sm:$0xf]
                  %693 = vst [vmem:[%s683 + $0x10] sm:$0xf] %v692
                  %v694 = vld [vmem:[%s682 + $0x14] sm:$0xf]
                  %695 = vst [vmem:[%s683 + $0x14] sm:$0xf] %v694
                  %v696 = vld [vmem:[%s682 + $0x18] sm:$0xf]
                  %697 = vst [vmem:[%s683 + $0x18] sm:$0xf] %v696
                  %v698 = vld [vmem:[%s682 + $0x1c] sm:$0xf]
                  %699 = vst [vmem:[%s683 + $0x1c] sm:$0xf] %v698
                  %v700 = vld [vmem:[%s682 + $0x20] sm:$0xf]
                  %701 = vst [vmem:[%s683 + $0x20] sm:$0xf] %v700
                  %v702 = vld [vmem:[%s682 + $0x24] sm:$0xf]
                  %703 = vst [vmem:[%s683 + $0x24] sm:$0xf] %v702
                  %v704 = vld [vmem:[%s682 + $0x28] sm:$0xf]
                  %705 = vst [vmem:[%s683 + $0x28] sm:$0xf] %v704
                  %v706 = vld [vmem:[%s682 + $0x2c] sm:$0xf]
                  %707 = vst [vmem:[%s683 + $0x2c] sm:$0xf] %v706
                  %v708 = vld [vmem:[%s682 + $0x30] sm:$0xf]
                  %709 = vst [vmem:[%s683 + $0x30] sm:$0xf] %v708
                  %v710 = vld [vmem:[%s682 + $0x34] sm:$0xf]
                  %711 = vst [vmem:[%s683 + $0x34] sm:$0xf] %v710
                  %v712 = vld [vmem:[%s682 + $0x38] sm:$0xf]
                  %713 = vst [vmem:[%s683 + $0x38] sm:$0xf] %v712
                  %v714 = vld [vmem:[%s682 + $0x3c] sm:$0xf]
                  %715 = vst [vmem:[%s683 + $0x3c] sm:$0xf] %v714
                  %v716 = vld [vmem:[%s682 + $0x40] sm:$0xf]
                  %717 = vst [vmem:[%s683 + $0x40] sm:$0xf] %v716
                  %v718 = vld [vmem:[%s682 + $0x44] sm:$0xf]
                  %719 = vst [vmem:[%s683 + $0x44] sm:$0xf] %v718
                  %v720 = vld [vmem:[%s682 + $0x48] sm:$0xf]
                  %721 = vst [vmem:[%s683 + $0x48] sm:$0xf] %v720
                  %v722 = vld [vmem:[%s682 + $0x4c] sm:$0xf]
                  %723 = vst [vmem:[%s683 + $0x4c] sm:$0xf] %v722
                  %v724 = vld [vmem:[%s682 + $0x50] sm:$0xf]
                  %725 = vst [vmem:[%s683 + $0x50] sm:$0xf] %v724
                  %v726 = vld [vmem:[%s682 + $0x54] sm:$0xf]
                  %727 = vst [vmem:[%s683 + $0x54] sm:$0xf] %v726
                  %v728 = vld [vmem:[%s682 + $0x58] sm:$0xf]
                  %729 = vst [vmem:[%s683 + $0x58] sm:$0xf] %v728
                  %v730 = vld [vmem:[%s682 + $0x5c] sm:$0xf]
                  %731 = vst [vmem:[%s683 + $0x5c] sm:$0xf] %v730
                  %v732 = vld [vmem:[%s682 + $0x60] sm:$0xf]
                  %733 = vst [vmem:[%s683 + $0x60] sm:$0xf] %v732
                  %v734 = vld [vmem:[%s682 + $0x64] sm:$0xf]
                  %735 = vst [vmem:[%s683 + $0x64] sm:$0xf] %v734
                  %v736 = vld [vmem:[%s682 + $0x68] sm:$0xf]
                  %737 = vst [vmem:[%s683 + $0x68] sm:$0xf] %v736
                  %v738 = vld [vmem:[%s682 + $0x6c] sm:$0xf]
                  %739 = vst [vmem:[%s683 + $0x6c] sm:$0xf] %v738
                  %v740 = vld [vmem:[%s682 + $0x70] sm:$0xf]
                  %741 = vst [vmem:[%s683 + $0x70] sm:$0xf] %v740
                  %v742 = vld [vmem:[%s682 + $0x74] sm:$0xf]
                  %743 = vst [vmem:[%s683 + $0x74] sm:$0xf] %v742
                  %v744 = vld [vmem:[%s682 + $0x78] sm:$0xf]
                  %745 = vst [vmem:[%s683 + $0x78] sm:$0xf] %v744
                  %v746 = vld [vmem:[%s682 + $0x7c] sm:$0xf]
                  %747 = vst [vmem:[%s683 + $0x7c] sm:$0xf] %v746
                  %v748 = vld [vmem:[%s682 + $0x80] sm:$0xf]
                  %749 = vst [vmem:[%s683 + $0x80] sm:$0xf] %v748
                  %v750 = vld [vmem:[%s682 + $0x84] sm:$0xf]
                  %751 = vst [vmem:[%s683 + $0x84] sm:$0xf] %v750
                  %v752 = vld [vmem:[%s682 + $0x88] sm:$0xf]
                  %753 = vst [vmem:[%s683 + $0x88] sm:$0xf] %v752
                  %v754 = vld [vmem:[%s682 + $0x8c] sm:$0xf]
                  %755 = vst [vmem:[%s683 + $0x8c] sm:$0xf] %v754
                  %v756 = vld [vmem:[%s682 + $0x90] sm:$0xf]
                  %757 = vst [vmem:[%s683 + $0x90] sm:$0xf] %v756
                  %v758 = vld [vmem:[%s682 + $0x94] sm:$0xf]
                  %759 = vst [vmem:[%s683 + $0x94] sm:$0xf] %v758
                  %v760 = vld [vmem:[%s682 + $0x98] sm:$0xf]
                  %761 = vst [vmem:[%s683 + $0x98] sm:$0xf] %v760
                  %v762 = vld [vmem:[%s682 + $0x9c] sm:$0xf]
                  %763 = vst [vmem:[%s683 + $0x9c] sm:$0xf] %v762
                  %v764 = vld [vmem:[%s682 + $0xa0] sm:$0xf]
                  %765 = vst [vmem:[%s683 + $0xa0] sm:$0xf] %v764
                  %v766 = vld [vmem:[%s682 + $0xa4] sm:$0xf]
                  %767 = vst [vmem:[%s683 + $0xa4] sm:$0xf] %v766
                  %v768 = vld [vmem:[%s682 + $0xa8] sm:$0xf]
                  %769 = vst [vmem:[%s683 + $0xa8] sm:$0xf] %v768
                  %v770 = vld [vmem:[%s682 + $0xac] sm:$0xf]
                  %771 = vst [vmem:[%s683 + $0xac] sm:$0xf] %v770
                  %v772 = vld [vmem:[%s682 + $0xb0] sm:$0xf]
                  %773 = vst [vmem:[%s683 + $0xb0] sm:$0xf] %v772
                  %v774 = vld [vmem:[%s682 + $0xb4] sm:$0xf]
                  %775 = vst [vmem:[%s683 + $0xb4] sm:$0xf] %v774
                  %v776 = vld [vmem:[%s682 + $0xb8] sm:$0xf]
                  %777 = vst [vmem:[%s683 + $0xb8] sm:$0xf] %v776
                  %v778 = vld [vmem:[%s682 + $0xbc] sm:$0xf]
                  %779 = vst [vmem:[%s683 + $0xbc] sm:$0xf] %v778
                  %v780 = vld [vmem:[%s682 + $0xc0] sm:$0xf]
                  %781 = vst [vmem:[%s683 + $0xc0] sm:$0xf] %v780
                  %v782 = vld [vmem:[%s682 + $0xc4] sm:$0xf]
                  %783 = vst [vmem:[%s683 + $0xc4] sm:$0xf] %v782
                  %v784 = vld [vmem:[%s682 + $0xc8] sm:$0xf]
                  %785 = vst [vmem:[%s683 + $0xc8] sm:$0xf] %v784
                  %v786 = vld [vmem:[%s682 + $0xcc] sm:$0xf]
                  %787 = vst [vmem:[%s683 + $0xcc] sm:$0xf] %v786
                  %v788 = vld [vmem:[%s682 + $0xd0] sm:$0xf]
                  %789 = vst [vmem:[%s683 + $0xd0] sm:$0xf] %v788
                  %v790 = vld [vmem:[%s682 + $0xd4] sm:$0xf]
                  %791 = vst [vmem:[%s683 + $0xd4] sm:$0xf] %v790
                  %v792 = vld [vmem:[%s682 + $0xd8] sm:$0xf]
                  %793 = vst [vmem:[%s683 + $0xd8] sm:$0xf] %v792
                  %v794 = vld [vmem:[%s682 + $0xdc] sm:$0xf]
                  %795 = vst [vmem:[%s683 + $0xdc] sm:$0xf] %v794
                  %v796 = vld [vmem:[%s682 + $0xe0] sm:$0xf]
                  %797 = vst [vmem:[%s683 + $0xe0] sm:$0xf] %v796
                  %v798 = vld [vmem:[%s682 + $0xe4] sm:$0xf]
                  %799 = vst [vmem:[%s683 + $0xe4] sm:$0xf] %v798
                  %v800 = vld [vmem:[%s682 + $0xe8] sm:$0xf]
                  %801 = vst [vmem:[%s683 + $0xe8] sm:$0xf] %v800
                  %v802 = vld [vmem:[%s682 + $0xec] sm:$0xf]
                  %803 = vst [vmem:[%s683 + $0xec] sm:$0xf] %v802
                  %v804 = vld [vmem:[%s682 + $0xf0] sm:$0xf]
                  %805 = vst [vmem:[%s683 + $0xf0] sm:$0xf] %v804
                  %v806 = vld [vmem:[%s682 + $0xf4] sm:$0xf]
                  %807 = vst [vmem:[%s683 + $0xf4] sm:$0xf] %v806
                  %v808 = vld [vmem:[%s682 + $0xf8] sm:$0xf]
                  %809 = vst [vmem:[%s683 + $0xf8] sm:$0xf] %v808
                  %v810 = vld [vmem:[%s682 + $0xfc] sm:$0xf]
                  %811 = vst [vmem:[%s683 + $0xfc] sm:$0xf] %v810
                  %v812 = vld [vmem:[%s682 + $0x200] sm:$0xf]
                  %813 = vst [vmem:[%s683 + $0x100] sm:$0xf] %v812
                  %v814 = vld [vmem:[%s682 + $0x204] sm:$0xf]
                  %815 = vst [vmem:[%s683 + $0x104] sm:$0xf] %v814
                  %v816 = vld [vmem:[%s682 + $0x208] sm:$0xf]
                  %817 = vst [vmem:[%s683 + $0x108] sm:$0xf] %v816
                  %v818 = vld [vmem:[%s682 + $0x20c] sm:$0xf]
                  %819 = vst [vmem:[%s683 + $0x10c] sm:$0xf] %v818
                  %v820 = vld [vmem:[%s682 + $0x210] sm:$0xf]
                  %821 = vst [vmem:[%s683 + $0x110] sm:$0xf] %v820
                  %v822 = vld [vmem:[%s682 + $0x214] sm:$0xf]
                  %823 = vst [vmem:[%s683 + $0x114] sm:$0xf] %v822
                  %v824 = vld [vmem:[%s682 + $0x218] sm:$0xf]
                  %825 = vst [vmem:[%s683 + $0x118] sm:$0xf] %v824
                  %v826 = vld [vmem:[%s682 + $0x21c] sm:$0xf]
                  %827 = vst [vmem:[%s683 + $0x11c] sm:$0xf] %v826
                  %v828 = vld [vmem:[%s682 + $0x220] sm:$0xf]
                  %829 = vst [vmem:[%s683 + $0x120] sm:$0xf] %v828
                  %v830 = vld [vmem:[%s682 + $0x224] sm:$0xf]
                  %831 = vst [vmem:[%s683 + $0x124] sm:$0xf] %v830
                  %v832 = vld [vmem:[%s682 + $0x228] sm:$0xf]
                  %833 = vst [vmem:[%s683 + $0x128] sm:$0xf] %v832
                  %v834 = vld [vmem:[%s682 + $0x22c] sm:$0xf]
                  %835 = vst [vmem:[%s683 + $0x12c] sm:$0xf] %v834
                  %v836 = vld [vmem:[%s682 + $0x230] sm:$0xf]
                  %837 = vst [vmem:[%s683 + $0x130] sm:$0xf] %v836
                  %v838 = vld [vmem:[%s682 + $0x234] sm:$0xf]
                  %839 = vst [vmem:[%s683 + $0x134] sm:$0xf] %v838
                  %v840 = vld [vmem:[%s682 + $0x238] sm:$0xf]
                  %841 = vst [vmem:[%s683 + $0x138] sm:$0xf] %v840
                  %v842 = vld [vmem:[%s682 + $0x23c] sm:$0xf]
                  %843 = vst [vmem:[%s683 + $0x13c] sm:$0xf] %v842
                  %v844 = vld [vmem:[%s682 + $0x240] sm:$0xf]
                  %845 = vst [vmem:[%s683 + $0x140] sm:$0xf] %v844
                  %v846 = vld [vmem:[%s682 + $0x244] sm:$0xf]
                  %847 = vst [vmem:[%s683 + $0x144] sm:$0xf] %v846
                  %v848 = vld [vmem:[%s682 + $0x248] sm:$0xf]
                  %849 = vst [vmem:[%s683 + $0x148] sm:$0xf] %v848
                  %v850 = vld [vmem:[%s682 + $0x24c] sm:$0xf]
                  %851 = vst [vmem:[%s683 + $0x14c] sm:$0xf] %v850
                  %v852 = vld [vmem:[%s682 + $0x250] sm:$0xf]
                  %853 = vst [vmem:[%s683 + $0x150] sm:$0xf] %v852
                  %v854 = vld [vmem:[%s682 + $0x254] sm:$0xf]
                  %855 = vst [vmem:[%s683 + $0x154] sm:$0xf] %v854
                  %v856 = vld [vmem:[%s682 + $0x258] sm:$0xf]
                  %857 = vst [vmem:[%s683 + $0x158] sm:$0xf] %v856
                  %v858 = vld [vmem:[%s682 + $0x25c] sm:$0xf]
                  %859 = vst [vmem:[%s683 + $0x15c] sm:$0xf] %v858
                  %v860 = vld [vmem:[%s682 + $0x260] sm:$0xf]
                  %861 = vst [vmem:[%s683 + $0x160] sm:$0xf] %v860
                  %v862 = vld [vmem:[%s682 + $0x264] sm:$0xf]
                  %863 = vst [vmem:[%s683 + $0x164] sm:$0xf] %v862
                  %v864 = vld [vmem:[%s682 + $0x268] sm:$0xf]
                  %865 = vst [vmem:[%s683 + $0x168] sm:$0xf] %v864
                  %v866 = vld [vmem:[%s682 + $0x26c] sm:$0xf]
                  %867 = vst [vmem:[%s683 + $0x16c] sm:$0xf] %v866
                  %v868 = vld [vmem:[%s682 + $0x270] sm:$0xf]
                  %869 = vst [vmem:[%s683 + $0x170] sm:$0xf] %v868
                  %v870 = vld [vmem:[%s682 + $0x274] sm:$0xf]
                  %871 = vst [vmem:[%s683 + $0x174] sm:$0xf] %v870
                  %v872 = vld [vmem:[%s682 + $0x278] sm:$0xf]
                  %873 = vst [vmem:[%s683 + $0x178] sm:$0xf] %v872
                  %v874 = vld [vmem:[%s682 + $0x27c] sm:$0xf]
                  %875 = vst [vmem:[%s683 + $0x17c] sm:$0xf] %v874
                  %v876 = vld [vmem:[%s682 + $0x280] sm:$0xf]
                  %877 = vst [vmem:[%s683 + $0x180] sm:$0xf] %v876
                  %v878 = vld [vmem:[%s682 + $0x284] sm:$0xf]
                  %879 = vst [vmem:[%s683 + $0x184] sm:$0xf] %v878
                  %v880 = vld [vmem:[%s682 + $0x288] sm:$0xf]
                  %881 = vst [vmem:[%s683 + $0x188] sm:$0xf] %v880
                  %v882 = vld [vmem:[%s682 + $0x28c] sm:$0xf]
                  %883 = vst [vmem:[%s683 + $0x18c] sm:$0xf] %v882
                  %v884 = vld [vmem:[%s682 + $0x290] sm:$0xf]
                  %885 = vst [vmem:[%s683 + $0x190] sm:$0xf] %v884
                  %v886 = vld [vmem:[%s682 + $0x294] sm:$0xf]
                  %887 = vst [vmem:[%s683 + $0x194] sm:$0xf] %v886
                  %v888 = vld [vmem:[%s682 + $0x298] sm:$0xf]
                  %889 = vst [vmem:[%s683 + $0x198] sm:$0xf] %v888
                  %v890 = vld [vmem:[%s682 + $0x29c] sm:$0xf]
                  %891 = vst [vmem:[%s683 + $0x19c] sm:$0xf] %v890
                  %v892 = vld [vmem:[%s682 + $0x2a0] sm:$0xf]
                  %893 = vst [vmem:[%s683 + $0x1a0] sm:$0xf] %v892
                  %v894 = vld [vmem:[%s682 + $0x2a4] sm:$0xf]
                  %895 = vst [vmem:[%s683 + $0x1a4] sm:$0xf] %v894
                  %v896 = vld [vmem:[%s682 + $0x2a8] sm:$0xf]
                  %897 = vst [vmem:[%s683 + $0x1a8] sm:$0xf] %v896
                  %v898 = vld [vmem:[%s682 + $0x2ac] sm:$0xf]
                  %899 = vst [vmem:[%s683 + $0x1ac] sm:$0xf] %v898
                  %v900 = vld [vmem:[%s682 + $0x2b0] sm:$0xf]
                  %901 = vst [vmem:[%s683 + $0x1b0] sm:$0xf] %v900
                  %v902 = vld [vmem:[%s682 + $0x2b4] sm:$0xf]
                  %903 = vst [vmem:[%s683 + $0x1b4] sm:$0xf] %v902
                  %v904 = vld [vmem:[%s682 + $0x2b8] sm:$0xf]
                  %905 = vst [vmem:[%s683 + $0x1b8] sm:$0xf] %v904
                  %v906 = vld [vmem:[%s682 + $0x2bc] sm:$0xf]
                  %907 = vst [vmem:[%s683 + $0x1bc] sm:$0xf] %v906
                  %v908 = vld [vmem:[%s682 + $0x2c0] sm:$0xf]
                  %909 = vst [vmem:[%s683 + $0x1c0] sm:$0xf] %v908
                  %v910 = vld [vmem:[%s682 + $0x2c4] sm:$0xf]
                  %911 = vst [vmem:[%s683 + $0x1c4] sm:$0xf] %v910
                  %v912 = vld [vmem:[%s682 + $0x2c8] sm:$0xf]
                  %913 = vst [vmem:[%s683 + $0x1c8] sm:$0xf] %v912
                  %v914 = vld [vmem:[%s682 + $0x2cc] sm:$0xf]
                  %915 = vst [vmem:[%s683 + $0x1cc] sm:$0xf] %v914
                  %v916 = vld [vmem:[%s682 + $0x2d0] sm:$0xf]
                  %917 = vst [vmem:[%s683 + $0x1d0] sm:$0xf] %v916
                  %v918 = vld [vmem:[%s682 + $0x2d4] sm:$0xf]
                  %919 = vst [vmem:[%s683 + $0x1d4] sm:$0xf] %v918
                  %v920 = vld [vmem:[%s682 + $0x2d8] sm:$0xf]
                  %921 = vst [vmem:[%s683 + $0x1d8] sm:$0xf] %v920
                  %v922 = vld [vmem:[%s682 + $0x2dc] sm:$0xf]
                  %923 = vst [vmem:[%s683 + $0x1dc] sm:$0xf] %v922
                  %v924 = vld [vmem:[%s682 + $0x2e0] sm:$0xf]
                  %925 = vst [vmem:[%s683 + $0x1e0] sm:$0xf] %v924
                  %v926 = vld [vmem:[%s682 + $0x2e4] sm:$0xf]
                  %927 = vst [vmem:[%s683 + $0x1e4] sm:$0xf] %v926
                  %v928 = vld [vmem:[%s682 + $0x2e8] sm:$0xf]
                  %929 = vst [vmem:[%s683 + $0x1e8] sm:$0xf] %v928
                  %v930 = vld [vmem:[%s682 + $0x2ec] sm:$0xf]
                  %931 = vst [vmem:[%s683 + $0x1ec] sm:$0xf] %v930
                  %v932 = vld [vmem:[%s682 + $0x2f0] sm:$0xf]
                  %933 = vst [vmem:[%s683 + $0x1f0] sm:$0xf] %v932
                  %v934 = vld [vmem:[%s682 + $0x2f4] sm:$0xf]
                  %935 = vst [vmem:[%s683 + $0x1f4] sm:$0xf] %v934
                  %v936 = vld [vmem:[%s682 + $0x2f8] sm:$0xf]
                  %937 = vst [vmem:[%s683 + $0x1f8] sm:$0xf] %v936
                  %v938 = vld [vmem:[%s682 + $0x2fc] sm:$0xf]
                  %939 = vst [vmem:[%s683 + $0x1fc] sm:$0xf] %v938
                  %v940 = vld [vmem:[%s682 + $0x400] sm:$0xf]
                  %941 = vst [vmem:[%s683 + $0x200] sm:$0xf] %v940
                  %v942 = vld [vmem:[%s682 + $0x404] sm:$0xf]
                  %943 = vst [vmem:[%s683 + $0x204] sm:$0xf] %v942
                  %v944 = vld [vmem:[%s682 + $0x408] sm:$0xf]
                  %945 = vst [vmem:[%s683 + $0x208] sm:$0xf] %v944
                  %v946 = vld [vmem:[%s682 + $0x40c] sm:$0xf]
                  %947 = vst [vmem:[%s683 + $0x20c] sm:$0xf] %v946
                  %v948 = vld [vmem:[%s682 + $0x410] sm:$0xf]
                  %949 = vst [vmem:[%s683 + $0x210] sm:$0xf] %v948
                  %v950 = vld [vmem:[%s682 + $0x414] sm:$0xf]
                  %951 = vst [vmem:[%s683 + $0x214] sm:$0xf] %v950
                  %v952 = vld [vmem:[%s682 + $0x418] sm:$0xf]
                  %953 = vst [vmem:[%s683 + $0x218] sm:$0xf] %v952
                  %v954 = vld [vmem:[%s682 + $0x41c] sm:$0xf]
                  %955 = vst [vmem:[%s683 + $0x21c] sm:$0xf] %v954
                  %v956 = vld [vmem:[%s682 + $0x420] sm:$0xf]
                  %957 = vst [vmem:[%s683 + $0x220] sm:$0xf] %v956
                  %v958 = vld [vmem:[%s682 + $0x424] sm:$0xf]
                  %959 = vst [vmem:[%s683 + $0x224] sm:$0xf] %v958
                  %v960 = vld [vmem:[%s682 + $0x428] sm:$0xf]
                  %961 = vst [vmem:[%s683 + $0x228] sm:$0xf] %v960
                  %v962 = vld [vmem:[%s682 + $0x42c] sm:$0xf]
                  %963 = vst [vmem:[%s683 + $0x22c] sm:$0xf] %v962
                  %v964 = vld [vmem:[%s682 + $0x430] sm:$0xf]
                  %965 = vst [vmem:[%s683 + $0x230] sm:$0xf] %v964
                  %v966 = vld [vmem:[%s682 + $0x434] sm:$0xf]
                  %967 = vst [vmem:[%s683 + $0x234] sm:$0xf] %v966
                  %v968 = vld [vmem:[%s682 + $0x438] sm:$0xf]
                  %969 = vst [vmem:[%s683 + $0x238] sm:$0xf] %v968
                  %v970 = vld [vmem:[%s682 + $0x43c] sm:$0xf]
                  %971 = vst [vmem:[%s683 + $0x23c] sm:$0xf] %v970
                  %v972 = vld [vmem:[%s682 + $0x440] sm:$0xf]
                  %973 = vst [vmem:[%s683 + $0x240] sm:$0xf] %v972
                  %v974 = vld [vmem:[%s682 + $0x444] sm:$0xf]
                  %975 = vst [vmem:[%s683 + $0x244] sm:$0xf] %v974
                  %v976 = vld [vmem:[%s682 + $0x448] sm:$0xf]
                  %977 = vst [vmem:[%s683 + $0x248] sm:$0xf] %v976
                  %v978 = vld [vmem:[%s682 + $0x44c] sm:$0xf]
                  %979 = vst [vmem:[%s683 + $0x24c] sm:$0xf] %v978
                  %v980 = vld [vmem:[%s682 + $0x450] sm:$0xf]
                  %981 = vst [vmem:[%s683 + $0x250] sm:$0xf] %v980
                  %v982 = vld [vmem:[%s682 + $0x454] sm:$0xf]
                  %983 = vst [vmem:[%s683 + $0x254] sm:$0xf] %v982
                  %v984 = vld [vmem:[%s682 + $0x458] sm:$0xf]
                  %985 = vst [vmem:[%s683 + $0x258] sm:$0xf] %v984
                  %v986 = vld [vmem:[%s682 + $0x45c] sm:$0xf]
                  %987 = vst [vmem:[%s683 + $0x25c] sm:$0xf] %v986
                  %v988 = vld [vmem:[%s682 + $0x460] sm:$0xf]
                  %989 = vst [vmem:[%s683 + $0x260] sm:$0xf] %v988
                  %v990 = vld [vmem:[%s682 + $0x464] sm:$0xf]
                  %991 = vst [vmem:[%s683 + $0x264] sm:$0xf] %v990
                  %v992 = vld [vmem:[%s682 + $0x468] sm:$0xf]
                  %993 = vst [vmem:[%s683 + $0x268] sm:$0xf] %v992
                  %v994 = vld [vmem:[%s682 + $0x46c] sm:$0xf]
                  %995 = vst [vmem:[%s683 + $0x26c] sm:$0xf] %v994
                  %v996 = vld [vmem:[%s682 + $0x470] sm:$0xf]
                  %997 = vst [vmem:[%s683 + $0x270] sm:$0xf] %v996
                  %v998 = vld [vmem:[%s682 + $0x474] sm:$0xf]
                  %999 = vst [vmem:[%s683 + $0x274] sm:$0xf] %v998
                  %v1000 = vld [vmem:[%s682 + $0x478] sm:$0xf]
                  %1001 = vst [vmem:[%s683 + $0x278] sm:$0xf] %v1000
                  %v1002 = vld [vmem:[%s682 + $0x47c] sm:$0xf]
                  %1003 = vst [vmem:[%s683 + $0x27c] sm:$0xf] %v1002
                  %v1004 = vld [vmem:[%s682 + $0x480] sm:$0xf]
                  %1005 = vst [vmem:[%s683 + $0x280] sm:$0xf] %v1004
                  %v1006 = vld [vmem:[%s682 + $0x484] sm:$0xf]
                  %1007 = vst [vmem:[%s683 + $0x284] sm:$0xf] %v1006
                  %v1008 = vld [vmem:[%s682 + $0x488] sm:$0xf]
                  %1009 = vst [vmem:[%s683 + $0x288] sm:$0xf] %v1008
                  %v1010 = vld [vmem:[%s682 + $0x48c] sm:$0xf]
                  %1011 = vst [vmem:[%s683 + $0x28c] sm:$0xf] %v1010
                  %v1012 = vld [vmem:[%s682 + $0x490] sm:$0xf]
                  %1013 = vst [vmem:[%s683 + $0x290] sm:$0xf] %v1012
                  %v1014 = vld [vmem:[%s682 + $0x494] sm:$0xf]
                  %1015 = vst [vmem:[%s683 + $0x294] sm:$0xf] %v1014
                  %v1016 = vld [vmem:[%s682 + $0x498] sm:$0xf]
                  %1017 = vst [vmem:[%s683 + $0x298] sm:$0xf] %v1016
                  %v1018 = vld [vmem:[%s682 + $0x49c] sm:$0xf]
                  %1019 = vst [vmem:[%s683 + $0x29c] sm:$0xf] %v1018
                  %v1020 = vld [vmem:[%s682 + $0x4a0] sm:$0xf]
                  %1021 = vst [vmem:[%s683 + $0x2a0] sm:$0xf] %v1020
                  %v1022 = vld [vmem:[%s682 + $0x4a4] sm:$0xf]
                  %1023 = vst [vmem:[%s683 + $0x2a4] sm:$0xf] %v1022
                  %v1024 = vld [vmem:[%s682 + $0x4a8] sm:$0xf]
                  %1025 = vst [vmem:[%s683 + $0x2a8] sm:$0xf] %v1024
                  %v1026 = vld [vmem:[%s682 + $0x4ac] sm:$0xf]
                  %1027 = vst [vmem:[%s683 + $0x2ac] sm:$0xf] %v1026
                  %v1028 = vld [vmem:[%s682 + $0x4b0] sm:$0xf]
                  %1029 = vst [vmem:[%s683 + $0x2b0] sm:$0xf] %v1028
                  %v1030 = vld [vmem:[%s682 + $0x4b4] sm:$0xf]
                  %1031 = vst [vmem:[%s683 + $0x2b4] sm:$0xf] %v1030
                  %v1032 = vld [vmem:[%s682 + $0x4b8] sm:$0xf]
                  %1033 = vst [vmem:[%s683 + $0x2b8] sm:$0xf] %v1032
                  %v1034 = vld [vmem:[%s682 + $0x4bc] sm:$0xf]
                  %1035 = vst [vmem:[%s683 + $0x2bc] sm:$0xf] %v1034
                  %v1036 = vld [vmem:[%s682 + $0x4c0] sm:$0xf]
                  %1037 = vst [vmem:[%s683 + $0x2c0] sm:$0xf] %v1036
                  %v1038 = vld [vmem:[%s682 + $0x4c4] sm:$0xf]
                  %1039 = vst [vmem:[%s683 + $0x2c4] sm:$0xf] %v1038
                  %v1040 = vld [vmem:[%s682 + $0x4c8] sm:$0xf]
                  %1041 = vst [vmem:[%s683 + $0x2c8] sm:$0xf] %v1040
                  %v1042 = vld [vmem:[%s682 + $0x4cc] sm:$0xf]
                  %1043 = vst [vmem:[%s683 + $0x2cc] sm:$0xf] %v1042
                  %v1044 = vld [vmem:[%s682 + $0x4d0] sm:$0xf]
                  %1045 = vst [vmem:[%s683 + $0x2d0] sm:$0xf] %v1044
                  %v1046 = vld [vmem:[%s682 + $0x4d4] sm:$0xf]
                  %1047 = vst [vmem:[%s683 + $0x2d4] sm:$0xf] %v1046
                  %v1048 = vld [vmem:[%s682 + $0x4d8] sm:$0xf]
                  %1049 = vst [vmem:[%s683 + $0x2d8] sm:$0xf] %v1048
                  %v1050 = vld [vmem:[%s682 + $0x4dc] sm:$0xf]
                  %1051 = vst [vmem:[%s683 + $0x2dc] sm:$0xf] %v1050
                  %v1052 = vld [vmem:[%s682 + $0x4e0] sm:$0xf]
                  %1053 = vst [vmem:[%s683 + $0x2e0] sm:$0xf] %v1052
                  %v1054 = vld [vmem:[%s682 + $0x4e4] sm:$0xf]
                  %1055 = vst [vmem:[%s683 + $0x2e4] sm:$0xf] %v1054
                  %v1056 = vld [vmem:[%s682 + $0x4e8] sm:$0xf]
                  %1057 = vst [vmem:[%s683 + $0x2e8] sm:$0xf] %v1056
                  %v1058 = vld [vmem:[%s682 + $0x4ec] sm:$0xf]
                  %1059 = vst [vmem:[%s683 + $0x2ec] sm:$0xf] %v1058
                  %v1060 = vld [vmem:[%s682 + $0x4f0] sm:$0xf]
                  %1061 = vst [vmem:[%s683 + $0x2f0] sm:$0xf] %v1060
                  %v1062 = vld [vmem:[%s682 + $0x4f4] sm:$0xf]
                  %1063 = vst [vmem:[%s683 + $0x2f4] sm:$0xf] %v1062
                  %v1064 = vld [vmem:[%s682 + $0x4f8] sm:$0xf]
                  %1065 = vst [vmem:[%s683 + $0x2f8] sm:$0xf] %v1064
                  %v1066 = vld [vmem:[%s682 + $0x4fc] sm:$0xf]
                  %1067 = vst [vmem:[%s683 + $0x2fc] sm:$0xf] %v1066
                  %v1068 = vld [vmem:[%s682 + $0x600] sm:$0xf]
                  %1069 = vst [vmem:[%s683 + $0x300] sm:$0xf] %v1068
                  %v1070 = vld [vmem:[%s682 + $0x604] sm:$0xf]
                  %1071 = vst [vmem:[%s683 + $0x304] sm:$0xf] %v1070
                  %v1072 = vld [vmem:[%s682 + $0x608] sm:$0xf]
                  %1073 = vst [vmem:[%s683 + $0x308] sm:$0xf] %v1072
                  %v1074 = vld [vmem:[%s682 + $0x60c] sm:$0xf]
                  %1075 = vst [vmem:[%s683 + $0x30c] sm:$0xf] %v1074
                  %v1076 = vld [vmem:[%s682 + $0x610] sm:$0xf]
                  %1077 = vst [vmem:[%s683 + $0x310] sm:$0xf] %v1076
                  %v1078 = vld [vmem:[%s682 + $0x614] sm:$0xf]
                  %1079 = vst [vmem:[%s683 + $0x314] sm:$0xf] %v1078
                  %v1080 = vld [vmem:[%s682 + $0x618] sm:$0xf]
                  %1081 = vst [vmem:[%s683 + $0x318] sm:$0xf] %v1080
                  %v1082 = vld [vmem:[%s682 + $0x61c] sm:$0xf]
                  %1083 = vst [vmem:[%s683 + $0x31c] sm:$0xf] %v1082
                  %v1084 = vld [vmem:[%s682 + $0x620] sm:$0xf]
                  %1085 = vst [vmem:[%s683 + $0x320] sm:$0xf] %v1084
                  %v1086 = vld [vmem:[%s682 + $0x624] sm:$0xf]
                  %1087 = vst [vmem:[%s683 + $0x324] sm:$0xf] %v1086
                  %v1088 = vld [vmem:[%s682 + $0x628] sm:$0xf]
                  %1089 = vst [vmem:[%s683 + $0x328] sm:$0xf] %v1088
                  %v1090 = vld [vmem:[%s682 + $0x62c] sm:$0xf]
                  %1091 = vst [vmem:[%s683 + $0x32c] sm:$0xf] %v1090
                  %v1092 = vld [vmem:[%s682 + $0x630] sm:$0xf]
                  %1093 = vst [vmem:[%s683 + $0x330] sm:$0xf] %v1092
                  %v1094 = vld [vmem:[%s682 + $0x634] sm:$0xf]
                  %1095 = vst [vmem:[%s683 + $0x334] sm:$0xf] %v1094
                  %v1096 = vld [vmem:[%s682 + $0x638] sm:$0xf]
                  %1097 = vst [vmem:[%s683 + $0x338] sm:$0xf] %v1096
                  %v1098 = vld [vmem:[%s682 + $0x63c] sm:$0xf]
                  %1099 = vst [vmem:[%s683 + $0x33c] sm:$0xf] %v1098
                  %v1100 = vld [vmem:[%s682 + $0x640] sm:$0xf]
                  %1101 = vst [vmem:[%s683 + $0x340] sm:$0xf] %v1100
                  %v1102 = vld [vmem:[%s682 + $0x644] sm:$0xf]
                  %1103 = vst [vmem:[%s683 + $0x344] sm:$0xf] %v1102
                  %v1104 = vld [vmem:[%s682 + $0x648] sm:$0xf]
                  %1105 = vst [vmem:[%s683 + $0x348] sm:$0xf] %v1104
                  %v1106 = vld [vmem:[%s682 + $0x64c] sm:$0xf]
                  %1107 = vst [vmem:[%s683 + $0x34c] sm:$0xf] %v1106
                  %v1108 = vld [vmem:[%s682 + $0x650] sm:$0xf]
                  %1109 = vst [vmem:[%s683 + $0x350] sm:$0xf] %v1108
                  %v1110 = vld [vmem:[%s682 + $0x654] sm:$0xf]
                  %1111 = vst [vmem:[%s683 + $0x354] sm:$0xf] %v1110
                  %v1112 = vld [vmem:[%s682 + $0x658] sm:$0xf]
                  %1113 = vst [vmem:[%s683 + $0x358] sm:$0xf] %v1112
                  %v1114 = vld [vmem:[%s682 + $0x65c] sm:$0xf]
                  %1115 = vst [vmem:[%s683 + $0x35c] sm:$0xf] %v1114
                  %v1116 = vld [vmem:[%s682 + $0x660] sm:$0xf]
                  %1117 = vst [vmem:[%s683 + $0x360] sm:$0xf] %v1116
                  %v1118 = vld [vmem:[%s682 + $0x664] sm:$0xf]
                  %1119 = vst [vmem:[%s683 + $0x364] sm:$0xf] %v1118
                  %v1120 = vld [vmem:[%s682 + $0x668] sm:$0xf]
                  %1121 = vst [vmem:[%s683 + $0x368] sm:$0xf] %v1120
                  %v1122 = vld [vmem:[%s682 + $0x66c] sm:$0xf]
                  %1123 = vst [vmem:[%s683 + $0x36c] sm:$0xf] %v1122
                  %v1124 = vld [vmem:[%s682 + $0x670] sm:$0xf]
                  %1125 = vst [vmem:[%s683 + $0x370] sm:$0xf] %v1124
                  %v1126 = vld [vmem:[%s682 + $0x674] sm:$0xf]
                  %1127 = vst [vmem:[%s683 + $0x374] sm:$0xf] %v1126
                  %v1128 = vld [vmem:[%s682 + $0x678] sm:$0xf]
                  %1129 = vst [vmem:[%s683 + $0x378] sm:$0xf] %v1128
                  %v1130 = vld [vmem:[%s682 + $0x67c] sm:$0xf]
                  %1131 = vst [vmem:[%s683 + $0x37c] sm:$0xf] %v1130
                  %v1132 = vld [vmem:[%s682 + $0x680] sm:$0xf]
                  %1133 = vst [vmem:[%s683 + $0x380] sm:$0xf] %v1132
                  %v1134 = vld [vmem:[%s682 + $0x684] sm:$0xf]
                  %1135 = vst [vmem:[%s683 + $0x384] sm:$0xf] %v1134
                  %v1136 = vld [vmem:[%s682 + $0x688] sm:$0xf]
                  %1137 = vst [vmem:[%s683 + $0x388] sm:$0xf] %v1136
                  %v1138 = vld [vmem:[%s682 + $0x68c] sm:$0xf]
                  %1139 = vst [vmem:[%s683 + $0x38c] sm:$0xf] %v1138
                  %v1140 = vld [vmem:[%s682 + $0x690] sm:$0xf]
                  %1141 = vst [vmem:[%s683 + $0x390] sm:$0xf] %v1140
                  %v1142 = vld [vmem:[%s682 + $0x694] sm:$0xf]
                  %1143 = vst [vmem:[%s683 + $0x394] sm:$0xf] %v1142
                  %v1144 = vld [vmem:[%s682 + $0x698] sm:$0xf]
                  %1145 = vst [vmem:[%s683 + $0x398] sm:$0xf] %v1144
                  %v1146 = vld [vmem:[%s682 + $0x69c] sm:$0xf]
                  %1147 = vst [vmem:[%s683 + $0x39c] sm:$0xf] %v1146
                  %v1148 = vld [vmem:[%s682 + $0x6a0] sm:$0xf]
                  %1149 = vst [vmem:[%s683 + $0x3a0] sm:$0xf] %v1148
                  %v1150 = vld [vmem:[%s682 + $0x6a4] sm:$0xf]
                  %1151 = vst [vmem:[%s683 + $0x3a4] sm:$0xf] %v1150
                  %v1152 = vld [vmem:[%s682 + $0x6a8] sm:$0xf]
                  %1153 = vst [vmem:[%s683 + $0x3a8] sm:$0xf] %v1152
                  %v1154 = vld [vmem:[%s682 + $0x6ac] sm:$0xf]
                  %1155 = vst [vmem:[%s683 + $0x3ac] sm:$0xf] %v1154
                  %v1156 = vld [vmem:[%s682 + $0x6b0] sm:$0xf]
                  %1157 = vst [vmem:[%s683 + $0x3b0] sm:$0xf] %v1156
                  %v1158 = vld [vmem:[%s682 + $0x6b4] sm:$0xf]
                  %1159 = vst [vmem:[%s683 + $0x3b4] sm:$0xf] %v1158
                  %v1160 = vld [vmem:[%s682 + $0x6b8] sm:$0xf]
                  %1161 = vst [vmem:[%s683 + $0x3b8] sm:$0xf] %v1160
                  %v1162 = vld [vmem:[%s682 + $0x6bc] sm:$0xf]
                  %1163 = vst [vmem:[%s683 + $0x3bc] sm:$0xf] %v1162
                  %v1164 = vld [vmem:[%s682 + $0x6c0] sm:$0xf]
                  %1165 = vst [vmem:[%s683 + $0x3c0] sm:$0xf] %v1164
                  %v1166 = vld [vmem:[%s682 + $0x6c4] sm:$0xf]
                  %1167 = vst [vmem:[%s683 + $0x3c4] sm:$0xf] %v1166
                  %v1168 = vld [vmem:[%s682 + $0x6c8] sm:$0xf]
                  %1169 = vst [vmem:[%s683 + $0x3c8] sm:$0xf] %v1168
                  %v1170 = vld [vmem:[%s682 + $0x6cc] sm:$0xf]
                  %1171 = vst [vmem:[%s683 + $0x3cc] sm:$0xf] %v1170
                  %v1172 = vld [vmem:[%s682 + $0x6d0] sm:$0xf]
                  %1173 = vst [vmem:[%s683 + $0x3d0] sm:$0xf] %v1172
                  %v1174 = vld [vmem:[%s682 + $0x6d4] sm:$0xf]
                  %1175 = vst [vmem:[%s683 + $0x3d4] sm:$0xf] %v1174
                  %v1176 = vld [vmem:[%s682 + $0x6d8] sm:$0xf]
                  %1177 = vst [vmem:[%s683 + $0x3d8] sm:$0xf] %v1176
                  %v1178 = vld [vmem:[%s682 + $0x6dc] sm:$0xf]
                  %1179 = vst [vmem:[%s683 + $0x3dc] sm:$0xf] %v1178
                  %v1180 = vld [vmem:[%s682 + $0x6e0] sm:$0xf]
                  %1181 = vst [vmem:[%s683 + $0x3e0] sm:$0xf] %v1180
                  %v1182 = vld [vmem:[%s682 + $0x6e4] sm:$0xf]
                  %1183 = vst [vmem:[%s683 + $0x3e4] sm:$0xf] %v1182
                  %v1184 = vld [vmem:[%s682 + $0x6e8] sm:$0xf]
                  %1185 = vst [vmem:[%s683 + $0x3e8] sm:$0xf] %v1184
                  %v1186 = vld [vmem:[%s682 + $0x6ec] sm:$0xf]
                  %1187 = vst [vmem:[%s683 + $0x3ec] sm:$0xf] %v1186
                  %v1188 = vld [vmem:[%s682 + $0x6f0] sm:$0xf]
                  %1189 = vst [vmem:[%s683 + $0x3f0] sm:$0xf] %v1188
                  %v1190 = vld [vmem:[%s682 + $0x6f4] sm:$0xf]
                  %1191 = vst [vmem:[%s683 + $0x3f4] sm:$0xf] %v1190
                  %v1192 = vld [vmem:[%s682 + $0x6f8] sm:$0xf]
                  %1193 = vst [vmem:[%s683 + $0x3f8] sm:$0xf] %v1192
                  %v1194 = vld [vmem:[%s682 + $0x6fc] sm:$0xf]
                  %1195 = vst [vmem:[%s683 + $0x3fc] sm:$0xf] %v1194
                $region63: #{cnn_cifar_global_forward.3} parent=50 // loop_footer
                  %s681 = sadd.s32 1, %s677
                $region64: #{cnn_cifar_global_forward.3} parent=50 // loop_footer_branch
                  %676 = sbr.rel target = $region60
                $region65: #{cnn_cifar_global_forward.3} parent=50 // loop_exit
                  _
              $region51: #{cnn_cifar_global_forward.3} parent=35 // pred_fallthru
                _
            $region36: #{cnn_cifar_global_forward.3} parent=31 // pred_fallthru
              _
            // Predicated region
            $region37: #{cnn_cifar_global_forward.3} parent=31 // pred_check
              _
            $region38: #{cnn_cifar_global_forward.3} parent=31 // pred_check_branch
              %143 = sbr.rel (0) target = $region40
            $region39: #{cnn_cifar_global_forward.3} parent=31 // pred_region
              loop: start=0, step=1, limit=1
              $region41: #{cnn_cifar_global_forward.3} parent=39 // loop_pre_header
                _
              $region42: #{cnn_cifar_global_forward.3} parent=39 // loop_header
                %s146 = sphi 0, %s150
                %p147 = scmp.ge.s32.totalorder %s146, 1
                %s151 = sphi %s137, %s137
                %s152 = sphi %s134, %s134
              $region43: #{cnn_cifar_global_forward.3} parent=39 // loop_header_branch
                %149 = sbr.rel (%p147) target = $region47
              $region44: #{cnn_cifar_global_forward.3} parent=39 // loop_body
                %v153 = vld [vmem:[%s151] sm:$0xf]
                %154 = vst [vmem:[%s152] sm:$0xf] %v153
                %v155 = vld [vmem:[%s151 + $0x4] sm:$0xf]
                %156 = vst [vmem:[%s152 + $0x4] sm:$0xf] %v155
                %v157 = vld [vmem:[%s151 + $0x8] sm:$0xf]
                %158 = vst [vmem:[%s152 + $0x8] sm:$0xf] %v157
                %v159 = vld [vmem:[%s151 + $0xc] sm:$0xf]
                %160 = vst [vmem:[%s152 + $0xc] sm:$0xf] %v159
                %v161 = vld [vmem:[%s151 + $0x10] sm:$0xf]
                %162 = vst [vmem:[%s152 + $0x10] sm:$0xf] %v161
                %v163 = vld [vmem:[%s151 + $0x14] sm:$0xf]
                %164 = vst [vmem:[%s152 + $0x14] sm:$0xf] %v163
                %v165 = vld [vmem:[%s151 + $0x18] sm:$0xf]
                %166 = vst [vmem:[%s152 + $0x18] sm:$0xf] %v165
                %v167 = vld [vmem:[%s151 + $0x1c] sm:$0xf]
                %168 = vst [vmem:[%s152 + $0x1c] sm:$0xf] %v167
                %v169 = vld [vmem:[%s151 + $0x20] sm:$0xf]
                %170 = vst [vmem:[%s152 + $0x20] sm:$0xf] %v169
                %v171 = vld [vmem:[%s151 + $0x24] sm:$0xf]
                %172 = vst [vmem:[%s152 + $0x24] sm:$0xf] %v171
                %v173 = vld [vmem:[%s151 + $0x28] sm:$0xf]
                %174 = vst [vmem:[%s152 + $0x28] sm:$0xf] %v173
                %v175 = vld [vmem:[%s151 + $0x2c] sm:$0xf]
                %176 = vst [vmem:[%s152 + $0x2c] sm:$0xf] %v175
                %v177 = vld [vmem:[%s151 + $0x30] sm:$0xf]
                %178 = vst [vmem:[%s152 + $0x30] sm:$0xf] %v177
                %v179 = vld [vmem:[%s151 + $0x34] sm:$0xf]
                %180 = vst [vmem:[%s152 + $0x34] sm:$0xf] %v179
                %v181 = vld [vmem:[%s151 + $0x38] sm:$0xf]
                %182 = vst [vmem:[%s152 + $0x38] sm:$0xf] %v181
                %v183 = vld [vmem:[%s151 + $0x3c] sm:$0xf]
                %184 = vst [vmem:[%s152 + $0x3c] sm:$0xf] %v183
                %v185 = vld [vmem:[%s151 + $0x40] sm:$0xf]
                %186 = vst [vmem:[%s152 + $0x40] sm:$0xf] %v185
                %v187 = vld [vmem:[%s151 + $0x44] sm:$0xf]
                %188 = vst [vmem:[%s152 + $0x44] sm:$0xf] %v187
                %v189 = vld [vmem:[%s151 + $0x48] sm:$0xf]
                %190 = vst [vmem:[%s152 + $0x48] sm:$0xf] %v189
                %v191 = vld [vmem:[%s151 + $0x4c] sm:$0xf]
                %192 = vst [vmem:[%s152 + $0x4c] sm:$0xf] %v191
                %v193 = vld [vmem:[%s151 + $0x50] sm:$0xf]
                %194 = vst [vmem:[%s152 + $0x50] sm:$0xf] %v193
                %v195 = vld [vmem:[%s151 + $0x54] sm:$0xf]
                %196 = vst [vmem:[%s152 + $0x54] sm:$0xf] %v195
                %v197 = vld [vmem:[%s151 + $0x58] sm:$0xf]
                %198 = vst [vmem:[%s152 + $0x58] sm:$0xf] %v197
                %v199 = vld [vmem:[%s151 + $0x5c] sm:$0xf]
                %200 = vst [vmem:[%s152 + $0x5c] sm:$0xf] %v199
                %v201 = vld [vmem:[%s151 + $0x60] sm:$0xf]
                %202 = vst [vmem:[%s152 + $0x60] sm:$0xf] %v201
                %v203 = vld [vmem:[%s151 + $0x64] sm:$0xf]
                %204 = vst [vmem:[%s152 + $0x64] sm:$0xf] %v203
                %v205 = vld [vmem:[%s151 + $0x68] sm:$0xf]
                %206 = vst [vmem:[%s152 + $0x68] sm:$0xf] %v205
                %v207 = vld [vmem:[%s151 + $0x6c] sm:$0xf]
                %208 = vst [vmem:[%s152 + $0x6c] sm:$0xf] %v207
                %v209 = vld [vmem:[%s151 + $0x70] sm:$0xf]
                %210 = vst [vmem:[%s152 + $0x70] sm:$0xf] %v209
                %v211 = vld [vmem:[%s151 + $0x74] sm:$0xf]
                %212 = vst [vmem:[%s152 + $0x74] sm:$0xf] %v211
                %v213 = vld [vmem:[%s151 + $0x78] sm:$0xf]
                %214 = vst [vmem:[%s152 + $0x78] sm:$0xf] %v213
                %v215 = vld [vmem:[%s151 + $0x7c] sm:$0xf]
                %216 = vst [vmem:[%s152 + $0x7c] sm:$0xf] %v215
                %v217 = vld [vmem:[%s151 + $0x80] sm:$0xf]
                %218 = vst [vmem:[%s152 + $0x80] sm:$0xf] %v217
                %v219 = vld [vmem:[%s151 + $0x84] sm:$0xf]
                %220 = vst [vmem:[%s152 + $0x84] sm:$0xf] %v219
                %v221 = vld [vmem:[%s151 + $0x88] sm:$0xf]
                %222 = vst [vmem:[%s152 + $0x88] sm:$0xf] %v221
                %v223 = vld [vmem:[%s151 + $0x8c] sm:$0xf]
                %224 = vst [vmem:[%s152 + $0x8c] sm:$0xf] %v223
                %v225 = vld [vmem:[%s151 + $0x90] sm:$0xf]
                %226 = vst [vmem:[%s152 + $0x90] sm:$0xf] %v225
                %v227 = vld [vmem:[%s151 + $0x94] sm:$0xf]
                %228 = vst [vmem:[%s152 + $0x94] sm:$0xf] %v227
                %v229 = vld [vmem:[%s151 + $0x98] sm:$0xf]
                %230 = vst [vmem:[%s152 + $0x98] sm:$0xf] %v229
                %v231 = vld [vmem:[%s151 + $0x9c] sm:$0xf]
                %232 = vst [vmem:[%s152 + $0x9c] sm:$0xf] %v231
                %v233 = vld [vmem:[%s151 + $0xa0] sm:$0xf]
                %234 = vst [vmem:[%s152 + $0xa0] sm:$0xf] %v233
                %v235 = vld [vmem:[%s151 + $0xa4] sm:$0xf]
                %236 = vst [vmem:[%s152 + $0xa4] sm:$0xf] %v235
                %v237 = vld [vmem:[%s151 + $0xa8] sm:$0xf]
                %238 = vst [vmem:[%s152 + $0xa8] sm:$0xf] %v237
                %v239 = vld [vmem:[%s151 + $0xac] sm:$0xf]
                %240 = vst [vmem:[%s152 + $0xac] sm:$0xf] %v239
                %v241 = vld [vmem:[%s151 + $0xb0] sm:$0xf]
                %242 = vst [vmem:[%s152 + $0xb0] sm:$0xf] %v241
                %v243 = vld [vmem:[%s151 + $0xb4] sm:$0xf]
                %244 = vst [vmem:[%s152 + $0xb4] sm:$0xf] %v243
                %v245 = vld [vmem:[%s151 + $0xb8] sm:$0xf]
                %246 = vst [vmem:[%s152 + $0xb8] sm:$0xf] %v245
                %v247 = vld [vmem:[%s151 + $0xbc] sm:$0xf]
                %248 = vst [vmem:[%s152 + $0xbc] sm:$0xf] %v247
                %v249 = vld [vmem:[%s151 + $0xc0] sm:$0xf]
                %250 = vst [vmem:[%s152 + $0xc0] sm:$0xf] %v249
                %v251 = vld [vmem:[%s151 + $0xc4] sm:$0xf]
                %252 = vst [vmem:[%s152 + $0xc4] sm:$0xf] %v251
                %v253 = vld [vmem:[%s151 + $0xc8] sm:$0xf]
                %254 = vst [vmem:[%s152 + $0xc8] sm:$0xf] %v253
                %v255 = vld [vmem:[%s151 + $0xcc] sm:$0xf]
                %256 = vst [vmem:[%s152 + $0xcc] sm:$0xf] %v255
                %v257 = vld [vmem:[%s151 + $0xd0] sm:$0xf]
                %258 = vst [vmem:[%s152 + $0xd0] sm:$0xf] %v257
                %v259 = vld [vmem:[%s151 + $0xd4] sm:$0xf]
                %260 = vst [vmem:[%s152 + $0xd4] sm:$0xf] %v259
                %v261 = vld [vmem:[%s151 + $0xd8] sm:$0xf]
                %262 = vst [vmem:[%s152 + $0xd8] sm:$0xf] %v261
                %v263 = vld [vmem:[%s151 + $0xdc] sm:$0xf]
                %264 = vst [vmem:[%s152 + $0xdc] sm:$0xf] %v263
                %v265 = vld [vmem:[%s151 + $0xe0] sm:$0xf]
                %266 = vst [vmem:[%s152 + $0xe0] sm:$0xf] %v265
                %v267 = vld [vmem:[%s151 + $0xe4] sm:$0xf]
                %268 = vst [vmem:[%s152 + $0xe4] sm:$0xf] %v267
                %v269 = vld [vmem:[%s151 + $0xe8] sm:$0xf]
                %270 = vst [vmem:[%s152 + $0xe8] sm:$0xf] %v269
                %v271 = vld [vmem:[%s151 + $0xec] sm:$0xf]
                %272 = vst [vmem:[%s152 + $0xec] sm:$0xf] %v271
                %v273 = vld [vmem:[%s151 + $0xf0] sm:$0xf]
                %274 = vst [vmem:[%s152 + $0xf0] sm:$0xf] %v273
                %v275 = vld [vmem:[%s151 + $0xf4] sm:$0xf]
                %276 = vst [vmem:[%s152 + $0xf4] sm:$0xf] %v275
                %v277 = vld [vmem:[%s151 + $0xf8] sm:$0xf]
                %278 = vst [vmem:[%s152 + $0xf8] sm:$0xf] %v277
                %v279 = vld [vmem:[%s151 + $0xfc] sm:$0xf]
                %280 = vst [vmem:[%s152 + $0xfc] sm:$0xf] %v279
                %v281 = vld [vmem:[%s151 + $0x200] sm:$0xf]
                %282 = vst [vmem:[%s152 + $0x100] sm:$0xf] %v281
                %v283 = vld [vmem:[%s151 + $0x204] sm:$0xf]
                %284 = vst [vmem:[%s152 + $0x104] sm:$0xf] %v283
                %v285 = vld [vmem:[%s151 + $0x208] sm:$0xf]
                %286 = vst [vmem:[%s152 + $0x108] sm:$0xf] %v285
                %v287 = vld [vmem:[%s151 + $0x20c] sm:$0xf]
                %288 = vst [vmem:[%s152 + $0x10c] sm:$0xf] %v287
                %v289 = vld [vmem:[%s151 + $0x210] sm:$0xf]
                %290 = vst [vmem:[%s152 + $0x110] sm:$0xf] %v289
                %v291 = vld [vmem:[%s151 + $0x214] sm:$0xf]
                %292 = vst [vmem:[%s152 + $0x114] sm:$0xf] %v291
                %v293 = vld [vmem:[%s151 + $0x218] sm:$0xf]
                %294 = vst [vmem:[%s152 + $0x118] sm:$0xf] %v293
                %v295 = vld [vmem:[%s151 + $0x21c] sm:$0xf]
                %296 = vst [vmem:[%s152 + $0x11c] sm:$0xf] %v295
                %v297 = vld [vmem:[%s151 + $0x220] sm:$0xf]
                %298 = vst [vmem:[%s152 + $0x120] sm:$0xf] %v297
                %v299 = vld [vmem:[%s151 + $0x224] sm:$0xf]
                %300 = vst [vmem:[%s152 + $0x124] sm:$0xf] %v299
                %v301 = vld [vmem:[%s151 + $0x228] sm:$0xf]
                %302 = vst [vmem:[%s152 + $0x128] sm:$0xf] %v301
                %v303 = vld [vmem:[%s151 + $0x22c] sm:$0xf]
                %304 = vst [vmem:[%s152 + $0x12c] sm:$0xf] %v303
                %v305 = vld [vmem:[%s151 + $0x230] sm:$0xf]
                %306 = vst [vmem:[%s152 + $0x130] sm:$0xf] %v305
                %v307 = vld [vmem:[%s151 + $0x234] sm:$0xf]
                %308 = vst [vmem:[%s152 + $0x134] sm:$0xf] %v307
                %v309 = vld [vmem:[%s151 + $0x238] sm:$0xf]
                %310 = vst [vmem:[%s152 + $0x138] sm:$0xf] %v309
                %v311 = vld [vmem:[%s151 + $0x23c] sm:$0xf]
                %312 = vst [vmem:[%s152 + $0x13c] sm:$0xf] %v311
                %v313 = vld [vmem:[%s151 + $0x240] sm:$0xf]
                %314 = vst [vmem:[%s152 + $0x140] sm:$0xf] %v313
                %v315 = vld [vmem:[%s151 + $0x244] sm:$0xf]
                %316 = vst [vmem:[%s152 + $0x144] sm:$0xf] %v315
                %v317 = vld [vmem:[%s151 + $0x248] sm:$0xf]
                %318 = vst [vmem:[%s152 + $0x148] sm:$0xf] %v317
                %v319 = vld [vmem:[%s151 + $0x24c] sm:$0xf]
                %320 = vst [vmem:[%s152 + $0x14c] sm:$0xf] %v319
                %v321 = vld [vmem:[%s151 + $0x250] sm:$0xf]
                %322 = vst [vmem:[%s152 + $0x150] sm:$0xf] %v321
                %v323 = vld [vmem:[%s151 + $0x254] sm:$0xf]
                %324 = vst [vmem:[%s152 + $0x154] sm:$0xf] %v323
                %v325 = vld [vmem:[%s151 + $0x258] sm:$0xf]
                %326 = vst [vmem:[%s152 + $0x158] sm:$0xf] %v325
                %v327 = vld [vmem:[%s151 + $0x25c] sm:$0xf]
                %328 = vst [vmem:[%s152 + $0x15c] sm:$0xf] %v327
                %v329 = vld [vmem:[%s151 + $0x260] sm:$0xf]
                %330 = vst [vmem:[%s152 + $0x160] sm:$0xf] %v329
                %v331 = vld [vmem:[%s151 + $0x264] sm:$0xf]
                %332 = vst [vmem:[%s152 + $0x164] sm:$0xf] %v331
                %v333 = vld [vmem:[%s151 + $0x268] sm:$0xf]
                %334 = vst [vmem:[%s152 + $0x168] sm:$0xf] %v333
                %v335 = vld [vmem:[%s151 + $0x26c] sm:$0xf]
                %336 = vst [vmem:[%s152 + $0x16c] sm:$0xf] %v335
                %v337 = vld [vmem:[%s151 + $0x270] sm:$0xf]
                %338 = vst [vmem:[%s152 + $0x170] sm:$0xf] %v337
                %v339 = vld [vmem:[%s151 + $0x274] sm:$0xf]
                %340 = vst [vmem:[%s152 + $0x174] sm:$0xf] %v339
                %v341 = vld [vmem:[%s151 + $0x278] sm:$0xf]
                %342 = vst [vmem:[%s152 + $0x178] sm:$0xf] %v341
                %v343 = vld [vmem:[%s151 + $0x27c] sm:$0xf]
                %344 = vst [vmem:[%s152 + $0x17c] sm:$0xf] %v343
                %v345 = vld [vmem:[%s151 + $0x280] sm:$0xf]
                %346 = vst [vmem:[%s152 + $0x180] sm:$0xf] %v345
                %v347 = vld [vmem:[%s151 + $0x284] sm:$0xf]
                %348 = vst [vmem:[%s152 + $0x184] sm:$0xf] %v347
                %v349 = vld [vmem:[%s151 + $0x288] sm:$0xf]
                %350 = vst [vmem:[%s152 + $0x188] sm:$0xf] %v349
                %v351 = vld [vmem:[%s151 + $0x28c] sm:$0xf]
                %352 = vst [vmem:[%s152 + $0x18c] sm:$0xf] %v351
                %v353 = vld [vmem:[%s151 + $0x290] sm:$0xf]
                %354 = vst [vmem:[%s152 + $0x190] sm:$0xf] %v353
                %v355 = vld [vmem:[%s151 + $0x294] sm:$0xf]
                %356 = vst [vmem:[%s152 + $0x194] sm:$0xf] %v355
                %v357 = vld [vmem:[%s151 + $0x298] sm:$0xf]
                %358 = vst [vmem:[%s152 + $0x198] sm:$0xf] %v357
                %v359 = vld [vmem:[%s151 + $0x29c] sm:$0xf]
                %360 = vst [vmem:[%s152 + $0x19c] sm:$0xf] %v359
                %v361 = vld [vmem:[%s151 + $0x2a0] sm:$0xf]
                %362 = vst [vmem:[%s152 + $0x1a0] sm:$0xf] %v361
                %v363 = vld [vmem:[%s151 + $0x2a4] sm:$0xf]
                %364 = vst [vmem:[%s152 + $0x1a4] sm:$0xf] %v363
                %v365 = vld [vmem:[%s151 + $0x2a8] sm:$0xf]
                %366 = vst [vmem:[%s152 + $0x1a8] sm:$0xf] %v365
                %v367 = vld [vmem:[%s151 + $0x2ac] sm:$0xf]
                %368 = vst [vmem:[%s152 + $0x1ac] sm:$0xf] %v367
                %v369 = vld [vmem:[%s151 + $0x2b0] sm:$0xf]
                %370 = vst [vmem:[%s152 + $0x1b0] sm:$0xf] %v369
                %v371 = vld [vmem:[%s151 + $0x2b4] sm:$0xf]
                %372 = vst [vmem:[%s152 + $0x1b4] sm:$0xf] %v371
                %v373 = vld [vmem:[%s151 + $0x2b8] sm:$0xf]
                %374 = vst [vmem:[%s152 + $0x1b8] sm:$0xf] %v373
                %v375 = vld [vmem:[%s151 + $0x2bc] sm:$0xf]
                %376 = vst [vmem:[%s152 + $0x1bc] sm:$0xf] %v375
                %v377 = vld [vmem:[%s151 + $0x2c0] sm:$0xf]
                %378 = vst [vmem:[%s152 + $0x1c0] sm:$0xf] %v377
                %v379 = vld [vmem:[%s151 + $0x2c4] sm:$0xf]
                %380 = vst [vmem:[%s152 + $0x1c4] sm:$0xf] %v379
                %v381 = vld [vmem:[%s151 + $0x2c8] sm:$0xf]
                %382 = vst [vmem:[%s152 + $0x1c8] sm:$0xf] %v381
                %v383 = vld [vmem:[%s151 + $0x2cc] sm:$0xf]
                %384 = vst [vmem:[%s152 + $0x1cc] sm:$0xf] %v383
                %v385 = vld [vmem:[%s151 + $0x2d0] sm:$0xf]
                %386 = vst [vmem:[%s152 + $0x1d0] sm:$0xf] %v385
                %v387 = vld [vmem:[%s151 + $0x2d4] sm:$0xf]
                %388 = vst [vmem:[%s152 + $0x1d4] sm:$0xf] %v387
                %v389 = vld [vmem:[%s151 + $0x2d8] sm:$0xf]
                %390 = vst [vmem:[%s152 + $0x1d8] sm:$0xf] %v389
                %v391 = vld [vmem:[%s151 + $0x2dc] sm:$0xf]
                %392 = vst [vmem:[%s152 + $0x1dc] sm:$0xf] %v391
                %v393 = vld [vmem:[%s151 + $0x2e0] sm:$0xf]
                %394 = vst [vmem:[%s152 + $0x1e0] sm:$0xf] %v393
                %v395 = vld [vmem:[%s151 + $0x2e4] sm:$0xf]
                %396 = vst [vmem:[%s152 + $0x1e4] sm:$0xf] %v395
                %v397 = vld [vmem:[%s151 + $0x2e8] sm:$0xf]
                %398 = vst [vmem:[%s152 + $0x1e8] sm:$0xf] %v397
                %v399 = vld [vmem:[%s151 + $0x2ec] sm:$0xf]
                %400 = vst [vmem:[%s152 + $0x1ec] sm:$0xf] %v399
                %v401 = vld [vmem:[%s151 + $0x2f0] sm:$0xf]
                %402 = vst [vmem:[%s152 + $0x1f0] sm:$0xf] %v401
                %v403 = vld [vmem:[%s151 + $0x2f4] sm:$0xf]
                %404 = vst [vmem:[%s152 + $0x1f4] sm:$0xf] %v403
                %v405 = vld [vmem:[%s151 + $0x2f8] sm:$0xf]
                %406 = vst [vmem:[%s152 + $0x1f8] sm:$0xf] %v405
                %v407 = vld [vmem:[%s151 + $0x2fc] sm:$0xf]
                %408 = vst [vmem:[%s152 + $0x1fc] sm:$0xf] %v407
                %v409 = vld [vmem:[%s151 + $0x400] sm:$0xf]
                %410 = vst [vmem:[%s152 + $0x200] sm:$0xf] %v409
                %v411 = vld [vmem:[%s151 + $0x404] sm:$0xf]
                %412 = vst [vmem:[%s152 + $0x204] sm:$0xf] %v411
                %v413 = vld [vmem:[%s151 + $0x408] sm:$0xf]
                %414 = vst [vmem:[%s152 + $0x208] sm:$0xf] %v413
                %v415 = vld [vmem:[%s151 + $0x40c] sm:$0xf]
                %416 = vst [vmem:[%s152 + $0x20c] sm:$0xf] %v415
                %v417 = vld [vmem:[%s151 + $0x410] sm:$0xf]
                %418 = vst [vmem:[%s152 + $0x210] sm:$0xf] %v417
                %v419 = vld [vmem:[%s151 + $0x414] sm:$0xf]
                %420 = vst [vmem:[%s152 + $0x214] sm:$0xf] %v419
                %v421 = vld [vmem:[%s151 + $0x418] sm:$0xf]
                %422 = vst [vmem:[%s152 + $0x218] sm:$0xf] %v421
                %v423 = vld [vmem:[%s151 + $0x41c] sm:$0xf]
                %424 = vst [vmem:[%s152 + $0x21c] sm:$0xf] %v423
                %v425 = vld [vmem:[%s151 + $0x420] sm:$0xf]
                %426 = vst [vmem:[%s152 + $0x220] sm:$0xf] %v425
                %v427 = vld [vmem:[%s151 + $0x424] sm:$0xf]
                %428 = vst [vmem:[%s152 + $0x224] sm:$0xf] %v427
                %v429 = vld [vmem:[%s151 + $0x428] sm:$0xf]
                %430 = vst [vmem:[%s152 + $0x228] sm:$0xf] %v429
                %v431 = vld [vmem:[%s151 + $0x42c] sm:$0xf]
                %432 = vst [vmem:[%s152 + $0x22c] sm:$0xf] %v431
                %v433 = vld [vmem:[%s151 + $0x430] sm:$0xf]
                %434 = vst [vmem:[%s152 + $0x230] sm:$0xf] %v433
                %v435 = vld [vmem:[%s151 + $0x434] sm:$0xf]
                %436 = vst [vmem:[%s152 + $0x234] sm:$0xf] %v435
                %v437 = vld [vmem:[%s151 + $0x438] sm:$0xf]
                %438 = vst [vmem:[%s152 + $0x238] sm:$0xf] %v437
                %v439 = vld [vmem:[%s151 + $0x43c] sm:$0xf]
                %440 = vst [vmem:[%s152 + $0x23c] sm:$0xf] %v439
                %v441 = vld [vmem:[%s151 + $0x440] sm:$0xf]
                %442 = vst [vmem:[%s152 + $0x240] sm:$0xf] %v441
                %v443 = vld [vmem:[%s151 + $0x444] sm:$0xf]
                %444 = vst [vmem:[%s152 + $0x244] sm:$0xf] %v443
                %v445 = vld [vmem:[%s151 + $0x448] sm:$0xf]
                %446 = vst [vmem:[%s152 + $0x248] sm:$0xf] %v445
                %v447 = vld [vmem:[%s151 + $0x44c] sm:$0xf]
                %448 = vst [vmem:[%s152 + $0x24c] sm:$0xf] %v447
                %v449 = vld [vmem:[%s151 + $0x450] sm:$0xf]
                %450 = vst [vmem:[%s152 + $0x250] sm:$0xf] %v449
                %v451 = vld [vmem:[%s151 + $0x454] sm:$0xf]
                %452 = vst [vmem:[%s152 + $0x254] sm:$0xf] %v451
                %v453 = vld [vmem:[%s151 + $0x458] sm:$0xf]
                %454 = vst [vmem:[%s152 + $0x258] sm:$0xf] %v453
                %v455 = vld [vmem:[%s151 + $0x45c] sm:$0xf]
                %456 = vst [vmem:[%s152 + $0x25c] sm:$0xf] %v455
                %v457 = vld [vmem:[%s151 + $0x460] sm:$0xf]
                %458 = vst [vmem:[%s152 + $0x260] sm:$0xf] %v457
                %v459 = vld [vmem:[%s151 + $0x464] sm:$0xf]
                %460 = vst [vmem:[%s152 + $0x264] sm:$0xf] %v459
                %v461 = vld [vmem:[%s151 + $0x468] sm:$0xf]
                %462 = vst [vmem:[%s152 + $0x268] sm:$0xf] %v461
                %v463 = vld [vmem:[%s151 + $0x46c] sm:$0xf]
                %464 = vst [vmem:[%s152 + $0x26c] sm:$0xf] %v463
                %v465 = vld [vmem:[%s151 + $0x470] sm:$0xf]
                %466 = vst [vmem:[%s152 + $0x270] sm:$0xf] %v465
                %v467 = vld [vmem:[%s151 + $0x474] sm:$0xf]
                %468 = vst [vmem:[%s152 + $0x274] sm:$0xf] %v467
                %v469 = vld [vmem:[%s151 + $0x478] sm:$0xf]
                %470 = vst [vmem:[%s152 + $0x278] sm:$0xf] %v469
                %v471 = vld [vmem:[%s151 + $0x47c] sm:$0xf]
                %472 = vst [vmem:[%s152 + $0x27c] sm:$0xf] %v471
                %v473 = vld [vmem:[%s151 + $0x480] sm:$0xf]
                %474 = vst [vmem:[%s152 + $0x280] sm:$0xf] %v473
                %v475 = vld [vmem:[%s151 + $0x484] sm:$0xf]
                %476 = vst [vmem:[%s152 + $0x284] sm:$0xf] %v475
                %v477 = vld [vmem:[%s151 + $0x488] sm:$0xf]
                %478 = vst [vmem:[%s152 + $0x288] sm:$0xf] %v477
                %v479 = vld [vmem:[%s151 + $0x48c] sm:$0xf]
                %480 = vst [vmem:[%s152 + $0x28c] sm:$0xf] %v479
                %v481 = vld [vmem:[%s151 + $0x490] sm:$0xf]
                %482 = vst [vmem:[%s152 + $0x290] sm:$0xf] %v481
                %v483 = vld [vmem:[%s151 + $0x494] sm:$0xf]
                %484 = vst [vmem:[%s152 + $0x294] sm:$0xf] %v483
                %v485 = vld [vmem:[%s151 + $0x498] sm:$0xf]
                %486 = vst [vmem:[%s152 + $0x298] sm:$0xf] %v485
                %v487 = vld [vmem:[%s151 + $0x49c] sm:$0xf]
                %488 = vst [vmem:[%s152 + $0x29c] sm:$0xf] %v487
                %v489 = vld [vmem:[%s151 + $0x4a0] sm:$0xf]
                %490 = vst [vmem:[%s152 + $0x2a0] sm:$0xf] %v489
                %v491 = vld [vmem:[%s151 + $0x4a4] sm:$0xf]
                %492 = vst [vmem:[%s152 + $0x2a4] sm:$0xf] %v491
                %v493 = vld [vmem:[%s151 + $0x4a8] sm:$0xf]
                %494 = vst [vmem:[%s152 + $0x2a8] sm:$0xf] %v493
                %v495 = vld [vmem:[%s151 + $0x4ac] sm:$0xf]
                %496 = vst [vmem:[%s152 + $0x2ac] sm:$0xf] %v495
                %v497 = vld [vmem:[%s151 + $0x4b0] sm:$0xf]
                %498 = vst [vmem:[%s152 + $0x2b0] sm:$0xf] %v497
                %v499 = vld [vmem:[%s151 + $0x4b4] sm:$0xf]
                %500 = vst [vmem:[%s152 + $0x2b4] sm:$0xf] %v499
                %v501 = vld [vmem:[%s151 + $0x4b8] sm:$0xf]
                %502 = vst [vmem:[%s152 + $0x2b8] sm:$0xf] %v501
                %v503 = vld [vmem:[%s151 + $0x4bc] sm:$0xf]
                %504 = vst [vmem:[%s152 + $0x2bc] sm:$0xf] %v503
                %v505 = vld [vmem:[%s151 + $0x4c0] sm:$0xf]
                %506 = vst [vmem:[%s152 + $0x2c0] sm:$0xf] %v505
                %v507 = vld [vmem:[%s151 + $0x4c4] sm:$0xf]
                %508 = vst [vmem:[%s152 + $0x2c4] sm:$0xf] %v507
                %v509 = vld [vmem:[%s151 + $0x4c8] sm:$0xf]
                %510 = vst [vmem:[%s152 + $0x2c8] sm:$0xf] %v509
                %v511 = vld [vmem:[%s151 + $0x4cc] sm:$0xf]
                %512 = vst [vmem:[%s152 + $0x2cc] sm:$0xf] %v511
                %v513 = vld [vmem:[%s151 + $0x4d0] sm:$0xf]
                %514 = vst [vmem:[%s152 + $0x2d0] sm:$0xf] %v513
                %v515 = vld [vmem:[%s151 + $0x4d4] sm:$0xf]
                %516 = vst [vmem:[%s152 + $0x2d4] sm:$0xf] %v515
                %v517 = vld [vmem:[%s151 + $0x4d8] sm:$0xf]
                %518 = vst [vmem:[%s152 + $0x2d8] sm:$0xf] %v517
                %v519 = vld [vmem:[%s151 + $0x4dc] sm:$0xf]
                %520 = vst [vmem:[%s152 + $0x2dc] sm:$0xf] %v519
                %v521 = vld [vmem:[%s151 + $0x4e0] sm:$0xf]
                %522 = vst [vmem:[%s152 + $0x2e0] sm:$0xf] %v521
                %v523 = vld [vmem:[%s151 + $0x4e4] sm:$0xf]
                %524 = vst [vmem:[%s152 + $0x2e4] sm:$0xf] %v523
                %v525 = vld [vmem:[%s151 + $0x4e8] sm:$0xf]
                %526 = vst [vmem:[%s152 + $0x2e8] sm:$0xf] %v525
                %v527 = vld [vmem:[%s151 + $0x4ec] sm:$0xf]
                %528 = vst [vmem:[%s152 + $0x2ec] sm:$0xf] %v527
                %v529 = vld [vmem:[%s151 + $0x4f0] sm:$0xf]
                %530 = vst [vmem:[%s152 + $0x2f0] sm:$0xf] %v529
                %v531 = vld [vmem:[%s151 + $0x4f4] sm:$0xf]
                %532 = vst [vmem:[%s152 + $0x2f4] sm:$0xf] %v531
                %v533 = vld [vmem:[%s151 + $0x4f8] sm:$0xf]
                %534 = vst [vmem:[%s152 + $0x2f8] sm:$0xf] %v533
                %v535 = vld [vmem:[%s151 + $0x4fc] sm:$0xf]
                %536 = vst [vmem:[%s152 + $0x2fc] sm:$0xf] %v535
                %v537 = vld [vmem:[%s151 + $0x600] sm:$0xf]
                %538 = vst [vmem:[%s152 + $0x300] sm:$0xf] %v537
                %v539 = vld [vmem:[%s151 + $0x604] sm:$0xf]
                %540 = vst [vmem:[%s152 + $0x304] sm:$0xf] %v539
                %v541 = vld [vmem:[%s151 + $0x608] sm:$0xf]
                %542 = vst [vmem:[%s152 + $0x308] sm:$0xf] %v541
                %v543 = vld [vmem:[%s151 + $0x60c] sm:$0xf]
                %544 = vst [vmem:[%s152 + $0x30c] sm:$0xf] %v543
                %v545 = vld [vmem:[%s151 + $0x610] sm:$0xf]
                %546 = vst [vmem:[%s152 + $0x310] sm:$0xf] %v545
                %v547 = vld [vmem:[%s151 + $0x614] sm:$0xf]
                %548 = vst [vmem:[%s152 + $0x314] sm:$0xf] %v547
                %v549 = vld [vmem:[%s151 + $0x618] sm:$0xf]
                %550 = vst [vmem:[%s152 + $0x318] sm:$0xf] %v549
                %v551 = vld [vmem:[%s151 + $0x61c] sm:$0xf]
                %552 = vst [vmem:[%s152 + $0x31c] sm:$0xf] %v551
                %v553 = vld [vmem:[%s151 + $0x620] sm:$0xf]
                %554 = vst [vmem:[%s152 + $0x320] sm:$0xf] %v553
                %v555 = vld [vmem:[%s151 + $0x624] sm:$0xf]
                %556 = vst [vmem:[%s152 + $0x324] sm:$0xf] %v555
                %v557 = vld [vmem:[%s151 + $0x628] sm:$0xf]
                %558 = vst [vmem:[%s152 + $0x328] sm:$0xf] %v557
                %v559 = vld [vmem:[%s151 + $0x62c] sm:$0xf]
                %560 = vst [vmem:[%s152 + $0x32c] sm:$0xf] %v559
                %v561 = vld [vmem:[%s151 + $0x630] sm:$0xf]
                %562 = vst [vmem:[%s152 + $0x330] sm:$0xf] %v561
                %v563 = vld [vmem:[%s151 + $0x634] sm:$0xf]
                %564 = vst [vmem:[%s152 + $0x334] sm:$0xf] %v563
                %v565 = vld [vmem:[%s151 + $0x638] sm:$0xf]
                %566 = vst [vmem:[%s152 + $0x338] sm:$0xf] %v565
                %v567 = vld [vmem:[%s151 + $0x63c] sm:$0xf]
                %568 = vst [vmem:[%s152 + $0x33c] sm:$0xf] %v567
                %v569 = vld [vmem:[%s151 + $0x640] sm:$0xf]
                %570 = vst [vmem:[%s152 + $0x340] sm:$0xf] %v569
                %v571 = vld [vmem:[%s151 + $0x644] sm:$0xf]
                %572 = vst [vmem:[%s152 + $0x344] sm:$0xf] %v571
                %v573 = vld [vmem:[%s151 + $0x648] sm:$0xf]
                %574 = vst [vmem:[%s152 + $0x348] sm:$0xf] %v573
                %v575 = vld [vmem:[%s151 + $0x64c] sm:$0xf]
                %576 = vst [vmem:[%s152 + $0x34c] sm:$0xf] %v575
                %v577 = vld [vmem:[%s151 + $0x650] sm:$0xf]
                %578 = vst [vmem:[%s152 + $0x350] sm:$0xf] %v577
                %v579 = vld [vmem:[%s151 + $0x654] sm:$0xf]
                %580 = vst [vmem:[%s152 + $0x354] sm:$0xf] %v579
                %v581 = vld [vmem:[%s151 + $0x658] sm:$0xf]
                %582 = vst [vmem:[%s152 + $0x358] sm:$0xf] %v581
                %v583 = vld [vmem:[%s151 + $0x65c] sm:$0xf]
                %584 = vst [vmem:[%s152 + $0x35c] sm:$0xf] %v583
                %v585 = vld [vmem:[%s151 + $0x660] sm:$0xf]
                %586 = vst [vmem:[%s152 + $0x360] sm:$0xf] %v585
                %v587 = vld [vmem:[%s151 + $0x664] sm:$0xf]
                %588 = vst [vmem:[%s152 + $0x364] sm:$0xf] %v587
                %v589 = vld [vmem:[%s151 + $0x668] sm:$0xf]
                %590 = vst [vmem:[%s152 + $0x368] sm:$0xf] %v589
                %v591 = vld [vmem:[%s151 + $0x66c] sm:$0xf]
                %592 = vst [vmem:[%s152 + $0x36c] sm:$0xf] %v591
                %v593 = vld [vmem:[%s151 + $0x670] sm:$0xf]
                %594 = vst [vmem:[%s152 + $0x370] sm:$0xf] %v593
                %v595 = vld [vmem:[%s151 + $0x674] sm:$0xf]
                %596 = vst [vmem:[%s152 + $0x374] sm:$0xf] %v595
                %v597 = vld [vmem:[%s151 + $0x678] sm:$0xf]
                %598 = vst [vmem:[%s152 + $0x378] sm:$0xf] %v597
                %v599 = vld [vmem:[%s151 + $0x67c] sm:$0xf]
                %600 = vst [vmem:[%s152 + $0x37c] sm:$0xf] %v599
                %v601 = vld [vmem:[%s151 + $0x680] sm:$0xf]
                %602 = vst [vmem:[%s152 + $0x380] sm:$0xf] %v601
                %v603 = vld [vmem:[%s151 + $0x684] sm:$0xf]
                %604 = vst [vmem:[%s152 + $0x384] sm:$0xf] %v603
                %v605 = vld [vmem:[%s151 + $0x688] sm:$0xf]
                %606 = vst [vmem:[%s152 + $0x388] sm:$0xf] %v605
                %v607 = vld [vmem:[%s151 + $0x68c] sm:$0xf]
                %608 = vst [vmem:[%s152 + $0x38c] sm:$0xf] %v607
                %v609 = vld [vmem:[%s151 + $0x690] sm:$0xf]
                %610 = vst [vmem:[%s152 + $0x390] sm:$0xf] %v609
                %v611 = vld [vmem:[%s151 + $0x694] sm:$0xf]
                %612 = vst [vmem:[%s152 + $0x394] sm:$0xf] %v611
                %v613 = vld [vmem:[%s151 + $0x698] sm:$0xf]
                %614 = vst [vmem:[%s152 + $0x398] sm:$0xf] %v613
                %v615 = vld [vmem:[%s151 + $0x69c] sm:$0xf]
                %616 = vst [vmem:[%s152 + $0x39c] sm:$0xf] %v615
                %v617 = vld [vmem:[%s151 + $0x6a0] sm:$0xf]
                %618 = vst [vmem:[%s152 + $0x3a0] sm:$0xf] %v617
                %v619 = vld [vmem:[%s151 + $0x6a4] sm:$0xf]
                %620 = vst [vmem:[%s152 + $0x3a4] sm:$0xf] %v619
                %v621 = vld [vmem:[%s151 + $0x6a8] sm:$0xf]
                %622 = vst [vmem:[%s152 + $0x3a8] sm:$0xf] %v621
                %v623 = vld [vmem:[%s151 + $0x6ac] sm:$0xf]
                %624 = vst [vmem:[%s152 + $0x3ac] sm:$0xf] %v623
                %v625 = vld [vmem:[%s151 + $0x6b0] sm:$0xf]
                %626 = vst [vmem:[%s152 + $0x3b0] sm:$0xf] %v625
                %v627 = vld [vmem:[%s151 + $0x6b4] sm:$0xf]
                %628 = vst [vmem:[%s152 + $0x3b4] sm:$0xf] %v627
                %v629 = vld [vmem:[%s151 + $0x6b8] sm:$0xf]
                %630 = vst [vmem:[%s152 + $0x3b8] sm:$0xf] %v629
                %v631 = vld [vmem:[%s151 + $0x6bc] sm:$0xf]
                %632 = vst [vmem:[%s152 + $0x3bc] sm:$0xf] %v631
                %v633 = vld [vmem:[%s151 + $0x6c0] sm:$0xf]
                %634 = vst [vmem:[%s152 + $0x3c0] sm:$0xf] %v633
                %v635 = vld [vmem:[%s151 + $0x6c4] sm:$0xf]
                %636 = vst [vmem:[%s152 + $0x3c4] sm:$0xf] %v635
                %v637 = vld [vmem:[%s151 + $0x6c8] sm:$0xf]
                %638 = vst [vmem:[%s152 + $0x3c8] sm:$0xf] %v637
                %v639 = vld [vmem:[%s151 + $0x6cc] sm:$0xf]
                %640 = vst [vmem:[%s152 + $0x3cc] sm:$0xf] %v639
                %v641 = vld [vmem:[%s151 + $0x6d0] sm:$0xf]
                %642 = vst [vmem:[%s152 + $0x3d0] sm:$0xf] %v641
                %v643 = vld [vmem:[%s151 + $0x6d4] sm:$0xf]
                %644 = vst [vmem:[%s152 + $0x3d4] sm:$0xf] %v643
                %v645 = vld [vmem:[%s151 + $0x6d8] sm:$0xf]
                %646 = vst [vmem:[%s152 + $0x3d8] sm:$0xf] %v645
                %v647 = vld [vmem:[%s151 + $0x6dc] sm:$0xf]
                %648 = vst [vmem:[%s152 + $0x3dc] sm:$0xf] %v647
                %v649 = vld [vmem:[%s151 + $0x6e0] sm:$0xf]
                %650 = vst [vmem:[%s152 + $0x3e0] sm:$0xf] %v649
                %v651 = vld [vmem:[%s151 + $0x6e4] sm:$0xf]
                %652 = vst [vmem:[%s152 + $0x3e4] sm:$0xf] %v651
                %v653 = vld [vmem:[%s151 + $0x6e8] sm:$0xf]
                %654 = vst [vmem:[%s152 + $0x3e8] sm:$0xf] %v653
                %v655 = vld [vmem:[%s151 + $0x6ec] sm:$0xf]
                %656 = vst [vmem:[%s152 + $0x3ec] sm:$0xf] %v655
                %v657 = vld [vmem:[%s151 + $0x6f0] sm:$0xf]
                %658 = vst [vmem:[%s152 + $0x3f0] sm:$0xf] %v657
                %v659 = vld [vmem:[%s151 + $0x6f4] sm:$0xf]
                %660 = vst [vmem:[%s152 + $0x3f4] sm:$0xf] %v659
                %v661 = vld [vmem:[%s151 + $0x6f8] sm:$0xf]
                %662 = vst [vmem:[%s152 + $0x3f8] sm:$0xf] %v661
                %v663 = vld [vmem:[%s151 + $0x6fc] sm:$0xf]
                %664 = vst [vmem:[%s152 + $0x3fc] sm:$0xf] %v663
              $region45: #{cnn_cifar_global_forward.3} parent=39 // loop_footer
                %s150 = sadd.s32 1, %s146
              $region46: #{cnn_cifar_global_forward.3} parent=39 // loop_footer_branch
                %145 = sbr.rel target = $region42
              $region47: #{cnn_cifar_global_forward.3} parent=39 // loop_exit
                _
            $region40: #{cnn_cifar_global_forward.3} parent=31 // pred_fallthru
              _
          $region32: #{cnn_cifar_global_forward.3} parent=27 // pred_fallthru
            _
          %1196 = vnop
        $region28: #{cnn_cifar_global_forward.3} parent=23 // pred_fallthru
          _
      $region24: #{cnn_cifar_global_forward.3} parent=5 // pred_fallthru
        _
      %p1197 = scmp.le.s32.totalorder 1, %s9
      %p1198 = scmp.lt.s32.totalorder %s9, 3
      %p1199 = pnand %p1197, %p1198
      %p1200 = pneg %p1199
      // Predicated region
      $region66: #{cnn_cifar_global_forward.3} parent=5 // pred_check
        _
      $region67: #{cnn_cifar_global_forward.3} parent=5 // pred_check_branch
        %1202 = sbr.rel (%p1199) target = $region69
      $region68: #{cnn_cifar_global_forward.3} parent=5 // pred_region
        %s1203 = ssub.s32 %s9, 1
        %s1204 = sand.u32 %s22, 1
        %s1205 = sand.u32 %s22, 1
        %s1206 = smul.addr %s1205, 1024
        %s1207 = scalar_lea.vmem [#allocation2], %s1206
        // Predicated region
        $region70: #{cnn_cifar_global_forward.3} parent=68 // pred_check
          %p1208 = pneg %p35
        $region71: #{cnn_cifar_global_forward.3} parent=68 // pred_check_branch
          %1210 = sbr.rel (%p1208) target = $region73
        $region72: #{cnn_cifar_global_forward.3} parent=68 // pred_region
          _
        $region73: #{cnn_cifar_global_forward.3} parent=68 // pred_fallthru
          _
        %s1211 = sand.u32 %s22, 1
        %s1212 = sand.u32 %s22, 1
        %s1213 = smul.addr %s1212, 1024
        %s1214 = scalar_lea.vmem [#allocation2], %s1213
        %p1215 = pneg %p35
        %p1216 = pneg %p32
        %p1217 = pneg %p56
        %p1218 = pneg %p53
        %p1219 = pneg %p77
        %p1220 = pneg %p74
        %p1221 = pneg %p103
        %p1222 = pneg %p100
        %s1223 = smul.u32 64, %s14
        %p1224 = scmp.lt.s32.totalorder %s1223, 127
        %s1225 = scalar_select %p1224, %s1223, 127
        %s1226 = smul.addr %s1225, 4
        %s1227 = scalar_lea.vmem %s3, %s1226
        %s1228 = smul.u32 64, %s14
        %s1229 = smul.u32 64, %s14
        %p1230 = scmp.lt.s32.totalorder %s1229, 127
        %s1231 = scalar_select %p1230, %s1229, 127
        %s1232 = smul.addr %s1231, 4
        %s1233 = scalar_lea.vmem %s3, %s1232
        %s1234 = smul.u32 64, %s14
        %v1236 = vld [vmem:[%s1] sm:$0xf]
        %v1237 = vld [vmem:[%s1 + $0x4] sm:$0xf]
        %v1238 = vld [vmem:[%s1 + $0x8] sm:$0xf]
        %v1239 = vld [vmem:[%s1 + $0xc] sm:$0xf]
        %v1240 = vld [vmem:[%s1 + $0x10] sm:$0xf]
        %v1241 = vld [vmem:[%s1 + $0x14] sm:$0xf]
        %v1242 = vld [vmem:[%s1 + $0x18] sm:$0xf]
        %v1243 = vld [vmem:[%s1 + $0x1c] sm:$0xf]
        %v1244 = vld [vmem:[%s1 + $0x20] sm:$0xf]
        %v1245 = vld [vmem:[%s1 + $0x24] sm:$0xf]
        %v1246 = vld [vmem:[%s1 + $0x28] sm:$0xf]
        %v1247 = vld [vmem:[%s1 + $0x2c] sm:$0xf]
        %v1248 = vld [vmem:[%s1 + $0x30] sm:$0xf]
        %v1249 = vld [vmem:[%s1 + $0x34] sm:$0xf]
        %v1250 = vld [vmem:[%s1 + $0x38] sm:$0xf]
        %v1251 = vld [vmem:[%s1 + $0x3c] sm:$0xf]
        %v1252 = vld [vmem:[%s1207] sm:$0xf]
        %v1253 = vld [vmem:[%s1207 + $0x4] sm:$0xf]
        %v1254 = vld [vmem:[%s1207 + $0x8] sm:$0xf]
        %v1255 = vld [vmem:[%s1207 + $0xc] sm:$0xf]
        %v1256 = vld [vmem:[%s1207 + $0x10] sm:$0xf]
        %v1257 = vld [vmem:[%s1207 + $0x14] sm:$0xf]
        %v1258 = vld [vmem:[%s1207 + $0x18] sm:$0xf]
        %v1259 = vld [vmem:[%s1207 + $0x1c] sm:$0xf]
        %v1260 = vld [vmem:[%s1207 + $0x20] sm:$0xf]
        %v1261 = vld [vmem:[%s1207 + $0x24] sm:$0xf]
        %v1262 = vld [vmem:[%s1207 + $0x28] sm:$0xf]
        %v1263 = vld [vmem:[%s1207 + $0x2c] sm:$0xf]
        %v1264 = vld [vmem:[%s1207 + $0x30] sm:$0xf]
        %v1265 = vld [vmem:[%s1207 + $0x34] sm:$0xf]
        %v1266 = vld [vmem:[%s1207 + $0x38] sm:$0xf]
        %v1267 = vld [vmem:[%s1207 + $0x3c] sm:$0xf]
        %v1268 = vld [vmem:[%s1207 + $0x40] sm:$0xf]
        %v1269 = vld [vmem:[%s1207 + $0x44] sm:$0xf]
        %v1270 = vld [vmem:[%s1207 + $0x48] sm:$0xf]
        %v1271 = vld [vmem:[%s1207 + $0x4c] sm:$0xf]
        %v1272 = vld [vmem:[%s1207 + $0x50] sm:$0xf]
        %v1273 = vld [vmem:[%s1207 + $0x54] sm:$0xf]
        %v1274 = vld [vmem:[%s1207 + $0x58] sm:$0xf]
        %v1275 = vld [vmem:[%s1207 + $0x5c] sm:$0xf]
        %v1276 = vld [vmem:[%s1207 + $0x60] sm:$0xf]
        %v1277 = vld [vmem:[%s1207 + $0x64] sm:$0xf]
        %v1278 = vld [vmem:[%s1207 + $0x68] sm:$0xf]
        %v1279 = vld [vmem:[%s1207 + $0x6c] sm:$0xf]
        %v1280 = vld [vmem:[%s1207 + $0x70] sm:$0xf]
        %v1281 = vld [vmem:[%s1207 + $0x74] sm:$0xf]
        %v1282 = vld [vmem:[%s1207 + $0x78] sm:$0xf]
        %v1283 = vld [vmem:[%s1207 + $0x7c] sm:$0xf]
        %v1284 = vld [vmem:[%s1207 + $0x80] sm:$0xf]
        %v1285 = vld [vmem:[%s1207 + $0x84] sm:$0xf]
        %v1286 = vld [vmem:[%s1207 + $0x88] sm:$0xf]
        %v1287 = vld [vmem:[%s1207 + $0x8c] sm:$0xf]
        %v1288 = vld [vmem:[%s1207 + $0x90] sm:$0xf]
        %v1289 = vld [vmem:[%s1207 + $0x94] sm:$0xf]
        %v1290 = vld [vmem:[%s1207 + $0x98] sm:$0xf]
        %v1291 = vld [vmem:[%s1207 + $0x9c] sm:$0xf]
        %v1292 = vld [vmem:[%s1207 + $0xa0] sm:$0xf]
        %v1293 = vld [vmem:[%s1207 + $0xa4] sm:$0xf]
        %v1294 = vld [vmem:[%s1207 + $0xa8] sm:$0xf]
        %v1295 = vld [vmem:[%s1207 + $0xac] sm:$0xf]
        %v1296 = vld [vmem:[%s1207 + $0xb0] sm:$0xf]
        %v1297 = vld [vmem:[%s1207 + $0xb4] sm:$0xf]
        %v1298 = vld [vmem:[%s1207 + $0xb8] sm:$0xf]
        %v1299 = vld [vmem:[%s1207 + $0xbc] sm:$0xf]
        %v1300 = vld [vmem:[%s1207 + $0xc0] sm:$0xf]
        %v1301 = vld [vmem:[%s1207 + $0xc4] sm:$0xf]
        %v1302 = vld [vmem:[%s1207 + $0xc8] sm:$0xf]
        %v1303 = vld [vmem:[%s1207 + $0xcc] sm:$0xf]
        %v1304 = vld [vmem:[%s1207 + $0xd0] sm:$0xf]
        %v1305 = vld [vmem:[%s1207 + $0xd4] sm:$0xf]
        %v1306 = vld [vmem:[%s1207 + $0xd8] sm:$0xf]
        %v1307 = vld [vmem:[%s1207 + $0xdc] sm:$0xf]
        %v1308 = vld [vmem:[%s1207 + $0xe0] sm:$0xf]
        %v1309 = vld [vmem:[%s1207 + $0xe4] sm:$0xf]
        %v1310 = vld [vmem:[%s1207 + $0xe8] sm:$0xf]
        %v1311 = vld [vmem:[%s1207 + $0xec] sm:$0xf]
        %v1312 = vld [vmem:[%s1207 + $0xf0] sm:$0xf]
        %v1313 = vld [vmem:[%s1207 + $0xf4] sm:$0xf]
        %v1314 = vld [vmem:[%s1207 + $0xf8] sm:$0xf]
        %v1315 = vld [vmem:[%s1207 + $0xfc] sm:$0xf]
        %v1380 = vunpack.c.l.b16 %v1252
        %v1381 = vunpack.c.l.b16 %v1253
        %v1382 = vunpack.c.l.b16 %v1254
        %v1383 = vunpack.c.l.b16 %v1255
        %v1384 = vunpack.c.l.b16 %v1256
        %v1385 = vunpack.c.l.b16 %v1257
        %v1386 = vunpack.c.l.b16 %v1258
        %v1387 = vunpack.c.l.b16 %v1259
        %v1388 = vunpack.c.l.b16 %v1260
        %v1389 = vunpack.c.l.b16 %v1261
        %v1390 = vunpack.c.l.b16 %v1262
        %v1391 = vunpack.c.l.b16 %v1263
        %v1392 = vunpack.c.l.b16 %v1264
        %v1393 = vunpack.c.l.b16 %v1265
        %v1394 = vunpack.c.l.b16 %v1266
        %v1395 = vunpack.c.l.b16 %v1267
        %v1396 = vunpack.c.l.b16 %v1268
        %v1397 = vunpack.c.l.b16 %v1269
        %v1398 = vunpack.c.l.b16 %v1270
        %v1399 = vunpack.c.l.b16 %v1271
        %v1400 = vunpack.c.l.b16 %v1272
        %v1401 = vunpack.c.l.b16 %v1273
        %v1402 = vunpack.c.l.b16 %v1274
        %v1403 = vunpack.c.l.b16 %v1275
        %v1404 = vunpack.c.l.b16 %v1276
        %v1405 = vunpack.c.l.b16 %v1277
        %v1406 = vunpack.c.l.b16 %v1278
        %v1407 = vunpack.c.l.b16 %v1279
        %v1408 = vunpack.c.l.b16 %v1280
        %v1409 = vunpack.c.l.b16 %v1281
        %v1410 = vunpack.c.l.b16 %v1282
        %v1411 = vunpack.c.l.b16 %v1283
        %v1412 = vunpack.c.l.b16 %v1284
        %v1413 = vunpack.c.l.b16 %v1285
        %v1414 = vunpack.c.l.b16 %v1286
        %v1415 = vunpack.c.l.b16 %v1287
        %v1416 = vunpack.c.l.b16 %v1288
        %v1417 = vunpack.c.l.b16 %v1289
        %v1418 = vunpack.c.l.b16 %v1290
        %v1419 = vunpack.c.l.b16 %v1291
        %v1420 = vunpack.c.l.b16 %v1292
        %v1421 = vunpack.c.l.b16 %v1293
        %v1422 = vunpack.c.l.b16 %v1294
        %v1423 = vunpack.c.l.b16 %v1295
        %v1424 = vunpack.c.l.b16 %v1296
        %v1425 = vunpack.c.l.b16 %v1297
        %v1426 = vunpack.c.l.b16 %v1298
        %v1427 = vunpack.c.l.b16 %v1299
        %v1428 = vunpack.c.l.b16 %v1300
        %v1429 = vunpack.c.l.b16 %v1301
        %v1430 = vunpack.c.l.b16 %v1302
        %v1431 = vunpack.c.l.b16 %v1303
        %v1432 = vunpack.c.l.b16 %v1304
        %v1433 = vunpack.c.l.b16 %v1305
        %v1434 = vunpack.c.l.b16 %v1306
        %v1435 = vunpack.c.l.b16 %v1307
        %v1436 = vunpack.c.l.b16 %v1308
        %v1437 = vunpack.c.l.b16 %v1309
        %v1438 = vunpack.c.l.b16 %v1310
        %v1439 = vunpack.c.l.b16 %v1311
        %v1440 = vunpack.c.l.b16 %v1312
        %v1441 = vunpack.c.l.b16 %v1313
        %v1442 = vunpack.c.l.b16 %v1314
        %v1443 = vunpack.c.l.b16 %v1315
        %v1444 = vpack.c.b16 %v1381, %v1380
        %v1445 = vpack.c.b16 %v1383, %v1382
        %v1446 = vpack.c.b16 %v1385, %v1384
        %v1447 = vpack.c.b16 %v1387, %v1386
        %v1448 = vpack.c.b16 %v1389, %v1388
        %v1449 = vpack.c.b16 %v1391, %v1390
        %v1450 = vpack.c.b16 %v1393, %v1392
        %v1451 = vpack.c.b16 %v1395, %v1394
        %v1452 = vpack.c.b16 %v1397, %v1396
        %v1453 = vpack.c.b16 %v1399, %v1398
        %v1454 = vpack.c.b16 %v1401, %v1400
        %v1455 = vpack.c.b16 %v1403, %v1402
        %v1456 = vpack.c.b16 %v1405, %v1404
        %v1457 = vpack.c.b16 %v1407, %v1406
        %v1458 = vpack.c.b16 %v1409, %v1408
        %v1459 = vpack.c.b16 %v1411, %v1410
        %v1460 = vpack.c.b16 %v1413, %v1412
        %v1461 = vpack.c.b16 %v1415, %v1414
        %v1462 = vpack.c.b16 %v1417, %v1416
        %v1463 = vpack.c.b16 %v1419, %v1418
        %v1464 = vpack.c.b16 %v1421, %v1420
        %v1465 = vpack.c.b16 %v1423, %v1422
        %v1466 = vpack.c.b16 %v1425, %v1424
        %v1467 = vpack.c.b16 %v1427, %v1426
        %v1468 = vpack.c.b16 %v1429, %v1428
        %v1469 = vpack.c.b16 %v1431, %v1430
        %v1470 = vpack.c.b16 %v1433, %v1432
        %v1471 = vpack.c.b16 %v1435, %v1434
        %v1472 = vpack.c.b16 %v1437, %v1436
        %v1473 = vpack.c.b16 %v1439, %v1438
        %v1474 = vpack.c.b16 %v1441, %v1440
        %v1475 = vpack.c.b16 %v1443, %v1442
        %v1524 = vunpack.c.l.b16 %v1236
        %v1525 = vunpack.c.l.b16 %v1237
        %v1526 = vunpack.c.l.b16 %v1238
        %v1527 = vunpack.c.l.b16 %v1239
        %v1528 = vunpack.c.l.b16 %v1240
        %v1529 = vunpack.c.l.b16 %v1241
        %v1530 = vunpack.c.l.b16 %v1242
        %v1531 = vunpack.c.l.b16 %v1243
        %v1532 = vunpack.c.l.b16 %v1244
        %v1533 = vunpack.c.l.b16 %v1245
        %v1534 = vunpack.c.l.b16 %v1246
        %v1535 = vunpack.c.l.b16 %v1247
        %v1536 = vunpack.c.l.b16 %v1248
        %v1537 = vunpack.c.l.b16 %v1249
        %v1538 = vunpack.c.l.b16 %v1250
        %v1539 = vunpack.c.l.b16 %v1251
        %v1540 = vpack.c.b16 %v1525, %v1524
        %v1541 = vpack.c.b16 %v1527, %v1526
        %v1542 = vpack.c.b16 %v1529, %v1528
        %v1543 = vpack.c.b16 %v1531, %v1530
        %v1544 = vpack.c.b16 %v1533, %v1532
        %v1545 = vpack.c.b16 %v1535, %v1534
        %v1546 = vpack.c.b16 %v1537, %v1536
        %v1547 = vpack.c.b16 %v1539, %v1538
        %1556 = vmatprep.subr.bf16.mxu0 0
        %1557 = vmatpush1.bf16.msra.mxu0 %v1540
        %1558 = vmatprep.subr.bf16.mxu0 0
        %1559 = vmatpush1.bf16.msra.mxu0 %v1541
        %1560 = vmatprep.subr.bf16.mxu0 0
        %1561 = vmatpush1.bf16.msra.mxu0 %v1542
        %1562 = vmatprep.subr.bf16.mxu0 0
        %1563 = vmatpush1.bf16.msra.mxu0 %v1543
        %1564 = vmatprep.subr.bf16.mxu0 0
        %1565 = vmatpush1.bf16.msra.mxu0 %v1544
        %1566 = vmatprep.subr.bf16.mxu0 0
        %1567 = vmatpush1.bf16.msra.mxu0 %v1545
        %1568 = vmatprep.subr.bf16.mxu0 0
        %1569 = vmatpush1.bf16.msra.mxu0 %v1546
        %1570 = vmatprep.subr.bf16.mxu0 0
        %1571 = vmatpush1.bf16.msra.mxu0 %v1547
        %1572 = vmatprep.subr.bf16.mxu0 0
        %1573 = vmatpush1.bf16.msra.mxu0 0
        %1574 = vmatprep.subr.bf16.mxu0 0
        %1575 = vmatpush1.bf16.msra.mxu0 0
        %1576 = vmatprep.subr.bf16.mxu0 0
        %1577 = vmatpush1.bf16.msra.mxu0 0
        %1578 = vmatprep.subr.bf16.mxu0 0
        %1579 = vmatpush1.bf16.msra.mxu0 0
        %1580 = vmatprep.subr.bf16.mxu0 0
        %1581 = vmatpush1.bf16.msra.mxu0 0
        %1582 = vmatprep.subr.bf16.mxu0 0
        %1583 = vmatpush1.bf16.msra.mxu0 0
        %1584 = vmatprep.subr.bf16.mxu0 0
        %1585 = vmatpush1.bf16.msra.mxu0 0
        %1586 = vmatprep.subr.bf16.mxu0 0
        %1587 = vmatpush1.bf16.msra.mxu0 0
        %1588 = vmatprep.mubr.bf16.mxu0 0
        %1589 = vmatmul.mubr.bf16.gmra.mrb[0].mxu0 %v1444
        %v1590 = vpop.f32.mrb[0].mxu0
        %v1591 = vadd.f32 0.0, %v1590
        %v1592 = vpop.f32.mrb[0].mxu0
        %v1593 = vpop.f32.mrb[0].mxu0
        %v1594 = vadd.f32 0.0, %v1593
        %v1595 = vpop.f32.mrb[0].mxu0
        %1596 = vmatprep.mubr.bf16.mxu0 0
        %1597 = vmatmul.mubr.bf16.gmra.mrb[0].mxu0 %v1445
        %v1598 = vpop.f32.mrb[0].mxu0
        %v1599 = vadd.f32 0.0, %v1598
        %v1600 = vpop.f32.mrb[0].mxu0
        %v1601 = vpop.f32.mrb[0].mxu0
        %v1602 = vadd.f32 0.0, %v1601
        %v1603 = vpop.f32.mrb[0].mxu0
        %1604 = vmatprep.mubr.bf16.mxu0 0
        %1605 = vmatmul.mubr.bf16.gmra.mrb[0].mxu0 %v1446
        %v1606 = vpop.f32.mrb[0].mxu0
        %v1607 = vadd.f32 0.0, %v1606
        %v1608 = vpop.f32.mrb[0].mxu0
        %v1609 = vpop.f32.mrb[0].mxu0
        %v1610 = vadd.f32 0.0, %v1609
        %v1611 = vpop.f32.mrb[0].mxu0
        %1612 = vmatprep.mubr.bf16.mxu0 0
        %1613 = vmatmul.mubr.bf16.gmra.mrb[0].mxu0 %v1447
        %v1614 = vpop.f32.mrb[0].mxu0
        %v1615 = vadd.f32 0.0, %v1614
        %v1616 = vpop.f32.mrb[0].mxu0
        %v1617 = vpop.f32.mrb[0].mxu0
        %v1618 = vadd.f32 0.0, %v1617
        %v1619 = vpop.f32.mrb[0].mxu0
        %1620 = vmatprep.mubr.bf16.mxu0 0
        %1621 = vmatmul.mubr.bf16.gmra.mrb[0].mxu0 %v1448
        %v1622 = vpop.f32.mrb[0].mxu0
        %v1623 = vadd.f32 0.0, %v1622
        %v1624 = vpop.f32.mrb[0].mxu0
        %v1625 = vpop.f32.mrb[0].mxu0
        %v1626 = vadd.f32 0.0, %v1625
        %v1627 = vpop.f32.mrb[0].mxu0
        %1628 = vmatprep.mubr.bf16.mxu0 0
        %1629 = vmatmul.mubr.bf16.gmra.mrb[0].mxu0 %v1449
        %v1630 = vpop.f32.mrb[0].mxu0
        %v1631 = vadd.f32 0.0, %v1630
        %v1632 = vpop.f32.mrb[0].mxu0
        %v1633 = vpop.f32.mrb[0].mxu0
        %v1634 = vadd.f32 0.0, %v1633
        %v1635 = vpop.f32.mrb[0].mxu0
        %1636 = vmatprep.mubr.bf16.mxu0 0
        %1637 = vmatmul.mubr.bf16.gmra.mrb[0].mxu0 %v1450
        %v1638 = vpop.f32.mrb[0].mxu0
        %v1639 = vadd.f32 0.0, %v1638
        %v1640 = vpop.f32.mrb[0].mxu0
        %v1641 = vpop.f32.mrb[0].mxu0
        %v1642 = vadd.f32 0.0, %v1641
        %v1643 = vpop.f32.mrb[0].mxu0
        %1644 = vmatprep.mubr.bf16.mxu0 0
        %1645 = vmatmul.mubr.bf16.gmra.mrb[0].mxu0 %v1451
        %v1646 = vpop.f32.mrb[0].mxu0
        %v1647 = vadd.f32 0.0, %v1646
        %v1648 = vpop.f32.mrb[0].mxu0
        %v1649 = vpop.f32.mrb[0].mxu0
        %v1650 = vadd.f32 0.0, %v1649
        %v1651 = vpop.f32.mrb[0].mxu0
        %1652 = vmatprep.mubr.bf16.mxu0 0
        %1653 = vmatmul.mubr.bf16.gmra.mrb[0].mxu0 %v1452
        %v1654 = vpop.f32.mrb[0].mxu0
        %v1655 = vadd.f32 0.0, %v1654
        %v1656 = vpop.f32.mrb[0].mxu0
        %v1657 = vpop.f32.mrb[0].mxu0
        %v1658 = vadd.f32 0.0, %v1657
        %v1659 = vpop.f32.mrb[0].mxu0
        %1660 = vmatprep.mubr.bf16.mxu0 0
        %1661 = vmatmul.mubr.bf16.gmra.mrb[0].mxu0 %v1453
        %v1662 = vpop.f32.mrb[0].mxu0
        %v1663 = vadd.f32 0.0, %v1662
        %v1664 = vpop.f32.mrb[0].mxu0
        %v1665 = vpop.f32.mrb[0].mxu0
        %v1666 = vadd.f32 0.0, %v1665
        %v1667 = vpop.f32.mrb[0].mxu0
        %1668 = vmatprep.mubr.bf16.mxu0 0
        %1669 = vmatmul.mubr.bf16.gmra.mrb[0].mxu0 %v1454
        %v1670 = vpop.f32.mrb[0].mxu0
        %v1671 = vadd.f32 0.0, %v1670
        %v1672 = vpop.f32.mrb[0].mxu0
        %v1673 = vpop.f32.mrb[0].mxu0
        %v1674 = vadd.f32 0.0, %v1673
        %v1675 = vpop.f32.mrb[0].mxu0
        %1676 = vmatprep.mubr.bf16.mxu0 0
        %1677 = vmatmul.mubr.bf16.gmra.mrb[0].mxu0 %v1455
        %v1678 = vpop.f32.mrb[0].mxu0
        %v1679 = vadd.f32 0.0, %v1678
        %v1680 = vpop.f32.mrb[0].mxu0
        %v1681 = vpop.f32.mrb[0].mxu0
        %v1682 = vadd.f32 0.0, %v1681
        %v1683 = vpop.f32.mrb[0].mxu0
        %1684 = vmatprep.mubr.bf16.mxu0 0
        %1685 = vmatmul.mubr.bf16.gmra.mrb[0].mxu0 %v1456
        %v1686 = vpop.f32.mrb[0].mxu0
        %v1687 = vadd.f32 0.0, %v1686
        %v1688 = vpop.f32.mrb[0].mxu0
        %v1689 = vpop.f32.mrb[0].mxu0
        %v1690 = vadd.f32 0.0, %v1689
        %v1691 = vpop.f32.mrb[0].mxu0
        %1692 = vmatprep.mubr.bf16.mxu0 0
        %1693 = vmatmul.mubr.bf16.gmra.mrb[0].mxu0 %v1457
        %v1694 = vpop.f32.mrb[0].mxu0
        %v1695 = vadd.f32 0.0, %v1694
        %v1696 = vpop.f32.mrb[0].mxu0
        %v1697 = vpop.f32.mrb[0].mxu0
        %v1698 = vadd.f32 0.0, %v1697
        %v1699 = vpop.f32.mrb[0].mxu0
        %1700 = vmatprep.mubr.bf16.mxu0 0
        %1701 = vmatmul.mubr.bf16.gmra.mrb[0].mxu0 %v1458
        %v1702 = vpop.f32.mrb[0].mxu0
        %v1703 = vadd.f32 0.0, %v1702
        %v1704 = vpop.f32.mrb[0].mxu0
        %v1705 = vpop.f32.mrb[0].mxu0
        %v1706 = vadd.f32 0.0, %v1705
        %v1707 = vpop.f32.mrb[0].mxu0
        %1708 = vmatprep.mubr.bf16.mxu0 0
        %1709 = vmatmul.mubr.bf16.gmra.mrb[0].mxu0 %v1459
        %v1710 = vpop.f32.mrb[0].mxu0
        %v1711 = vadd.f32 0.0, %v1710
        %v1712 = vpop.f32.mrb[0].mxu0
        %v1713 = vpop.f32.mrb[0].mxu0
        %v1714 = vadd.f32 0.0, %v1713
        %v1715 = vpop.f32.mrb[0].mxu0
        %1716 = vmatprep.mubr.bf16.mxu0 0
        %1717 = vmatmul.mubr.bf16.gmra.mrb[0].mxu0 %v1460
        %v1718 = vpop.f32.mrb[0].mxu0
        %v1719 = vadd.f32 0.0, %v1718
        %v1720 = vpop.f32.mrb[0].mxu0
        %v1721 = vpop.f32.mrb[0].mxu0
        %v1722 = vadd.f32 0.0, %v1721
        %v1723 = vpop.f32.mrb[0].mxu0
        %1724 = vmatprep.mubr.bf16.mxu0 0
        %1725 = vmatmul.mubr.bf16.gmra.mrb[0].mxu0 %v1461
        %v1726 = vpop.f32.mrb[0].mxu0
        %v1727 = vadd.f32 0.0, %v1726
        %v1728 = vpop.f32.mrb[0].mxu0
        %v1729 = vpop.f32.mrb[0].mxu0
        %v1730 = vadd.f32 0.0, %v1729
        %v1731 = vpop.f32.mrb[0].mxu0
        %1732 = vmatprep.mubr.bf16.mxu0 0
        %1733 = vmatmul.mubr.bf16.gmra.mrb[0].mxu0 %v1462
        %v1734 = vpop.f32.mrb[0].mxu0
        %v1735 = vadd.f32 0.0, %v1734
        %v1736 = vpop.f32.mrb[0].mxu0
        %v1737 = vpop.f32.mrb[0].mxu0
        %v1738 = vadd.f32 0.0, %v1737
        %v1739 = vpop.f32.mrb[0].mxu0
        %1740 = vmatprep.mubr.bf16.mxu0 0
        %1741 = vmatmul.mubr.bf16.gmra.mrb[0].mxu0 %v1463
        %v1742 = vpop.f32.mrb[0].mxu0
        %v1743 = vadd.f32 0.0, %v1742
        %v1744 = vpop.f32.mrb[0].mxu0
        %v1745 = vpop.f32.mrb[0].mxu0
        %v1746 = vadd.f32 0.0, %v1745
        %v1747 = vpop.f32.mrb[0].mxu0
        %1748 = vmatprep.mubr.bf16.mxu0 0
        %1749 = vmatmul.mubr.bf16.gmra.mrb[0].mxu0 %v1464
        %v1750 = vpop.f32.mrb[0].mxu0
        %v1751 = vadd.f32 0.0, %v1750
        %v1752 = vpop.f32.mrb[0].mxu0
        %v1753 = vpop.f32.mrb[0].mxu0
        %v1754 = vadd.f32 0.0, %v1753
        %v1755 = vpop.f32.mrb[0].mxu0
        %1756 = vmatprep.mubr.bf16.mxu0 0
        %1757 = vmatmul.mubr.bf16.gmra.mrb[0].mxu0 %v1465
        %v1758 = vpop.f32.mrb[0].mxu0
        %v1759 = vadd.f32 0.0, %v1758
        %v1760 = vpop.f32.mrb[0].mxu0
        %v1761 = vpop.f32.mrb[0].mxu0
        %v1762 = vadd.f32 0.0, %v1761
        %v1763 = vpop.f32.mrb[0].mxu0
        %1764 = vmatprep.mubr.bf16.mxu0 0
        %1765 = vmatmul.mubr.bf16.gmra.mrb[0].mxu0 %v1466
        %v1766 = vpop.f32.mrb[0].mxu0
        %v1767 = vadd.f32 0.0, %v1766
        %v1768 = vpop.f32.mrb[0].mxu0
        %v1769 = vpop.f32.mrb[0].mxu0
        %v1770 = vadd.f32 0.0, %v1769
        %v1771 = vpop.f32.mrb[0].mxu0
        %1772 = vmatprep.mubr.bf16.mxu0 0
        %1773 = vmatmul.mubr.bf16.gmra.mrb[0].mxu0 %v1467
        %v1774 = vpop.f32.mrb[0].mxu0
        %v1775 = vadd.f32 0.0, %v1774
        %v1776 = vpop.f32.mrb[0].mxu0
        %v1777 = vpop.f32.mrb[0].mxu0
        %v1778 = vadd.f32 0.0, %v1777
        %v1779 = vpop.f32.mrb[0].mxu0
        %1780 = vmatprep.mubr.bf16.mxu0 0
        %1781 = vmatmul.mubr.bf16.gmra.mrb[0].mxu0 %v1468
        %v1782 = vpop.f32.mrb[0].mxu0
        %v1783 = vadd.f32 0.0, %v1782
        %v1784 = vpop.f32.mrb[0].mxu0
        %v1785 = vpop.f32.mrb[0].mxu0
        %v1786 = vadd.f32 0.0, %v1785
        %v1787 = vpop.f32.mrb[0].mxu0
        %1788 = vmatprep.mubr.bf16.mxu0 0
        %1789 = vmatmul.mubr.bf16.gmra.mrb[0].mxu0 %v1469
        %v1790 = vpop.f32.mrb[0].mxu0
        %v1791 = vadd.f32 0.0, %v1790
        %v1792 = vpop.f32.mrb[0].mxu0
        %v1793 = vpop.f32.mrb[0].mxu0
        %v1794 = vadd.f32 0.0, %v1793
        %v1795 = vpop.f32.mrb[0].mxu0
        %1796 = vmatprep.mubr.bf16.mxu0 0
        %1797 = vmatmul.mubr.bf16.gmra.mrb[0].mxu0 %v1470
        %v1798 = vpop.f32.mrb[0].mxu0
        %v1799 = vadd.f32 0.0, %v1798
        %v1800 = vpop.f32.mrb[0].mxu0
        %v1801 = vpop.f32.mrb[0].mxu0
        %v1802 = vadd.f32 0.0, %v1801
        %v1803 = vpop.f32.mrb[0].mxu0
        %1804 = vmatprep.mubr.bf16.mxu0 0
        %1805 = vmatmul.mubr.bf16.gmra.mrb[0].mxu0 %v1471
        %v1806 = vpop.f32.mrb[0].mxu0
        %v1807 = vadd.f32 0.0, %v1806
        %v1808 = vpop.f32.mrb[0].mxu0
        %v1809 = vpop.f32.mrb[0].mxu0
        %v1810 = vadd.f32 0.0, %v1809
        %v1811 = vpop.f32.mrb[0].mxu0
        %1812 = vmatprep.mubr.bf16.mxu0 0
        %1813 = vmatmul.mubr.bf16.gmra.mrb[0].mxu0 %v1472
        %v1814 = vpop.f32.mrb[0].mxu0
        %v1815 = vadd.f32 0.0, %v1814
        %v1816 = vpop.f32.mrb[0].mxu0
        %v1817 = vpop.f32.mrb[0].mxu0
        %v1818 = vadd.f32 0.0, %v1817
        %v1819 = vpop.f32.mrb[0].mxu0
        %1820 = vmatprep.mubr.bf16.mxu0 0
        %1821 = vmatmul.mubr.bf16.gmra.mrb[0].mxu0 %v1473
        %v1822 = vpop.f32.mrb[0].mxu0
        %v1823 = vadd.f32 0.0, %v1822
        %v1824 = vpop.f32.mrb[0].mxu0
        %v1825 = vpop.f32.mrb[0].mxu0
        %v1826 = vadd.f32 0.0, %v1825
        %v1827 = vpop.f32.mrb[0].mxu0
        %1828 = vmatprep.mubr.bf16.mxu0 0
        %1829 = vmatmul.mubr.bf16.gmra.mrb[0].mxu0 %v1474
        %v1830 = vpop.f32.mrb[0].mxu0
        %v1831 = vadd.f32 0.0, %v1830
        %v1832 = vpop.f32.mrb[0].mxu0
        %v1833 = vpop.f32.mrb[0].mxu0
        %v1834 = vadd.f32 0.0, %v1833
        %v1835 = vpop.f32.mrb[0].mxu0
        %1836 = vmatprep.mubr.bf16.mxu0 0
        %1837 = vmatmul.mubr.bf16.gmra.mrb[0].mxu0 %v1475
        %v1838 = vpop.f32.mrb[0].mxu0
        %v1839 = vadd.f32 0.0, %v1838
        %v1840 = vpop.f32.mrb[0].mxu0
        %v1841 = vpop.f32.mrb[0].mxu0
        %v1842 = vadd.f32 0.0, %v1841
        %v1843 = vpop.f32.mrb[0].mxu0
        %1844 = vdwg.mxu0
        %s1845 = scalar_lea.vmem %s1207, 256 [#allocation2]
        %v1846 = vld [vmem:[%s1845] sm:$0xf]
        %v1847 = vld [vmem:[%s1845 + $0x4] sm:$0xf]
        %v1848 = vld [vmem:[%s1845 + $0x8] sm:$0xf]
        %v1849 = vld [vmem:[%s1845 + $0xc] sm:$0xf]
        %v1850 = vld [vmem:[%s1845 + $0x10] sm:$0xf]
        %v1851 = vld [vmem:[%s1845 + $0x14] sm:$0xf]
        %v1852 = vld [vmem:[%s1845 + $0x18] sm:$0xf]
        %v1853 = vld [vmem:[%s1845 + $0x1c] sm:$0xf]
        %v1854 = vld [vmem:[%s1845 + $0x20] sm:$0xf]
        %v1855 = vld [vmem:[%s1845 + $0x24] sm:$0xf]
        %v1856 = vld [vmem:[%s1845 + $0x28] sm:$0xf]
        %v1857 = vld [vmem:[%s1845 + $0x2c] sm:$0xf]
        %v1858 = vld [vmem:[%s1845 + $0x30] sm:$0xf]
        %v1859 = vld [vmem:[%s1845 + $0x34] sm:$0xf]
        %v1860 = vld [vmem:[%s1845 + $0x38] sm:$0xf]
        %v1861 = vld [vmem:[%s1845 + $0x3c] sm:$0xf]
        %v1862 = vld [vmem:[%s1845 + $0x40] sm:$0xf]
        %v1863 = vld [vmem:[%s1845 + $0x44] sm:$0xf]
        %v1864 = vld [vmem:[%s1845 + $0x48] sm:$0xf]
        %v1865 = vld [vmem:[%s1845 + $0x4c] sm:$0xf]
        %v1866 = vld [vmem:[%s1845 + $0x50] sm:$0xf]
        %v1867 = vld [vmem:[%s1845 + $0x54] sm:$0xf]
        %v1868 = vld [vmem:[%s1845 + $0x58] sm:$0xf]
        %v1869 = vld [vmem:[%s1845 + $0x5c] sm:$0xf]
        %v1870 = vld [vmem:[%s1845 + $0x60] sm:$0xf]
        %v1871 = vld [vmem:[%s1845 + $0x64] sm:$0xf]
        %v1872 = vld [vmem:[%s1845 + $0x68] sm:$0xf]
        %v1873 = vld [vmem:[%s1845 + $0x6c] sm:$0xf]
        %v1874 = vld [vmem:[%s1845 + $0x70] sm:$0xf]
        %v1875 = vld [vmem:[%s1845 + $0x74] sm:$0xf]
        %v1876 = vld [vmem:[%s1845 + $0x78] sm:$0xf]
        %v1877 = vld [vmem:[%s1845 + $0x7c] sm:$0xf]
        %v1878 = vld [vmem:[%s1845 + $0x80] sm:$0xf]
        %v1879 = vld [vmem:[%s1845 + $0x84] sm:$0xf]
        %v1880 = vld [vmem:[%s1845 + $0x88] sm:$0xf]
        %v1881 = vld [vmem:[%s1845 + $0x8c] sm:$0xf]
        %v1882 = vld [vmem:[%s1845 + $0x90] sm:$0xf]
        %v1883 = vld [vmem:[%s1845 + $0x94] sm:$0xf]
        %v1884 = vld [vmem:[%s1845 + $0x98] sm:$0xf]
        %v1885 = vld [vmem:[%s1845 + $0x9c] sm:$0xf]
        %v1886 = vld [vmem:[%s1845 + $0xa0] sm:$0xf]
        %v1887 = vld [vmem:[%s1845 + $0xa4] sm:$0xf]
        %v1888 = vld [vmem:[%s1845 + $0xa8] sm:$0xf]
        %v1889 = vld [vmem:[%s1845 + $0xac] sm:$0xf]
        %v1890 = vld [vmem:[%s1845 + $0xb0] sm:$0xf]
        %v1891 = vld [vmem:[%s1845 + $0xb4] sm:$0xf]
        %v1892 = vld [vmem:[%s1845 + $0xb8] sm:$0xf]
        %v1893 = vld [vmem:[%s1845 + $0xbc] sm:$0xf]
        %v1894 = vld [vmem:[%s1845 + $0xc0] sm:$0xf]
        %v1895 = vld [vmem:[%s1845 + $0xc4] sm:$0xf]
        %v1896 = vld [vmem:[%s1845 + $0xc8] sm:$0xf]
        %v1897 = vld [vmem:[%s1845 + $0xcc] sm:$0xf]
        %v1898 = vld [vmem:[%s1845 + $0xd0] sm:$0xf]
        %v1899 = vld [vmem:[%s1845 + $0xd4] sm:$0xf]
        %v1900 = vld [vmem:[%s1845 + $0xd8] sm:$0xf]
        %v1901 = vld [vmem:[%s1845 + $0xdc] sm:$0xf]
        %v1902 = vld [vmem:[%s1845 + $0xe0] sm:$0xf]
        %v1903 = vld [vmem:[%s1845 + $0xe4] sm:$0xf]
        %v1904 = vld [vmem:[%s1845 + $0xe8] sm:$0xf]
        %v1905 = vld [vmem:[%s1845 + $0xec] sm:$0xf]
        %v1906 = vld [vmem:[%s1845 + $0xf0] sm:$0xf]
        %v1907 = vld [vmem:[%s1845 + $0xf4] sm:$0xf]
        %v1908 = vld [vmem:[%s1845 + $0xf8] sm:$0xf]
        %v1909 = vld [vmem:[%s1845 + $0xfc] sm:$0xf]
        %v1974 = vunpack.c.l.b16 %v1846
        %v1975 = vunpack.c.l.b16 %v1847
        %v1976 = vunpack.c.l.b16 %v1848
        %v1977 = vunpack.c.l.b16 %v1849
        %v1978 = vunpack.c.l.b16 %v1850
        %v1979 = vunpack.c.l.b16 %v1851
        %v1980 = vunpack.c.l.b16 %v1852
        %v1981 = vunpack.c.l.b16 %v1853
        %v1982 = vunpack.c.l.b16 %v1854
        %v1983 = vunpack.c.l.b16 %v1855
        %v1984 = vunpack.c.l.b16 %v1856
        %v1985 = vunpack.c.l.b16 %v1857
        %v1986 = vunpack.c.l.b16 %v1858
        %v1987 = vunpack.c.l.b16 %v1859
        %v1988 = vunpack.c.l.b16 %v1860
        %v1989 = vunpack.c.l.b16 %v1861
        %v1990 = vunpack.c.l.b16 %v1862
        %v1991 = vunpack.c.l.b16 %v1863
        %v1992 = vunpack.c.l.b16 %v1864
        %v1993 = vunpack.c.l.b16 %v1865
        %v1994 = vunpack.c.l.b16 %v1866
        %v1995 = vunpack.c.l.b16 %v1867
        %v1996 = vunpack.c.l.b16 %v1868
        %v1997 = vunpack.c.l.b16 %v1869
        %v1998 = vunpack.c.l.b16 %v1870
        %v1999 = vunpack.c.l.b16 %v1871
        %v2000 = vunpack.c.l.b16 %v1872
        %v2001 = vunpack.c.l.b16 %v1873
        %v2002 = vunpack.c.l.b16 %v1874
        %v2003 = vunpack.c.l.b16 %v1875
        %v2004 = vunpack.c.l.b16 %v1876
        %v2005 = vunpack.c.l.b16 %v1877
        %v2006 = vunpack.c.l.b16 %v1878
        %v2007 = vunpack.c.l.b16 %v1879
        %v2008 = vunpack.c.l.b16 %v1880
        %v2009 = vunpack.c.l.b16 %v1881
        %v2010 = vunpack.c.l.b16 %v1882
        %v2011 = vunpack.c.l.b16 %v1883
        %v2012 = vunpack.c.l.b16 %v1884
        %v2013 = vunpack.c.l.b16 %v1885
        %v2014 = vunpack.c.l.b16 %v1886
        %v2015 = vunpack.c.l.b16 %v1887
        %v2016 = vunpack.c.l.b16 %v1888
        %v2017 = vunpack.c.l.b16 %v1889
        %v2018 = vunpack.c.l.b16 %v1890
        %v2019 = vunpack.c.l.b16 %v1891
        %v2020 = vunpack.c.l.b16 %v1892
        %v2021 = vunpack.c.l.b16 %v1893
        %v2022 = vunpack.c.l.b16 %v1894
        %v2023 = vunpack.c.l.b16 %v1895
        %v2024 = vunpack.c.l.b16 %v1896
        %v2025 = vunpack.c.l.b16 %v1897
        %v2026 = vunpack.c.l.b16 %v1898
        %v2027 = vunpack.c.l.b16 %v1899
        %v2028 = vunpack.c.l.b16 %v1900
        %v2029 = vunpack.c.l.b16 %v1901
        %v2030 = vunpack.c.l.b16 %v1902
        %v2031 = vunpack.c.l.b16 %v1903
        %v2032 = vunpack.c.l.b16 %v1904
        %v2033 = vunpack.c.l.b16 %v1905
        %v2034 = vunpack.c.l.b16 %v1906
        %v2035 = vunpack.c.l.b16 %v1907
        %v2036 = vunpack.c.l.b16 %v1908
        %v2037 = vunpack.c.l.b16 %v1909
        %v2038 = vpack.c.b16 %v1975, %v1974
        %v2039 = vpack.c.b16 %v1977, %v1976
        %v2040 = vpack.c.b16 %v1979, %v1978
        %v2041 = vpack.c.b16 %v1981, %v1980
        %v2042 = vpack.c.b16 %v1983, %v1982
        %v2043 = vpack.c.b16 %v1985, %v1984
        %v2044 = vpack.c.b16 %v1987, %v1986
        %v2045 = vpack.c.b16 %v1989, %v1988
        %v2046 = vpack.c.b16 %v1991, %v1990
        %v2047 = vpack.c.b16 %v1993, %v1992
        %v2048 = vpack.c.b16 %v1995, %v1994
        %v2049 = vpack.c.b16 %v1997, %v1996
        %v2050 = vpack.c.b16 %v1999, %v1998
        %v2051 = vpack.c.b16 %v2001, %v2000
        %v2052 = vpack.c.b16 %v2003, %v2002
        %v2053 = vpack.c.b16 %v2005, %v2004
        %v2054 = vpack.c.b16 %v2007, %v2006
        %v2055 = vpack.c.b16 %v2009, %v2008
        %v2056 = vpack.c.b16 %v2011, %v2010
        %v2057 = vpack.c.b16 %v2013, %v2012
        %v2058 = vpack.c.b16 %v2015, %v2014
        %v2059 = vpack.c.b16 %v2017, %v2016
        %v2060 = vpack.c.b16 %v2019, %v2018
        %v2061 = vpack.c.b16 %v2021, %v2020
        %v2062 = vpack.c.b16 %v2023, %v2022
        %v2063 = vpack.c.b16 %v2025, %v2024
        %v2064 = vpack.c.b16 %v2027, %v2026
        %v2065 = vpack.c.b16 %v2029, %v2028
        %v2066 = vpack.c.b16 %v2031, %v2030
        %v2067 = vpack.c.b16 %v2033, %v2032
        %v2068 = vpack.c.b16 %v2035, %v2034
        %v2069 = vpack.c.b16 %v2037, %v2036
        %2102 = vmatprep.subr.bf16.mxu0 0
        %2103 = vmatpush1.bf16.msra.mxu0 %v1540
        %2104 = vmatprep.subr.bf16.mxu0 0
        %2105 = vmatpush1.bf16.msra.mxu0 %v1541
        %2106 = vmatprep.subr.bf16.mxu0 0
        %2107 = vmatpush1.bf16.msra.mxu0 %v1542
        %2108 = vmatprep.subr.bf16.mxu0 0
        %2109 = vmatpush1.bf16.msra.mxu0 %v1543
        %2110 = vmatprep.subr.bf16.mxu0 0
        %2111 = vmatpush1.bf16.msra.mxu0 %v1544
        %2112 = vmatprep.subr.bf16.mxu0 0
        %2113 = vmatpush1.bf16.msra.mxu0 %v1545
        %2114 = vmatprep.subr.bf16.mxu0 0
        %2115 = vmatpush1.bf16.msra.mxu0 %v1546
        %2116 = vmatprep.subr.bf16.mxu0 0
        %2117 = vmatpush1.bf16.msra.mxu0 %v1547
        %2118 = vmatprep.subr.bf16.mxu0 0
        %2119 = vmatpush1.bf16.msra.mxu0 0
        %2120 = vmatprep.subr.bf16.mxu0 0
        %2121 = vmatpush1.bf16.msra.mxu0 0
        %2122 = vmatprep.subr.bf16.mxu0 0
        %2123 = vmatpush1.bf16.msra.mxu0 0
        %2124 = vmatprep.subr.bf16.mxu0 0
        %2125 = vmatpush1.bf16.msra.mxu0 0
        %2126 = vmatprep.subr.bf16.mxu0 0
        %2127 = vmatpush1.bf16.msra.mxu0 0
        %2128 = vmatprep.subr.bf16.mxu0 0
        %2129 = vmatpush1.bf16.msra.mxu0 0
        %2130 = vmatprep.subr.bf16.mxu0 0
        %2131 = vmatpush1.bf16.msra.mxu0 0
        %2132 = vmatprep.subr.bf16.mxu0 0
        %2133 = vmatpush1.bf16.msra.mxu0 0
        %2134 = vmatprep.mubr.bf16.mxu0 0
        %2135 = vmatmul.mubr.bf16.gmra.mrb[0].mxu0 %v2038
        %v2136 = vpop.f32.mrb[0].mxu0
        %v2137 = vadd.f32 0.0, %v2136
        %v2138 = vpop.f32.mrb[0].mxu0
        %v2139 = vpop.f32.mrb[0].mxu0
        %v2140 = vadd.f32 0.0, %v2139
        %v2141 = vpop.f32.mrb[0].mxu0
        %2142 = vmatprep.mubr.bf16.mxu0 0
        %2143 = vmatmul.mubr.bf16.gmra.mrb[0].mxu0 %v2039
        %v2144 = vpop.f32.mrb[0].mxu0
        %v2145 = vadd.f32 0.0, %v2144
        %v2146 = vpop.f32.mrb[0].mxu0
        %v2147 = vpop.f32.mrb[0].mxu0
        %v2148 = vadd.f32 0.0, %v2147
        %v2149 = vpop.f32.mrb[0].mxu0
        %2150 = vmatprep.mubr.bf16.mxu0 0
        %2151 = vmatmul.mubr.bf16.gmra.mrb[0].mxu0 %v2040
        %v2152 = vpop.f32.mrb[0].mxu0
        %v2153 = vadd.f32 0.0, %v2152
        %v2154 = vpop.f32.mrb[0].mxu0
        %v2155 = vpop.f32.mrb[0].mxu0
        %v2156 = vadd.f32 0.0, %v2155
        %v2157 = vpop.f32.mrb[0].mxu0
        %2158 = vmatprep.mubr.bf16.mxu0 0
        %2159 = vmatmul.mubr.bf16.gmra.mrb[0].mxu0 %v2041
        %v2160 = vpop.f32.mrb[0].mxu0
        %v2161 = vadd.f32 0.0, %v2160
        %v2162 = vpop.f32.mrb[0].mxu0
        %v2163 = vpop.f32.mrb[0].mxu0
        %v2164 = vadd.f32 0.0, %v2163
        %v2165 = vpop.f32.mrb[0].mxu0
        %2166 = vmatprep.mubr.bf16.mxu0 0
        %2167 = vmatmul.mubr.bf16.gmra.mrb[0].mxu0 %v2042
        %v2168 = vpop.f32.mrb[0].mxu0
        %v2169 = vadd.f32 0.0, %v2168
        %v2170 = vpop.f32.mrb[0].mxu0
        %v2171 = vpop.f32.mrb[0].mxu0
        %v2172 = vadd.f32 0.0, %v2171
        %v2173 = vpop.f32.mrb[0].mxu0
        %2174 = vmatprep.mubr.bf16.mxu0 0
        %2175 = vmatmul.mubr.bf16.gmra.mrb[0].mxu0 %v2043
        %v2176 = vpop.f32.mrb[0].mxu0
        %v2177 = vadd.f32 0.0, %v2176
        %v2178 = vpop.f32.mrb[0].mxu0
        %v2179 = vpop.f32.mrb[0].mxu0
        %v2180 = vadd.f32 0.0, %v2179
        %v2181 = vpop.f32.mrb[0].mxu0
        %2182 = vmatprep.mubr.bf16.mxu0 0
        %2183 = vmatmul.mubr.bf16.gmra.mrb[0].mxu0 %v2044
        %v2184 = vpop.f32.mrb[0].mxu0
        %v2185 = vadd.f32 0.0, %v2184
        %v2186 = vpop.f32.mrb[0].mxu0
        %v2187 = vpop.f32.mrb[0].mxu0
        %v2188 = vadd.f32 0.0, %v2187
        %v2189 = vpop.f32.mrb[0].mxu0
        %2190 = vmatprep.mubr.bf16.mxu0 0
        %2191 = vmatmul.mubr.bf16.gmra.mrb[0].mxu0 %v2045
        %v2192 = vpop.f32.mrb[0].mxu0
        %v2193 = vadd.f32 0.0, %v2192
        %v2194 = vpop.f32.mrb[0].mxu0
        %v2195 = vpop.f32.mrb[0].mxu0
        %v2196 = vadd.f32 0.0, %v2195
        %v2197 = vpop.f32.mrb[0].mxu0
        %2198 = vmatprep.mubr.bf16.mxu0 0
        %2199 = vmatmul.mubr.bf16.gmra.mrb[0].mxu0 %v2046
        %v2200 = vpop.f32.mrb[0].mxu0
        %v2201 = vadd.f32 0.0, %v2200
        %v2202 = vpop.f32.mrb[0].mxu0
        %v2203 = vpop.f32.mrb[0].mxu0
        %v2204 = vadd.f32 0.0, %v2203
        %v2205 = vpop.f32.mrb[0].mxu0
        %2206 = vmatprep.mubr.bf16.mxu0 0
        %2207 = vmatmul.mubr.bf16.gmra.mrb[0].mxu0 %v2047
        %v2208 = vpop.f32.mrb[0].mxu0
        %v2209 = vadd.f32 0.0, %v2208
        %v2210 = vpop.f32.mrb[0].mxu0
        %v2211 = vpop.f32.mrb[0].mxu0
        %v2212 = vadd.f32 0.0, %v2211
        %v2213 = vpop.f32.mrb[0].mxu0
        %2214 = vmatprep.mubr.bf16.mxu0 0
        %2215 = vmatmul.mubr.bf16.gmra.mrb[0].mxu0 %v2048
        %v2216 = vpop.f32.mrb[0].mxu0
        %v2217 = vadd.f32 0.0, %v2216
        %v2218 = vpop.f32.mrb[0].mxu0
        %v2219 = vpop.f32.mrb[0].mxu0
        %v2220 = vadd.f32 0.0, %v2219
        %v2221 = vpop.f32.mrb[0].mxu0
        %2222 = vmatprep.mubr.bf16.mxu0 0
        %2223 = vmatmul.mubr.bf16.gmra.mrb[0].mxu0 %v2049
        %v2224 = vpop.f32.mrb[0].mxu0
        %v2225 = vadd.f32 0.0, %v2224
        %v2226 = vpop.f32.mrb[0].mxu0
        %v2227 = vpop.f32.mrb[0].mxu0
        %v2228 = vadd.f32 0.0, %v2227
        %v2229 = vpop.f32.mrb[0].mxu0
        %2230 = vmatprep.mubr.bf16.mxu0 0
        %2231 = vmatmul.mubr.bf16.gmra.mrb[0].mxu0 %v2050
        %v2232 = vpop.f32.mrb[0].mxu0
        %v2233 = vadd.f32 0.0, %v2232
        %v2234 = vpop.f32.mrb[0].mxu0
        %v2235 = vpop.f32.mrb[0].mxu0
        %v2236 = vadd.f32 0.0, %v2235
        %v2237 = vpop.f32.mrb[0].mxu0
        %2238 = vmatprep.mubr.bf16.mxu0 0
        %2239 = vmatmul.mubr.bf16.gmra.mrb[0].mxu0 %v2051
        %v2240 = vpop.f32.mrb[0].mxu0
        %v2241 = vadd.f32 0.0, %v2240
        %v2242 = vpop.f32.mrb[0].mxu0
        %v2243 = vpop.f32.mrb[0].mxu0
        %v2244 = vadd.f32 0.0, %v2243
        %v2245 = vpop.f32.mrb[0].mxu0
        %2246 = vmatprep.mubr.bf16.mxu0 0
        %2247 = vmatmul.mubr.bf16.gmra.mrb[0].mxu0 %v2052
        %v2248 = vpop.f32.mrb[0].mxu0
        %v2249 = vadd.f32 0.0, %v2248
        %v2250 = vpop.f32.mrb[0].mxu0
        %v2251 = vpop.f32.mrb[0].mxu0
        %v2252 = vadd.f32 0.0, %v2251
        %v2253 = vpop.f32.mrb[0].mxu0
        %2254 = vmatprep.mubr.bf16.mxu0 0
        %2255 = vmatmul.mubr.bf16.gmra.mrb[0].mxu0 %v2053
        %v2256 = vpop.f32.mrb[0].mxu0
        %v2257 = vadd.f32 0.0, %v2256
        %v2258 = vpop.f32.mrb[0].mxu0
        %v2259 = vpop.f32.mrb[0].mxu0
        %v2260 = vadd.f32 0.0, %v2259
        %v2261 = vpop.f32.mrb[0].mxu0
        %2262 = vmatprep.mubr.bf16.mxu0 0
        %2263 = vmatmul.mubr.bf16.gmra.mrb[0].mxu0 %v2054
        %v2264 = vpop.f32.mrb[0].mxu0
        %v2265 = vadd.f32 0.0, %v2264
        %v2266 = vpop.f32.mrb[0].mxu0
        %v2267 = vpop.f32.mrb[0].mxu0
        %v2268 = vadd.f32 0.0, %v2267
        %v2269 = vpop.f32.mrb[0].mxu0
        %2270 = vmatprep.mubr.bf16.mxu0 0
        %2271 = vmatmul.mubr.bf16.gmra.mrb[0].mxu0 %v2055
        %v2272 = vpop.f32.mrb[0].mxu0
        %v2273 = vadd.f32 0.0, %v2272
        %v2274 = vpop.f32.mrb[0].mxu0
        %v2275 = vpop.f32.mrb[0].mxu0
        %v2276 = vadd.f32 0.0, %v2275
        %v2277 = vpop.f32.mrb[0].mxu0
        %2278 = vmatprep.mubr.bf16.mxu0 0
        %2279 = vmatmul.mubr.bf16.gmra.mrb[0].mxu0 %v2056
        %v2280 = vpop.f32.mrb[0].mxu0
        %v2281 = vadd.f32 0.0, %v2280
        %v2282 = vpop.f32.mrb[0].mxu0
        %v2283 = vpop.f32.mrb[0].mxu0
        %v2284 = vadd.f32 0.0, %v2283
        %v2285 = vpop.f32.mrb[0].mxu0
        %2286 = vmatprep.mubr.bf16.mxu0 0
        %2287 = vmatmul.mubr.bf16.gmra.mrb[0].mxu0 %v2057
        %v2288 = vpop.f32.mrb[0].mxu0
        %v2289 = vadd.f32 0.0, %v2288
        %v2290 = vpop.f32.mrb[0].mxu0
        %v2291 = vpop.f32.mrb[0].mxu0
        %v2292 = vadd.f32 0.0, %v2291
        %v2293 = vpop.f32.mrb[0].mxu0
        %2294 = vmatprep.mubr.bf16.mxu0 0
        %2295 = vmatmul.mubr.bf16.gmra.mrb[0].mxu0 %v2058
        %v2296 = vpop.f32.mrb[0].mxu0
        %v2297 = vadd.f32 0.0, %v2296
        %v2298 = vpop.f32.mrb[0].mxu0
        %v2299 = vpop.f32.mrb[0].mxu0
        %v2300 = vadd.f32 0.0, %v2299
        %v2301 = vpop.f32.mrb[0].mxu0
        %2302 = vmatprep.mubr.bf16.mxu0 0
        %2303 = vmatmul.mubr.bf16.gmra.mrb[0].mxu0 %v2059
        %v2304 = vpop.f32.mrb[0].mxu0
        %v2305 = vadd.f32 0.0, %v2304
        %v2306 = vpop.f32.mrb[0].mxu0
        %v2307 = vpop.f32.mrb[0].mxu0
        %v2308 = vadd.f32 0.0, %v2307
        %v2309 = vpop.f32.mrb[0].mxu0
        %2310 = vmatprep.mubr.bf16.mxu0 0
        %2311 = vmatmul.mubr.bf16.gmra.mrb[0].mxu0 %v2060
        %v2312 = vpop.f32.mrb[0].mxu0
        %v2313 = vadd.f32 0.0, %v2312
        %v2314 = vpop.f32.mrb[0].mxu0
        %v2315 = vpop.f32.mrb[0].mxu0
        %v2316 = vadd.f32 0.0, %v2315
        %v2317 = vpop.f32.mrb[0].mxu0
        %2318 = vmatprep.mubr.bf16.mxu0 0
        %2319 = vmatmul.mubr.bf16.gmra.mrb[0].mxu0 %v2061
        %v2320 = vpop.f32.mrb[0].mxu0
        %v2321 = vadd.f32 0.0, %v2320
        %v2322 = vpop.f32.mrb[0].mxu0
        %v2323 = vpop.f32.mrb[0].mxu0
        %v2324 = vadd.f32 0.0, %v2323
        %v2325 = vpop.f32.mrb[0].mxu0
        %2326 = vmatprep.mubr.bf16.mxu0 0
        %2327 = vmatmul.mubr.bf16.gmra.mrb[0].mxu0 %v2062
        %v2328 = vpop.f32.mrb[0].mxu0
        %v2329 = vadd.f32 0.0, %v2328
        %v2330 = vpop.f32.mrb[0].mxu0
        %v2331 = vpop.f32.mrb[0].mxu0
        %v2332 = vadd.f32 0.0, %v2331
        %v2333 = vpop.f32.mrb[0].mxu0
        %2334 = vmatprep.mubr.bf16.mxu0 0
        %2335 = vmatmul.mubr.bf16.gmra.mrb[0].mxu0 %v2063
        %v2336 = vpop.f32.mrb[0].mxu0
        %v2337 = vadd.f32 0.0, %v2336
        %v2338 = vpop.f32.mrb[0].mxu0
        %v2339 = vpop.f32.mrb[0].mxu0
        %v2340 = vadd.f32 0.0, %v2339
        %v2341 = vpop.f32.mrb[0].mxu0
        %2342 = vmatprep.mubr.bf16.mxu0 0
        %2343 = vmatmul.mubr.bf16.gmra.mrb[0].mxu0 %v2064
        %v2344 = vpop.f32.mrb[0].mxu0
        %v2345 = vadd.f32 0.0, %v2344
        %v2346 = vpop.f32.mrb[0].mxu0
        %v2347 = vpop.f32.mrb[0].mxu0
        %v2348 = vadd.f32 0.0, %v2347
        %v2349 = vpop.f32.mrb[0].mxu0
        %2350 = vmatprep.mubr.bf16.mxu0 0
        %2351 = vmatmul.mubr.bf16.gmra.mrb[0].mxu0 %v2065
        %v2352 = vpop.f32.mrb[0].mxu0
        %v2353 = vadd.f32 0.0, %v2352
        %v2354 = vpop.f32.mrb[0].mxu0
        %v2355 = vpop.f32.mrb[0].mxu0
        %v2356 = vadd.f32 0.0, %v2355
        %v2357 = vpop.f32.mrb[0].mxu0
        %2358 = vmatprep.mubr.bf16.mxu0 0
        %2359 = vmatmul.mubr.bf16.gmra.mrb[0].mxu0 %v2066
        %v2360 = vpop.f32.mrb[0].mxu0
        %v2361 = vadd.f32 0.0, %v2360
        %v2362 = vpop.f32.mrb[0].mxu0
        %v2363 = vpop.f32.mrb[0].mxu0
        %v2364 = vadd.f32 0.0, %v2363
        %v2365 = vpop.f32.mrb[0].mxu0
        %2366 = vmatprep.mubr.bf16.mxu0 0
        %2367 = vmatmul.mubr.bf16.gmra.mrb[0].mxu0 %v2067
        %v2368 = vpop.f32.mrb[0].mxu0
        %v2369 = vadd.f32 0.0, %v2368
        %v2370 = vpop.f32.mrb[0].mxu0
        %v2371 = vpop.f32.mrb[0].mxu0
        %v2372 = vadd.f32 0.0, %v2371
        %v2373 = vpop.f32.mrb[0].mxu0
        %2374 = vmatprep.mubr.bf16.mxu0 0
        %2375 = vmatmul.mubr.bf16.gmra.mrb[0].mxu0 %v2068
        %v2376 = vpop.f32.mrb[0].mxu0
        %v2377 = vadd.f32 0.0, %v2376
        %v2378 = vpop.f32.mrb[0].mxu0
        %v2379 = vpop.f32.mrb[0].mxu0
        %v2380 = vadd.f32 0.0, %v2379
        %v2381 = vpop.f32.mrb[0].mxu0
        %2382 = vmatprep.mubr.bf16.mxu0 0
        %2383 = vmatmul.mubr.bf16.gmra.mrb[0].mxu0 %v2069
        %v2384 = vpop.f32.mrb[0].mxu0
        %v2385 = vadd.f32 0.0, %v2384
        %v2386 = vpop.f32.mrb[0].mxu0
        %v2387 = vpop.f32.mrb[0].mxu0
        %v2388 = vadd.f32 0.0, %v2387
        %v2389 = vpop.f32.mrb[0].mxu0
        %2390 = vdwg.mxu0
        %v2391 = vmax.f32 %v1591, %v2137
        %v2392 = vmax.f32 %v1594, %v2140
        %v2393 = vmax.f32 %v1599, %v2145
        %v2394 = vmax.f32 %v1602, %v2148
        %v2395 = vmax.f32 %v1607, %v2153
        %v2396 = vmax.f32 %v1610, %v2156
        %v2397 = vmax.f32 %v1615, %v2161
        %v2398 = vmax.f32 %v1618, %v2164
        %v2399 = vmax.f32 %v1623, %v2169
        %v2400 = vmax.f32 %v1626, %v2172
        %v2401 = vmax.f32 %v1631, %v2177
        %v2402 = vmax.f32 %v1634, %v2180
        %v2403 = vmax.f32 %v1639, %v2185
        %v2404 = vmax.f32 %v1642, %v2188
        %v2405 = vmax.f32 %v1647, %v2193
        %v2406 = vmax.f32 %v1650, %v2196
        %v2407 = vmax.f32 %v1655, %v2201
        %v2408 = vmax.f32 %v1658, %v2204
        %v2409 = vmax.f32 %v1663, %v2209
        %v2410 = vmax.f32 %v1666, %v2212
        %v2411 = vmax.f32 %v1671, %v2217
        %v2412 = vmax.f32 %v1674, %v2220
        %v2413 = vmax.f32 %v1679, %v2225
        %v2414 = vmax.f32 %v1682, %v2228
        %v2415 = vmax.f32 %v1687, %v2233
        %v2416 = vmax.f32 %v1690, %v2236
        %v2417 = vmax.f32 %v1695, %v2241
        %v2418 = vmax.f32 %v1698, %v2244
        %v2419 = vmax.f32 %v1703, %v2249
        %v2420 = vmax.f32 %v1706, %v2252
        %v2421 = vmax.f32 %v1711, %v2257
        %v2422 = vmax.f32 %v1714, %v2260
        %v2423 = vmax.f32 %v1719, %v2265
        %v2424 = vmax.f32 %v1722, %v2268
        %v2425 = vmax.f32 %v1727, %v2273
        %v2426 = vmax.f32 %v1730, %v2276
        %v2427 = vmax.f32 %v1735, %v2281
        %v2428 = vmax.f32 %v1738, %v2284
        %v2429 = vmax.f32 %v1743, %v2289
        %v2430 = vmax.f32 %v1746, %v2292
        %v2431 = vmax.f32 %v1751, %v2297
        %v2432 = vmax.f32 %v1754, %v2300
        %v2433 = vmax.f32 %v1759, %v2305
        %v2434 = vmax.f32 %v1762, %v2308
        %v2435 = vmax.f32 %v1767, %v2313
        %v2436 = vmax.f32 %v1770, %v2316
        %v2437 = vmax.f32 %v1775, %v2321
        %v2438 = vmax.f32 %v1778, %v2324
        %v2439 = vmax.f32 %v1783, %v2329
        %v2440 = vmax.f32 %v1786, %v2332
        %v2441 = vmax.f32 %v1791, %v2337
        %v2442 = vmax.f32 %v1794, %v2340
        %v2443 = vmax.f32 %v1799, %v2345
        %v2444 = vmax.f32 %v1802, %v2348
        %v2445 = vmax.f32 %v1807, %v2353
        %v2446 = vmax.f32 %v1810, %v2356
        %v2447 = vmax.f32 %v1815, %v2361
        %v2448 = vmax.f32 %v1818, %v2364
        %v2449 = vmax.f32 %v1823, %v2369
        %v2450 = vmax.f32 %v1826, %v2372
        %v2451 = vmax.f32 %v1831, %v2377
        %v2452 = vmax.f32 %v1834, %v2380
        %v2453 = vmax.f32 %v1839, %v2385
        %v2454 = vmax.f32 %v1842, %v2388
        %s2455 = scalar_lea.vmem %s1207, 512 [#allocation2]
        %v2456 = vld [vmem:[%s2455] sm:$0xf]
        %v2457 = vld [vmem:[%s2455 + $0x4] sm:$0xf]
        %v2458 = vld [vmem:[%s2455 + $0x8] sm:$0xf]
        %v2459 = vld [vmem:[%s2455 + $0xc] sm:$0xf]
        %v2460 = vld [vmem:[%s2455 + $0x10] sm:$0xf]
        %v2461 = vld [vmem:[%s2455 + $0x14] sm:$0xf]
        %v2462 = vld [vmem:[%s2455 + $0x18] sm:$0xf]
        %v2463 = vld [vmem:[%s2455 + $0x1c] sm:$0xf]
        %v2464 = vld [vmem:[%s2455 + $0x20] sm:$0xf]
        %v2465 = vld [vmem:[%s2455 + $0x24] sm:$0xf]
        %v2466 = vld [vmem:[%s2455 + $0x28] sm:$0xf]
        %v2467 = vld [vmem:[%s2455 + $0x2c] sm:$0xf]
        %v2468 = vld [vmem:[%s2455 + $0x30] sm:$0xf]
        %v2469 = vld [vmem:[%s2455 + $0x34] sm:$0xf]
        %v2470 = vld [vmem:[%s2455 + $0x38] sm:$0xf]
        %v2471 = vld [vmem:[%s2455 + $0x3c] sm:$0xf]
        %v2472 = vld [vmem:[%s2455 + $0x40] sm:$0xf]
        %v2473 = vld [vmem:[%s2455 + $0x44] sm:$0xf]
        %v2474 = vld [vmem:[%s2455 + $0x48] sm:$0xf]
        %v2475 = vld [vmem:[%s2455 + $0x4c] sm:$0xf]
        %v2476 = vld [vmem:[%s2455 + $0x50] sm:$0xf]
        %v2477 = vld [vmem:[%s2455 + $0x54] sm:$0xf]
        %v2478 = vld [vmem:[%s2455 + $0x58] sm:$0xf]
        %v2479 = vld [vmem:[%s2455 + $0x5c] sm:$0xf]
        %v2480 = vld [vmem:[%s2455 + $0x60] sm:$0xf]
        %v2481 = vld [vmem:[%s2455 + $0x64] sm:$0xf]
        %v2482 = vld [vmem:[%s2455 + $0x68] sm:$0xf]
        %v2483 = vld [vmem:[%s2455 + $0x6c] sm:$0xf]
        %v2484 = vld [vmem:[%s2455 + $0x70] sm:$0xf]
        %v2485 = vld [vmem:[%s2455 + $0x74] sm:$0xf]
        %v2486 = vld [vmem:[%s2455 + $0x78] sm:$0xf]
        %v2487 = vld [vmem:[%s2455 + $0x7c] sm:$0xf]
        %v2488 = vld [vmem:[%s2455 + $0x80] sm:$0xf]
        %v2489 = vld [vmem:[%s2455 + $0x84] sm:$0xf]
        %v2490 = vld [vmem:[%s2455 + $0x88] sm:$0xf]
        %v2491 = vld [vmem:[%s2455 + $0x8c] sm:$0xf]
        %v2492 = vld [vmem:[%s2455 + $0x90] sm:$0xf]
        %v2493 = vld [vmem:[%s2455 + $0x94] sm:$0xf]
        %v2494 = vld [vmem:[%s2455 + $0x98] sm:$0xf]
        %v2495 = vld [vmem:[%s2455 + $0x9c] sm:$0xf]
        %v2496 = vld [vmem:[%s2455 + $0xa0] sm:$0xf]
        %v2497 = vld [vmem:[%s2455 + $0xa4] sm:$0xf]
        %v2498 = vld [vmem:[%s2455 + $0xa8] sm:$0xf]
        %v2499 = vld [vmem:[%s2455 + $0xac] sm:$0xf]
        %v2500 = vld [vmem:[%s2455 + $0xb0] sm:$0xf]
        %v2501 = vld [vmem:[%s2455 + $0xb4] sm:$0xf]
        %v2502 = vld [vmem:[%s2455 + $0xb8] sm:$0xf]
        %v2503 = vld [vmem:[%s2455 + $0xbc] sm:$0xf]
        %v2504 = vld [vmem:[%s2455 + $0xc0] sm:$0xf]
        %v2505 = vld [vmem:[%s2455 + $0xc4] sm:$0xf]
        %v2506 = vld [vmem:[%s2455 + $0xc8] sm:$0xf]
        %v2507 = vld [vmem:[%s2455 + $0xcc] sm:$0xf]
        %v2508 = vld [vmem:[%s2455 + $0xd0] sm:$0xf]
        %v2509 = vld [vmem:[%s2455 + $0xd4] sm:$0xf]
        %v2510 = vld [vmem:[%s2455 + $0xd8] sm:$0xf]
        %v2511 = vld [vmem:[%s2455 + $0xdc] sm:$0xf]
        %v2512 = vld [vmem:[%s2455 + $0xe0] sm:$0xf]
        %v2513 = vld [vmem:[%s2455 + $0xe4] sm:$0xf]
        %v2514 = vld [vmem:[%s2455 + $0xe8] sm:$0xf]
        %v2515 = vld [vmem:[%s2455 + $0xec] sm:$0xf]
        %v2516 = vld [vmem:[%s2455 + $0xf0] sm:$0xf]
        %v2517 = vld [vmem:[%s2455 + $0xf4] sm:$0xf]
        %v2518 = vld [vmem:[%s2455 + $0xf8] sm:$0xf]
        %v2519 = vld [vmem:[%s2455 + $0xfc] sm:$0xf]
        %v2584 = vunpack.c.l.b16 %v2456
        %v2585 = vunpack.c.l.b16 %v2457
        %v2586 = vunpack.c.l.b16 %v2458
        %v2587 = vunpack.c.l.b16 %v2459
        %v2588 = vunpack.c.l.b16 %v2460
        %v2589 = vunpack.c.l.b16 %v2461
        %v2590 = vunpack.c.l.b16 %v2462
        %v2591 = vunpack.c.l.b16 %v2463
        %v2592 = vunpack.c.l.b16 %v2464
        %v2593 = vunpack.c.l.b16 %v2465
        %v2594 = vunpack.c.l.b16 %v2466
        %v2595 = vunpack.c.l.b16 %v2467
        %v2596 = vunpack.c.l.b16 %v2468
        %v2597 = vunpack.c.l.b16 %v2469
        %v2598 = vunpack.c.l.b16 %v2470
        %v2599 = vunpack.c.l.b16 %v2471
        %v2600 = vunpack.c.l.b16 %v2472
        %v2601 = vunpack.c.l.b16 %v2473
        %v2602 = vunpack.c.l.b16 %v2474
        %v2603 = vunpack.c.l.b16 %v2475
        %v2604 = vunpack.c.l.b16 %v2476
        %v2605 = vunpack.c.l.b16 %v2477
        %v2606 = vunpack.c.l.b16 %v2478
        %v2607 = vunpack.c.l.b16 %v2479
        %v2608 = vunpack.c.l.b16 %v2480
        %v2609 = vunpack.c.l.b16 %v2481
        %v2610 = vunpack.c.l.b16 %v2482
        %v2611 = vunpack.c.l.b16 %v2483
        %v2612 = vunpack.c.l.b16 %v2484
        %v2613 = vunpack.c.l.b16 %v2485
        %v2614 = vunpack.c.l.b16 %v2486
        %v2615 = vunpack.c.l.b16 %v2487
        %v2616 = vunpack.c.l.b16 %v2488
        %v2617 = vunpack.c.l.b16 %v2489
        %v2618 = vunpack.c.l.b16 %v2490
        %v2619 = vunpack.c.l.b16 %v2491
        %v2620 = vunpack.c.l.b16 %v2492
        %v2621 = vunpack.c.l.b16 %v2493
        %v2622 = vunpack.c.l.b16 %v2494
        %v2623 = vunpack.c.l.b16 %v2495
        %v2624 = vunpack.c.l.b16 %v2496
        %v2625 = vunpack.c.l.b16 %v2497
        %v2626 = vunpack.c.l.b16 %v2498
        %v2627 = vunpack.c.l.b16 %v2499
        %v2628 = vunpack.c.l.b16 %v2500
        %v2629 = vunpack.c.l.b16 %v2501
        %v2630 = vunpack.c.l.b16 %v2502
        %v2631 = vunpack.c.l.b16 %v2503
        %v2632 = vunpack.c.l.b16 %v2504
        %v2633 = vunpack.c.l.b16 %v2505
        %v2634 = vunpack.c.l.b16 %v2506
        %v2635 = vunpack.c.l.b16 %v2507
        %v2636 = vunpack.c.l.b16 %v2508
        %v2637 = vunpack.c.l.b16 %v2509
        %v2638 = vunpack.c.l.b16 %v2510
        %v2639 = vunpack.c.l.b16 %v2511
        %v2640 = vunpack.c.l.b16 %v2512
        %v2641 = vunpack.c.l.b16 %v2513
        %v2642 = vunpack.c.l.b16 %v2514
        %v2643 = vunpack.c.l.b16 %v2515
        %v2644 = vunpack.c.l.b16 %v2516
        %v2645 = vunpack.c.l.b16 %v2517
        %v2646 = vunpack.c.l.b16 %v2518
        %v2647 = vunpack.c.l.b16 %v2519
        %v2648 = vpack.c.b16 %v2585, %v2584
        %v2649 = vpack.c.b16 %v2587, %v2586
        %v2650 = vpack.c.b16 %v2589, %v2588
        %v2651 = vpack.c.b16 %v2591, %v2590
        %v2652 = vpack.c.b16 %v2593, %v2592
        %v2653 = vpack.c.b16 %v2595, %v2594
        %v2654 = vpack.c.b16 %v2597, %v2596
        %v2655 = vpack.c.b16 %v2599, %v2598
        %v2656 = vpack.c.b16 %v2601, %v2600
        %v2657 = vpack.c.b16 %v2603, %v2602
        %v2658 = vpack.c.b16 %v2605, %v2604
        %v2659 = vpack.c.b16 %v2607, %v2606
        %v2660 = vpack.c.b16 %v2609, %v2608
        %v2661 = vpack.c.b16 %v2611, %v2610
        %v2662 = vpack.c.b16 %v2613, %v2612
        %v2663 = vpack.c.b16 %v2615, %v2614
        %v2664 = vpack.c.b16 %v2617, %v2616
        %v2665 = vpack.c.b16 %v2619, %v2618
        %v2666 = vpack.c.b16 %v2621, %v2620
        %v2667 = vpack.c.b16 %v2623, %v2622
        %v2668 = vpack.c.b16 %v2625, %v2624
        %v2669 = vpack.c.b16 %v2627, %v2626
        %v2670 = vpack.c.b16 %v2629, %v2628
        %v2671 = vpack.c.b16 %v2631, %v2630
        %v2672 = vpack.c.b16 %v2633, %v2632
        %v2673 = vpack.c.b16 %v2635, %v2634
        %v2674 = vpack.c.b16 %v2637, %v2636
        %v2675 = vpack.c.b16 %v2639, %v2638
        %v2676 = vpack.c.b16 %v2641, %v2640
        %v2677 = vpack.c.b16 %v2643, %v2642
        %v2678 = vpack.c.b16 %v2645, %v2644
        %v2679 = vpack.c.b16 %v2647, %v2646
        %2712 = vmatprep.subr.bf16.mxu0 0
        %2713 = vmatpush1.bf16.msra.mxu0 %v1540
        %2714 = vmatprep.subr.bf16.mxu0 0
        %2715 = vmatpush1.bf16.msra.mxu0 %v1541
        %2716 = vmatprep.subr.bf16.mxu0 0
        %2717 = vmatpush1.bf16.msra.mxu0 %v1542
        %2718 = vmatprep.subr.bf16.mxu0 0
        %2719 = vmatpush1.bf16.msra.mxu0 %v1543
        %2720 = vmatprep.subr.bf16.mxu0 0
        %2721 = vmatpush1.bf16.msra.mxu0 %v1544
        %2722 = vmatprep.subr.bf16.mxu0 0
        %2723 = vmatpush1.bf16.msra.mxu0 %v1545
        %2724 = vmatprep.subr.bf16.mxu0 0
        %2725 = vmatpush1.bf16.msra.mxu0 %v1546
        %2726 = vmatprep.subr.bf16.mxu0 0
        %2727 = vmatpush1.bf16.msra.mxu0 %v1547
        %2728 = vmatprep.subr.bf16.mxu0 0
        %2729 = vmatpush1.bf16.msra.mxu0 0
        %2730 = vmatprep.subr.bf16.mxu0 0
        %2731 = vmatpush1.bf16.msra.mxu0 0
        %2732 = vmatprep.subr.bf16.mxu0 0
        %2733 = vmatpush1.bf16.msra.mxu0 0
        %2734 = vmatprep.subr.bf16.mxu0 0
        %2735 = vmatpush1.bf16.msra.mxu0 0
        %2736 = vmatprep.subr.bf16.mxu0 0
        %2737 = vmatpush1.bf16.msra.mxu0 0
        %2738 = vmatprep.subr.bf16.mxu0 0
        %2739 = vmatpush1.bf16.msra.mxu0 0
        %2740 = vmatprep.subr.bf16.mxu0 0
        %2741 = vmatpush1.bf16.msra.mxu0 0
        %2742 = vmatprep.subr.bf16.mxu0 0
        %2743 = vmatpush1.bf16.msra.mxu0 0
        %2744 = vmatprep.mubr.bf16.mxu0 0
        %2745 = vmatmul.mubr.bf16.gmra.mrb[0].mxu0 %v2648
        %v2746 = vpop.f32.mrb[0].mxu0
        %v2747 = vadd.f32 0.0, %v2746
        %v2748 = vpop.f32.mrb[0].mxu0
        %v2749 = vpop.f32.mrb[0].mxu0
        %v2750 = vadd.f32 0.0, %v2749
        %v2751 = vpop.f32.mrb[0].mxu0
        %2752 = vmatprep.mubr.bf16.mxu0 0
        %2753 = vmatmul.mubr.bf16.gmra.mrb[0].mxu0 %v2649
        %v2754 = vpop.f32.mrb[0].mxu0
        %v2755 = vadd.f32 0.0, %v2754
        %v2756 = vpop.f32.mrb[0].mxu0
        %v2757 = vpop.f32.mrb[0].mxu0
        %v2758 = vadd.f32 0.0, %v2757
        %v2759 = vpop.f32.mrb[0].mxu0
        %2760 = vmatprep.mubr.bf16.mxu0 0
        %2761 = vmatmul.mubr.bf16.gmra.mrb[0].mxu0 %v2650
        %v2762 = vpop.f32.mrb[0].mxu0
        %v2763 = vadd.f32 0.0, %v2762
        %v2764 = vpop.f32.mrb[0].mxu0
        %v2765 = vpop.f32.mrb[0].mxu0
        %v2766 = vadd.f32 0.0, %v2765
        %v2767 = vpop.f32.mrb[0].mxu0
        %2768 = vmatprep.mubr.bf16.mxu0 0
        %2769 = vmatmul.mubr.bf16.gmra.mrb[0].mxu0 %v2651
        %v2770 = vpop.f32.mrb[0].mxu0
        %v2771 = vadd.f32 0.0, %v2770
        %v2772 = vpop.f32.mrb[0].mxu0
        %v2773 = vpop.f32.mrb[0].mxu0
        %v2774 = vadd.f32 0.0, %v2773
        %v2775 = vpop.f32.mrb[0].mxu0
        %2776 = vmatprep.mubr.bf16.mxu0 0
        %2777 = vmatmul.mubr.bf16.gmra.mrb[0].mxu0 %v2652
        %v2778 = vpop.f32.mrb[0].mxu0
        %v2779 = vadd.f32 0.0, %v2778
        %v2780 = vpop.f32.mrb[0].mxu0
        %v2781 = vpop.f32.mrb[0].mxu0
        %v2782 = vadd.f32 0.0, %v2781
        %v2783 = vpop.f32.mrb[0].mxu0
        %2784 = vmatprep.mubr.bf16.mxu0 0
        %2785 = vmatmul.mubr.bf16.gmra.mrb[0].mxu0 %v2653
        %v2786 = vpop.f32.mrb[0].mxu0
        %v2787 = vadd.f32 0.0, %v2786
        %v2788 = vpop.f32.mrb[0].mxu0
        %v2789 = vpop.f32.mrb[0].mxu0
        %v2790 = vadd.f32 0.0, %v2789
        %v2791 = vpop.f32.mrb[0].mxu0
        %2792 = vmatprep.mubr.bf16.mxu0 0
        %2793 = vmatmul.mubr.bf16.gmra.mrb[0].mxu0 %v2654
        %v2794 = vpop.f32.mrb[0].mxu0
        %v2795 = vadd.f32 0.0, %v2794
        %v2796 = vpop.f32.mrb[0].mxu0
        %v2797 = vpop.f32.mrb[0].mxu0
        %v2798 = vadd.f32 0.0, %v2797
        %v2799 = vpop.f32.mrb[0].mxu0
        %2800 = vmatprep.mubr.bf16.mxu0 0
        %2801 = vmatmul.mubr.bf16.gmra.mrb[0].mxu0 %v2655
        %v2802 = vpop.f32.mrb[0].mxu0
        %v2803 = vadd.f32 0.0, %v2802
        %v2804 = vpop.f32.mrb[0].mxu0
        %v2805 = vpop.f32.mrb[0].mxu0
        %v2806 = vadd.f32 0.0, %v2805
        %v2807 = vpop.f32.mrb[0].mxu0
        %2808 = vmatprep.mubr.bf16.mxu0 0
        %2809 = vmatmul.mubr.bf16.gmra.mrb[0].mxu0 %v2656
        %v2810 = vpop.f32.mrb[0].mxu0
        %v2811 = vadd.f32 0.0, %v2810
        %v2812 = vpop.f32.mrb[0].mxu0
        %v2813 = vpop.f32.mrb[0].mxu0
        %v2814 = vadd.f32 0.0, %v2813
        %v2815 = vpop.f32.mrb[0].mxu0
        %2816 = vmatprep.mubr.bf16.mxu0 0
        %2817 = vmatmul.mubr.bf16.gmra.mrb[0].mxu0 %v2657
        %v2818 = vpop.f32.mrb[0].mxu0
        %v2819 = vadd.f32 0.0, %v2818
        %v2820 = vpop.f32.mrb[0].mxu0
        %v2821 = vpop.f32.mrb[0].mxu0
        %v2822 = vadd.f32 0.0, %v2821
        %v2823 = vpop.f32.mrb[0].mxu0
        %2824 = vmatprep.mubr.bf16.mxu0 0
        %2825 = vmatmul.mubr.bf16.gmra.mrb[0].mxu0 %v2658
        %v2826 = vpop.f32.mrb[0].mxu0
        %v2827 = vadd.f32 0.0, %v2826
        %v2828 = vpop.f32.mrb[0].mxu0
        %v2829 = vpop.f32.mrb[0].mxu0
        %v2830 = vadd.f32 0.0, %v2829
        %v2831 = vpop.f32.mrb[0].mxu0
        %2832 = vmatprep.mubr.bf16.mxu0 0
        %2833 = vmatmul.mubr.bf16.gmra.mrb[0].mxu0 %v2659
        %v2834 = vpop.f32.mrb[0].mxu0
        %v2835 = vadd.f32 0.0, %v2834
        %v2836 = vpop.f32.mrb[0].mxu0
        %v2837 = vpop.f32.mrb[0].mxu0
        %v2838 = vadd.f32 0.0, %v2837
        %v2839 = vpop.f32.mrb[0].mxu0
        %2840 = vmatprep.mubr.bf16.mxu0 0
        %2841 = vmatmul.mubr.bf16.gmra.mrb[0].mxu0 %v2660
        %v2842 = vpop.f32.mrb[0].mxu0
        %v2843 = vadd.f32 0.0, %v2842
        %v2844 = vpop.f32.mrb[0].mxu0
        %v2845 = vpop.f32.mrb[0].mxu0
        %v2846 = vadd.f32 0.0, %v2845
        %v2847 = vpop.f32.mrb[0].mxu0
        %2848 = vmatprep.mubr.bf16.mxu0 0
        %2849 = vmatmul.mubr.bf16.gmra.mrb[0].mxu0 %v2661
        %v2850 = vpop.f32.mrb[0].mxu0
        %v2851 = vadd.f32 0.0, %v2850
        %v2852 = vpop.f32.mrb[0].mxu0
        %v2853 = vpop.f32.mrb[0].mxu0
        %v2854 = vadd.f32 0.0, %v2853
        %v2855 = vpop.f32.mrb[0].mxu0
        %2856 = vmatprep.mubr.bf16.mxu0 0
        %2857 = vmatmul.mubr.bf16.gmra.mrb[0].mxu0 %v2662
        %v2858 = vpop.f32.mrb[0].mxu0
        %v2859 = vadd.f32 0.0, %v2858
        %v2860 = vpop.f32.mrb[0].mxu0
        %v2861 = vpop.f32.mrb[0].mxu0
        %v2862 = vadd.f32 0.0, %v2861
        %v2863 = vpop.f32.mrb[0].mxu0
        %2864 = vmatprep.mubr.bf16.mxu0 0
        %2865 = vmatmul.mubr.bf16.gmra.mrb[0].mxu0 %v2663
        %v2866 = vpop.f32.mrb[0].mxu0
        %v2867 = vadd.f32 0.0, %v2866
        %v2868 = vpop.f32.mrb[0].mxu0
        %v2869 = vpop.f32.mrb[0].mxu0
        %v2870 = vadd.f32 0.0, %v2869
        %v2871 = vpop.f32.mrb[0].mxu0
        %2872 = vmatprep.mubr.bf16.mxu0 0
        %2873 = vmatmul.mubr.bf16.gmra.mrb[0].mxu0 %v2664
        %v2874 = vpop.f32.mrb[0].mxu0
        %v2875 = vadd.f32 0.0, %v2874
        %v2876 = vpop.f32.mrb[0].mxu0
        %v2877 = vpop.f32.mrb[0].mxu0
        %v2878 = vadd.f32 0.0, %v2877
        %v2879 = vpop.f32.mrb[0].mxu0
        %2880 = vmatprep.mubr.bf16.mxu0 0
        %2881 = vmatmul.mubr.bf16.gmra.mrb[0].mxu0 %v2665
        %v2882 = vpop.f32.mrb[0].mxu0
        %v2883 = vadd.f32 0.0, %v2882
        %v2884 = vpop.f32.mrb[0].mxu0
        %v2885 = vpop.f32.mrb[0].mxu0
        %v2886 = vadd.f32 0.0, %v2885
        %v2887 = vpop.f32.mrb[0].mxu0
        %2888 = vmatprep.mubr.bf16.mxu0 0
        %2889 = vmatmul.mubr.bf16.gmra.mrb[0].mxu0 %v2666
        %v2890 = vpop.f32.mrb[0].mxu0
        %v2891 = vadd.f32 0.0, %v2890
        %v2892 = vpop.f32.mrb[0].mxu0
        %v2893 = vpop.f32.mrb[0].mxu0
        %v2894 = vadd.f32 0.0, %v2893
        %v2895 = vpop.f32.mrb[0].mxu0
        %2896 = vmatprep.mubr.bf16.mxu0 0
        %2897 = vmatmul.mubr.bf16.gmra.mrb[0].mxu0 %v2667
        %v2898 = vpop.f32.mrb[0].mxu0
        %v2899 = vadd.f32 0.0, %v2898
        %v2900 = vpop.f32.mrb[0].mxu0
        %v2901 = vpop.f32.mrb[0].mxu0
        %v2902 = vadd.f32 0.0, %v2901
        %v2903 = vpop.f32.mrb[0].mxu0
        %2904 = vmatprep.mubr.bf16.mxu0 0
        %2905 = vmatmul.mubr.bf16.gmra.mrb[0].mxu0 %v2668
        %v2906 = vpop.f32.mrb[0].mxu0
        %v2907 = vadd.f32 0.0, %v2906
        %v2908 = vpop.f32.mrb[0].mxu0
        %v2909 = vpop.f32.mrb[0].mxu0
        %v2910 = vadd.f32 0.0, %v2909
        %v2911 = vpop.f32.mrb[0].mxu0
        %2912 = vmatprep.mubr.bf16.mxu0 0
        %2913 = vmatmul.mubr.bf16.gmra.mrb[0].mxu0 %v2669
        %v2914 = vpop.f32.mrb[0].mxu0
        %v2915 = vadd.f32 0.0, %v2914
        %v2916 = vpop.f32.mrb[0].mxu0
        %v2917 = vpop.f32.mrb[0].mxu0
        %v2918 = vadd.f32 0.0, %v2917
        %v2919 = vpop.f32.mrb[0].mxu0
        %2920 = vmatprep.mubr.bf16.mxu0 0
        %2921 = vmatmul.mubr.bf16.gmra.mrb[0].mxu0 %v2670
        %v2922 = vpop.f32.mrb[0].mxu0
        %v2923 = vadd.f32 0.0, %v2922
        %v2924 = vpop.f32.mrb[0].mxu0
        %v2925 = vpop.f32.mrb[0].mxu0
        %v2926 = vadd.f32 0.0, %v2925
        %v2927 = vpop.f32.mrb[0].mxu0
        %2928 = vmatprep.mubr.bf16.mxu0 0
        %2929 = vmatmul.mubr.bf16.gmra.mrb[0].mxu0 %v2671
        %v2930 = vpop.f32.mrb[0].mxu0
        %v2931 = vadd.f32 0.0, %v2930
        %v2932 = vpop.f32.mrb[0].mxu0
        %v2933 = vpop.f32.mrb[0].mxu0
        %v2934 = vadd.f32 0.0, %v2933
        %v2935 = vpop.f32.mrb[0].mxu0
        %2936 = vmatprep.mubr.bf16.mxu0 0
        %2937 = vmatmul.mubr.bf16.gmra.mrb[0].mxu0 %v2672
        %v2938 = vpop.f32.mrb[0].mxu0
        %v2939 = vadd.f32 0.0, %v2938
        %v2940 = vpop.f32.mrb[0].mxu0
        %v2941 = vpop.f32.mrb[0].mxu0
        %v2942 = vadd.f32 0.0, %v2941
        %v2943 = vpop.f32.mrb[0].mxu0
        %2944 = vmatprep.mubr.bf16.mxu0 0
        %2945 = vmatmul.mubr.bf16.gmra.mrb[0].mxu0 %v2673
        %v2946 = vpop.f32.mrb[0].mxu0
        %v2947 = vadd.f32 0.0, %v2946
        %v2948 = vpop.f32.mrb[0].mxu0
        %v2949 = vpop.f32.mrb[0].mxu0
        %v2950 = vadd.f32 0.0, %v2949
        %v2951 = vpop.f32.mrb[0].mxu0
        %2952 = vmatprep.mubr.bf16.mxu0 0
        %2953 = vmatmul.mubr.bf16.gmra.mrb[0].mxu0 %v2674
        %v2954 = vpop.f32.mrb[0].mxu0
        %v2955 = vadd.f32 0.0, %v2954
        %v2956 = vpop.f32.mrb[0].mxu0
        %v2957 = vpop.f32.mrb[0].mxu0
        %v2958 = vadd.f32 0.0, %v2957
        %v2959 = vpop.f32.mrb[0].mxu0
        %2960 = vmatprep.mubr.bf16.mxu0 0
        %2961 = vmatmul.mubr.bf16.gmra.mrb[0].mxu0 %v2675
        %v2962 = vpop.f32.mrb[0].mxu0
        %v2963 = vadd.f32 0.0, %v2962
        %v2964 = vpop.f32.mrb[0].mxu0
        %v2965 = vpop.f32.mrb[0].mxu0
        %v2966 = vadd.f32 0.0, %v2965
        %v2967 = vpop.f32.mrb[0].mxu0
        %2968 = vmatprep.mubr.bf16.mxu0 0
        %2969 = vmatmul.mubr.bf16.gmra.mrb[0].mxu0 %v2676
        %v2970 = vpop.f32.mrb[0].mxu0
        %v2971 = vadd.f32 0.0, %v2970
        %v2972 = vpop.f32.mrb[0].mxu0
        %v2973 = vpop.f32.mrb[0].mxu0
        %v2974 = vadd.f32 0.0, %v2973
        %v2975 = vpop.f32.mrb[0].mxu0
        %2976 = vmatprep.mubr.bf16.mxu0 0
        %2977 = vmatmul.mubr.bf16.gmra.mrb[0].mxu0 %v2677
        %v2978 = vpop.f32.mrb[0].mxu0
        %v2979 = vadd.f32 0.0, %v2978
        %v2980 = vpop.f32.mrb[0].mxu0
        %v2981 = vpop.f32.mrb[0].mxu0
        %v2982 = vadd.f32 0.0, %v2981
        %v2983 = vpop.f32.mrb[0].mxu0
        %2984 = vmatprep.mubr.bf16.mxu0 0
        %2985 = vmatmul.mubr.bf16.gmra.mrb[0].mxu0 %v2678
        %v2986 = vpop.f32.mrb[0].mxu0
        %v2987 = vadd.f32 0.0, %v2986
        %v2988 = vpop.f32.mrb[0].mxu0
        %v2989 = vpop.f32.mrb[0].mxu0
        %v2990 = vadd.f32 0.0, %v2989
        %v2991 = vpop.f32.mrb[0].mxu0
        %2992 = vmatprep.mubr.bf16.mxu0 0
        %2993 = vmatmul.mubr.bf16.gmra.mrb[0].mxu0 %v2679
        %v2994 = vpop.f32.mrb[0].mxu0
        %v2995 = vadd.f32 0.0, %v2994
        %v2996 = vpop.f32.mrb[0].mxu0
        %v2997 = vpop.f32.mrb[0].mxu0
        %v2998 = vadd.f32 0.0, %v2997
        %v2999 = vpop.f32.mrb[0].mxu0
        %3000 = vdwg.mxu0
        %v3001 = vmax.f32 %v2391, %v2747
        %v3002 = vmax.f32 %v2392, %v2750
        %v3003 = vmax.f32 %v2393, %v2755
        %v3004 = vmax.f32 %v2394, %v2758
        %v3005 = vmax.f32 %v2395, %v2763
        %v3006 = vmax.f32 %v2396, %v2766
        %v3007 = vmax.f32 %v2397, %v2771
        %v3008 = vmax.f32 %v2398, %v2774
        %v3009 = vmax.f32 %v2399, %v2779
        %v3010 = vmax.f32 %v2400, %v2782
        %v3011 = vmax.f32 %v2401, %v2787
        %v3012 = vmax.f32 %v2402, %v2790
        %v3013 = vmax.f32 %v2403, %v2795
        %v3014 = vmax.f32 %v2404, %v2798
        %v3015 = vmax.f32 %v2405, %v2803
        %v3016 = vmax.f32 %v2406, %v2806
        %v3017 = vmax.f32 %v2407, %v2811
        %v3018 = vmax.f32 %v2408, %v2814
        %v3019 = vmax.f32 %v2409, %v2819
        %v3020 = vmax.f32 %v2410, %v2822
        %v3021 = vmax.f32 %v2411, %v2827
        %v3022 = vmax.f32 %v2412, %v2830
        %v3023 = vmax.f32 %v2413, %v2835
        %v3024 = vmax.f32 %v2414, %v2838
        %v3025 = vmax.f32 %v2415, %v2843
        %v3026 = vmax.f32 %v2416, %v2846
        %v3027 = vmax.f32 %v2417, %v2851
        %v3028 = vmax.f32 %v2418, %v2854
        %v3029 = vmax.f32 %v2419, %v2859
        %v3030 = vmax.f32 %v2420, %v2862
        %v3031 = vmax.f32 %v2421, %v2867
        %v3032 = vmax.f32 %v2422, %v2870
        %v3033 = vmax.f32 %v2423, %v2875
        %v3034 = vmax.f32 %v2424, %v2878
        %v3035 = vmax.f32 %v2425, %v2883
        %v3036 = vmax.f32 %v2426, %v2886
        %v3037 = vmax.f32 %v2427, %v2891
        %v3038 = vmax.f32 %v2428, %v2894
        %v3039 = vmax.f32 %v2429, %v2899
        %v3040 = vmax.f32 %v2430, %v2902
        %v3041 = vmax.f32 %v2431, %v2907
        %v3042 = vmax.f32 %v2432, %v2910
        %v3043 = vmax.f32 %v2433, %v2915
        %v3044 = vmax.f32 %v2434, %v2918
        %v3045 = vmax.f32 %v2435, %v2923
        %v3046 = vmax.f32 %v2436, %v2926
        %v3047 = vmax.f32 %v2437, %v2931
        %v3048 = vmax.f32 %v2438, %v2934
        %v3049 = vmax.f32 %v2439, %v2939
        %v3050 = vmax.f32 %v2440, %v2942
        %v3051 = vmax.f32 %v2441, %v2947
        %v3052 = vmax.f32 %v2442, %v2950
        %v3053 = vmax.f32 %v2443, %v2955
        %v3054 = vmax.f32 %v2444, %v2958
        %v3055 = vmax.f32 %v2445, %v2963
        %v3056 = vmax.f32 %v2446, %v2966
        %v3057 = vmax.f32 %v2447, %v2971
        %v3058 = vmax.f32 %v2448, %v2974
        %v3059 = vmax.f32 %v2449, %v2979
        %v3060 = vmax.f32 %v2450, %v2982
        %v3061 = vmax.f32 %v2451, %v2987
        %v3062 = vmax.f32 %v2452, %v2990
        %v3063 = vmax.f32 %v2453, %v2995
        %v3064 = vmax.f32 %v2454, %v2998
        %s3065 = scalar_lea.vmem %s1207, 768 [#allocation2]
        %v3066 = vld [vmem:[%s3065] sm:$0xf]
        %v3067 = vld [vmem:[%s3065 + $0x4] sm:$0xf]
        %v3068 = vld [vmem:[%s3065 + $0x8] sm:$0xf]
        %v3069 = vld [vmem:[%s3065 + $0xc] sm:$0xf]
        %v3070 = vld [vmem:[%s3065 + $0x10] sm:$0xf]
        %v3071 = vld [vmem:[%s3065 + $0x14] sm:$0xf]
        %v3072 = vld [vmem:[%s3065 + $0x18] sm:$0xf]
        %v3073 = vld [vmem:[%s3065 + $0x1c] sm:$0xf]
        %v3074 = vld [vmem:[%s3065 + $0x20] sm:$0xf]
        %v3075 = vld [vmem:[%s3065 + $0x24] sm:$0xf]
        %v3076 = vld [vmem:[%s3065 + $0x28] sm:$0xf]
        %v3077 = vld [vmem:[%s3065 + $0x2c] sm:$0xf]
        %v3078 = vld [vmem:[%s3065 + $0x30] sm:$0xf]
        %v3079 = vld [vmem:[%s3065 + $0x34] sm:$0xf]
        %v3080 = vld [vmem:[%s3065 + $0x38] sm:$0xf]
        %v3081 = vld [vmem:[%s3065 + $0x3c] sm:$0xf]
        %v3082 = vld [vmem:[%s3065 + $0x40] sm:$0xf]
        %v3083 = vld [vmem:[%s3065 + $0x44] sm:$0xf]
        %v3084 = vld [vmem:[%s3065 + $0x48] sm:$0xf]
        %v3085 = vld [vmem:[%s3065 + $0x4c] sm:$0xf]
        %v3086 = vld [vmem:[%s3065 + $0x50] sm:$0xf]
        %v3087 = vld [vmem:[%s3065 + $0x54] sm:$0xf]
        %v3088 = vld [vmem:[%s3065 + $0x58] sm:$0xf]
        %v3089 = vld [vmem:[%s3065 + $0x5c] sm:$0xf]
        %v3090 = vld [vmem:[%s3065 + $0x60] sm:$0xf]
        %v3091 = vld [vmem:[%s3065 + $0x64] sm:$0xf]
        %v3092 = vld [vmem:[%s3065 + $0x68] sm:$0xf]
        %v3093 = vld [vmem:[%s3065 + $0x6c] sm:$0xf]
        %v3094 = vld [vmem:[%s3065 + $0x70] sm:$0xf]
        %v3095 = vld [vmem:[%s3065 + $0x74] sm:$0xf]
        %v3096 = vld [vmem:[%s3065 + $0x78] sm:$0xf]
        %v3097 = vld [vmem:[%s3065 + $0x7c] sm:$0xf]
        %v3098 = vld [vmem:[%s3065 + $0x80] sm:$0xf]
        %v3099 = vld [vmem:[%s3065 + $0x84] sm:$0xf]
        %v3100 = vld [vmem:[%s3065 + $0x88] sm:$0xf]
        %v3101 = vld [vmem:[%s3065 + $0x8c] sm:$0xf]
        %v3102 = vld [vmem:[%s3065 + $0x90] sm:$0xf]
        %v3103 = vld [vmem:[%s3065 + $0x94] sm:$0xf]
        %v3104 = vld [vmem:[%s3065 + $0x98] sm:$0xf]
        %v3105 = vld [vmem:[%s3065 + $0x9c] sm:$0xf]
        %v3106 = vld [vmem:[%s3065 + $0xa0] sm:$0xf]
        %v3107 = vld [vmem:[%s3065 + $0xa4] sm:$0xf]
        %v3108 = vld [vmem:[%s3065 + $0xa8] sm:$0xf]
        %v3109 = vld [vmem:[%s3065 + $0xac] sm:$0xf]
        %v3110 = vld [vmem:[%s3065 + $0xb0] sm:$0xf]
        %v3111 = vld [vmem:[%s3065 + $0xb4] sm:$0xf]
        %v3112 = vld [vmem:[%s3065 + $0xb8] sm:$0xf]
        %v3113 = vld [vmem:[%s3065 + $0xbc] sm:$0xf]
        %v3114 = vld [vmem:[%s3065 + $0xc0] sm:$0xf]
        %v3115 = vld [vmem:[%s3065 + $0xc4] sm:$0xf]
        %v3116 = vld [vmem:[%s3065 + $0xc8] sm:$0xf]
        %v3117 = vld [vmem:[%s3065 + $0xcc] sm:$0xf]
        %v3118 = vld [vmem:[%s3065 + $0xd0] sm:$0xf]
        %v3119 = vld [vmem:[%s3065 + $0xd4] sm:$0xf]
        %v3120 = vld [vmem:[%s3065 + $0xd8] sm:$0xf]
        %v3121 = vld [vmem:[%s3065 + $0xdc] sm:$0xf]
        %v3122 = vld [vmem:[%s3065 + $0xe0] sm:$0xf]
        %v3123 = vld [vmem:[%s3065 + $0xe4] sm:$0xf]
        %v3124 = vld [vmem:[%s3065 + $0xe8] sm:$0xf]
        %v3125 = vld [vmem:[%s3065 + $0xec] sm:$0xf]
        %v3126 = vld [vmem:[%s3065 + $0xf0] sm:$0xf]
        %v3127 = vld [vmem:[%s3065 + $0xf4] sm:$0xf]
        %v3128 = vld [vmem:[%s3065 + $0xf8] sm:$0xf]
        %v3129 = vld [vmem:[%s3065 + $0xfc] sm:$0xf]
        %v3194 = vunpack.c.l.b16 %v3066
        %v3195 = vunpack.c.l.b16 %v3067
        %v3196 = vunpack.c.l.b16 %v3068
        %v3197 = vunpack.c.l.b16 %v3069
        %v3198 = vunpack.c.l.b16 %v3070
        %v3199 = vunpack.c.l.b16 %v3071
        %v3200 = vunpack.c.l.b16 %v3072
        %v3201 = vunpack.c.l.b16 %v3073
        %v3202 = vunpack.c.l.b16 %v3074
        %v3203 = vunpack.c.l.b16 %v3075
        %v3204 = vunpack.c.l.b16 %v3076
        %v3205 = vunpack.c.l.b16 %v3077
        %v3206 = vunpack.c.l.b16 %v3078
        %v3207 = vunpack.c.l.b16 %v3079
        %v3208 = vunpack.c.l.b16 %v3080
        %v3209 = vunpack.c.l.b16 %v3081
        %v3210 = vunpack.c.l.b16 %v3082
        %v3211 = vunpack.c.l.b16 %v3083
        %v3212 = vunpack.c.l.b16 %v3084
        %v3213 = vunpack.c.l.b16 %v3085
        %v3214 = vunpack.c.l.b16 %v3086
        %v3215 = vunpack.c.l.b16 %v3087
        %v3216 = vunpack.c.l.b16 %v3088
        %v3217 = vunpack.c.l.b16 %v3089
        %v3218 = vunpack.c.l.b16 %v3090
        %v3219 = vunpack.c.l.b16 %v3091
        %v3220 = vunpack.c.l.b16 %v3092
        %v3221 = vunpack.c.l.b16 %v3093
        %v3222 = vunpack.c.l.b16 %v3094
        %v3223 = vunpack.c.l.b16 %v3095
        %v3224 = vunpack.c.l.b16 %v3096
        %v3225 = vunpack.c.l.b16 %v3097
        %v3226 = vunpack.c.l.b16 %v3098
        %v3227 = vunpack.c.l.b16 %v3099
        %v3228 = vunpack.c.l.b16 %v3100
        %v3229 = vunpack.c.l.b16 %v3101
        %v3230 = vunpack.c.l.b16 %v3102
        %v3231 = vunpack.c.l.b16 %v3103
        %v3232 = vunpack.c.l.b16 %v3104
        %v3233 = vunpack.c.l.b16 %v3105
        %v3234 = vunpack.c.l.b16 %v3106
        %v3235 = vunpack.c.l.b16 %v3107
        %v3236 = vunpack.c.l.b16 %v3108
        %v3237 = vunpack.c.l.b16 %v3109
        %v3238 = vunpack.c.l.b16 %v3110
        %v3239 = vunpack.c.l.b16 %v3111
        %v3240 = vunpack.c.l.b16 %v3112
        %v3241 = vunpack.c.l.b16 %v3113
        %v3242 = vunpack.c.l.b16 %v3114
        %v3243 = vunpack.c.l.b16 %v3115
        %v3244 = vunpack.c.l.b16 %v3116
        %v3245 = vunpack.c.l.b16 %v3117
        %v3246 = vunpack.c.l.b16 %v3118
        %v3247 = vunpack.c.l.b16 %v3119
        %v3248 = vunpack.c.l.b16 %v3120
        %v3249 = vunpack.c.l.b16 %v3121
        %v3250 = vunpack.c.l.b16 %v3122
        %v3251 = vunpack.c.l.b16 %v3123
        %v3252 = vunpack.c.l.b16 %v3124
        %v3253 = vunpack.c.l.b16 %v3125
        %v3254 = vunpack.c.l.b16 %v3126
        %v3255 = vunpack.c.l.b16 %v3127
        %v3256 = vunpack.c.l.b16 %v3128
        %v3257 = vunpack.c.l.b16 %v3129
        %v3258 = vpack.c.b16 %v3195, %v3194
        %v3259 = vpack.c.b16 %v3197, %v3196
        %v3260 = vpack.c.b16 %v3199, %v3198
        %v3261 = vpack.c.b16 %v3201, %v3200
        %v3262 = vpack.c.b16 %v3203, %v3202
        %v3263 = vpack.c.b16 %v3205, %v3204
        %v3264 = vpack.c.b16 %v3207, %v3206
        %v3265 = vpack.c.b16 %v3209, %v3208
        %v3266 = vpack.c.b16 %v3211, %v3210
        %v3267 = vpack.c.b16 %v3213, %v3212
        %v3268 = vpack.c.b16 %v3215, %v3214
        %v3269 = vpack.c.b16 %v3217, %v3216
        %v3270 = vpack.c.b16 %v3219, %v3218
        %v3271 = vpack.c.b16 %v3221, %v3220
        %v3272 = vpack.c.b16 %v3223, %v3222
        %v3273 = vpack.c.b16 %v3225, %v3224
        %v3274 = vpack.c.b16 %v3227, %v3226
        %v3275 = vpack.c.b16 %v3229, %v3228
        %v3276 = vpack.c.b16 %v3231, %v3230
        %v3277 = vpack.c.b16 %v3233, %v3232
        %v3278 = vpack.c.b16 %v3235, %v3234
        %v3279 = vpack.c.b16 %v3237, %v3236
        %v3280 = vpack.c.b16 %v3239, %v3238
        %v3281 = vpack.c.b16 %v3241, %v3240
        %v3282 = vpack.c.b16 %v3243, %v3242
        %v3283 = vpack.c.b16 %v3245, %v3244
        %v3284 = vpack.c.b16 %v3247, %v3246
        %v3285 = vpack.c.b16 %v3249, %v3248
        %v3286 = vpack.c.b16 %v3251, %v3250
        %v3287 = vpack.c.b16 %v3253, %v3252
        %v3288 = vpack.c.b16 %v3255, %v3254
        %v3289 = vpack.c.b16 %v3257, %v3256
        %3322 = vmatprep.subr.bf16.mxu0 0
        %3323 = vmatpush1.bf16.msra.mxu0 %v1540
        %3324 = vmatprep.subr.bf16.mxu0 0
        %3325 = vmatpush1.bf16.msra.mxu0 %v1541
        %3326 = vmatprep.subr.bf16.mxu0 0
        %3327 = vmatpush1.bf16.msra.mxu0 %v1542
        %3328 = vmatprep.subr.bf16.mxu0 0
        %3329 = vmatpush1.bf16.msra.mxu0 %v1543
        %3330 = vmatprep.subr.bf16.mxu0 0
        %3331 = vmatpush1.bf16.msra.mxu0 %v1544
        %3332 = vmatprep.subr.bf16.mxu0 0
        %3333 = vmatpush1.bf16.msra.mxu0 %v1545
        %3334 = vmatprep.subr.bf16.mxu0 0
        %3335 = vmatpush1.bf16.msra.mxu0 %v1546
        %3336 = vmatprep.subr.bf16.mxu0 0
        %3337 = vmatpush1.bf16.msra.mxu0 %v1547
        %3338 = vmatprep.subr.bf16.mxu0 0
        %3339 = vmatpush1.bf16.msra.mxu0 0
        %3340 = vmatprep.subr.bf16.mxu0 0
        %3341 = vmatpush1.bf16.msra.mxu0 0
        %3342 = vmatprep.subr.bf16.mxu0 0
        %3343 = vmatpush1.bf16.msra.mxu0 0
        %3344 = vmatprep.subr.bf16.mxu0 0
        %3345 = vmatpush1.bf16.msra.mxu0 0
        %3346 = vmatprep.subr.bf16.mxu0 0
        %3347 = vmatpush1.bf16.msra.mxu0 0
        %3348 = vmatprep.subr.bf16.mxu0 0
        %3349 = vmatpush1.bf16.msra.mxu0 0
        %3350 = vmatprep.subr.bf16.mxu0 0
        %3351 = vmatpush1.bf16.msra.mxu0 0
        %3352 = vmatprep.subr.bf16.mxu0 0
        %3353 = vmatpush1.bf16.msra.mxu0 0
        %3354 = vmatprep.mubr.bf16.mxu0 0
        %3355 = vmatmul.mubr.bf16.gmra.mrb[0].mxu0 %v3258
        %v3356 = vpop.f32.mrb[0].mxu0
        %v3357 = vadd.f32 0.0, %v3356
        %v3358 = vpop.f32.mrb[0].mxu0
        %v3359 = vpop.f32.mrb[0].mxu0
        %v3360 = vadd.f32 0.0, %v3359
        %v3361 = vpop.f32.mrb[0].mxu0
        %3362 = vmatprep.mubr.bf16.mxu0 0
        %3363 = vmatmul.mubr.bf16.gmra.mrb[0].mxu0 %v3259
        %v3364 = vpop.f32.mrb[0].mxu0
        %v3365 = vadd.f32 0.0, %v3364
        %v3366 = vpop.f32.mrb[0].mxu0
        %v3367 = vpop.f32.mrb[0].mxu0
        %v3368 = vadd.f32 0.0, %v3367
        %v3369 = vpop.f32.mrb[0].mxu0
        %3370 = vmatprep.mubr.bf16.mxu0 0
        %3371 = vmatmul.mubr.bf16.gmra.mrb[0].mxu0 %v3260
        %v3372 = vpop.f32.mrb[0].mxu0
        %v3373 = vadd.f32 0.0, %v3372
        %v3374 = vpop.f32.mrb[0].mxu0
        %v3375 = vpop.f32.mrb[0].mxu0
        %v3376 = vadd.f32 0.0, %v3375
        %v3377 = vpop.f32.mrb[0].mxu0
        %3378 = vmatprep.mubr.bf16.mxu0 0
        %3379 = vmatmul.mubr.bf16.gmra.mrb[0].mxu0 %v3261
        %v3380 = vpop.f32.mrb[0].mxu0
        %v3381 = vadd.f32 0.0, %v3380
        %v3382 = vpop.f32.mrb[0].mxu0
        %v3383 = vpop.f32.mrb[0].mxu0
        %v3384 = vadd.f32 0.0, %v3383
        %v3385 = vpop.f32.mrb[0].mxu0
        %3386 = vmatprep.mubr.bf16.mxu0 0
        %3387 = vmatmul.mubr.bf16.gmra.mrb[0].mxu0 %v3262
        %v3388 = vpop.f32.mrb[0].mxu0
        %v3389 = vadd.f32 0.0, %v3388
        %v3390 = vpop.f32.mrb[0].mxu0
        %v3391 = vpop.f32.mrb[0].mxu0
        %v3392 = vadd.f32 0.0, %v3391
        %v3393 = vpop.f32.mrb[0].mxu0
        %3394 = vmatprep.mubr.bf16.mxu0 0
        %3395 = vmatmul.mubr.bf16.gmra.mrb[0].mxu0 %v3263
        %v3396 = vpop.f32.mrb[0].mxu0
        %v3397 = vadd.f32 0.0, %v3396
        %v3398 = vpop.f32.mrb[0].mxu0
        %v3399 = vpop.f32.mrb[0].mxu0
        %v3400 = vadd.f32 0.0, %v3399
        %v3401 = vpop.f32.mrb[0].mxu0
        %3402 = vmatprep.mubr.bf16.mxu0 0
        %3403 = vmatmul.mubr.bf16.gmra.mrb[0].mxu0 %v3264
        %v3404 = vpop.f32.mrb[0].mxu0
        %v3405 = vadd.f32 0.0, %v3404
        %v3406 = vpop.f32.mrb[0].mxu0
        %v3407 = vpop.f32.mrb[0].mxu0
        %v3408 = vadd.f32 0.0, %v3407
        %v3409 = vpop.f32.mrb[0].mxu0
        %3410 = vmatprep.mubr.bf16.mxu0 0
        %3411 = vmatmul.mubr.bf16.gmra.mrb[0].mxu0 %v3265
        %v3412 = vpop.f32.mrb[0].mxu0
        %v3413 = vadd.f32 0.0, %v3412
        %v3414 = vpop.f32.mrb[0].mxu0
        %v3415 = vpop.f32.mrb[0].mxu0
        %v3416 = vadd.f32 0.0, %v3415
        %v3417 = vpop.f32.mrb[0].mxu0
        %3418 = vmatprep.mubr.bf16.mxu0 0
        %3419 = vmatmul.mubr.bf16.gmra.mrb[0].mxu0 %v3266
        %v3420 = vpop.f32.mrb[0].mxu0
        %v3421 = vadd.f32 0.0, %v3420
        %v3422 = vpop.f32.mrb[0].mxu0
        %v3423 = vpop.f32.mrb[0].mxu0
        %v3424 = vadd.f32 0.0, %v3423
        %v3425 = vpop.f32.mrb[0].mxu0
        %3426 = vmatprep.mubr.bf16.mxu0 0
        %3427 = vmatmul.mubr.bf16.gmra.mrb[0].mxu0 %v3267
        %v3428 = vpop.f32.mrb[0].mxu0
        %v3429 = vadd.f32 0.0, %v3428
        %v3430 = vpop.f32.mrb[0].mxu0
        %v3431 = vpop.f32.mrb[0].mxu0
        %v3432 = vadd.f32 0.0, %v3431
        %v3433 = vpop.f32.mrb[0].mxu0
        %3434 = vmatprep.mubr.bf16.mxu0 0
        %3435 = vmatmul.mubr.bf16.gmra.mrb[0].mxu0 %v3268
        %v3436 = vpop.f32.mrb[0].mxu0
        %v3437 = vadd.f32 0.0, %v3436
        %v3438 = vpop.f32.mrb[0].mxu0
        %v3439 = vpop.f32.mrb[0].mxu0
        %v3440 = vadd.f32 0.0, %v3439
        %v3441 = vpop.f32.mrb[0].mxu0
        %3442 = vmatprep.mubr.bf16.mxu0 0
        %3443 = vmatmul.mubr.bf16.gmra.mrb[0].mxu0 %v3269
        %v3444 = vpop.f32.mrb[0].mxu0
        %v3445 = vadd.f32 0.0, %v3444
        %v3446 = vpop.f32.mrb[0].mxu0
        %v3447 = vpop.f32.mrb[0].mxu0
        %v3448 = vadd.f32 0.0, %v3447
        %v3449 = vpop.f32.mrb[0].mxu0
        %3450 = vmatprep.mubr.bf16.mxu0 0
        %3451 = vmatmul.mubr.bf16.gmra.mrb[0].mxu0 %v3270
        %v3452 = vpop.f32.mrb[0].mxu0
        %v3453 = vadd.f32 0.0, %v3452
        %v3454 = vpop.f32.mrb[0].mxu0
        %v3455 = vpop.f32.mrb[0].mxu0
        %v3456 = vadd.f32 0.0, %v3455
        %v3457 = vpop.f32.mrb[0].mxu0
        %3458 = vmatprep.mubr.bf16.mxu0 0
        %3459 = vmatmul.mubr.bf16.gmra.mrb[0].mxu0 %v3271
        %v3460 = vpop.f32.mrb[0].mxu0
        %v3461 = vadd.f32 0.0, %v3460
        %v3462 = vpop.f32.mrb[0].mxu0
        %v3463 = vpop.f32.mrb[0].mxu0
        %v3464 = vadd.f32 0.0, %v3463
        %v3465 = vpop.f32.mrb[0].mxu0
        %3466 = vmatprep.mubr.bf16.mxu0 0
        %3467 = vmatmul.mubr.bf16.gmra.mrb[0].mxu0 %v3272
        %v3468 = vpop.f32.mrb[0].mxu0
        %v3469 = vadd.f32 0.0, %v3468
        %v3470 = vpop.f32.mrb[0].mxu0
        %v3471 = vpop.f32.mrb[0].mxu0
        %v3472 = vadd.f32 0.0, %v3471
        %v3473 = vpop.f32.mrb[0].mxu0
        %3474 = vmatprep.mubr.bf16.mxu0 0
        %3475 = vmatmul.mubr.bf16.gmra.mrb[0].mxu0 %v3273
        %v3476 = vpop.f32.mrb[0].mxu0
        %v3477 = vadd.f32 0.0, %v3476
        %v3478 = vpop.f32.mrb[0].mxu0
        %v3479 = vpop.f32.mrb[0].mxu0
        %v3480 = vadd.f32 0.0, %v3479
        %v3481 = vpop.f32.mrb[0].mxu0
        %3482 = vmatprep.mubr.bf16.mxu0 0
        %3483 = vmatmul.mubr.bf16.gmra.mrb[0].mxu0 %v3274
        %v3484 = vpop.f32.mrb[0].mxu0
        %v3485 = vadd.f32 0.0, %v3484
        %v3486 = vpop.f32.mrb[0].mxu0
        %v3487 = vpop.f32.mrb[0].mxu0
        %v3488 = vadd.f32 0.0, %v3487
        %v3489 = vpop.f32.mrb[0].mxu0
        %3490 = vmatprep.mubr.bf16.mxu0 0
        %3491 = vmatmul.mubr.bf16.gmra.mrb[0].mxu0 %v3275
        %v3492 = vpop.f32.mrb[0].mxu0
        %v3493 = vadd.f32 0.0, %v3492
        %v3494 = vpop.f32.mrb[0].mxu0
        %v3495 = vpop.f32.mrb[0].mxu0
        %v3496 = vadd.f32 0.0, %v3495
        %v3497 = vpop.f32.mrb[0].mxu0
        %3498 = vmatprep.mubr.bf16.mxu0 0
        %3499 = vmatmul.mubr.bf16.gmra.mrb[0].mxu0 %v3276
        %v3500 = vpop.f32.mrb[0].mxu0
        %v3501 = vadd.f32 0.0, %v3500
        %v3502 = vpop.f32.mrb[0].mxu0
        %v3503 = vpop.f32.mrb[0].mxu0
        %v3504 = vadd.f32 0.0, %v3503
        %v3505 = vpop.f32.mrb[0].mxu0
        %3506 = vmatprep.mubr.bf16.mxu0 0
        %3507 = vmatmul.mubr.bf16.gmra.mrb[0].mxu0 %v3277
        %v3508 = vpop.f32.mrb[0].mxu0
        %v3509 = vadd.f32 0.0, %v3508
        %v3510 = vpop.f32.mrb[0].mxu0
        %v3511 = vpop.f32.mrb[0].mxu0
        %v3512 = vadd.f32 0.0, %v3511
        %v3513 = vpop.f32.mrb[0].mxu0
        %3514 = vmatprep.mubr.bf16.mxu0 0
        %3515 = vmatmul.mubr.bf16.gmra.mrb[0].mxu0 %v3278
        %v3516 = vpop.f32.mrb[0].mxu0
        %v3517 = vadd.f32 0.0, %v3516
        %v3518 = vpop.f32.mrb[0].mxu0
        %v3519 = vpop.f32.mrb[0].mxu0
        %v3520 = vadd.f32 0.0, %v3519
        %v3521 = vpop.f32.mrb[0].mxu0
        %3522 = vmatprep.mubr.bf16.mxu0 0
        %3523 = vmatmul.mubr.bf16.gmra.mrb[0].mxu0 %v3279
        %v3524 = vpop.f32.mrb[0].mxu0
        %v3525 = vadd.f32 0.0, %v3524
        %v3526 = vpop.f32.mrb[0].mxu0
        %v3527 = vpop.f32.mrb[0].mxu0
        %v3528 = vadd.f32 0.0, %v3527
        %v3529 = vpop.f32.mrb[0].mxu0
        %3530 = vmatprep.mubr.bf16.mxu0 0
        %3531 = vmatmul.mubr.bf16.gmra.mrb[0].mxu0 %v3280
        %v3532 = vpop.f32.mrb[0].mxu0
        %v3533 = vadd.f32 0.0, %v3532
        %v3534 = vpop.f32.mrb[0].mxu0
        %v3535 = vpop.f32.mrb[0].mxu0
        %v3536 = vadd.f32 0.0, %v3535
        %v3537 = vpop.f32.mrb[0].mxu0
        %3538 = vmatprep.mubr.bf16.mxu0 0
        %3539 = vmatmul.mubr.bf16.gmra.mrb[0].mxu0 %v3281
        %v3540 = vpop.f32.mrb[0].mxu0
        %v3541 = vadd.f32 0.0, %v3540
        %v3542 = vpop.f32.mrb[0].mxu0
        %v3543 = vpop.f32.mrb[0].mxu0
        %v3544 = vadd.f32 0.0, %v3543
        %v3545 = vpop.f32.mrb[0].mxu0
        %3546 = vmatprep.mubr.bf16.mxu0 0
        %3547 = vmatmul.mubr.bf16.gmra.mrb[0].mxu0 %v3282
        %v3548 = vpop.f32.mrb[0].mxu0
        %v3549 = vadd.f32 0.0, %v3548
        %v3550 = vpop.f32.mrb[0].mxu0
        %v3551 = vpop.f32.mrb[0].mxu0
        %v3552 = vadd.f32 0.0, %v3551
        %v3553 = vpop.f32.mrb[0].mxu0
        %3554 = vmatprep.mubr.bf16.mxu0 0
        %3555 = vmatmul.mubr.bf16.gmra.mrb[0].mxu0 %v3283
        %v3556 = vpop.f32.mrb[0].mxu0
        %v3557 = vadd.f32 0.0, %v3556
        %v3558 = vpop.f32.mrb[0].mxu0
        %v3559 = vpop.f32.mrb[0].mxu0
        %v3560 = vadd.f32 0.0, %v3559
        %v3561 = vpop.f32.mrb[0].mxu0
        %3562 = vmatprep.mubr.bf16.mxu0 0
        %3563 = vmatmul.mubr.bf16.gmra.mrb[0].mxu0 %v3284
        %v3564 = vpop.f32.mrb[0].mxu0
        %v3565 = vadd.f32 0.0, %v3564
        %v3566 = vpop.f32.mrb[0].mxu0
        %v3567 = vpop.f32.mrb[0].mxu0
        %v3568 = vadd.f32 0.0, %v3567
        %v3569 = vpop.f32.mrb[0].mxu0
        %3570 = vmatprep.mubr.bf16.mxu0 0
        %3571 = vmatmul.mubr.bf16.gmra.mrb[0].mxu0 %v3285
        %v3572 = vpop.f32.mrb[0].mxu0
        %v3573 = vadd.f32 0.0, %v3572
        %v3574 = vpop.f32.mrb[0].mxu0
        %v3575 = vpop.f32.mrb[0].mxu0
        %v3576 = vadd.f32 0.0, %v3575
        %v3577 = vpop.f32.mrb[0].mxu0
        %3578 = vmatprep.mubr.bf16.mxu0 0
        %3579 = vmatmul.mubr.bf16.gmra.mrb[0].mxu0 %v3286
        %v3580 = vpop.f32.mrb[0].mxu0
        %v3581 = vadd.f32 0.0, %v3580
        %v3582 = vpop.f32.mrb[0].mxu0
        %v3583 = vpop.f32.mrb[0].mxu0
        %v3584 = vadd.f32 0.0, %v3583
        %v3585 = vpop.f32.mrb[0].mxu0
        %3586 = vmatprep.mubr.bf16.mxu0 0
        %3587 = vmatmul.mubr.bf16.gmra.mrb[0].mxu0 %v3287
        %v3588 = vpop.f32.mrb[0].mxu0
        %v3589 = vadd.f32 0.0, %v3588
        %v3590 = vpop.f32.mrb[0].mxu0
        %v3591 = vpop.f32.mrb[0].mxu0
        %v3592 = vadd.f32 0.0, %v3591
        %v3593 = vpop.f32.mrb[0].mxu0
        %3594 = vmatprep.mubr.bf16.mxu0 0
        %3595 = vmatmul.mubr.bf16.gmra.mrb[0].mxu0 %v3288
        %v3596 = vpop.f32.mrb[0].mxu0
        %v3597 = vadd.f32 0.0, %v3596
        %v3598 = vpop.f32.mrb[0].mxu0
        %v3599 = vpop.f32.mrb[0].mxu0
        %v3600 = vadd.f32 0.0, %v3599
        %v3601 = vpop.f32.mrb[0].mxu0
        %3602 = vmatprep.mubr.bf16.mxu0 0
        %3603 = vmatmul.mubr.bf16.gmra.mrb[0].mxu0 %v3289
        %v3604 = vpop.f32.mrb[0].mxu0
        %v3605 = vadd.f32 0.0, %v3604
        %v3606 = vpop.f32.mrb[0].mxu0
        %v3607 = vpop.f32.mrb[0].mxu0
        %v3608 = vadd.f32 0.0, %v3607
        %v3609 = vpop.f32.mrb[0].mxu0
        %3610 = vdwg.mxu0
        %v3611 = vmax.f32 %v3001, %v3357
        %v3612 = vmax.f32 %v3002, %v3360
        %v3613 = vmax.f32 %v3003, %v3365
        %v3614 = vmax.f32 %v3004, %v3368
        %v3615 = vmax.f32 %v3005, %v3373
        %v3616 = vmax.f32 %v3006, %v3376
        %v3617 = vmax.f32 %v3007, %v3381
        %v3618 = vmax.f32 %v3008, %v3384
        %v3619 = vmax.f32 %v3009, %v3389
        %v3620 = vmax.f32 %v3010, %v3392
        %v3621 = vmax.f32 %v3011, %v3397
        %v3622 = vmax.f32 %v3012, %v3400
        %v3623 = vmax.f32 %v3013, %v3405
        %v3624 = vmax.f32 %v3014, %v3408
        %v3625 = vmax.f32 %v3015, %v3413
        %v3626 = vmax.f32 %v3016, %v3416
        %v3627 = vmax.f32 %v3017, %v3421
        %v3628 = vmax.f32 %v3018, %v3424
        %v3629 = vmax.f32 %v3019, %v3429
        %v3630 = vmax.f32 %v3020, %v3432
        %v3631 = vmax.f32 %v3021, %v3437
        %v3632 = vmax.f32 %v3022, %v3440
        %v3633 = vmax.f32 %v3023, %v3445
        %v3634 = vmax.f32 %v3024, %v3448
        %v3635 = vmax.f32 %v3025, %v3453
        %v3636 = vmax.f32 %v3026, %v3456
        %v3637 = vmax.f32 %v3027, %v3461
        %v3638 = vmax.f32 %v3028, %v3464
        %v3639 = vmax.f32 %v3029, %v3469
        %v3640 = vmax.f32 %v3030, %v3472
        %v3641 = vmax.f32 %v3031, %v3477
        %v3642 = vmax.f32 %v3032, %v3480
        %v3643 = vmax.f32 %v3033, %v3485
        %v3644 = vmax.f32 %v3034, %v3488
        %v3645 = vmax.f32 %v3035, %v3493
        %v3646 = vmax.f32 %v3036, %v3496
        %v3647 = vmax.f32 %v3037, %v3501
        %v3648 = vmax.f32 %v3038, %v3504
        %v3649 = vmax.f32 %v3039, %v3509
        %v3650 = vmax.f32 %v3040, %v3512
        %v3651 = vmax.f32 %v3041, %v3517
        %v3652 = vmax.f32 %v3042, %v3520
        %v3653 = vmax.f32 %v3043, %v3525
        %v3654 = vmax.f32 %v3044, %v3528
        %v3655 = vmax.f32 %v3045, %v3533
        %v3656 = vmax.f32 %v3046, %v3536
        %v3657 = vmax.f32 %v3047, %v3541
        %v3658 = vmax.f32 %v3048, %v3544
        %v3659 = vmax.f32 %v3049, %v3549
        %v3660 = vmax.f32 %v3050, %v3552
        %v3661 = vmax.f32 %v3051, %v3557
        %v3662 = vmax.f32 %v3052, %v3560
        %v3663 = vmax.f32 %v3053, %v3565
        %v3664 = vmax.f32 %v3054, %v3568
        %v3665 = vmax.f32 %v3055, %v3573
        %v3666 = vmax.f32 %v3056, %v3576
        %v3667 = vmax.f32 %v3057, %v3581
        %v3668 = vmax.f32 %v3058, %v3584
        %v3669 = vmax.f32 %v3059, %v3589
        %v3670 = vmax.f32 %v3060, %v3592
        %v3671 = vmax.f32 %v3061, %v3597
        %v3672 = vmax.f32 %v3062, %v3600
        %v3673 = vmax.f32 %v3063, %v3605
        %v3674 = vmax.f32 %v3064, %v3608
        %v3675 = vld [vmem:[%s2] sm:$0x1]
        %v3677 = vlaneseq
        %v3678 = vshrl.u32 %v3677, 7
        %v3679 = vsub.s32 0, %v3678
        %v3680 = vrot.slane %v3675, %v3679
        %v3682 = vadd.f32 %v3611, %v3680
        %v3683 = vadd.f32 %v3612, %v3680
        %v3684 = vadd.f32 %v3613, %v3680
        %v3685 = vadd.f32 %v3614, %v3680
        %v3686 = vadd.f32 %v3615, %v3680
        %v3687 = vadd.f32 %v3616, %v3680
        %v3688 = vadd.f32 %v3617, %v3680
        %v3689 = vadd.f32 %v3618, %v3680
        %v3690 = vadd.f32 %v3619, %v3680
        %v3691 = vadd.f32 %v3620, %v3680
        %v3692 = vadd.f32 %v3621, %v3680
        %v3693 = vadd.f32 %v3622, %v3680
        %v3694 = vadd.f32 %v3623, %v3680
        %v3695 = vadd.f32 %v3624, %v3680
        %v3696 = vadd.f32 %v3625, %v3680
        %v3697 = vadd.f32 %v3626, %v3680
        %v3698 = vadd.f32 %v3627, %v3680
        %v3699 = vadd.f32 %v3628, %v3680
        %v3700 = vadd.f32 %v3629, %v3680
        %v3701 = vadd.f32 %v3630, %v3680
        %v3702 = vadd.f32 %v3631, %v3680
        %v3703 = vadd.f32 %v3632, %v3680
        %v3704 = vadd.f32 %v3633, %v3680
        %v3705 = vadd.f32 %v3634, %v3680
        %v3706 = vadd.f32 %v3635, %v3680
        %v3707 = vadd.f32 %v3636, %v3680
        %v3708 = vadd.f32 %v3637, %v3680
        %v3709 = vadd.f32 %v3638, %v3680
        %v3710 = vadd.f32 %v3639, %v3680
        %v3711 = vadd.f32 %v3640, %v3680
        %v3712 = vadd.f32 %v3641, %v3680
        %v3713 = vadd.f32 %v3642, %v3680
        %v3714 = vadd.f32 %v3643, %v3680
        %v3715 = vadd.f32 %v3644, %v3680
        %v3716 = vadd.f32 %v3645, %v3680
        %v3717 = vadd.f32 %v3646, %v3680
        %v3718 = vadd.f32 %v3647, %v3680
        %v3719 = vadd.f32 %v3648, %v3680
        %v3720 = vadd.f32 %v3649, %v3680
        %v3721 = vadd.f32 %v3650, %v3680
        %v3722 = vadd.f32 %v3651, %v3680
        %v3723 = vadd.f32 %v3652, %v3680
        %v3724 = vadd.f32 %v3653, %v3680
        %v3725 = vadd.f32 %v3654, %v3680
        %v3726 = vadd.f32 %v3655, %v3680
        %v3727 = vadd.f32 %v3656, %v3680
        %v3728 = vadd.f32 %v3657, %v3680
        %v3729 = vadd.f32 %v3658, %v3680
        %v3730 = vadd.f32 %v3659, %v3680
        %v3731 = vadd.f32 %v3660, %v3680
        %v3732 = vadd.f32 %v3661, %v3680
        %v3733 = vadd.f32 %v3662, %v3680
        %v3734 = vadd.f32 %v3663, %v3680
        %v3735 = vadd.f32 %v3664, %v3680
        %v3736 = vadd.f32 %v3665, %v3680
        %v3737 = vadd.f32 %v3666, %v3680
        %v3738 = vadd.f32 %v3667, %v3680
        %v3739 = vadd.f32 %v3668, %v3680
        %v3740 = vadd.f32 %v3669, %v3680
        %v3741 = vadd.f32 %v3670, %v3680
        %v3742 = vadd.f32 %v3671, %v3680
        %v3743 = vadd.f32 %v3672, %v3680
        %v3744 = vadd.f32 %v3673, %v3680
        %v3745 = vadd.f32 %v3674, %v3680
        %v3746 = vmax.f32 %v3682, 0.0
        %v3747 = vmax.f32 %v3683, 0.0
        %v3748 = vmax.f32 %v3684, 0.0
        %v3749 = vmax.f32 %v3685, 0.0
        %v3750 = vmax.f32 %v3686, 0.0
        %v3751 = vmax.f32 %v3687, 0.0
        %v3752 = vmax.f32 %v3688, 0.0
        %v3753 = vmax.f32 %v3689, 0.0
        %v3754 = vmax.f32 %v3690, 0.0
        %v3755 = vmax.f32 %v3691, 0.0
        %v3756 = vmax.f32 %v3692, 0.0
        %v3757 = vmax.f32 %v3693, 0.0
        %v3758 = vmax.f32 %v3694, 0.0
        %v3759 = vmax.f32 %v3695, 0.0
        %v3760 = vmax.f32 %v3696, 0.0
        %v3761 = vmax.f32 %v3697, 0.0
        %v3762 = vmax.f32 %v3698, 0.0
        %v3763 = vmax.f32 %v3699, 0.0
        %v3764 = vmax.f32 %v3700, 0.0
        %v3765 = vmax.f32 %v3701, 0.0
        %v3766 = vmax.f32 %v3702, 0.0
        %v3767 = vmax.f32 %v3703, 0.0
        %v3768 = vmax.f32 %v3704, 0.0
        %v3769 = vmax.f32 %v3705, 0.0
        %v3770 = vmax.f32 %v3706, 0.0
        %v3771 = vmax.f32 %v3707, 0.0
        %v3772 = vmax.f32 %v3708, 0.0
        %v3773 = vmax.f32 %v3709, 0.0
        %v3774 = vmax.f32 %v3710, 0.0
        %v3775 = vmax.f32 %v3711, 0.0
        %v3776 = vmax.f32 %v3712, 0.0
        %v3777 = vmax.f32 %v3713, 0.0
        %v3778 = vmax.f32 %v3714, 0.0
        %v3779 = vmax.f32 %v3715, 0.0
        %v3780 = vmax.f32 %v3716, 0.0
        %v3781 = vmax.f32 %v3717, 0.0
        %v3782 = vmax.f32 %v3718, 0.0
        %v3783 = vmax.f32 %v3719, 0.0
        %v3784 = vmax.f32 %v3720, 0.0
        %v3785 = vmax.f32 %v3721, 0.0
        %v3786 = vmax.f32 %v3722, 0.0
        %v3787 = vmax.f32 %v3723, 0.0
        %v3788 = vmax.f32 %v3724, 0.0
        %v3789 = vmax.f32 %v3725, 0.0
        %v3790 = vmax.f32 %v3726, 0.0
        %v3791 = vmax.f32 %v3727, 0.0
        %v3792 = vmax.f32 %v3728, 0.0
        %v3793 = vmax.f32 %v3729, 0.0
        %v3794 = vmax.f32 %v3730, 0.0
        %v3795 = vmax.f32 %v3731, 0.0
        %v3796 = vmax.f32 %v3732, 0.0
        %v3797 = vmax.f32 %v3733, 0.0
        %v3798 = vmax.f32 %v3734, 0.0
        %v3799 = vmax.f32 %v3735, 0.0
        %v3800 = vmax.f32 %v3736, 0.0
        %v3801 = vmax.f32 %v3737, 0.0
        %v3802 = vmax.f32 %v3738, 0.0
        %v3803 = vmax.f32 %v3739, 0.0
        %v3804 = vmax.f32 %v3740, 0.0
        %v3805 = vmax.f32 %v3741, 0.0
        %v3806 = vmax.f32 %v3742, 0.0
        %v3807 = vmax.f32 %v3743, 0.0
        %v3808 = vmax.f32 %v3744, 0.0
        %v3809 = vmax.f32 %v3745, 0.0
        %v3810 = vpack.c.bf16 %v3747, %v3746
        %v3811 = vpack.c.bf16 %v3749, %v3748
        %v3812 = vpack.c.bf16 %v3751, %v3750
        %v3813 = vpack.c.bf16 %v3753, %v3752
        %v3814 = vpack.c.bf16 %v3755, %v3754
        %v3815 = vpack.c.bf16 %v3757, %v3756
        %v3816 = vpack.c.bf16 %v3759, %v3758
        %v3817 = vpack.c.bf16 %v3761, %v3760
        %v3818 = vpack.c.bf16 %v3763, %v3762
        %v3819 = vpack.c.bf16 %v3765, %v3764
        %v3820 = vpack.c.bf16 %v3767, %v3766
        %v3821 = vpack.c.bf16 %v3769, %v3768
        %v3822 = vpack.c.bf16 %v3771, %v3770
        %v3823 = vpack.c.bf16 %v3773, %v3772
        %v3824 = vpack.c.bf16 %v3775, %v3774
        %v3825 = vpack.c.bf16 %v3777, %v3776
        %v3826 = vpack.c.bf16 %v3779, %v3778
        %v3827 = vpack.c.bf16 %v3781, %v3780
        %v3828 = vpack.c.bf16 %v3783, %v3782
        %v3829 = vpack.c.bf16 %v3785, %v3784
        %v3830 = vpack.c.bf16 %v3787, %v3786
        %v3831 = vpack.c.bf16 %v3789, %v3788
        %v3832 = vpack.c.bf16 %v3791, %v3790
        %v3833 = vpack.c.bf16 %v3793, %v3792
        %v3834 = vpack.c.bf16 %v3795, %v3794
        %v3835 = vpack.c.bf16 %v3797, %v3796
        %v3836 = vpack.c.bf16 %v3799, %v3798
        %v3837 = vpack.c.bf16 %v3801, %v3800
        %v3838 = vpack.c.bf16 %v3803, %v3802
        %v3839 = vpack.c.bf16 %v3805, %v3804
        %v3840 = vpack.c.bf16 %v3807, %v3806
        %v3841 = vpack.c.bf16 %v3809, %v3808
        %v3874 = vunpack.c.l.b16 %v3810
        %v3875 = vunpack.c.h.b16 %v3810
        %v3876 = vunpack.c.l.b16 %v3811
        %v3877 = vunpack.c.h.b16 %v3811
        %v3878 = vunpack.c.l.b16 %v3812
        %v3879 = vunpack.c.h.b16 %v3812
        %v3880 = vunpack.c.l.b16 %v3813
        %v3881 = vunpack.c.h.b16 %v3813
        %v3882 = vunpack.c.l.b16 %v3814
        %v3883 = vunpack.c.h.b16 %v3814
        %v3884 = vunpack.c.l.b16 %v3815
        %v3885 = vunpack.c.h.b16 %v3815
        %v3886 = vunpack.c.l.b16 %v3816
        %v3887 = vunpack.c.h.b16 %v3816
        %v3888 = vunpack.c.l.b16 %v3817
        %v3889 = vunpack.c.h.b16 %v3817
        %v3890 = vunpack.c.l.b16 %v3818
        %v3891 = vunpack.c.h.b16 %v3818
        %v3892 = vunpack.c.l.b16 %v3819
        %v3893 = vunpack.c.h.b16 %v3819
        %v3894 = vunpack.c.l.b16 %v3820
        %v3895 = vunpack.c.h.b16 %v3820
        %v3896 = vunpack.c.l.b16 %v3821
        %v3897 = vunpack.c.h.b16 %v3821
        %v3898 = vunpack.c.l.b16 %v3822
        %v3899 = vunpack.c.h.b16 %v3822
        %v3900 = vunpack.c.l.b16 %v3823
        %v3901 = vunpack.c.h.b16 %v3823
        %v3902 = vunpack.c.l.b16 %v3824
        %v3903 = vunpack.c.h.b16 %v3824
        %v3904 = vunpack.c.l.b16 %v3825
        %v3905 = vunpack.c.h.b16 %v3825
        %v3906 = vunpack.c.l.b16 %v3826
        %v3907 = vunpack.c.h.b16 %v3826
        %v3908 = vunpack.c.l.b16 %v3827
        %v3909 = vunpack.c.h.b16 %v3827
        %v3910 = vunpack.c.l.b16 %v3828
        %v3911 = vunpack.c.h.b16 %v3828
        %v3912 = vunpack.c.l.b16 %v3829
        %v3913 = vunpack.c.h.b16 %v3829
        %v3914 = vunpack.c.l.b16 %v3830
        %v3915 = vunpack.c.h.b16 %v3830
        %v3916 = vunpack.c.l.b16 %v3831
        %v3917 = vunpack.c.h.b16 %v3831
        %v3918 = vunpack.c.l.b16 %v3832
        %v3919 = vunpack.c.h.b16 %v3832
        %v3920 = vunpack.c.l.b16 %v3833
        %v3921 = vunpack.c.h.b16 %v3833
        %v3922 = vunpack.c.l.b16 %v3834
        %v3923 = vunpack.c.h.b16 %v3834
        %v3924 = vunpack.c.l.b16 %v3835
        %v3925 = vunpack.c.h.b16 %v3835
        %v3926 = vunpack.c.l.b16 %v3836
        %v3927 = vunpack.c.h.b16 %v3836
        %v3928 = vunpack.c.l.b16 %v3837
        %v3929 = vunpack.c.h.b16 %v3837
        %v3930 = vunpack.c.l.b16 %v3838
        %v3931 = vunpack.c.h.b16 %v3838
        %v3932 = vunpack.c.l.b16 %v3839
        %v3933 = vunpack.c.h.b16 %v3839
        %v3934 = vunpack.c.l.b16 %v3840
        %v3935 = vunpack.c.h.b16 %v3840
        %v3936 = vunpack.c.l.b16 %v3841
        %v3937 = vunpack.c.h.b16 %v3841
        %v3938 = vpack.c.b16 %v3874, %v3874
        %v3939 = vpack.c.b16 %v3875, %v3875
        %v3940 = vpack.c.b16 %v3876, %v3876
        %v3941 = vpack.c.b16 %v3877, %v3877
        %v3942 = vpack.c.b16 %v3878, %v3878
        %v3943 = vpack.c.b16 %v3879, %v3879
        %v3944 = vpack.c.b16 %v3880, %v3880
        %v3945 = vpack.c.b16 %v3881, %v3881
        %v3946 = vpack.c.b16 %v3882, %v3882
        %v3947 = vpack.c.b16 %v3883, %v3883
        %v3948 = vpack.c.b16 %v3884, %v3884
        %v3949 = vpack.c.b16 %v3885, %v3885
        %v3950 = vpack.c.b16 %v3886, %v3886
        %v3951 = vpack.c.b16 %v3887, %v3887
        %v3952 = vpack.c.b16 %v3888, %v3888
        %v3953 = vpack.c.b16 %v3889, %v3889
        %v3954 = vpack.c.b16 %v3890, %v3890
        %v3955 = vpack.c.b16 %v3891, %v3891
        %v3956 = vpack.c.b16 %v3892, %v3892
        %v3957 = vpack.c.b16 %v3893, %v3893
        %v3958 = vpack.c.b16 %v3894, %v3894
        %v3959 = vpack.c.b16 %v3895, %v3895
        %v3960 = vpack.c.b16 %v3896, %v3896
        %v3961 = vpack.c.b16 %v3897, %v3897
        %v3962 = vpack.c.b16 %v3898, %v3898
        %v3963 = vpack.c.b16 %v3899, %v3899
        %v3964 = vpack.c.b16 %v3900, %v3900
        %v3965 = vpack.c.b16 %v3901, %v3901
        %v3966 = vpack.c.b16 %v3902, %v3902
        %v3967 = vpack.c.b16 %v3903, %v3903
        %v3968 = vpack.c.b16 %v3904, %v3904
        %v3969 = vpack.c.b16 %v3905, %v3905
        %v3970 = vpack.c.b16 %v3906, %v3906
        %v3971 = vpack.c.b16 %v3907, %v3907
        %v3972 = vpack.c.b16 %v3908, %v3908
        %v3973 = vpack.c.b16 %v3909, %v3909
        %v3974 = vpack.c.b16 %v3910, %v3910
        %v3975 = vpack.c.b16 %v3911, %v3911
        %v3976 = vpack.c.b16 %v3912, %v3912
        %v3977 = vpack.c.b16 %v3913, %v3913
        %v3978 = vpack.c.b16 %v3914, %v3914
        %v3979 = vpack.c.b16 %v3915, %v3915
        %v3980 = vpack.c.b16 %v3916, %v3916
        %v3981 = vpack.c.b16 %v3917, %v3917
        %v3982 = vpack.c.b16 %v3918, %v3918
        %v3983 = vpack.c.b16 %v3919, %v3919
        %v3984 = vpack.c.b16 %v3920, %v3920
        %v3985 = vpack.c.b16 %v3921, %v3921
        %v3986 = vpack.c.b16 %v3922, %v3922
        %v3987 = vpack.c.b16 %v3923, %v3923
        %v3988 = vpack.c.b16 %v3924, %v3924
        %v3989 = vpack.c.b16 %v3925, %v3925
        %v3990 = vpack.c.b16 %v3926, %v3926
        %v3991 = vpack.c.b16 %v3927, %v3927
        %v3992 = vpack.c.b16 %v3928, %v3928
        %v3993 = vpack.c.b16 %v3929, %v3929
        %v3994 = vpack.c.b16 %v3930, %v3930
        %v3995 = vpack.c.b16 %v3931, %v3931
        %v3996 = vpack.c.b16 %v3932, %v3932
        %v3997 = vpack.c.b16 %v3933, %v3933
        %v3998 = vpack.c.b16 %v3934, %v3934
        %v3999 = vpack.c.b16 %v3935, %v3935
        %v4000 = vpack.c.b16 %v3936, %v3936
        %v4001 = vpack.c.b16 %v3937, %v3937
        %4066 = vst [vmem:[%s1233] sm:$0xf] %v3938
        %4067 = vst [vmem:[%s1233 + $0x4] sm:$0xf] %v3939
        %4068 = vst [vmem:[%s1233 + $0x8] sm:$0xf] %v3940
        %4069 = vst [vmem:[%s1233 + $0xc] sm:$0xf] %v3941
        %4070 = vst [vmem:[%s1233 + $0x10] sm:$0xf] %v3942
        %4071 = vst [vmem:[%s1233 + $0x14] sm:$0xf] %v3943
        %4072 = vst [vmem:[%s1233 + $0x18] sm:$0xf] %v3944
        %4073 = vst [vmem:[%s1233 + $0x1c] sm:$0xf] %v3945
        %4074 = vst [vmem:[%s1233 + $0x20] sm:$0xf] %v3946
        %4075 = vst [vmem:[%s1233 + $0x24] sm:$0xf] %v3947
        %4076 = vst [vmem:[%s1233 + $0x28] sm:$0xf] %v3948
        %4077 = vst [vmem:[%s1233 + $0x2c] sm:$0xf] %v3949
        %4078 = vst [vmem:[%s1233 + $0x30] sm:$0xf] %v3950
        %4079 = vst [vmem:[%s1233 + $0x34] sm:$0xf] %v3951
        %4080 = vst [vmem:[%s1233 + $0x38] sm:$0xf] %v3952
        %4081 = vst [vmem:[%s1233 + $0x3c] sm:$0xf] %v3953
        %4082 = vst [vmem:[%s1233 + $0x40] sm:$0xf] %v3954
        %4083 = vst [vmem:[%s1233 + $0x44] sm:$0xf] %v3955
        %4084 = vst [vmem:[%s1233 + $0x48] sm:$0xf] %v3956
        %4085 = vst [vmem:[%s1233 + $0x4c] sm:$0xf] %v3957
        %4086 = vst [vmem:[%s1233 + $0x50] sm:$0xf] %v3958
        %4087 = vst [vmem:[%s1233 + $0x54] sm:$0xf] %v3959
        %4088 = vst [vmem:[%s1233 + $0x58] sm:$0xf] %v3960
        %4089 = vst [vmem:[%s1233 + $0x5c] sm:$0xf] %v3961
        %4090 = vst [vmem:[%s1233 + $0x60] sm:$0xf] %v3962
        %4091 = vst [vmem:[%s1233 + $0x64] sm:$0xf] %v3963
        %4092 = vst [vmem:[%s1233 + $0x68] sm:$0xf] %v3964
        %4093 = vst [vmem:[%s1233 + $0x6c] sm:$0xf] %v3965
        %4094 = vst [vmem:[%s1233 + $0x70] sm:$0xf] %v3966
        %4095 = vst [vmem:[%s1233 + $0x74] sm:$0xf] %v3967
        %4096 = vst [vmem:[%s1233 + $0x78] sm:$0xf] %v3968
        %4097 = vst [vmem:[%s1233 + $0x7c] sm:$0xf] %v3969
        %4098 = vst [vmem:[%s1233 + $0x80] sm:$0xf] %v3970
        %4099 = vst [vmem:[%s1233 + $0x84] sm:$0xf] %v3971
        %4100 = vst [vmem:[%s1233 + $0x88] sm:$0xf] %v3972
        %4101 = vst [vmem:[%s1233 + $0x8c] sm:$0xf] %v3973
        %4102 = vst [vmem:[%s1233 + $0x90] sm:$0xf] %v3974
        %4103 = vst [vmem:[%s1233 + $0x94] sm:$0xf] %v3975
        %4104 = vst [vmem:[%s1233 + $0x98] sm:$0xf] %v3976
        %4105 = vst [vmem:[%s1233 + $0x9c] sm:$0xf] %v3977
        %4106 = vst [vmem:[%s1233 + $0xa0] sm:$0xf] %v3978
        %4107 = vst [vmem:[%s1233 + $0xa4] sm:$0xf] %v3979
        %4108 = vst [vmem:[%s1233 + $0xa8] sm:$0xf] %v3980
        %4109 = vst [vmem:[%s1233 + $0xac] sm:$0xf] %v3981
        %4110 = vst [vmem:[%s1233 + $0xb0] sm:$0xf] %v3982
        %4111 = vst [vmem:[%s1233 + $0xb4] sm:$0xf] %v3983
        %4112 = vst [vmem:[%s1233 + $0xb8] sm:$0xf] %v3984
        %4113 = vst [vmem:[%s1233 + $0xbc] sm:$0xf] %v3985
        %4114 = vst [vmem:[%s1233 + $0xc0] sm:$0xf] %v3986
        %4115 = vst [vmem:[%s1233 + $0xc4] sm:$0xf] %v3987
        %4116 = vst [vmem:[%s1233 + $0xc8] sm:$0xf] %v3988
        %4117 = vst [vmem:[%s1233 + $0xcc] sm:$0xf] %v3989
        %4118 = vst [vmem:[%s1233 + $0xd0] sm:$0xf] %v3990
        %4119 = vst [vmem:[%s1233 + $0xd4] sm:$0xf] %v3991
        %4120 = vst [vmem:[%s1233 + $0xd8] sm:$0xf] %v3992
        %4121 = vst [vmem:[%s1233 + $0xdc] sm:$0xf] %v3993
        %4122 = vst [vmem:[%s1233 + $0xe0] sm:$0xf] %v3994
        %4123 = vst [vmem:[%s1233 + $0xe4] sm:$0xf] %v3995
        %4124 = vst [vmem:[%s1233 + $0xe8] sm:$0xf] %v3996
        %4125 = vst [vmem:[%s1233 + $0xec] sm:$0xf] %v3997
        %4126 = vst [vmem:[%s1233 + $0xf0] sm:$0xf] %v3998
        %4127 = vst [vmem:[%s1233 + $0xf4] sm:$0xf] %v3999
        %4128 = vst [vmem:[%s1233 + $0xf8] sm:$0xf] %v4000
        %4129 = vst [vmem:[%s1233 + $0xfc] sm:$0xf] %v4001
        %s4130 = smul.u32 64, %s14
        %p4131 = scmp.lt.s32.totalorder %s4130, 127
        %s4132 = scalar_select %p4131, %s4130, 127
        %s4133 = smul.addr %s4132, 4
        %s4134 = scalar_lea.vmem %s3, %s4133
        // Predicated region
        $region74: #{cnn_cifar_global_forward.3} parent=68 // pred_check
          %p4135 = pneg %p100
        $region75: #{cnn_cifar_global_forward.3} parent=68 // pred_check_branch
          %4137 = sbr.rel (%p4135) target = $region77
        $region76: #{cnn_cifar_global_forward.3} parent=68 // pred_region
          %s4138 = smul.u32 64, %s14
        $region77: #{cnn_cifar_global_forward.3} parent=68 // pred_fallthru
          _
      $region69: #{cnn_cifar_global_forward.3} parent=5 // pred_fallthru
        _
      %p4139 = scmp.le.s32.totalorder 2, %s9
      // Predicated region
      $region78: #{cnn_cifar_global_forward.3} parent=5 // pred_check
        %p4140 = pneg %p4139
      $region79: #{cnn_cifar_global_forward.3} parent=5 // pred_check_branch
        %4142 = sbr.rel (%p4140) target = $region81
      $region80: #{cnn_cifar_global_forward.3} parent=5 // pred_region
        %s4143 = ssub.s32 %s9, 2
        // Predicated region
        $region82: #{cnn_cifar_global_forward.3} parent=80 // pred_check
          %p4144 = pneg %p106
        $region83: #{cnn_cifar_global_forward.3} parent=80 // pred_check_branch
          %4146 = sbr.rel (%p4144) target = $region85
        $region84: #{cnn_cifar_global_forward.3} parent=80 // pred_region
          %s4147 = smul.u32 64, %s15
          %p4148 = scmp.lt.s32.totalorder %s4147, 127
          %s4149 = scalar_select %p4148, %s4147, 127
          %s4150 = smul.addr %s4149, 4
          %s4151 = scalar_lea.vmem %s3, %s4150
        $region85: #{cnn_cifar_global_forward.3} parent=80 // pred_fallthru
          _
      $region81: #{cnn_cifar_global_forward.3} parent=5 // pred_fallthru
        _
    $region6: #{cnn_cifar_global_forward.3} parent=1 // loop_footer
      %s13 = sadd.s32 1, %s9
    $region7: #{cnn_cifar_global_forward.3} parent=1 // loop_footer_branch
      %8 = sbr.rel target = $region3
    $region8: #{cnn_cifar_global_forward.3} parent=1 // loop_exit
      _

// kernel: cnn_cifar_global_forward.5
$region0: #{cnn_cifar_global_forward.5}
  #allocation0 [shape = 'u32[]', space=smem, size = 0x4, offset = 0x4, fixed_abs, tag = 'smem constant byte address 0x4 - core index']
  #allocation1 [shape = 'u32[144,128]{1,0:T(1,128)}', space=vmem, size = 0x12000, scoped, tag = 'internal scratch']
  %s0 = inlined_call_operand.vmem [shape: bf16[4,3200], index: 0, kind: input, shape index: {}]
  %s1 = inlined_call_operand.vmem [shape: bf16[3200,128], index: 1, kind: input, shape index: {}]
  %s2 = inlined_call_operand.vmem [shape: f32[1,128], index: 2, kind: input, shape index: {}]
  %s3 = inlined_call_operand.vmem [shape: bf16[128,128], index: 3, kind: input, shape index: {}]
  %s4 = inlined_call_operand.vmem [shape: f32[1,128], index: 4, kind: input, shape index: {}]
  %s5 = inlined_call_operand.hbm [shape: f32[4,128], index: 5, kind: output, shape index: {}]
  %s6 = sld [smem:[#allocation0]]
  $region30: #{cnn_cifar_global_forward.5} parent=0
    _
  %s8 = ssub.s32 1, %s6
  %s9 = scalar_select 0, %s8, %s6
  $region1: #{cnn_cifar_global_forward.5} parent=0
    #allocation2 [shape = 'u8[2048]{0}', space=vmem, size = 0x800, scoped, tag = 'output window, operand 0, single buffered']
    #allocation3 [shape = 's32[1]{0}', space=sflag, size = 0x4, scoped, tag = 'scoped memory for cnn_cifar_global_forward.5']
    %10 = vsyncpa [#allocation3], 0
    // Predicated region
    $region2: #{cnn_cifar_global_forward.5} parent=1 // pred_check
      _
    $region3: #{cnn_cifar_global_forward.5} parent=1 // pred_check_branch
      %12 = sbr.rel (0) target = $region5
    $region4: #{cnn_cifar_global_forward.5} parent=1 // pred_region
      _
    $region5: #{cnn_cifar_global_forward.5} parent=1 // pred_fallthru
      _
    // Predicated region
    $region6: #{cnn_cifar_global_forward.5} parent=1 // pred_check
      _
    $region7: #{cnn_cifar_global_forward.5} parent=1 // pred_check_branch
      %14 = sbr.rel (0) target = $region9
    $region8: #{cnn_cifar_global_forward.5} parent=1 // pred_region
      _
    $region9: #{cnn_cifar_global_forward.5} parent=1 // pred_fallthru
      _
    // Predicated region
    $region10: #{cnn_cifar_global_forward.5} parent=1 // pred_check
      _
    $region11: #{cnn_cifar_global_forward.5} parent=1 // pred_check_branch
      %16 = sbr.rel (0) target = $region13
    $region12: #{cnn_cifar_global_forward.5} parent=1 // pred_region
      _
    $region13: #{cnn_cifar_global_forward.5} parent=1 // pred_fallthru
      _
    // Predicated region
    $region14: #{cnn_cifar_global_forward.5} parent=1 // pred_check
      _
    $region15: #{cnn_cifar_global_forward.5} parent=1 // pred_check_branch
      %18 = sbr.rel (0) target = $region17
    $region16: #{cnn_cifar_global_forward.5} parent=1 // pred_region
      _
    $region17: #{cnn_cifar_global_forward.5} parent=1 // pred_fallthru
      _
    // Predicated region
    $region18: #{cnn_cifar_global_forward.5} parent=1 // pred_check
      _
    $region19: #{cnn_cifar_global_forward.5} parent=1 // pred_check_branch
      %20 = sbr.rel (0) target = $region21
    $region20: #{cnn_cifar_global_forward.5} parent=1 // pred_region
      _
    $region21: #{cnn_cifar_global_forward.5} parent=1 // pred_fallthru
      _
    %v22 = vld [vmem:[%s0] sm:$0xff]
    %v23 = vld [vmem:[%s0 + $0x8] sm:$0xff]
    %v24 = vld [vmem:[%s0 + $0x10] sm:$0xff]
    %v25 = vld [vmem:[%s0 + $0x18] sm:$0xff]
    %v26 = vld [vmem:[%s0 + $0x20] sm:$0xff]
    %v27 = vld [vmem:[%s0 + $0x28] sm:$0xff]
    %v28 = vld [vmem:[%s0 + $0x30] sm:$0x3]
    %v29 = vld [vmem:[%s1] sm:$0xf]
    %v30 = vld [vmem:[%s1 + $0x4] sm:$0xf]
    %v31 = vld [vmem:[%s1 + $0x8] sm:$0xf]
    %v32 = vld [vmem:[%s1 + $0xc] sm:$0xf]
    %v33 = vld [vmem:[%s1 + $0x10] sm:$0xf]
    %v34 = vld [vmem:[%s1 + $0x14] sm:$0xf]
    %v35 = vld [vmem:[%s1 + $0x18] sm:$0xf]
    %v36 = vld [vmem:[%s1 + $0x1c] sm:$0xf]
    %v37 = vld [vmem:[%s1 + $0x20] sm:$0xf]
    %v38 = vld [vmem:[%s1 + $0x24] sm:$0xf]
    %v39 = vld [vmem:[%s1 + $0x28] sm:$0xf]
    %v40 = vld [vmem:[%s1 + $0x2c] sm:$0xf]
    %v41 = vld [vmem:[%s1 + $0x30] sm:$0xf]
    %v42 = vld [vmem:[%s1 + $0x34] sm:$0xf]
    %v43 = vld [vmem:[%s1 + $0x38] sm:$0xf]
    %v44 = vld [vmem:[%s1 + $0x3c] sm:$0xf]
    %v45 = vld [vmem:[%s1 + $0x40] sm:$0xf]
    %v46 = vld [vmem:[%s1 + $0x44] sm:$0xf]
    %v47 = vld [vmem:[%s1 + $0x48] sm:$0xf]
    %v48 = vld [vmem:[%s1 + $0x4c] sm:$0xf]
    %v49 = vld [vmem:[%s1 + $0x50] sm:$0xf]
    %v50 = vld [vmem:[%s1 + $0x54] sm:$0xf]
    %v51 = vld [vmem:[%s1 + $0x58] sm:$0xf]
    %v52 = vld [vmem:[%s1 + $0x5c] sm:$0xf]
    %v53 = vld [vmem:[%s1 + $0x60] sm:$0xf]
    %v54 = vld [vmem:[%s1 + $0x64] sm:$0xf]
    %v55 = vld [vmem:[%s1 + $0x68] sm:$0xf]
    %v56 = vld [vmem:[%s1 + $0x6c] sm:$0xf]
    %v57 = vld [vmem:[%s1 + $0x70] sm:$0xf]
    %v58 = vld [vmem:[%s1 + $0x74] sm:$0xf]
    %v59 = vld [vmem:[%s1 + $0x78] sm:$0xf]
    %v60 = vld [vmem:[%s1 + $0x7c] sm:$0xf]
    %v61 = vld [vmem:[%s1 + $0x80] sm:$0xf]
    %v62 = vld [vmem:[%s1 + $0x84] sm:$0xf]
    %v63 = vld [vmem:[%s1 + $0x88] sm:$0xf]
    %v64 = vld [vmem:[%s1 + $0x8c] sm:$0xf]
    %v65 = vld [vmem:[%s1 + $0x90] sm:$0xf]
    %v66 = vld [vmem:[%s1 + $0x94] sm:$0xf]
    %v67 = vld [vmem:[%s1 + $0x98] sm:$0xf]
    %v68 = vld [vmem:[%s1 + $0x9c] sm:$0xf]
    %v69 = vld [vmem:[%s1 + $0xa0] sm:$0xf]
    %v70 = vld [vmem:[%s1 + $0xa4] sm:$0xf]
    %v71 = vld [vmem:[%s1 + $0xa8] sm:$0xf]
    %v72 = vld [vmem:[%s1 + $0xac] sm:$0xf]
    %v73 = vld [vmem:[%s1 + $0xb0] sm:$0xf]
    %v74 = vld [vmem:[%s1 + $0xb4] sm:$0xf]
    %v75 = vld [vmem:[%s1 + $0xb8] sm:$0xf]
    %v76 = vld [vmem:[%s1 + $0xbc] sm:$0xf]
    %v77 = vld [vmem:[%s1 + $0xc0] sm:$0xf]
    %v78 = vld [vmem:[%s1 + $0xc4] sm:$0xf]
    %v79 = vld [vmem:[%s1 + $0xc8] sm:$0xf]
    %v80 = vld [vmem:[%s1 + $0xcc] sm:$0xf]
    %v81 = vld [vmem:[%s1 + $0xd0] sm:$0xf]
    %v82 = vld [vmem:[%s1 + $0xd4] sm:$0xf]
    %v83 = vld [vmem:[%s1 + $0xd8] sm:$0xf]
    %v84 = vld [vmem:[%s1 + $0xdc] sm:$0xf]
    %v85 = vld [vmem:[%s1 + $0xe0] sm:$0xf]
    %v86 = vld [vmem:[%s1 + $0xe4] sm:$0xf]
    %v87 = vld [vmem:[%s1 + $0xe8] sm:$0xf]
    %v88 = vld [vmem:[%s1 + $0xec] sm:$0xf]
    %v89 = vld [vmem:[%s1 + $0xf0] sm:$0xf]
    %v90 = vld [vmem:[%s1 + $0xf4] sm:$0xf]
    %v91 = vld [vmem:[%s1 + $0xf8] sm:$0xf]
    %v92 = vld [vmem:[%s1 + $0xfc] sm:$0xf]
    %v93 = vld [vmem:[%s1 + $0x100] sm:$0xf]
    %v94 = vld [vmem:[%s1 + $0x104] sm:$0xf]
    %v95 = vld [vmem:[%s1 + $0x108] sm:$0xf]
    %v96 = vld [vmem:[%s1 + $0x10c] sm:$0xf]
    %v97 = vld [vmem:[%s1 + $0x110] sm:$0xf]
    %v98 = vld [vmem:[%s1 + $0x114] sm:$0xf]
    %v99 = vld [vmem:[%s1 + $0x118] sm:$0xf]
    %v100 = vld [vmem:[%s1 + $0x11c] sm:$0xf]
    %v101 = vld [vmem:[%s1 + $0x120] sm:$0xf]
    %v102 = vld [vmem:[%s1 + $0x124] sm:$0xf]
    %v103 = vld [vmem:[%s1 + $0x128] sm:$0xf]
    %v104 = vld [vmem:[%s1 + $0x12c] sm:$0xf]
    %v105 = vld [vmem:[%s1 + $0x130] sm:$0xf]
    %v106 = vld [vmem:[%s1 + $0x134] sm:$0xf]
    %v107 = vld [vmem:[%s1 + $0x138] sm:$0xf]
    %v108 = vld [vmem:[%s1 + $0x13c] sm:$0xf]
    %v109 = vld [vmem:[%s1 + $0x140] sm:$0xf]
    %v110 = vld [vmem:[%s1 + $0x144] sm:$0xf]
    %v111 = vld [vmem:[%s1 + $0x148] sm:$0xf]
    %v112 = vld [vmem:[%s1 + $0x14c] sm:$0xf]
    %v113 = vld [vmem:[%s1 + $0x150] sm:$0xf]
    %v114 = vld [vmem:[%s1 + $0x154] sm:$0xf]
    %v115 = vld [vmem:[%s1 + $0x158] sm:$0xf]
    %v116 = vld [vmem:[%s1 + $0x15c] sm:$0xf]
    %v117 = vld [vmem:[%s1 + $0x160] sm:$0xf]
    %v118 = vld [vmem:[%s1 + $0x164] sm:$0xf]
    %v119 = vld [vmem:[%s1 + $0x168] sm:$0xf]
    %v120 = vld [vmem:[%s1 + $0x16c] sm:$0xf]
    %v121 = vld [vmem:[%s1 + $0x170] sm:$0xf]
    %v122 = vld [vmem:[%s1 + $0x174] sm:$0xf]
    %v123 = vld [vmem:[%s1 + $0x178] sm:$0xf]
    %v124 = vld [vmem:[%s1 + $0x17c] sm:$0xf]
    %v125 = vld [vmem:[%s1 + $0x180] sm:$0xf]
    %v126 = vld [vmem:[%s1 + $0x184] sm:$0xf]
    %v127 = vld [vmem:[%s1 + $0x188] sm:$0xf]
    %v128 = vld [vmem:[%s1 + $0x18c] sm:$0xf]
    %v129 = vld [vmem:[%s1 + $0x190] sm:$0xf]
    %v130 = vld [vmem:[%s1 + $0x194] sm:$0xf]
    %v131 = vld [vmem:[%s1 + $0x198] sm:$0xf]
    %v132 = vld [vmem:[%s1 + $0x19c] sm:$0xf]
    %v133 = vld [vmem:[%s1 + $0x1a0] sm:$0xf]
    %v134 = vld [vmem:[%s1 + $0x1a4] sm:$0xf]
    %v135 = vld [vmem:[%s1 + $0x1a8] sm:$0xf]
    %v136 = vld [vmem:[%s1 + $0x1ac] sm:$0xf]
    %v137 = vld [vmem:[%s1 + $0x1b0] sm:$0xf]
    %v138 = vld [vmem:[%s1 + $0x1b4] sm:$0xf]
    %v139 = vld [vmem:[%s1 + $0x1b8] sm:$0xf]
    %v140 = vld [vmem:[%s1 + $0x1bc] sm:$0xf]
    %v141 = vld [vmem:[%s1 + $0x1c0] sm:$0xf]
    %v142 = vld [vmem:[%s1 + $0x1c4] sm:$0xf]
    %v143 = vld [vmem:[%s1 + $0x1c8] sm:$0xf]
    %v144 = vld [vmem:[%s1 + $0x1cc] sm:$0xf]
    %v145 = vld [vmem:[%s1 + $0x1d0] sm:$0xf]
    %v146 = vld [vmem:[%s1 + $0x1d4] sm:$0xf]
    %v147 = vld [vmem:[%s1 + $0x1d8] sm:$0xf]
    %v148 = vld [vmem:[%s1 + $0x1dc] sm:$0xf]
    %v149 = vld [vmem:[%s1 + $0x1e0] sm:$0xf]
    %v150 = vld [vmem:[%s1 + $0x1e4] sm:$0xf]
    %v151 = vld [vmem:[%s1 + $0x1e8] sm:$0xf]
    %v152 = vld [vmem:[%s1 + $0x1ec] sm:$0xf]
    %v153 = vld [vmem:[%s1 + $0x1f0] sm:$0xf]
    %v154 = vld [vmem:[%s1 + $0x1f4] sm:$0xf]
    %v155 = vld [vmem:[%s1 + $0x1f8] sm:$0xf]
    %v156 = vld [vmem:[%s1 + $0x1fc] sm:$0xf]
    %v157 = vld [vmem:[%s1 + $0x200] sm:$0xf]
    %v158 = vld [vmem:[%s1 + $0x204] sm:$0xf]
    %v159 = vld [vmem:[%s1 + $0x208] sm:$0xf]
    %v160 = vld [vmem:[%s1 + $0x20c] sm:$0xf]
    %v161 = vld [vmem:[%s1 + $0x210] sm:$0xf]
    %v162 = vld [vmem:[%s1 + $0x214] sm:$0xf]
    %v163 = vld [vmem:[%s1 + $0x218] sm:$0xf]
    %v164 = vld [vmem:[%s1 + $0x21c] sm:$0xf]
    %v165 = vld [vmem:[%s1 + $0x220] sm:$0xf]
    %v166 = vld [vmem:[%s1 + $0x224] sm:$0xf]
    %v167 = vld [vmem:[%s1 + $0x228] sm:$0xf]
    %v168 = vld [vmem:[%s1 + $0x22c] sm:$0xf]
    %v169 = vld [vmem:[%s1 + $0x230] sm:$0xf]
    %v170 = vld [vmem:[%s1 + $0x234] sm:$0xf]
    %v171 = vld [vmem:[%s1 + $0x238] sm:$0xf]
    %v172 = vld [vmem:[%s1 + $0x23c] sm:$0xf]
    %v173 = vld [vmem:[%s1 + $0x240] sm:$0xf]
    %v174 = vld [vmem:[%s1 + $0x244] sm:$0xf]
    %v175 = vld [vmem:[%s1 + $0x248] sm:$0xf]
    %v176 = vld [vmem:[%s1 + $0x24c] sm:$0xf]
    %v177 = vld [vmem:[%s1 + $0x250] sm:$0xf]
    %v178 = vld [vmem:[%s1 + $0x254] sm:$0xf]
    %v179 = vld [vmem:[%s1 + $0x258] sm:$0xf]
    %v180 = vld [vmem:[%s1 + $0x25c] sm:$0xf]
    %v181 = vld [vmem:[%s1 + $0x260] sm:$0xf]
    %v182 = vld [vmem:[%s1 + $0x264] sm:$0xf]
    %v183 = vld [vmem:[%s1 + $0x268] sm:$0xf]
    %v184 = vld [vmem:[%s1 + $0x26c] sm:$0xf]
    %v185 = vld [vmem:[%s1 + $0x270] sm:$0xf]
    %v186 = vld [vmem:[%s1 + $0x274] sm:$0xf]
    %v187 = vld [vmem:[%s1 + $0x278] sm:$0xf]
    %v188 = vld [vmem:[%s1 + $0x27c] sm:$0xf]
    %v189 = vld [vmem:[%s1 + $0x280] sm:$0xf]
    %v190 = vld [vmem:[%s1 + $0x284] sm:$0xf]
    %v191 = vld [vmem:[%s1 + $0x288] sm:$0xf]
    %v192 = vld [vmem:[%s1 + $0x28c] sm:$0xf]
    %v193 = vld [vmem:[%s1 + $0x290] sm:$0xf]
    %v194 = vld [vmem:[%s1 + $0x294] sm:$0xf]
    %v195 = vld [vmem:[%s1 + $0x298] sm:$0xf]
    %v196 = vld [vmem:[%s1 + $0x29c] sm:$0xf]
    %v197 = vld [vmem:[%s1 + $0x2a0] sm:$0xf]
    %v198 = vld [vmem:[%s1 + $0x2a4] sm:$0xf]
    %v199 = vld [vmem:[%s1 + $0x2a8] sm:$0xf]
    %v200 = vld [vmem:[%s1 + $0x2ac] sm:$0xf]
    %v201 = vld [vmem:[%s1 + $0x2b0] sm:$0xf]
    %v202 = vld [vmem:[%s1 + $0x2b4] sm:$0xf]
    %v203 = vld [vmem:[%s1 + $0x2b8] sm:$0xf]
    %v204 = vld [vmem:[%s1 + $0x2bc] sm:$0xf]
    %v205 = vld [vmem:[%s1 + $0x2c0] sm:$0xf]
    %v206 = vld [vmem:[%s1 + $0x2c4] sm:$0xf]
    %v207 = vld [vmem:[%s1 + $0x2c8] sm:$0xf]
    %v208 = vld [vmem:[%s1 + $0x2cc] sm:$0xf]
    %v209 = vld [vmem:[%s1 + $0x2d0] sm:$0xf]
    %v210 = vld [vmem:[%s1 + $0x2d4] sm:$0xf]
    %v211 = vld [vmem:[%s1 + $0x2d8] sm:$0xf]
    %v212 = vld [vmem:[%s1 + $0x2dc] sm:$0xf]
    %v213 = vld [vmem:[%s1 + $0x2e0] sm:$0xf]
    %v214 = vld [vmem:[%s1 + $0x2e4] sm:$0xf]
    %v215 = vld [vmem:[%s1 + $0x2e8] sm:$0xf]
    %v216 = vld [vmem:[%s1 + $0x2ec] sm:$0xf]
    %v217 = vld [vmem:[%s1 + $0x2f0] sm:$0xf]
    %v218 = vld [vmem:[%s1 + $0x2f4] sm:$0xf]
    %v219 = vld [vmem:[%s1 + $0x2f8] sm:$0xf]
    %v220 = vld [vmem:[%s1 + $0x2fc] sm:$0xf]
    %v221 = vld [vmem:[%s1 + $0x300] sm:$0xf]
    %v222 = vld [vmem:[%s1 + $0x304] sm:$0xf]
    %v223 = vld [vmem:[%s1 + $0x308] sm:$0xf]
    %v224 = vld [vmem:[%s1 + $0x30c] sm:$0xf]
    %v225 = vld [vmem:[%s1 + $0x310] sm:$0xf]
    %v226 = vld [vmem:[%s1 + $0x314] sm:$0xf]
    %v227 = vld [vmem:[%s1 + $0x318] sm:$0xf]
    %v228 = vld [vmem:[%s1 + $0x31c] sm:$0xf]
    %v229 = vld [vmem:[%s1 + $0x320] sm:$0xf]
    %v230 = vld [vmem:[%s1 + $0x324] sm:$0xf]
    %v231 = vld [vmem:[%s1 + $0x328] sm:$0xf]
    %v232 = vld [vmem:[%s1 + $0x32c] sm:$0xf]
    %v233 = vld [vmem:[%s1 + $0x330] sm:$0xf]
    %v234 = vld [vmem:[%s1 + $0x334] sm:$0xf]
    %v235 = vld [vmem:[%s1 + $0x338] sm:$0xf]
    %v236 = vld [vmem:[%s1 + $0x33c] sm:$0xf]
    %v237 = vld [vmem:[%s1 + $0x340] sm:$0xf]
    %v238 = vld [vmem:[%s1 + $0x344] sm:$0xf]
    %v239 = vld [vmem:[%s1 + $0x348] sm:$0xf]
    %v240 = vld [vmem:[%s1 + $0x34c] sm:$0xf]
    %v241 = vld [vmem:[%s1 + $0x350] sm:$0xf]
    %v242 = vld [vmem:[%s1 + $0x354] sm:$0xf]
    %v243 = vld [vmem:[%s1 + $0x358] sm:$0xf]
    %v244 = vld [vmem:[%s1 + $0x35c] sm:$0xf]
    %v245 = vld [vmem:[%s1 + $0x360] sm:$0xf]
    %v246 = vld [vmem:[%s1 + $0x364] sm:$0xf]
    %v247 = vld [vmem:[%s1 + $0x368] sm:$0xf]
    %v248 = vld [vmem:[%s1 + $0x36c] sm:$0xf]
    %v249 = vld [vmem:[%s1 + $0x370] sm:$0xf]
    %v250 = vld [vmem:[%s1 + $0x374] sm:$0xf]
    %v251 = vld [vmem:[%s1 + $0x378] sm:$0xf]
    %v252 = vld [vmem:[%s1 + $0x37c] sm:$0xf]
    %v253 = vld [vmem:[%s1 + $0x380] sm:$0xf]
    %v254 = vld [vmem:[%s1 + $0x384] sm:$0xf]
    %v255 = vld [vmem:[%s1 + $0x388] sm:$0xf]
    %v256 = vld [vmem:[%s1 + $0x38c] sm:$0xf]
    %v257 = vld [vmem:[%s1 + $0x390] sm:$0xf]
    %v258 = vld [vmem:[%s1 + $0x394] sm:$0xf]
    %v259 = vld [vmem:[%s1 + $0x398] sm:$0xf]
    %v260 = vld [vmem:[%s1 + $0x39c] sm:$0xf]
    %v261 = vld [vmem:[%s1 + $0x3a0] sm:$0xf]
    %v262 = vld [vmem:[%s1 + $0x3a4] sm:$0xf]
    %v263 = vld [vmem:[%s1 + $0x3a8] sm:$0xf]
    %v264 = vld [vmem:[%s1 + $0x3ac] sm:$0xf]
    %v265 = vld [vmem:[%s1 + $0x3b0] sm:$0xf]
    %v266 = vld [vmem:[%s1 + $0x3b4] sm:$0xf]
    %v267 = vld [vmem:[%s1 + $0x3b8] sm:$0xf]
    %v268 = vld [vmem:[%s1 + $0x3bc] sm:$0xf]
    %v269 = vld [vmem:[%s1 + $0x3c0] sm:$0xf]
    %v270 = vld [vmem:[%s1 + $0x3c4] sm:$0xf]
    %v271 = vld [vmem:[%s1 + $0x3c8] sm:$0xf]
    %v272 = vld [vmem:[%s1 + $0x3cc] sm:$0xf]
    %v273 = vld [vmem:[%s1 + $0x3d0] sm:$0xf]
    %v274 = vld [vmem:[%s1 + $0x3d4] sm:$0xf]
    %v275 = vld [vmem:[%s1 + $0x3d8] sm:$0xf]
    %v276 = vld [vmem:[%s1 + $0x3dc] sm:$0xf]
    %v277 = vld [vmem:[%s1 + $0x3e0] sm:$0xf]
    %v278 = vld [vmem:[%s1 + $0x3e4] sm:$0xf]
    %v279 = vld [vmem:[%s1 + $0x3e8] sm:$0xf]
    %v280 = vld [vmem:[%s1 + $0x3ec] sm:$0xf]
    %v281 = vld [vmem:[%s1 + $0x3f0] sm:$0xf]
    %v282 = vld [vmem:[%s1 + $0x3f4] sm:$0xf]
    %v283 = vld [vmem:[%s1 + $0x3f8] sm:$0xf]
    %v284 = vld [vmem:[%s1 + $0x3fc] sm:$0xf]
    %v285 = vld [vmem:[%s1 + $0x400] sm:$0xf]
    %v286 = vld [vmem:[%s1 + $0x404] sm:$0xf]
    %v287 = vld [vmem:[%s1 + $0x408] sm:$0xf]
    %v288 = vld [vmem:[%s1 + $0x40c] sm:$0xf]
    %v289 = vld [vmem:[%s1 + $0x410] sm:$0xf]
    %v290 = vld [vmem:[%s1 + $0x414] sm:$0xf]
    %v291 = vld [vmem:[%s1 + $0x418] sm:$0xf]
    %v292 = vld [vmem:[%s1 + $0x41c] sm:$0xf]
    %v293 = vld [vmem:[%s1 + $0x420] sm:$0xf]
    %v294 = vld [vmem:[%s1 + $0x424] sm:$0xf]
    %v295 = vld [vmem:[%s1 + $0x428] sm:$0xf]
    %v296 = vld [vmem:[%s1 + $0x42c] sm:$0xf]
    %v297 = vld [vmem:[%s1 + $0x430] sm:$0xf]
    %v298 = vld [vmem:[%s1 + $0x434] sm:$0xf]
    %v299 = vld [vmem:[%s1 + $0x438] sm:$0xf]
    %v300 = vld [vmem:[%s1 + $0x43c] sm:$0xf]
    %v301 = vld [vmem:[%s1 + $0x440] sm:$0xf]
    %v302 = vld [vmem:[%s1 + $0x444] sm:$0xf]
    %v303 = vld [vmem:[%s1 + $0x448] sm:$0xf]
    %v304 = vld [vmem:[%s1 + $0x44c] sm:$0xf]
    %v305 = vld [vmem:[%s1 + $0x450] sm:$0xf]
    %v306 = vld [vmem:[%s1 + $0x454] sm:$0xf]
    %v307 = vld [vmem:[%s1 + $0x458] sm:$0xf]
    %v308 = vld [vmem:[%s1 + $0x45c] sm:$0xf]
    %v309 = vld [vmem:[%s1 + $0x460] sm:$0xf]
    %v310 = vld [vmem:[%s1 + $0x464] sm:$0xf]
    %v311 = vld [vmem:[%s1 + $0x468] sm:$0xf]
    %v312 = vld [vmem:[%s1 + $0x46c] sm:$0xf]
    %v313 = vld [vmem:[%s1 + $0x470] sm:$0xf]
    %v314 = vld [vmem:[%s1 + $0x474] sm:$0xf]
    %v315 = vld [vmem:[%s1 + $0x478] sm:$0xf]
    %v316 = vld [vmem:[%s1 + $0x47c] sm:$0xf]
    %v317 = vld [vmem:[%s1 + $0x480] sm:$0xf]
    %v318 = vld [vmem:[%s1 + $0x484] sm:$0xf]
    %v319 = vld [vmem:[%s1 + $0x488] sm:$0xf]
    %v320 = vld [vmem:[%s1 + $0x48c] sm:$0xf]
    %v321 = vld [vmem:[%s1 + $0x490] sm:$0xf]
    %v322 = vld [vmem:[%s1 + $0x494] sm:$0xf]
    %v323 = vld [vmem:[%s1 + $0x498] sm:$0xf]
    %v324 = vld [vmem:[%s1 + $0x49c] sm:$0xf]
    %v325 = vld [vmem:[%s1 + $0x4a0] sm:$0xf]
    %v326 = vld [vmem:[%s1 + $0x4a4] sm:$0xf]
    %v327 = vld [vmem:[%s1 + $0x4a8] sm:$0xf]
    %v328 = vld [vmem:[%s1 + $0x4ac] sm:$0xf]
    %v329 = vld [vmem:[%s1 + $0x4b0] sm:$0xf]
    %v330 = vld [vmem:[%s1 + $0x4b4] sm:$0xf]
    %v331 = vld [vmem:[%s1 + $0x4b8] sm:$0xf]
    %v332 = vld [vmem:[%s1 + $0x4bc] sm:$0xf]
    %v333 = vld [vmem:[%s1 + $0x4c0] sm:$0xf]
    %v334 = vld [vmem:[%s1 + $0x4c4] sm:$0xf]
    %v335 = vld [vmem:[%s1 + $0x4c8] sm:$0xf]
    %v336 = vld [vmem:[%s1 + $0x4cc] sm:$0xf]
    %v337 = vld [vmem:[%s1 + $0x4d0] sm:$0xf]
    %v338 = vld [vmem:[%s1 + $0x4d4] sm:$0xf]
    %v339 = vld [vmem:[%s1 + $0x4d8] sm:$0xf]
    %v340 = vld [vmem:[%s1 + $0x4dc] sm:$0xf]
    %v341 = vld [vmem:[%s1 + $0x4e0] sm:$0xf]
    %v342 = vld [vmem:[%s1 + $0x4e4] sm:$0xf]
    %v343 = vld [vmem:[%s1 + $0x4e8] sm:$0xf]
    %v344 = vld [vmem:[%s1 + $0x4ec] sm:$0xf]
    %v345 = vld [vmem:[%s1 + $0x4f0] sm:$0xf]
    %v346 = vld [vmem:[%s1 + $0x4f4] sm:$0xf]
    %v347 = vld [vmem:[%s1 + $0x4f8] sm:$0xf]
    %v348 = vld [vmem:[%s1 + $0x4fc] sm:$0xf]
    %v349 = vld [vmem:[%s1 + $0x500] sm:$0xf]
    %v350 = vld [vmem:[%s1 + $0x504] sm:$0xf]
    %v351 = vld [vmem:[%s1 + $0x508] sm:$0xf]
    %v352 = vld [vmem:[%s1 + $0x50c] sm:$0xf]
    %v353 = vld [vmem:[%s1 + $0x510] sm:$0xf]
    %v354 = vld [vmem:[%s1 + $0x514] sm:$0xf]
    %v355 = vld [vmem:[%s1 + $0x518] sm:$0xf]
    %v356 = vld [vmem:[%s1 + $0x51c] sm:$0xf]
    %v357 = vld [vmem:[%s1 + $0x520] sm:$0xf]
    %v358 = vld [vmem:[%s1 + $0x524] sm:$0xf]
    %v359 = vld [vmem:[%s1 + $0x528] sm:$0xf]
    %v360 = vld [vmem:[%s1 + $0x52c] sm:$0xf]
    %v361 = vld [vmem:[%s1 + $0x530] sm:$0xf]
    %v362 = vld [vmem:[%s1 + $0x534] sm:$0xf]
    %v363 = vld [vmem:[%s1 + $0x538] sm:$0xf]
    %v364 = vld [vmem:[%s1 + $0x53c] sm:$0xf]
    %v365 = vld [vmem:[%s1 + $0x540] sm:$0xf]
    %v366 = vld [vmem:[%s1 + $0x544] sm:$0xf]
    %v367 = vld [vmem:[%s1 + $0x548] sm:$0xf]
    %v368 = vld [vmem:[%s1 + $0x54c] sm:$0xf]
    %v369 = vld [vmem:[%s1 + $0x550] sm:$0xf]
    %v370 = vld [vmem:[%s1 + $0x554] sm:$0xf]
    %v371 = vld [vmem:[%s1 + $0x558] sm:$0xf]
    %v372 = vld [vmem:[%s1 + $0x55c] sm:$0xf]
    %v373 = vld [vmem:[%s1 + $0x560] sm:$0xf]
    %v374 = vld [vmem:[%s1 + $0x564] sm:$0xf]
    %v375 = vld [vmem:[%s1 + $0x568] sm:$0xf]
    %v376 = vld [vmem:[%s1 + $0x56c] sm:$0xf]
    %v377 = vld [vmem:[%s1 + $0x570] sm:$0xf]
    %v378 = vld [vmem:[%s1 + $0x574] sm:$0xf]
    %v379 = vld [vmem:[%s1 + $0x578] sm:$0xf]
    %v380 = vld [vmem:[%s1 + $0x57c] sm:$0xf]
    %v381 = vld [vmem:[%s1 + $0x580] sm:$0xf]
    %v382 = vld [vmem:[%s1 + $0x584] sm:$0xf]
    %v383 = vld [vmem:[%s1 + $0x588] sm:$0xf]
    %v384 = vld [vmem:[%s1 + $0x58c] sm:$0xf]
    %v385 = vld [vmem:[%s1 + $0x590] sm:$0xf]
    %v386 = vld [vmem:[%s1 + $0x594] sm:$0xf]
    %v387 = vld [vmem:[%s1 + $0x598] sm:$0xf]
    %v388 = vld [vmem:[%s1 + $0x59c] sm:$0xf]
    %v389 = vld [vmem:[%s1 + $0x5a0] sm:$0xf]
    %v390 = vld [vmem:[%s1 + $0x5a4] sm:$0xf]
    %v391 = vld [vmem:[%s1 + $0x5a8] sm:$0xf]
    %v392 = vld [vmem:[%s1 + $0x5ac] sm:$0xf]
    %v393 = vld [vmem:[%s1 + $0x5b0] sm:$0xf]
    %v394 = vld [vmem:[%s1 + $0x5b4] sm:$0xf]
    %v395 = vld [vmem:[%s1 + $0x5b8] sm:$0xf]
    %v396 = vld [vmem:[%s1 + $0x5bc] sm:$0xf]
    %v397 = vld [vmem:[%s1 + $0x5c0] sm:$0xf]
    %v398 = vld [vmem:[%s1 + $0x5c4] sm:$0xf]
    %v399 = vld [vmem:[%s1 + $0x5c8] sm:$0xf]
    %v400 = vld [vmem:[%s1 + $0x5cc] sm:$0xf]
    %v401 = vld [vmem:[%s1 + $0x5d0] sm:$0xf]
    %v402 = vld [vmem:[%s1 + $0x5d4] sm:$0xf]
    %v403 = vld [vmem:[%s1 + $0x5d8] sm:$0xf]
    %v404 = vld [vmem:[%s1 + $0x5dc] sm:$0xf]
    %v405 = vld [vmem:[%s1 + $0x5e0] sm:$0xf]
    %v406 = vld [vmem:[%s1 + $0x5e4] sm:$0xf]
    %v407 = vld [vmem:[%s1 + $0x5e8] sm:$0xf]
    %v408 = vld [vmem:[%s1 + $0x5ec] sm:$0xf]
    %v409 = vld [vmem:[%s1 + $0x5f0] sm:$0xf]
    %v410 = vld [vmem:[%s1 + $0x5f4] sm:$0xf]
    %v411 = vld [vmem:[%s1 + $0x5f8] sm:$0xf]
    %v412 = vld [vmem:[%s1 + $0x5fc] sm:$0xf]
    %v413 = vld [vmem:[%s1 + $0x600] sm:$0xf]
    %v414 = vld [vmem:[%s1 + $0x604] sm:$0xf]
    %v415 = vld [vmem:[%s1 + $0x608] sm:$0xf]
    %v416 = vld [vmem:[%s1 + $0x60c] sm:$0xf]
    %v417 = vld [vmem:[%s1 + $0x610] sm:$0xf]
    %v418 = vld [vmem:[%s1 + $0x614] sm:$0xf]
    %v419 = vld [vmem:[%s1 + $0x618] sm:$0xf]
    %v420 = vld [vmem:[%s1 + $0x61c] sm:$0xf]
    %v421 = vld [vmem:[%s1 + $0x620] sm:$0xf]
    %v422 = vld [vmem:[%s1 + $0x624] sm:$0xf]
    %v423 = vld [vmem:[%s1 + $0x628] sm:$0xf]
    %v424 = vld [vmem:[%s1 + $0x62c] sm:$0xf]
    %v425 = vld [vmem:[%s1 + $0x630] sm:$0xf]
    %v426 = vld [vmem:[%s1 + $0x634] sm:$0xf]
    %v427 = vld [vmem:[%s1 + $0x638] sm:$0xf]
    %v428 = vld [vmem:[%s1 + $0x63c] sm:$0xf]
    %v429 = vld [vmem:[%s2] sm:$0x1]
    %v431 = vlaneseq
    %v432 = vshrl.u32 %v431, 7
    %v433 = vsub.s32 0, %v432
    %v434 = vrot.slane %v429, %v433
    %v443 = vcombine.high %v22, %v22
    %v445 = vunpack.c.l.s4 1983009808
    %v446 = vunpack.c.0.s8 %v445
    %v447 = vlaneseq
    %v448 = vshrl.u32 %v447, 7
    %v449 = vsub.s32 %v446, %v448
    %v450 = vrot.slane %v22, %v449
    %v452 = vunpack.c.l.s4 1983009808
    %v453 = vunpack.c.0.s8 %v452
    %v454 = vlaneseq
    %v455 = vshrl.u32 %v454, 7
    %v456 = vsub.s32 %v453, %v455
    %v457 = vrot.slane %v443, %v456
    %v458 = vcombine.high %v450, %v450
    %v459 = vcombine.high %v457, %v457
    %v460 = vcombine.high %v23, %v23
    %v462 = vunpack.c.l.s4 1983009808
    %v463 = vunpack.c.0.s8 %v462
    %v464 = vlaneseq
    %v465 = vshrl.u32 %v464, 7
    %v466 = vsub.s32 %v463, %v465
    %v467 = vrot.slane %v23, %v466
    %v469 = vunpack.c.l.s4 1983009808
    %v470 = vunpack.c.0.s8 %v469
    %v471 = vlaneseq
    %v472 = vshrl.u32 %v471, 7
    %v473 = vsub.s32 %v470, %v472
    %v474 = vrot.slane %v460, %v473
    %v475 = vcombine.high %v467, %v467
    %v476 = vcombine.high %v474, %v474
    %v477 = vcombine.high %v24, %v24
    %v479 = vunpack.c.l.s4 1983009808
    %v480 = vunpack.c.0.s8 %v479
    %v481 = vlaneseq
    %v482 = vshrl.u32 %v481, 7
    %v483 = vsub.s32 %v480, %v482
    %v484 = vrot.slane %v24, %v483
    %v486 = vunpack.c.l.s4 1983009808
    %v487 = vunpack.c.0.s8 %v486
    %v488 = vlaneseq
    %v489 = vshrl.u32 %v488, 7
    %v490 = vsub.s32 %v487, %v489
    %v491 = vrot.slane %v477, %v490
    %v492 = vcombine.high %v484, %v484
    %v493 = vcombine.high %v491, %v491
    %v494 = vcombine.high %v25, %v25
    %v496 = vunpack.c.l.s4 1983009808
    %v497 = vunpack.c.0.s8 %v496
    %v498 = vlaneseq
    %v499 = vshrl.u32 %v498, 7
    %v500 = vsub.s32 %v497, %v499
    %v501 = vrot.slane %v25, %v500
    %v503 = vunpack.c.l.s4 1983009808
    %v504 = vunpack.c.0.s8 %v503
    %v505 = vlaneseq
    %v506 = vshrl.u32 %v505, 7
    %v507 = vsub.s32 %v504, %v506
    %v508 = vrot.slane %v494, %v507
    %v509 = vcombine.high %v501, %v501
    %v510 = vcombine.high %v508, %v508
    %v511 = vcombine.high %v26, %v26
    %v513 = vunpack.c.l.s4 1983009808
    %v514 = vunpack.c.0.s8 %v513
    %v515 = vlaneseq
    %v516 = vshrl.u32 %v515, 7
    %v517 = vsub.s32 %v514, %v516
    %v518 = vrot.slane %v26, %v517
    %v520 = vunpack.c.l.s4 1983009808
    %v521 = vunpack.c.0.s8 %v520
    %v522 = vlaneseq
    %v523 = vshrl.u32 %v522, 7
    %v524 = vsub.s32 %v521, %v523
    %v525 = vrot.slane %v511, %v524
    %v526 = vcombine.high %v518, %v518
    %v527 = vcombine.high %v525, %v525
    %v528 = vcombine.high %v27, %v27
    %v530 = vunpack.c.l.s4 1983009808
    %v531 = vunpack.c.0.s8 %v530
    %v532 = vlaneseq
    %v533 = vshrl.u32 %v532, 7
    %v534 = vsub.s32 %v531, %v533
    %v535 = vrot.slane %v27, %v534
    %v537 = vunpack.c.l.s4 1983009808
    %v538 = vunpack.c.0.s8 %v537
    %v539 = vlaneseq
    %v540 = vshrl.u32 %v539, 7
    %v541 = vsub.s32 %v538, %v540
    %v542 = vrot.slane %v528, %v541
    %v543 = vcombine.high %v535, %v535
    %v544 = vcombine.high %v542, %v542
    %v546 = vunpack.c.l.s4 1983009808
    %v547 = vunpack.c.0.s8 %v546
    %v548 = vlaneseq
    %v549 = vshrl.u32 %v548, 7
    %v550 = vsub.s32 %v547, %v549
    %v551 = vrot.slane %v28, %v550
    %v977 = vunpack.c.l.b16 %v29
    %v978 = vunpack.c.l.b16 %v30
    %v979 = vunpack.c.l.b16 %v31
    %v980 = vunpack.c.l.b16 %v32
    %v981 = vunpack.c.l.b16 %v33
    %v982 = vunpack.c.l.b16 %v34
    %v983 = vunpack.c.l.b16 %v35
    %v984 = vunpack.c.l.b16 %v36
    %v985 = vunpack.c.l.b16 %v37
    %v986 = vunpack.c.l.b16 %v38
    %v987 = vunpack.c.l.b16 %v39
    %v988 = vunpack.c.l.b16 %v40
    %v989 = vunpack.c.l.b16 %v41
    %v990 = vunpack.c.l.b16 %v42
    %v991 = vunpack.c.l.b16 %v43
    %v992 = vunpack.c.l.b16 %v44
    %v993 = vunpack.c.l.b16 %v45
    %v994 = vunpack.c.l.b16 %v46
    %v995 = vunpack.c.l.b16 %v47
    %v996 = vunpack.c.l.b16 %v48
    %v997 = vunpack.c.l.b16 %v49
    %v998 = vunpack.c.l.b16 %v50
    %v999 = vunpack.c.l.b16 %v51
    %v1000 = vunpack.c.l.b16 %v52
    %v1001 = vunpack.c.l.b16 %v53
    %v1002 = vunpack.c.l.b16 %v54
    %v1003 = vunpack.c.l.b16 %v55
    %v1004 = vunpack.c.l.b16 %v56
    %v1005 = vunpack.c.l.b16 %v57
    %v1006 = vunpack.c.l.b16 %v58
    %v1007 = vunpack.c.l.b16 %v59
    %v1008 = vunpack.c.l.b16 %v60
    %v1009 = vunpack.c.l.b16 %v61
    %v1010 = vunpack.c.l.b16 %v62
    %v1011 = vunpack.c.l.b16 %v63
    %v1012 = vunpack.c.l.b16 %v64
    %v1013 = vunpack.c.l.b16 %v65
    %v1014 = vunpack.c.l.b16 %v66
    %v1015 = vunpack.c.l.b16 %v67
    %v1016 = vunpack.c.l.b16 %v68
    %v1017 = vunpack.c.l.b16 %v69
    %v1018 = vunpack.c.l.b16 %v70
    %v1019 = vunpack.c.l.b16 %v71
    %v1020 = vunpack.c.l.b16 %v72
    %v1021 = vunpack.c.l.b16 %v73
    %v1022 = vunpack.c.l.b16 %v74
    %v1023 = vunpack.c.l.b16 %v75
    %v1024 = vunpack.c.l.b16 %v76
    %v1025 = vunpack.c.l.b16 %v77
    %v1026 = vunpack.c.l.b16 %v78
    %v1027 = vunpack.c.l.b16 %v79
    %v1028 = vunpack.c.l.b16 %v80
    %v1029 = vunpack.c.l.b16 %v81
    %v1030 = vunpack.c.l.b16 %v82
    %v1031 = vunpack.c.l.b16 %v83
    %v1032 = vunpack.c.l.b16 %v84
    %v1033 = vunpack.c.l.b16 %v85
    %v1034 = vunpack.c.l.b16 %v86
    %v1035 = vunpack.c.l.b16 %v87
    %v1036 = vunpack.c.l.b16 %v88
    %v1037 = vunpack.c.l.b16 %v89
    %v1038 = vunpack.c.l.b16 %v90
    %v1039 = vunpack.c.l.b16 %v91
    %v1040 = vunpack.c.l.b16 %v92
    %v1041 = vunpack.c.l.b16 %v93
    %v1042 = vunpack.c.l.b16 %v94
    %v1043 = vunpack.c.l.b16 %v95
    %v1044 = vunpack.c.l.b16 %v96
    %v1045 = vunpack.c.l.b16 %v97
    %v1046 = vunpack.c.l.b16 %v98
    %v1047 = vunpack.c.l.b16 %v99
    %v1048 = vunpack.c.l.b16 %v100
    %v1049 = vunpack.c.l.b16 %v101
    %v1050 = vunpack.c.l.b16 %v102
    %v1051 = vunpack.c.l.b16 %v103
    %v1052 = vunpack.c.l.b16 %v104
    %v1053 = vunpack.c.l.b16 %v105
    %v1054 = vunpack.c.l.b16 %v106
    %v1055 = vunpack.c.l.b16 %v107
    %v1056 = vunpack.c.l.b16 %v108
    %v1057 = vunpack.c.l.b16 %v109
    %v1058 = vunpack.c.l.b16 %v110
    %v1059 = vunpack.c.l.b16 %v111
    %v1060 = vunpack.c.l.b16 %v112
    %v1061 = vunpack.c.l.b16 %v113
    %v1062 = vunpack.c.l.b16 %v114
    %v1063 = vunpack.c.l.b16 %v115
    %v1064 = vunpack.c.l.b16 %v116
    %v1065 = vunpack.c.l.b16 %v117
    %v1066 = vunpack.c.l.b16 %v118
    %v1067 = vunpack.c.l.b16 %v119
    %v1068 = vunpack.c.l.b16 %v120
    %v1069 = vunpack.c.l.b16 %v121
    %v1070 = vunpack.c.l.b16 %v122
    %v1071 = vunpack.c.l.b16 %v123
    %v1072 = vunpack.c.l.b16 %v124
    %v1073 = vunpack.c.l.b16 %v125
    %v1074 = vunpack.c.l.b16 %v126
    %v1075 = vunpack.c.l.b16 %v127
    %v1076 = vunpack.c.l.b16 %v128
    %v1077 = vunpack.c.l.b16 %v129
    %v1078 = vunpack.c.l.b16 %v130
    %v1079 = vunpack.c.l.b16 %v131
    %v1080 = vunpack.c.l.b16 %v132
    %v1081 = vunpack.c.l.b16 %v133
    %v1082 = vunpack.c.l.b16 %v134
    %v1083 = vunpack.c.l.b16 %v135
    %v1084 = vunpack.c.l.b16 %v136
    %v1085 = vunpack.c.l.b16 %v137
    %v1086 = vunpack.c.l.b16 %v138
    %v1087 = vunpack.c.l.b16 %v139
    %v1088 = vunpack.c.l.b16 %v140
    %v1089 = vunpack.c.l.b16 %v141
    %v1090 = vunpack.c.l.b16 %v142
    %v1091 = vunpack.c.l.b16 %v143
    %v1092 = vunpack.c.l.b16 %v144
    %v1093 = vunpack.c.l.b16 %v145
    %v1094 = vunpack.c.l.b16 %v146
    %v1095 = vunpack.c.l.b16 %v147
    %v1096 = vunpack.c.l.b16 %v148
    %v1097 = vunpack.c.l.b16 %v149
    %v1098 = vunpack.c.l.b16 %v150
    %v1099 = vunpack.c.l.b16 %v151
    %v1100 = vunpack.c.l.b16 %v152
    %v1101 = vunpack.c.l.b16 %v153
    %v1102 = vunpack.c.l.b16 %v154
    %v1103 = vunpack.c.l.b16 %v155
    %v1104 = vunpack.c.l.b16 %v156
    %v1105 = vunpack.c.l.b16 %v157
    %v1106 = vunpack.c.l.b16 %v158
    %v1107 = vunpack.c.l.b16 %v159
    %v1108 = vunpack.c.l.b16 %v160
    %v1109 = vunpack.c.l.b16 %v161
    %v1110 = vunpack.c.l.b16 %v162
    %v1111 = vunpack.c.l.b16 %v163
    %v1112 = vunpack.c.l.b16 %v164
    %v1113 = vunpack.c.l.b16 %v165
    %v1114 = vunpack.c.l.b16 %v166
    %v1115 = vunpack.c.l.b16 %v167
    %v1116 = vunpack.c.l.b16 %v168
    %v1117 = vunpack.c.l.b16 %v169
    %v1118 = vunpack.c.l.b16 %v170
    %v1119 = vunpack.c.l.b16 %v171
    %v1120 = vunpack.c.l.b16 %v172
    %v1121 = vunpack.c.l.b16 %v173
    %v1122 = vunpack.c.l.b16 %v174
    %v1123 = vunpack.c.l.b16 %v175
    %v1124 = vunpack.c.l.b16 %v176
    %v1125 = vunpack.c.l.b16 %v177
    %v1126 = vunpack.c.l.b16 %v178
    %v1127 = vunpack.c.l.b16 %v179
    %v1128 = vunpack.c.l.b16 %v180
    %v1129 = vunpack.c.l.b16 %v181
    %v1130 = vunpack.c.l.b16 %v182
    %v1131 = vunpack.c.l.b16 %v183
    %v1132 = vunpack.c.l.b16 %v184
    %v1133 = vunpack.c.l.b16 %v185
    %v1134 = vunpack.c.l.b16 %v186
    %v1135 = vunpack.c.l.b16 %v187
    %v1136 = vunpack.c.l.b16 %v188
    %v1137 = vunpack.c.l.b16 %v189
    %v1138 = vunpack.c.l.b16 %v190
    %v1139 = vunpack.c.l.b16 %v191
    %v1140 = vunpack.c.l.b16 %v192
    %v1141 = vunpack.c.l.b16 %v193
    %v1142 = vunpack.c.l.b16 %v194
    %v1143 = vunpack.c.l.b16 %v195
    %v1144 = vunpack.c.l.b16 %v196
    %v1145 = vunpack.c.l.b16 %v197
    %v1146 = vunpack.c.l.b16 %v198
    %v1147 = vunpack.c.l.b16 %v199
    %v1148 = vunpack.c.l.b16 %v200
    %v1149 = vunpack.c.l.b16 %v201
    %v1150 = vunpack.c.l.b16 %v202
    %v1151 = vunpack.c.l.b16 %v203
    %v1152 = vunpack.c.l.b16 %v204
    %v1153 = vunpack.c.l.b16 %v205
    %v1154 = vunpack.c.l.b16 %v206
    %v1155 = vunpack.c.l.b16 %v207
    %v1156 = vunpack.c.l.b16 %v208
    %v1157 = vunpack.c.l.b16 %v209
    %v1158 = vunpack.c.l.b16 %v210
    %v1159 = vunpack.c.l.b16 %v211
    %v1160 = vunpack.c.l.b16 %v212
    %v1161 = vunpack.c.l.b16 %v213
    %v1162 = vunpack.c.l.b16 %v214
    %v1163 = vunpack.c.l.b16 %v215
    %v1164 = vunpack.c.l.b16 %v216
    %v1165 = vunpack.c.l.b16 %v217
    %v1166 = vunpack.c.l.b16 %v218
    %v1167 = vunpack.c.l.b16 %v219
    %v1168 = vunpack.c.l.b16 %v220
    %v1169 = vunpack.c.l.b16 %v221
    %v1170 = vunpack.c.l.b16 %v222
    %v1171 = vunpack.c.l.b16 %v223
    %v1172 = vunpack.c.l.b16 %v224
    %v1173 = vunpack.c.l.b16 %v225
    %v1174 = vunpack.c.l.b16 %v226
    %v1175 = vunpack.c.l.b16 %v227
    %v1176 = vunpack.c.l.b16 %v228
    %v1177 = vunpack.c.l.b16 %v229
    %v1178 = vunpack.c.l.b16 %v230
    %v1179 = vunpack.c.l.b16 %v231
    %v1180 = vunpack.c.l.b16 %v232
    %v1181 = vunpack.c.l.b16 %v233
    %v1182 = vunpack.c.l.b16 %v234
    %v1183 = vunpack.c.l.b16 %v235
    %v1184 = vunpack.c.l.b16 %v236
    %v1185 = vunpack.c.l.b16 %v237
    %v1186 = vunpack.c.l.b16 %v238
    %v1187 = vunpack.c.l.b16 %v239
    %v1188 = vunpack.c.l.b16 %v240
    %v1189 = vunpack.c.l.b16 %v241
    %v1190 = vunpack.c.l.b16 %v242
    %v1191 = vunpack.c.l.b16 %v243
    %v1192 = vunpack.c.l.b16 %v244
    %v1193 = vunpack.c.l.b16 %v245
    %v1194 = vunpack.c.l.b16 %v246
    %v1195 = vunpack.c.l.b16 %v247
    %v1196 = vunpack.c.l.b16 %v248
    %v1197 = vunpack.c.l.b16 %v249
    %v1198 = vunpack.c.l.b16 %v250
    %v1199 = vunpack.c.l.b16 %v251
    %v1200 = vunpack.c.l.b16 %v252
    %v1201 = vunpack.c.l.b16 %v253
    %v1202 = vunpack.c.l.b16 %v254
    %v1203 = vunpack.c.l.b16 %v255
    %v1204 = vunpack.c.l.b16 %v256
    %v1205 = vunpack.c.l.b16 %v257
    %v1206 = vunpack.c.l.b16 %v258
    %v1207 = vunpack.c.l.b16 %v259
    %v1208 = vunpack.c.l.b16 %v260
    %v1209 = vunpack.c.l.b16 %v261
    %v1210 = vunpack.c.l.b16 %v262
    %v1211 = vunpack.c.l.b16 %v263
    %v1212 = vunpack.c.l.b16 %v264
    %v1213 = vunpack.c.l.b16 %v265
    %v1214 = vunpack.c.l.b16 %v266
    %v1215 = vunpack.c.l.b16 %v267
    %v1216 = vunpack.c.l.b16 %v268
    %v1217 = vunpack.c.l.b16 %v269
    %v1218 = vunpack.c.l.b16 %v270
    %v1219 = vunpack.c.l.b16 %v271
    %v1220 = vunpack.c.l.b16 %v272
    %v1221 = vunpack.c.l.b16 %v273
    %v1222 = vunpack.c.l.b16 %v274
    %v1223 = vunpack.c.l.b16 %v275
    %v1224 = vunpack.c.l.b16 %v276
    %v1225 = vunpack.c.l.b16 %v277
    %v1226 = vunpack.c.l.b16 %v278
    %v1227 = vunpack.c.l.b16 %v279
    %v1228 = vunpack.c.l.b16 %v280
    %v1229 = vunpack.c.l.b16 %v281
    %v1230 = vunpack.c.l.b16 %v282
    %v1231 = vunpack.c.l.b16 %v283
    %v1232 = vunpack.c.l.b16 %v284
    %v1233 = vunpack.c.l.b16 %v285
    %v1234 = vunpack.c.l.b16 %v286
    %v1235 = vunpack.c.l.b16 %v287
    %v1236 = vunpack.c.l.b16 %v288
    %v1237 = vunpack.c.l.b16 %v289
    %v1238 = vunpack.c.l.b16 %v290
    %v1239 = vunpack.c.l.b16 %v291
    %v1240 = vunpack.c.l.b16 %v292
    %v1241 = vunpack.c.l.b16 %v293
    %v1242 = vunpack.c.l.b16 %v294
    %v1243 = vunpack.c.l.b16 %v295
    %v1244 = vunpack.c.l.b16 %v296
    %v1245 = vunpack.c.l.b16 %v297
    %v1246 = vunpack.c.l.b16 %v298
    %v1247 = vunpack.c.l.b16 %v299
    %v1248 = vunpack.c.l.b16 %v300
    %v1249 = vunpack.c.l.b16 %v301
    %v1250 = vunpack.c.l.b16 %v302
    %v1251 = vunpack.c.l.b16 %v303
    %v1252 = vunpack.c.l.b16 %v304
    %v1253 = vunpack.c.l.b16 %v305
    %v1254 = vunpack.c.l.b16 %v306
    %v1255 = vunpack.c.l.b16 %v307
    %v1256 = vunpack.c.l.b16 %v308
    %v1257 = vunpack.c.l.b16 %v309
    %v1258 = vunpack.c.l.b16 %v310
    %v1259 = vunpack.c.l.b16 %v311
    %v1260 = vunpack.c.l.b16 %v312
    %v1261 = vunpack.c.l.b16 %v313
    %v1262 = vunpack.c.l.b16 %v314
    %v1263 = vunpack.c.l.b16 %v315
    %v1264 = vunpack.c.l.b16 %v316
    %v1265 = vunpack.c.l.b16 %v317
    %v1266 = vunpack.c.l.b16 %v318
    %v1267 = vunpack.c.l.b16 %v319
    %v1268 = vunpack.c.l.b16 %v320
    %v1269 = vunpack.c.l.b16 %v321
    %v1270 = vunpack.c.l.b16 %v322
    %v1271 = vunpack.c.l.b16 %v323
    %v1272 = vunpack.c.l.b16 %v324
    %v1273 = vunpack.c.l.b16 %v325
    %v1274 = vunpack.c.l.b16 %v326
    %v1275 = vunpack.c.l.b16 %v327
    %v1276 = vunpack.c.l.b16 %v328
    %v1277 = vunpack.c.l.b16 %v329
    %v1278 = vunpack.c.l.b16 %v330
    %v1279 = vunpack.c.l.b16 %v331
    %v1280 = vunpack.c.l.b16 %v332
    %v1281 = vunpack.c.l.b16 %v333
    %v1282 = vunpack.c.l.b16 %v334
    %v1283 = vunpack.c.l.b16 %v335
    %v1284 = vunpack.c.l.b16 %v336
    %v1285 = vunpack.c.l.b16 %v337
    %v1286 = vunpack.c.l.b16 %v338
    %v1287 = vunpack.c.l.b16 %v339
    %v1288 = vunpack.c.l.b16 %v340
    %v1289 = vunpack.c.l.b16 %v341
    %v1290 = vunpack.c.l.b16 %v342
    %v1291 = vunpack.c.l.b16 %v343
    %v1292 = vunpack.c.l.b16 %v344
    %v1293 = vunpack.c.l.b16 %v345
    %v1294 = vunpack.c.l.b16 %v346
    %v1295 = vunpack.c.l.b16 %v347
    %v1296 = vunpack.c.l.b16 %v348
    %v1297 = vunpack.c.l.b16 %v349
    %v1298 = vunpack.c.l.b16 %v350
    %v1299 = vunpack.c.l.b16 %v351
    %v1300 = vunpack.c.l.b16 %v352
    %v1301 = vunpack.c.l.b16 %v353
    %v1302 = vunpack.c.l.b16 %v354
    %v1303 = vunpack.c.l.b16 %v355
    %v1304 = vunpack.c.l.b16 %v356
    %v1305 = vunpack.c.l.b16 %v357
    %v1306 = vunpack.c.l.b16 %v358
    %v1307 = vunpack.c.l.b16 %v359
    %v1308 = vunpack.c.l.b16 %v360
    %v1309 = vunpack.c.l.b16 %v361
    %v1310 = vunpack.c.l.b16 %v362
    %v1311 = vunpack.c.l.b16 %v363
    %v1312 = vunpack.c.l.b16 %v364
    %v1313 = vunpack.c.l.b16 %v365
    %v1314 = vunpack.c.l.b16 %v366
    %v1315 = vunpack.c.l.b16 %v367
    %v1316 = vunpack.c.l.b16 %v368
    %v1317 = vunpack.c.l.b16 %v369
    %v1318 = vunpack.c.l.b16 %v370
    %v1319 = vunpack.c.l.b16 %v371
    %v1320 = vunpack.c.l.b16 %v372
    %v1321 = vunpack.c.l.b16 %v373
    %v1322 = vunpack.c.l.b16 %v374
    %v1323 = vunpack.c.l.b16 %v375
    %v1324 = vunpack.c.l.b16 %v376
    %v1325 = vunpack.c.l.b16 %v377
    %v1326 = vunpack.c.l.b16 %v378
    %v1327 = vunpack.c.l.b16 %v379
    %v1328 = vunpack.c.l.b16 %v380
    %v1329 = vunpack.c.l.b16 %v381
    %v1330 = vunpack.c.l.b16 %v382
    %v1331 = vunpack.c.l.b16 %v383
    %v1332 = vunpack.c.l.b16 %v384
    %v1333 = vunpack.c.l.b16 %v385
    %v1334 = vunpack.c.l.b16 %v386
    %v1335 = vunpack.c.l.b16 %v387
    %v1336 = vunpack.c.l.b16 %v388
    %v1337 = vunpack.c.l.b16 %v389
    %v1338 = vunpack.c.l.b16 %v390
    %v1339 = vunpack.c.l.b16 %v391
    %v1340 = vunpack.c.l.b16 %v392
    %v1341 = vunpack.c.l.b16 %v393
    %v1342 = vunpack.c.l.b16 %v394
    %v1343 = vunpack.c.l.b16 %v395
    %v1344 = vunpack.c.l.b16 %v396
    %v1345 = vunpack.c.l.b16 %v397
    %v1346 = vunpack.c.l.b16 %v398
    %v1347 = vunpack.c.l.b16 %v399
    %v1348 = vunpack.c.l.b16 %v400
    %v1349 = vunpack.c.l.b16 %v401
    %v1350 = vunpack.c.l.b16 %v402
    %v1351 = vunpack.c.l.b16 %v403
    %v1352 = vunpack.c.l.b16 %v404
    %v1353 = vunpack.c.l.b16 %v405
    %v1354 = vunpack.c.l.b16 %v406
    %v1355 = vunpack.c.l.b16 %v407
    %v1356 = vunpack.c.l.b16 %v408
    %v1357 = vunpack.c.l.b16 %v409
    %v1358 = vunpack.c.l.b16 %v410
    %v1359 = vunpack.c.l.b16 %v411
    %v1360 = vunpack.c.l.b16 %v412
    %v1361 = vunpack.c.l.b16 %v413
    %v1362 = vunpack.c.l.b16 %v414
    %v1363 = vunpack.c.l.b16 %v415
    %v1364 = vunpack.c.l.b16 %v416
    %v1365 = vunpack.c.l.b16 %v417
    %v1366 = vunpack.c.l.b16 %v418
    %v1367 = vunpack.c.l.b16 %v419
    %v1368 = vunpack.c.l.b16 %v420
    %v1369 = vunpack.c.l.b16 %v421
    %v1370 = vunpack.c.l.b16 %v422
    %v1371 = vunpack.c.l.b16 %v423
    %v1372 = vunpack.c.l.b16 %v424
    %v1373 = vunpack.c.l.b16 %v425
    %v1374 = vunpack.c.l.b16 %v426
    %v1375 = vunpack.c.l.b16 %v427
    %v1376 = vunpack.c.l.b16 %v428
    %v1377 = vpack.c.b16 %v978, %v977
    %v1378 = vpack.c.b16 %v980, %v979
    %v1379 = vpack.c.b16 %v982, %v981
    %v1380 = vpack.c.b16 %v984, %v983
    %v1381 = vpack.c.b16 %v986, %v985
    %v1382 = vpack.c.b16 %v988, %v987
    %v1383 = vpack.c.b16 %v990, %v989
    %v1384 = vpack.c.b16 %v992, %v991
    %v1385 = vpack.c.b16 %v994, %v993
    %v1386 = vpack.c.b16 %v996, %v995
    %v1387 = vpack.c.b16 %v998, %v997
    %v1388 = vpack.c.b16 %v1000, %v999
    %v1389 = vpack.c.b16 %v1002, %v1001
    %v1390 = vpack.c.b16 %v1004, %v1003
    %v1391 = vpack.c.b16 %v1006, %v1005
    %v1392 = vpack.c.b16 %v1008, %v1007
    %v1393 = vpack.c.b16 %v1010, %v1009
    %v1394 = vpack.c.b16 %v1012, %v1011
    %v1395 = vpack.c.b16 %v1014, %v1013
    %v1396 = vpack.c.b16 %v1016, %v1015
    %v1397 = vpack.c.b16 %v1018, %v1017
    %v1398 = vpack.c.b16 %v1020, %v1019
    %v1399 = vpack.c.b16 %v1022, %v1021
    %v1400 = vpack.c.b16 %v1024, %v1023
    %v1401 = vpack.c.b16 %v1026, %v1025
    %v1402 = vpack.c.b16 %v1028, %v1027
    %v1403 = vpack.c.b16 %v1030, %v1029
    %v1404 = vpack.c.b16 %v1032, %v1031
    %v1405 = vpack.c.b16 %v1034, %v1033
    %v1406 = vpack.c.b16 %v1036, %v1035
    %v1407 = vpack.c.b16 %v1038, %v1037
    %v1408 = vpack.c.b16 %v1040, %v1039
    %v1409 = vpack.c.b16 %v1042, %v1041
    %v1410 = vpack.c.b16 %v1044, %v1043
    %v1411 = vpack.c.b16 %v1046, %v1045
    %v1412 = vpack.c.b16 %v1048, %v1047
    %v1413 = vpack.c.b16 %v1050, %v1049
    %v1414 = vpack.c.b16 %v1052, %v1051
    %v1415 = vpack.c.b16 %v1054, %v1053
    %v1416 = vpack.c.b16 %v1056, %v1055
    %v1417 = vpack.c.b16 %v1058, %v1057
    %v1418 = vpack.c.b16 %v1060, %v1059
    %v1419 = vpack.c.b16 %v1062, %v1061
    %v1420 = vpack.c.b16 %v1064, %v1063
    %v1421 = vpack.c.b16 %v1066, %v1065
    %v1422 = vpack.c.b16 %v1068, %v1067
    %v1423 = vpack.c.b16 %v1070, %v1069
    %v1424 = vpack.c.b16 %v1072, %v1071
    %v1425 = vpack.c.b16 %v1074, %v1073
    %v1426 = vpack.c.b16 %v1076, %v1075
    %v1427 = vpack.c.b16 %v1078, %v1077
    %v1428 = vpack.c.b16 %v1080, %v1079
    %v1429 = vpack.c.b16 %v1082, %v1081
    %v1430 = vpack.c.b16 %v1084, %v1083
    %v1431 = vpack.c.b16 %v1086, %v1085
    %v1432 = vpack.c.b16 %v1088, %v1087
    %v1433 = vpack.c.b16 %v1090, %v1089
    %v1434 = vpack.c.b16 %v1092, %v1091
    %v1435 = vpack.c.b16 %v1094, %v1093
    %v1436 = vpack.c.b16 %v1096, %v1095
    %v1437 = vpack.c.b16 %v1098, %v1097
    %v1438 = vpack.c.b16 %v1100, %v1099
    %v1439 = vpack.c.b16 %v1102, %v1101
    %v1440 = vpack.c.b16 %v1104, %v1103
    %v1441 = vpack.c.b16 %v1106, %v1105
    %v1442 = vpack.c.b16 %v1108, %v1107
    %v1443 = vpack.c.b16 %v1110, %v1109
    %v1444 = vpack.c.b16 %v1112, %v1111
    %v1445 = vpack.c.b16 %v1114, %v1113
    %v1446 = vpack.c.b16 %v1116, %v1115
    %v1447 = vpack.c.b16 %v1118, %v1117
    %v1448 = vpack.c.b16 %v1120, %v1119
    %v1449 = vpack.c.b16 %v1122, %v1121
    %v1450 = vpack.c.b16 %v1124, %v1123
    %v1451 = vpack.c.b16 %v1126, %v1125
    %v1452 = vpack.c.b16 %v1128, %v1127
    %v1453 = vpack.c.b16 %v1130, %v1129
    %v1454 = vpack.c.b16 %v1132, %v1131
    %v1455 = vpack.c.b16 %v1134, %v1133
    %v1456 = vpack.c.b16 %v1136, %v1135
    %v1457 = vpack.c.b16 %v1138, %v1137
    %v1458 = vpack.c.b16 %v1140, %v1139
    %v1459 = vpack.c.b16 %v1142, %v1141
    %v1460 = vpack.c.b16 %v1144, %v1143
    %v1461 = vpack.c.b16 %v1146, %v1145
    %v1462 = vpack.c.b16 %v1148, %v1147
    %v1463 = vpack.c.b16 %v1150, %v1149
    %v1464 = vpack.c.b16 %v1152, %v1151
    %v1465 = vpack.c.b16 %v1154, %v1153
    %v1466 = vpack.c.b16 %v1156, %v1155
    %v1467 = vpack.c.b16 %v1158, %v1157
    %v1468 = vpack.c.b16 %v1160, %v1159
    %v1469 = vpack.c.b16 %v1162, %v1161
    %v1470 = vpack.c.b16 %v1164, %v1163
    %v1471 = vpack.c.b16 %v1166, %v1165
    %v1472 = vpack.c.b16 %v1168, %v1167
    %v1473 = vpack.c.b16 %v1170, %v1169
    %v1474 = vpack.c.b16 %v1172, %v1171
    %v1475 = vpack.c.b16 %v1174, %v1173
    %v1476 = vpack.c.b16 %v1176, %v1175
    %v1477 = vpack.c.b16 %v1178, %v1177
    %v1478 = vpack.c.b16 %v1180, %v1179
    %v1479 = vpack.c.b16 %v1182, %v1181
    %v1480 = vpack.c.b16 %v1184, %v1183
    %v1481 = vpack.c.b16 %v1186, %v1185
    %v1482 = vpack.c.b16 %v1188, %v1187
    %v1483 = vpack.c.b16 %v1190, %v1189
    %v1484 = vpack.c.b16 %v1192, %v1191
    %v1485 = vpack.c.b16 %v1194, %v1193
    %v1486 = vpack.c.b16 %v1196, %v1195
    %v1487 = vpack.c.b16 %v1198, %v1197
    %v1488 = vpack.c.b16 %v1200, %v1199
    %v1489 = vpack.c.b16 %v1202, %v1201
    %v1490 = vpack.c.b16 %v1204, %v1203
    %v1491 = vpack.c.b16 %v1206, %v1205
    %v1492 = vpack.c.b16 %v1208, %v1207
    %v1493 = vpack.c.b16 %v1210, %v1209
    %v1494 = vpack.c.b16 %v1212, %v1211
    %v1495 = vpack.c.b16 %v1214, %v1213
    %v1496 = vpack.c.b16 %v1216, %v1215
    %v1497 = vpack.c.b16 %v1218, %v1217
    %v1498 = vpack.c.b16 %v1220, %v1219
    %v1499 = vpack.c.b16 %v1222, %v1221
    %v1500 = vpack.c.b16 %v1224, %v1223
    %v1501 = vpack.c.b16 %v1226, %v1225
    %v1502 = vpack.c.b16 %v1228, %v1227
    %v1503 = vpack.c.b16 %v1230, %v1229
    %v1504 = vpack.c.b16 %v1232, %v1231
    %v1505 = vpack.c.b16 %v1234, %v1233
    %v1506 = vpack.c.b16 %v1236, %v1235
    %v1507 = vpack.c.b16 %v1238, %v1237
    %v1508 = vpack.c.b16 %v1240, %v1239
    %v1509 = vpack.c.b16 %v1242, %v1241
    %v1510 = vpack.c.b16 %v1244, %v1243
    %v1511 = vpack.c.b16 %v1246, %v1245
    %v1512 = vpack.c.b16 %v1248, %v1247
    %v1513 = vpack.c.b16 %v1250, %v1249
    %v1514 = vpack.c.b16 %v1252, %v1251
    %v1515 = vpack.c.b16 %v1254, %v1253
    %v1516 = vpack.c.b16 %v1256, %v1255
    %v1517 = vpack.c.b16 %v1258, %v1257
    %v1518 = vpack.c.b16 %v1260, %v1259
    %v1519 = vpack.c.b16 %v1262, %v1261
    %v1520 = vpack.c.b16 %v1264, %v1263
    %v1521 = vpack.c.b16 %v1266, %v1265
    %v1522 = vpack.c.b16 %v1268, %v1267
    %v1523 = vpack.c.b16 %v1270, %v1269
    %v1524 = vpack.c.b16 %v1272, %v1271
    %v1525 = vpack.c.b16 %v1274, %v1273
    %v1526 = vpack.c.b16 %v1276, %v1275
    %v1527 = vpack.c.b16 %v1278, %v1277
    %v1528 = vpack.c.b16 %v1280, %v1279
    %v1529 = vpack.c.b16 %v1282, %v1281
    %v1530 = vpack.c.b16 %v1284, %v1283
    %v1531 = vpack.c.b16 %v1286, %v1285
    %v1532 = vpack.c.b16 %v1288, %v1287
    %v1533 = vpack.c.b16 %v1290, %v1289
    %v1534 = vpack.c.b16 %v1292, %v1291
    %v1535 = vpack.c.b16 %v1294, %v1293
    %v1536 = vpack.c.b16 %v1296, %v1295
    %v1537 = vpack.c.b16 %v1298, %v1297
    %v1538 = vpack.c.b16 %v1300, %v1299
    %v1539 = vpack.c.b16 %v1302, %v1301
    %v1540 = vpack.c.b16 %v1304, %v1303
    %v1541 = vpack.c.b16 %v1306, %v1305
    %v1542 = vpack.c.b16 %v1308, %v1307
    %v1543 = vpack.c.b16 %v1310, %v1309
    %v1544 = vpack.c.b16 %v1312, %v1311
    %v1545 = vpack.c.b16 %v1314, %v1313
    %v1546 = vpack.c.b16 %v1316, %v1315
    %v1547 = vpack.c.b16 %v1318, %v1317
    %v1548 = vpack.c.b16 %v1320, %v1319
    %v1549 = vpack.c.b16 %v1322, %v1321
    %v1550 = vpack.c.b16 %v1324, %v1323
    %v1551 = vpack.c.b16 %v1326, %v1325
    %v1552 = vpack.c.b16 %v1328, %v1327
    %v1553 = vpack.c.b16 %v1330, %v1329
    %v1554 = vpack.c.b16 %v1332, %v1331
    %v1555 = vpack.c.b16 %v1334, %v1333
    %v1556 = vpack.c.b16 %v1336, %v1335
    %v1557 = vpack.c.b16 %v1338, %v1337
    %v1558 = vpack.c.b16 %v1340, %v1339
    %v1559 = vpack.c.b16 %v1342, %v1341
    %v1560 = vpack.c.b16 %v1344, %v1343
    %v1561 = vpack.c.b16 %v1346, %v1345
    %v1562 = vpack.c.b16 %v1348, %v1347
    %v1563 = vpack.c.b16 %v1350, %v1349
    %v1564 = vpack.c.b16 %v1352, %v1351
    %v1565 = vpack.c.b16 %v1354, %v1353
    %v1566 = vpack.c.b16 %v1356, %v1355
    %v1567 = vpack.c.b16 %v1358, %v1357
    %v1568 = vpack.c.b16 %v1360, %v1359
    %v1569 = vpack.c.b16 %v1362, %v1361
    %v1570 = vpack.c.b16 %v1364, %v1363
    %v1571 = vpack.c.b16 %v1366, %v1365
    %v1572 = vpack.c.b16 %v1368, %v1367
    %v1573 = vpack.c.b16 %v1370, %v1369
    %v1574 = vpack.c.b16 %v1372, %v1371
    %v1575 = vpack.c.b16 %v1374, %v1373
    %v1576 = vpack.c.b16 %v1376, %v1375
    %1777 = vmatprep.subr.bf16.mxu0 0
    %1778 = vmatpush1.bf16.msra.mxu0 %v1377
    %1779 = vmatprep.subr.bf16.mxu0 0
    %1780 = vmatpush1.bf16.msra.mxu0 %v1378
    %1781 = vmatprep.subr.bf16.mxu0 0
    %1782 = vmatpush1.bf16.msra.mxu0 %v1379
    %1783 = vmatprep.subr.bf16.mxu0 0
    %1784 = vmatpush1.bf16.msra.mxu0 %v1380
    %1785 = vmatprep.subr.bf16.mxu0 0
    %1786 = vmatpush1.bf16.msra.mxu0 %v1381
    %1787 = vmatprep.subr.bf16.mxu0 0
    %1788 = vmatpush1.bf16.msra.mxu0 %v1382
    %1789 = vmatprep.subr.bf16.mxu0 0
    %1790 = vmatpush1.bf16.msra.mxu0 %v1383
    %1791 = vmatprep.subr.bf16.mxu0 0
    %1792 = vmatpush1.bf16.msra.mxu0 %v1384
    %1793 = vmatprep.subr.bf16.mxu0 0
    %1794 = vmatpush1.bf16.msra.mxu0 %v1385
    %1795 = vmatprep.subr.bf16.mxu0 0
    %1796 = vmatpush1.bf16.msra.mxu0 %v1386
    %1797 = vmatprep.subr.bf16.mxu0 0
    %1798 = vmatpush1.bf16.msra.mxu0 %v1387
    %1799 = vmatprep.subr.bf16.mxu0 0
    %1800 = vmatpush1.bf16.msra.mxu0 %v1388
    %1801 = vmatprep.subr.bf16.mxu0 0
    %1802 = vmatpush1.bf16.msra.mxu0 %v1389
    %1803 = vmatprep.subr.bf16.mxu0 0
    %1804 = vmatpush1.bf16.msra.mxu0 %v1390
    %1805 = vmatprep.subr.bf16.mxu0 0
    %1806 = vmatpush1.bf16.msra.mxu0 %v1391
    %1807 = vmatprep.subr.bf16.mxu0 0
    %1808 = vmatpush1.bf16.msra.mxu0 %v1392
    %1809 = vmatprep.mubr.bf16.mxu0 %v458
    %1810 = vmatmul.mubr.bf16.gmra.mrb[0].mxu0 %v450
    %v1811 = vpop.f32.mrb[0].mxu0
    %v1812 = vadd.f32 %v434, %v1811
    %v1813 = vpop.f32.mrb[0].mxu0
    %v1814 = vpop.f32.mrb[0].mxu0
    %v1815 = vpop.f32.mrb[0].mxu0
    %1816 = vdwg.mxu0
    %1817 = vmatprep.subr.bf16.mxu0 0
    %1818 = vmatpush1.bf16.msra.mxu0 %v1393
    %1819 = vmatprep.subr.bf16.mxu0 0
    %1820 = vmatpush1.bf16.msra.mxu0 %v1394
    %1821 = vmatprep.subr.bf16.mxu0 0
    %1822 = vmatpush1.bf16.msra.mxu0 %v1395
    %1823 = vmatprep.subr.bf16.mxu0 0
    %1824 = vmatpush1.bf16.msra.mxu0 %v1396
    %1825 = vmatprep.subr.bf16.mxu0 0
    %1826 = vmatpush1.bf16.msra.mxu0 %v1397
    %1827 = vmatprep.subr.bf16.mxu0 0
    %1828 = vmatpush1.bf16.msra.mxu0 %v1398
    %1829 = vmatprep.subr.bf16.mxu0 0
    %1830 = vmatpush1.bf16.msra.mxu0 %v1399
    %1831 = vmatprep.subr.bf16.mxu0 0
    %1832 = vmatpush1.bf16.msra.mxu0 %v1400
    %1833 = vmatprep.subr.bf16.mxu0 0
    %1834 = vmatpush1.bf16.msra.mxu0 %v1401
    %1835 = vmatprep.subr.bf16.mxu0 0
    %1836 = vmatpush1.bf16.msra.mxu0 %v1402
    %1837 = vmatprep.subr.bf16.mxu0 0
    %1838 = vmatpush1.bf16.msra.mxu0 %v1403
    %1839 = vmatprep.subr.bf16.mxu0 0
    %1840 = vmatpush1.bf16.msra.mxu0 %v1404
    %1841 = vmatprep.subr.bf16.mxu0 0
    %1842 = vmatpush1.bf16.msra.mxu0 %v1405
    %1843 = vmatprep.subr.bf16.mxu0 0
    %1844 = vmatpush1.bf16.msra.mxu0 %v1406
    %1845 = vmatprep.subr.bf16.mxu0 0
    %1846 = vmatpush1.bf16.msra.mxu0 %v1407
    %1847 = vmatprep.subr.bf16.mxu0 0
    %1848 = vmatpush1.bf16.msra.mxu0 %v1408
    %1849 = vmatprep.mubr.bf16.mxu0 %v459
    %1850 = vmatmul.mubr.bf16.gmra.mrb[0].mxu0 %v457
    %v1851 = vpop.f32.mrb[0].mxu0
    %v1852 = vadd.f32 %v1812, %v1851
    %v1853 = vpop.f32.mrb[0].mxu0
    %v1854 = vpop.f32.mrb[0].mxu0
    %v1855 = vpop.f32.mrb[0].mxu0
    %1856 = vdwg.mxu0
    %1857 = vmatprep.subr.bf16.mxu0 0
    %1858 = vmatpush1.bf16.msra.mxu0 %v1409
    %1859 = vmatprep.subr.bf16.mxu0 0
    %1860 = vmatpush1.bf16.msra.mxu0 %v1410
    %1861 = vmatprep.subr.bf16.mxu0 0
    %1862 = vmatpush1.bf16.msra.mxu0 %v1411
    %1863 = vmatprep.subr.bf16.mxu0 0
    %1864 = vmatpush1.bf16.msra.mxu0 %v1412
    %1865 = vmatprep.subr.bf16.mxu0 0
    %1866 = vmatpush1.bf16.msra.mxu0 %v1413
    %1867 = vmatprep.subr.bf16.mxu0 0
    %1868 = vmatpush1.bf16.msra.mxu0 %v1414
    %1869 = vmatprep.subr.bf16.mxu0 0
    %1870 = vmatpush1.bf16.msra.mxu0 %v1415
    %1871 = vmatprep.subr.bf16.mxu0 0
    %1872 = vmatpush1.bf16.msra.mxu0 %v1416
    %1873 = vmatprep.subr.bf16.mxu0 0
    %1874 = vmatpush1.bf16.msra.mxu0 %v1417
    %1875 = vmatprep.subr.bf16.mxu0 0
    %1876 = vmatpush1.bf16.msra.mxu0 %v1418
    %1877 = vmatprep.subr.bf16.mxu0 0
    %1878 = vmatpush1.bf16.msra.mxu0 %v1419
    %1879 = vmatprep.subr.bf16.mxu0 0
    %1880 = vmatpush1.bf16.msra.mxu0 %v1420
    %1881 = vmatprep.subr.bf16.mxu0 0
    %1882 = vmatpush1.bf16.msra.mxu0 %v1421
    %1883 = vmatprep.subr.bf16.mxu0 0
    %1884 = vmatpush1.bf16.msra.mxu0 %v1422
    %1885 = vmatprep.subr.bf16.mxu0 0
    %1886 = vmatpush1.bf16.msra.mxu0 %v1423
    %1887 = vmatprep.subr.bf16.mxu0 0
    %1888 = vmatpush1.bf16.msra.mxu0 %v1424
    %1889 = vmatprep.mubr.bf16.mxu0 %v475
    %1890 = vmatmul.mubr.bf16.gmra.mrb[0].mxu0 %v467
    %v1891 = vpop.f32.mrb[0].mxu0
    %v1892 = vadd.f32 %v1852, %v1891
    %v1893 = vpop.f32.mrb[0].mxu0
    %v1894 = vpop.f32.mrb[0].mxu0
    %v1895 = vpop.f32.mrb[0].mxu0
    %1896 = vdwg.mxu0
    %1897 = vmatprep.subr.bf16.mxu0 0
    %1898 = vmatpush1.bf16.msra.mxu0 %v1425
    %1899 = vmatprep.subr.bf16.mxu0 0
    %1900 = vmatpush1.bf16.msra.mxu0 %v1426
    %1901 = vmatprep.subr.bf16.mxu0 0
    %1902 = vmatpush1.bf16.msra.mxu0 %v1427
    %1903 = vmatprep.subr.bf16.mxu0 0
    %1904 = vmatpush1.bf16.msra.mxu0 %v1428
    %1905 = vmatprep.subr.bf16.mxu0 0
    %1906 = vmatpush1.bf16.msra.mxu0 %v1429
    %1907 = vmatprep.subr.bf16.mxu0 0
    %1908 = vmatpush1.bf16.msra.mxu0 %v1430
    %1909 = vmatprep.subr.bf16.mxu0 0
    %1910 = vmatpush1.bf16.msra.mxu0 %v1431
    %1911 = vmatprep.subr.bf16.mxu0 0
    %1912 = vmatpush1.bf16.msra.mxu0 %v1432
    %1913 = vmatprep.subr.bf16.mxu0 0
    %1914 = vmatpush1.bf16.msra.mxu0 %v1433
    %1915 = vmatprep.subr.bf16.mxu0 0
    %1916 = vmatpush1.bf16.msra.mxu0 %v1434
    %1917 = vmatprep.subr.bf16.mxu0 0
    %1918 = vmatpush1.bf16.msra.mxu0 %v1435
    %1919 = vmatprep.subr.bf16.mxu0 0
    %1920 = vmatpush1.bf16.msra.mxu0 %v1436
    %1921 = vmatprep.subr.bf16.mxu0 0
    %1922 = vmatpush1.bf16.msra.mxu0 %v1437
    %1923 = vmatprep.subr.bf16.mxu0 0
    %1924 = vmatpush1.bf16.msra.mxu0 %v1438
    %1925 = vmatprep.subr.bf16.mxu0 0
    %1926 = vmatpush1.bf16.msra.mxu0 %v1439
    %1927 = vmatprep.subr.bf16.mxu0 0
    %1928 = vmatpush1.bf16.msra.mxu0 %v1440
    %1929 = vmatprep.mubr.bf16.mxu0 %v476
    %1930 = vmatmul.mubr.bf16.gmra.mrb[0].mxu0 %v474
    %v1931 = vpop.f32.mrb[0].mxu0
    %v1932 = vadd.f32 %v1892, %v1931
    %v1933 = vpop.f32.mrb[0].mxu0
    %v1934 = vpop.f32.mrb[0].mxu0
    %v1935 = vpop.f32.mrb[0].mxu0
    %1936 = vdwg.mxu0
    %1937 = vmatprep.subr.bf16.mxu0 0
    %1938 = vmatpush1.bf16.msra.mxu0 %v1441
    %1939 = vmatprep.subr.bf16.mxu0 0
    %1940 = vmatpush1.bf16.msra.mxu0 %v1442
    %1941 = vmatprep.subr.bf16.mxu0 0
    %1942 = vmatpush1.bf16.msra.mxu0 %v1443
    %1943 = vmatprep.subr.bf16.mxu0 0
    %1944 = vmatpush1.bf16.msra.mxu0 %v1444
    %1945 = vmatprep.subr.bf16.mxu0 0
    %1946 = vmatpush1.bf16.msra.mxu0 %v1445
    %1947 = vmatprep.subr.bf16.mxu0 0
    %1948 = vmatpush1.bf16.msra.mxu0 %v1446
    %1949 = vmatprep.subr.bf16.mxu0 0
    %1950 = vmatpush1.bf16.msra.mxu0 %v1447
    %1951 = vmatprep.subr.bf16.mxu0 0
    %1952 = vmatpush1.bf16.msra.mxu0 %v1448
    %1953 = vmatprep.subr.bf16.mxu0 0
    %1954 = vmatpush1.bf16.msra.mxu0 %v1449
    %1955 = vmatprep.subr.bf16.mxu0 0
    %1956 = vmatpush1.bf16.msra.mxu0 %v1450
    %1957 = vmatprep.subr.bf16.mxu0 0
    %1958 = vmatpush1.bf16.msra.mxu0 %v1451
    %1959 = vmatprep.subr.bf16.mxu0 0
    %1960 = vmatpush1.bf16.msra.mxu0 %v1452
    %1961 = vmatprep.subr.bf16.mxu0 0
    %1962 = vmatpush1.bf16.msra.mxu0 %v1453
    %1963 = vmatprep.subr.bf16.mxu0 0
    %1964 = vmatpush1.bf16.msra.mxu0 %v1454
    %1965 = vmatprep.subr.bf16.mxu0 0
    %1966 = vmatpush1.bf16.msra.mxu0 %v1455
    %1967 = vmatprep.subr.bf16.mxu0 0
    %1968 = vmatpush1.bf16.msra.mxu0 %v1456
    %1969 = vmatprep.mubr.bf16.mxu0 %v492
    %1970 = vmatmul.mubr.bf16.gmra.mrb[0].mxu0 %v484
    %v1971 = vpop.f32.mrb[0].mxu0
    %v1972 = vadd.f32 %v1932, %v1971
    %v1973 = vpop.f32.mrb[0].mxu0
    %v1974 = vpop.f32.mrb[0].mxu0
    %v1975 = vpop.f32.mrb[0].mxu0
    %1976 = vdwg.mxu0
    %1977 = vmatprep.subr.bf16.mxu0 0
    %1978 = vmatpush1.bf16.msra.mxu0 %v1457
    %1979 = vmatprep.subr.bf16.mxu0 0
    %1980 = vmatpush1.bf16.msra.mxu0 %v1458
    %1981 = vmatprep.subr.bf16.mxu0 0
    %1982 = vmatpush1.bf16.msra.mxu0 %v1459
    %1983 = vmatprep.subr.bf16.mxu0 0
    %1984 = vmatpush1.bf16.msra.mxu0 %v1460
    %1985 = vmatprep.subr.bf16.mxu0 0
    %1986 = vmatpush1.bf16.msra.mxu0 %v1461
    %1987 = vmatprep.subr.bf16.mxu0 0
    %1988 = vmatpush1.bf16.msra.mxu0 %v1462
    %1989 = vmatprep.subr.bf16.mxu0 0
    %1990 = vmatpush1.bf16.msra.mxu0 %v1463
    %1991 = vmatprep.subr.bf16.mxu0 0
    %1992 = vmatpush1.bf16.msra.mxu0 %v1464
    %1993 = vmatprep.subr.bf16.mxu0 0
    %1994 = vmatpush1.bf16.msra.mxu0 %v1465
    %1995 = vmatprep.subr.bf16.mxu0 0
    %1996 = vmatpush1.bf16.msra.mxu0 %v1466
    %1997 = vmatprep.subr.bf16.mxu0 0
    %1998 = vmatpush1.bf16.msra.mxu0 %v1467
    %1999 = vmatprep.subr.bf16.mxu0 0
    %2000 = vmatpush1.bf16.msra.mxu0 %v1468
    %2001 = vmatprep.subr.bf16.mxu0 0
    %2002 = vmatpush1.bf16.msra.mxu0 %v1469
    %2003 = vmatprep.subr.bf16.mxu0 0
    %2004 = vmatpush1.bf16.msra.mxu0 %v1470
    %2005 = vmatprep.subr.bf16.mxu0 0
    %2006 = vmatpush1.bf16.msra.mxu0 %v1471
    %2007 = vmatprep.subr.bf16.mxu0 0
    %2008 = vmatpush1.bf16.msra.mxu0 %v1472
    %2009 = vmatprep.mubr.bf16.mxu0 %v493
    %2010 = vmatmul.mubr.bf16.gmra.mrb[0].mxu0 %v491
    %v2011 = vpop.f32.mrb[0].mxu0
    %v2012 = vadd.f32 %v1972, %v2011
    %v2013 = vpop.f32.mrb[0].mxu0
    %v2014 = vpop.f32.mrb[0].mxu0
    %v2015 = vpop.f32.mrb[0].mxu0
    %2016 = vdwg.mxu0
    %2017 = vmatprep.subr.bf16.mxu0 0
    %2018 = vmatpush1.bf16.msra.mxu0 %v1473
    %2019 = vmatprep.subr.bf16.mxu0 0
    %2020 = vmatpush1.bf16.msra.mxu0 %v1474
    %2021 = vmatprep.subr.bf16.mxu0 0
    %2022 = vmatpush1.bf16.msra.mxu0 %v1475
    %2023 = vmatprep.subr.bf16.mxu0 0
    %2024 = vmatpush1.bf16.msra.mxu0 %v1476
    %2025 = vmatprep.subr.bf16.mxu0 0
    %2026 = vmatpush1.bf16.msra.mxu0 %v1477
    %2027 = vmatprep.subr.bf16.mxu0 0
    %2028 = vmatpush1.bf16.msra.mxu0 %v1478
    %2029 = vmatprep.subr.bf16.mxu0 0
    %2030 = vmatpush1.bf16.msra.mxu0 %v1479
    %2031 = vmatprep.subr.bf16.mxu0 0
    %2032 = vmatpush1.bf16.msra.mxu0 %v1480
    %2033 = vmatprep.subr.bf16.mxu0 0
    %2034 = vmatpush1.bf16.msra.mxu0 %v1481
    %2035 = vmatprep.subr.bf16.mxu0 0
    %2036 = vmatpush1.bf16.msra.mxu0 %v1482
    %2037 = vmatprep.subr.bf16.mxu0 0
    %2038 = vmatpush1.bf16.msra.mxu0 %v1483
    %2039 = vmatprep.subr.bf16.mxu0 0
    %2040 = vmatpush1.bf16.msra.mxu0 %v1484
    %2041 = vmatprep.subr.bf16.mxu0 0
    %2042 = vmatpush1.bf16.msra.mxu0 %v1485
    %2043 = vmatprep.subr.bf16.mxu0 0
    %2044 = vmatpush1.bf16.msra.mxu0 %v1486
    %2045 = vmatprep.subr.bf16.mxu0 0
    %2046 = vmatpush1.bf16.msra.mxu0 %v1487
    %2047 = vmatprep.subr.bf16.mxu0 0
    %2048 = vmatpush1.bf16.msra.mxu0 %v1488
    %2049 = vmatprep.mubr.bf16.mxu0 %v509
    %2050 = vmatmul.mubr.bf16.gmra.mrb[0].mxu0 %v501
    %v2051 = vpop.f32.mrb[0].mxu0
    %v2052 = vadd.f32 %v2012, %v2051
    %v2053 = vpop.f32.mrb[0].mxu0
    %v2054 = vpop.f32.mrb[0].mxu0
    %v2055 = vpop.f32.mrb[0].mxu0
    %2056 = vdwg.mxu0
    %2057 = vmatprep.subr.bf16.mxu0 0
    %2058 = vmatpush1.bf16.msra.mxu0 %v1489
    %2059 = vmatprep.subr.bf16.mxu0 0
    %2060 = vmatpush1.bf16.msra.mxu0 %v1490
    %2061 = vmatprep.subr.bf16.mxu0 0
    %2062 = vmatpush1.bf16.msra.mxu0 %v1491
    %2063 = vmatprep.subr.bf16.mxu0 0
    %2064 = vmatpush1.bf16.msra.mxu0 %v1492
    %2065 = vmatprep.subr.bf16.mxu0 0
    %2066 = vmatpush1.bf16.msra.mxu0 %v1493
    %2067 = vmatprep.subr.bf16.mxu0 0
    %2068 = vmatpush1.bf16.msra.mxu0 %v1494
    %2069 = vmatprep.subr.bf16.mxu0 0
    %2070 = vmatpush1.bf16.msra.mxu0 %v1495
    %2071 = vmatprep.subr.bf16.mxu0 0
    %2072 = vmatpush1.bf16.msra.mxu0 %v1496
    %2073 = vmatprep.subr.bf16.mxu0 0
    %2074 = vmatpush1.bf16.msra.mxu0 %v1497
    %2075 = vmatprep.subr.bf16.mxu0 0
    %2076 = vmatpush1.bf16.msra.mxu0 %v1498
    %2077 = vmatprep.subr.bf16.mxu0 0
    %2078 = vmatpush1.bf16.msra.mxu0 %v1499
    %2079 = vmatprep.subr.bf16.mxu0 0
    %2080 = vmatpush1.bf16.msra.mxu0 %v1500
    %2081 = vmatprep.subr.bf16.mxu0 0
    %2082 = vmatpush1.bf16.msra.mxu0 %v1501
    %2083 = vmatprep.subr.bf16.mxu0 0
    %2084 = vmatpush1.bf16.msra.mxu0 %v1502
    %2085 = vmatprep.subr.bf16.mxu0 0
    %2086 = vmatpush1.bf16.msra.mxu0 %v1503
    %2087 = vmatprep.subr.bf16.mxu0 0
    %2088 = vmatpush1.bf16.msra.mxu0 %v1504
    %2089 = vmatprep.mubr.bf16.mxu0 %v510
    %2090 = vmatmul.mubr.bf16.gmra.mrb[0].mxu0 %v508
    %v2091 = vpop.f32.mrb[0].mxu0
    %v2092 = vadd.f32 %v2052, %v2091
    %v2093 = vpop.f32.mrb[0].mxu0
    %v2094 = vpop.f32.mrb[0].mxu0
    %v2095 = vpop.f32.mrb[0].mxu0
    %2096 = vdwg.mxu0
    %2097 = vmatprep.subr.bf16.mxu0 0
    %2098 = vmatpush1.bf16.msra.mxu0 %v1505
    %2099 = vmatprep.subr.bf16.mxu0 0
    %2100 = vmatpush1.bf16.msra.mxu0 %v1506
    %2101 = vmatprep.subr.bf16.mxu0 0
    %2102 = vmatpush1.bf16.msra.mxu0 %v1507
    %2103 = vmatprep.subr.bf16.mxu0 0
    %2104 = vmatpush1.bf16.msra.mxu0 %v1508
    %2105 = vmatprep.subr.bf16.mxu0 0
    %2106 = vmatpush1.bf16.msra.mxu0 %v1509
    %2107 = vmatprep.subr.bf16.mxu0 0
    %2108 = vmatpush1.bf16.msra.mxu0 %v1510
    %2109 = vmatprep.subr.bf16.mxu0 0
    %2110 = vmatpush1.bf16.msra.mxu0 %v1511
    %2111 = vmatprep.subr.bf16.mxu0 0
    %2112 = vmatpush1.bf16.msra.mxu0 %v1512
    %2113 = vmatprep.subr.bf16.mxu0 0
    %2114 = vmatpush1.bf16.msra.mxu0 %v1513
    %2115 = vmatprep.subr.bf16.mxu0 0
    %2116 = vmatpush1.bf16.msra.mxu0 %v1514
    %2117 = vmatprep.subr.bf16.mxu0 0
    %2118 = vmatpush1.bf16.msra.mxu0 %v1515
    %2119 = vmatprep.subr.bf16.mxu0 0
    %2120 = vmatpush1.bf16.msra.mxu0 %v1516
    %2121 = vmatprep.subr.bf16.mxu0 0
    %2122 = vmatpush1.bf16.msra.mxu0 %v1517
    %2123 = vmatprep.subr.bf16.mxu0 0
    %2124 = vmatpush1.bf16.msra.mxu0 %v1518
    %2125 = vmatprep.subr.bf16.mxu0 0
    %2126 = vmatpush1.bf16.msra.mxu0 %v1519
    %2127 = vmatprep.subr.bf16.mxu0 0
    %2128 = vmatpush1.bf16.msra.mxu0 %v1520
    %2129 = vmatprep.mubr.bf16.mxu0 %v526
    %2130 = vmatmul.mubr.bf16.gmra.mrb[0].mxu0 %v518
    %v2131 = vpop.f32.mrb[0].mxu0
    %v2132 = vadd.f32 %v2092, %v2131
    %v2133 = vpop.f32.mrb[0].mxu0
    %v2134 = vpop.f32.mrb[0].mxu0
    %v2135 = vpop.f32.mrb[0].mxu0
    %2136 = vdwg.mxu0
    %2137 = vmatprep.subr.bf16.mxu0 0
    %2138 = vmatpush1.bf16.msra.mxu0 %v1521
    %2139 = vmatprep.subr.bf16.mxu0 0
    %2140 = vmatpush1.bf16.msra.mxu0 %v1522
    %2141 = vmatprep.subr.bf16.mxu0 0
    %2142 = vmatpush1.bf16.msra.mxu0 %v1523
    %2143 = vmatprep.subr.bf16.mxu0 0
    %2144 = vmatpush1.bf16.msra.mxu0 %v1524
    %2145 = vmatprep.subr.bf16.mxu0 0
    %2146 = vmatpush1.bf16.msra.mxu0 %v1525
    %2147 = vmatprep.subr.bf16.mxu0 0
    %2148 = vmatpush1.bf16.msra.mxu0 %v1526
    %2149 = vmatprep.subr.bf16.mxu0 0
    %2150 = vmatpush1.bf16.msra.mxu0 %v1527
    %2151 = vmatprep.subr.bf16.mxu0 0
    %2152 = vmatpush1.bf16.msra.mxu0 %v1528
    %2153 = vmatprep.subr.bf16.mxu0 0
    %2154 = vmatpush1.bf16.msra.mxu0 %v1529
    %2155 = vmatprep.subr.bf16.mxu0 0
    %2156 = vmatpush1.bf16.msra.mxu0 %v1530
    %2157 = vmatprep.subr.bf16.mxu0 0
    %2158 = vmatpush1.bf16.msra.mxu0 %v1531
    %2159 = vmatprep.subr.bf16.mxu0 0
    %2160 = vmatpush1.bf16.msra.mxu0 %v1532
    %2161 = vmatprep.subr.bf16.mxu0 0
    %2162 = vmatpush1.bf16.msra.mxu0 %v1533
    %2163 = vmatprep.subr.bf16.mxu0 0
    %2164 = vmatpush1.bf16.msra.mxu0 %v1534
    %2165 = vmatprep.subr.bf16.mxu0 0
    %2166 = vmatpush1.bf16.msra.mxu0 %v1535
    %2167 = vmatprep.subr.bf16.mxu0 0
    %2168 = vmatpush1.bf16.msra.mxu0 %v1536
    %2169 = vmatprep.mubr.bf16.mxu0 %v527
    %2170 = vmatmul.mubr.bf16.gmra.mrb[0].mxu0 %v525
    %v2171 = vpop.f32.mrb[0].mxu0
    %v2172 = vadd.f32 %v2132, %v2171
    %v2173 = vpop.f32.mrb[0].mxu0
    %v2174 = vpop.f32.mrb[0].mxu0
    %v2175 = vpop.f32.mrb[0].mxu0
    %2176 = vdwg.mxu0
    %2177 = vmatprep.subr.bf16.mxu0 0
    %2178 = vmatpush1.bf16.msra.mxu0 %v1537
    %2179 = vmatprep.subr.bf16.mxu0 0
    %2180 = vmatpush1.bf16.msra.mxu0 %v1538
    %2181 = vmatprep.subr.bf16.mxu0 0
    %2182 = vmatpush1.bf16.msra.mxu0 %v1539
    %2183 = vmatprep.subr.bf16.mxu0 0
    %2184 = vmatpush1.bf16.msra.mxu0 %v1540
    %2185 = vmatprep.subr.bf16.mxu0 0
    %2186 = vmatpush1.bf16.msra.mxu0 %v1541
    %2187 = vmatprep.subr.bf16.mxu0 0
    %2188 = vmatpush1.bf16.msra.mxu0 %v1542
    %2189 = vmatprep.subr.bf16.mxu0 0
    %2190 = vmatpush1.bf16.msra.mxu0 %v1543
    %2191 = vmatprep.subr.bf16.mxu0 0
    %2192 = vmatpush1.bf16.msra.mxu0 %v1544
    %2193 = vmatprep.subr.bf16.mxu0 0
    %2194 = vmatpush1.bf16.msra.mxu0 %v1545
    %2195 = vmatprep.subr.bf16.mxu0 0
    %2196 = vmatpush1.bf16.msra.mxu0 %v1546
    %2197 = vmatprep.subr.bf16.mxu0 0
    %2198 = vmatpush1.bf16.msra.mxu0 %v1547
    %2199 = vmatprep.subr.bf16.mxu0 0
    %2200 = vmatpush1.bf16.msra.mxu0 %v1548
    %2201 = vmatprep.subr.bf16.mxu0 0
    %2202 = vmatpush1.bf16.msra.mxu0 %v1549
    %2203 = vmatprep.subr.bf16.mxu0 0
    %2204 = vmatpush1.bf16.msra.mxu0 %v1550
    %2205 = vmatprep.subr.bf16.mxu0 0
    %2206 = vmatpush1.bf16.msra.mxu0 %v1551
    %2207 = vmatprep.subr.bf16.mxu0 0
    %2208 = vmatpush1.bf16.msra.mxu0 %v1552
    %2209 = vmatprep.mubr.bf16.mxu0 %v543
    %2210 = vmatmul.mubr.bf16.gmra.mrb[0].mxu0 %v535
    %v2211 = vpop.f32.mrb[0].mxu0
    %v2212 = vadd.f32 %v2172, %v2211
    %v2213 = vpop.f32.mrb[0].mxu0
    %v2214 = vpop.f32.mrb[0].mxu0
    %v2215 = vpop.f32.mrb[0].mxu0
    %2216 = vdwg.mxu0
    %2217 = vmatprep.subr.bf16.mxu0 0
    %2218 = vmatpush1.bf16.msra.mxu0 %v1553
    %2219 = vmatprep.subr.bf16.mxu0 0
    %2220 = vmatpush1.bf16.msra.mxu0 %v1554
    %2221 = vmatprep.subr.bf16.mxu0 0
    %2222 = vmatpush1.bf16.msra.mxu0 %v1555
    %2223 = vmatprep.subr.bf16.mxu0 0
    %2224 = vmatpush1.bf16.msra.mxu0 %v1556
    %2225 = vmatprep.subr.bf16.mxu0 0
    %2226 = vmatpush1.bf16.msra.mxu0 %v1557
    %2227 = vmatprep.subr.bf16.mxu0 0
    %2228 = vmatpush1.bf16.msra.mxu0 %v1558
    %2229 = vmatprep.subr.bf16.mxu0 0
    %2230 = vmatpush1.bf16.msra.mxu0 %v1559
    %2231 = vmatprep.subr.bf16.mxu0 0
    %2232 = vmatpush1.bf16.msra.mxu0 %v1560
    %2233 = vmatprep.subr.bf16.mxu0 0
    %2234 = vmatpush1.bf16.msra.mxu0 %v1561
    %2235 = vmatprep.subr.bf16.mxu0 0
    %2236 = vmatpush1.bf16.msra.mxu0 %v1562
    %2237 = vmatprep.subr.bf16.mxu0 0
    %2238 = vmatpush1.bf16.msra.mxu0 %v1563
    %2239 = vmatprep.subr.bf16.mxu0 0
    %2240 = vmatpush1.bf16.msra.mxu0 %v1564
    %2241 = vmatprep.subr.bf16.mxu0 0
    %2242 = vmatpush1.bf16.msra.mxu0 %v1565
    %2243 = vmatprep.subr.bf16.mxu0 0
    %2244 = vmatpush1.bf16.msra.mxu0 %v1566
    %2245 = vmatprep.subr.bf16.mxu0 0
    %2246 = vmatpush1.bf16.msra.mxu0 %v1567
    %2247 = vmatprep.subr.bf16.mxu0 0
    %2248 = vmatpush1.bf16.msra.mxu0 %v1568
    %2249 = vmatprep.mubr.bf16.mxu0 %v544
    %2250 = vmatmul.mubr.bf16.gmra.mrb[0].mxu0 %v542
    %v2251 = vpop.f32.mrb[0].mxu0
    %v2252 = vadd.f32 %v2212, %v2251
    %v2253 = vpop.f32.mrb[0].mxu0
    %v2254 = vpop.f32.mrb[0].mxu0
    %v2255 = vpop.f32.mrb[0].mxu0
    %2256 = vdwg.mxu0
    %2257 = vmatprep.subr.bf16.mxu0 0
    %2258 = vmatpush1.bf16.msra.mxu0 %v1569
    %2259 = vmatprep.subr.bf16.mxu0 0
    %2260 = vmatpush1.bf16.msra.mxu0 %v1570
    %2261 = vmatprep.subr.bf16.mxu0 0
    %2262 = vmatpush1.bf16.msra.mxu0 %v1571
    %2263 = vmatprep.subr.bf16.mxu0 0
    %2264 = vmatpush1.bf16.msra.mxu0 %v1572
    %2265 = vmatprep.subr.bf16.mxu0 0
    %2266 = vmatpush1.bf16.msra.mxu0 %v1573
    %2267 = vmatprep.subr.bf16.mxu0 0
    %2268 = vmatpush1.bf16.msra.mxu0 %v1574
    %2269 = vmatprep.subr.bf16.mxu0 0
    %2270 = vmatpush1.bf16.msra.mxu0 %v1575
    %2271 = vmatprep.subr.bf16.mxu0 0
    %2272 = vmatpush1.bf16.msra.mxu0 %v1576
    %2273 = vmatprep.subr.bf16.mxu0 0
    %2274 = vmatpush1.bf16.msra.mxu0 0
    %2275 = vmatprep.subr.bf16.mxu0 0
    %2276 = vmatpush1.bf16.msra.mxu0 0
    %2277 = vmatprep.subr.bf16.mxu0 0
    %2278 = vmatpush1.bf16.msra.mxu0 0
    %2279 = vmatprep.subr.bf16.mxu0 0
    %2280 = vmatpush1.bf16.msra.mxu0 0
    %2281 = vmatprep.subr.bf16.mxu0 0
    %2282 = vmatpush1.bf16.msra.mxu0 0
    %2283 = vmatprep.subr.bf16.mxu0 0
    %2284 = vmatpush1.bf16.msra.mxu0 0
    %2285 = vmatprep.subr.bf16.mxu0 0
    %2286 = vmatpush1.bf16.msra.mxu0 0
    %2287 = vmatprep.subr.bf16.mxu0 0
    %2288 = vmatpush1.bf16.msra.mxu0 0
    %2289 = vmatprep.mubr.bf16.mxu0 0
    %2290 = vmatmul.mubr.bf16.gmra.mrb[0].mxu0 %v551
    %v2291 = vpop.f32.mrb[0].mxu0
    %v2292 = vadd.f32 %v2252, %v2291
    %v2293 = vpop.f32.mrb[0].mxu0
    %v2294 = vpop.f32.mrb[0].mxu0
    %v2295 = vpop.f32.mrb[0].mxu0
    %2296 = vdwg.mxu0
    %v2297 = vmax.f32 %v2292, 0.0
    %v2298 = vpack.c.bf16 %v2297, %v2297
    %v2299 = vld [vmem:[%s3] sm:$0xf]
    %v2300 = vld [vmem:[%s3 + $0x4] sm:$0xf]
    %v2301 = vld [vmem:[%s3 + $0x8] sm:$0xf]
    %v2302 = vld [vmem:[%s3 + $0xc] sm:$0xf]
    %v2303 = vld [vmem:[%s3 + $0x10] sm:$0xf]
    %v2304 = vld [vmem:[%s3 + $0x14] sm:$0xf]
    %v2305 = vld [vmem:[%s3 + $0x18] sm:$0xf]
    %v2306 = vld [vmem:[%s3 + $0x1c] sm:$0xf]
    %v2307 = vld [vmem:[%s3 + $0x20] sm:$0xf]
    %v2308 = vld [vmem:[%s3 + $0x24] sm:$0xf]
    %v2309 = vld [vmem:[%s3 + $0x28] sm:$0xf]
    %v2310 = vld [vmem:[%s3 + $0x2c] sm:$0xf]
    %v2311 = vld [vmem:[%s3 + $0x30] sm:$0xf]
    %v2312 = vld [vmem:[%s3 + $0x34] sm:$0xf]
    %v2313 = vld [vmem:[%s3 + $0x38] sm:$0xf]
    %v2314 = vld [vmem:[%s3 + $0x3c] sm:$0xf]
    %v2315 = vld [vmem:[%s4] sm:$0x1]
    %v2317 = vlaneseq
    %v2318 = vshrl.u32 %v2317, 7
    %v2319 = vsub.s32 0, %v2318
    %v2320 = vrot.slane %v2315, %v2319
    %v2338 = vunpack.c.l.b16 %v2299
    %v2339 = vunpack.c.l.b16 %v2300
    %v2340 = vunpack.c.l.b16 %v2301
    %v2341 = vunpack.c.l.b16 %v2302
    %v2342 = vunpack.c.l.b16 %v2303
    %v2343 = vunpack.c.l.b16 %v2304
    %v2344 = vunpack.c.l.b16 %v2305
    %v2345 = vunpack.c.l.b16 %v2306
    %v2346 = vunpack.c.l.b16 %v2307
    %v2347 = vunpack.c.l.b16 %v2308
    %v2348 = vunpack.c.l.b16 %v2309
    %v2349 = vunpack.c.l.b16 %v2310
    %v2350 = vunpack.c.l.b16 %v2311
    %v2351 = vunpack.c.l.b16 %v2312
    %v2352 = vunpack.c.l.b16 %v2313
    %v2353 = vunpack.c.l.b16 %v2314
    %v2354 = vpack.c.b16 %v2339, %v2338
    %v2355 = vpack.c.b16 %v2341, %v2340
    %v2356 = vpack.c.b16 %v2343, %v2342
    %v2357 = vpack.c.b16 %v2345, %v2344
    %v2358 = vpack.c.b16 %v2347, %v2346
    %v2359 = vpack.c.b16 %v2349, %v2348
    %v2360 = vpack.c.b16 %v2351, %v2350
    %v2361 = vpack.c.b16 %v2353, %v2352
    %2370 = vmatprep.subr.bf16.mxu0 0
    %2371 = vmatpush1.bf16.msra.mxu0 %v2354
    %2372 = vmatprep.subr.bf16.mxu0 0
    %2373 = vmatpush1.bf16.msra.mxu0 %v2355
    %2374 = vmatprep.subr.bf16.mxu0 0
    %2375 = vmatpush1.bf16.msra.mxu0 %v2356
    %2376 = vmatprep.subr.bf16.mxu0 0
    %2377 = vmatpush1.bf16.msra.mxu0 %v2357
    %2378 = vmatprep.subr.bf16.mxu0 0
    %2379 = vmatpush1.bf16.msra.mxu0 %v2358
    %2380 = vmatprep.subr.bf16.mxu0 0
    %2381 = vmatpush1.bf16.msra.mxu0 %v2359
    %2382 = vmatprep.subr.bf16.mxu0 0
    %2383 = vmatpush1.bf16.msra.mxu0 %v2360
    %2384 = vmatprep.subr.bf16.mxu0 0
    %2385 = vmatpush1.bf16.msra.mxu0 %v2361
    %2386 = vmatprep.subr.bf16.mxu0 0
    %2387 = vmatpush1.bf16.msra.mxu0 0
    %2388 = vmatprep.subr.bf16.mxu0 0
    %2389 = vmatpush1.bf16.msra.mxu0 0
    %2390 = vmatprep.subr.bf16.mxu0 0
    %2391 = vmatpush1.bf16.msra.mxu0 0
    %2392 = vmatprep.subr.bf16.mxu0 0
    %2393 = vmatpush1.bf16.msra.mxu0 0
    %2394 = vmatprep.subr.bf16.mxu0 0
    %2395 = vmatpush1.bf16.msra.mxu0 0
    %2396 = vmatprep.subr.bf16.mxu0 0
    %2397 = vmatpush1.bf16.msra.mxu0 0
    %2398 = vmatprep.subr.bf16.mxu0 0
    %2399 = vmatpush1.bf16.msra.mxu0 0
    %2400 = vmatprep.subr.bf16.mxu0 0
    %2401 = vmatpush1.bf16.msra.mxu0 0
    %2402 = vmatprep.mubr.bf16.mxu0 0
    %2403 = vmatmul.mubr.bf16.gmra.mrb[0].mxu0 %v2298
    %v2404 = vpop.f32.mrb[0].mxu0
    %v2405 = vadd.f32 %v2320, %v2404
    %v2406 = vpop.f32.mrb[0].mxu0
    %v2407 = vpop.f32.mrb[0].mxu0
    %v2408 = vpop.f32.mrb[0].mxu0
    %2409 = vdwg.mxu0
    %v2410 = vmax.f32 %v2405, 0.0
    %2411 = vst [vmem:[#allocation2] sm:$0xf] %v2410
    // Predicated region
    $region22: #{cnn_cifar_global_forward.5} parent=1 // pred_check
      _
    $region23: #{cnn_cifar_global_forward.5} parent=1 // pred_check_branch
      %2413 = sbr.rel (0) target = $region25
    $region24: #{cnn_cifar_global_forward.5} parent=1 // pred_region
      %s2415 = ssub.s32 64, 64
      %2416 = vsyncadd [#allocation3], %s2415
      %s2418 = sshll.u32 [#allocation2], 4
      %s2419 = int_to_ptr.vmem [resolvable:$true] %s2418
      %2421 = dma.vmem_to_hbm [thread:$0]  %s2419, 64, %s5, [#allocation3]
    $region25: #{cnn_cifar_global_forward.5} parent=1 // pred_fallthru
      _
    // Predicated region
    $region26: #{cnn_cifar_global_forward.5} parent=1 // pred_check
      _
    $region27: #{cnn_cifar_global_forward.5} parent=1 // pred_check_branch
      %2423 = sbr.rel (0) target = $region29
    $region28: #{cnn_cifar_global_forward.5} parent=1 // pred_region
      %2424 = dma.done [#allocation3], 64
    $region29: #{cnn_cifar_global_forward.5} parent=1 // pred_fallthru
      _
    %2425 = vsyncpa [#allocation3], 1

// kernel: cnn_cifar_global_forward.4
$region0: #{cnn_cifar_global_forward.4}
  #allocation0 [shape = 'u32[]', space=smem, size = 0x4, offset = 0x4, fixed_abs, tag = 'smem constant byte address 0x4 - core index']
  #allocation1 [shape = 'u32[144,128]{1,0:T(1,128)}', space=vmem, size = 0x12000, scoped, tag = 'internal scratch']
  %s0 = inlined_call_operand.vmem [shape: bf16[4,100,1600], index: 0, kind: input, shape index: {}]
  %s1 = inlined_call_operand.vmem [shape: bf16[1600,128], index: 1, kind: input, shape index: {}]
  %s2 = inlined_call_operand.vmem [shape: f32[1,128], index: 2, kind: input, shape index: {}]
  %s3 = inlined_call_operand.vmem [shape: bf16[100,128], index: 3, kind: output, shape index: {}]
  %s4 = sld [smem:[#allocation0]]
  $region22: #{cnn_cifar_global_forward.4} parent=0
    _
  %s6 = ssub.s32 1, %s4
  %s7 = scalar_select 0, %s6, %s4
  // Predicated region
  $region2: #{cnn_cifar_global_forward.4} parent=0 // pred_check
    _
  $region3: #{cnn_cifar_global_forward.4} parent=0 // pred_check_branch
    %9 = sbr.rel (0) target = $region5
  $region4: #{cnn_cifar_global_forward.4} parent=0 // pred_region
    _
  $region5: #{cnn_cifar_global_forward.4} parent=0 // pred_fallthru
    _
  // Predicated region
  $region6: #{cnn_cifar_global_forward.4} parent=0 // pred_check
    _
  $region7: #{cnn_cifar_global_forward.4} parent=0 // pred_check_branch
    %11 = sbr.rel (0) target = $region9
  $region8: #{cnn_cifar_global_forward.4} parent=0 // pred_region
    _
  $region9: #{cnn_cifar_global_forward.4} parent=0 // pred_fallthru
    _
  // Predicated region
  $region10: #{cnn_cifar_global_forward.4} parent=0 // pred_check
    _
  $region11: #{cnn_cifar_global_forward.4} parent=0 // pred_check_branch
    %13 = sbr.rel (0) target = $region13
  $region12: #{cnn_cifar_global_forward.4} parent=0 // pred_region
    _
  $region13: #{cnn_cifar_global_forward.4} parent=0 // pred_fallthru
    _
  %v15 = vld [vmem:[%s1] sm:$0xf]
  %v16 = vld [vmem:[%s1 + $0x4] sm:$0xf]
  %v17 = vld [vmem:[%s1 + $0x8] sm:$0xf]
  %v18 = vld [vmem:[%s1 + $0xc] sm:$0xf]
  %v19 = vld [vmem:[%s1 + $0x10] sm:$0xf]
  %v20 = vld [vmem:[%s1 + $0x14] sm:$0xf]
  %v21 = vld [vmem:[%s1 + $0x18] sm:$0xf]
  %v22 = vld [vmem:[%s1 + $0x1c] sm:$0xf]
  %v23 = vld [vmem:[%s1 + $0x20] sm:$0xf]
  %v24 = vld [vmem:[%s1 + $0x24] sm:$0xf]
  %v25 = vld [vmem:[%s1 + $0x28] sm:$0xf]
  %v26 = vld [vmem:[%s1 + $0x2c] sm:$0xf]
  %v27 = vld [vmem:[%s1 + $0x30] sm:$0xf]
  %v28 = vld [vmem:[%s1 + $0x34] sm:$0xf]
  %v29 = vld [vmem:[%s1 + $0x38] sm:$0xf]
  %v30 = vld [vmem:[%s1 + $0x3c] sm:$0xf]
  %v31 = vld [vmem:[%s1 + $0x40] sm:$0xf]
  %v32 = vld [vmem:[%s1 + $0x44] sm:$0xf]
  %v33 = vld [vmem:[%s1 + $0x48] sm:$0xf]
  %v34 = vld [vmem:[%s1 + $0x4c] sm:$0xf]
  %v35 = vld [vmem:[%s1 + $0x50] sm:$0xf]
  %v36 = vld [vmem:[%s1 + $0x54] sm:$0xf]
  %v37 = vld [vmem:[%s1 + $0x58] sm:$0xf]
  %v38 = vld [vmem:[%s1 + $0x5c] sm:$0xf]
  %v39 = vld [vmem:[%s1 + $0x60] sm:$0xf]
  %v40 = vld [vmem:[%s1 + $0x64] sm:$0xf]
  %v41 = vld [vmem:[%s1 + $0x68] sm:$0xf]
  %v42 = vld [vmem:[%s1 + $0x6c] sm:$0xf]
  %v43 = vld [vmem:[%s1 + $0x70] sm:$0xf]
  %v44 = vld [vmem:[%s1 + $0x74] sm:$0xf]
  %v45 = vld [vmem:[%s1 + $0x78] sm:$0xf]
  %v46 = vld [vmem:[%s1 + $0x7c] sm:$0xf]
  %v47 = vld [vmem:[%s1 + $0x80] sm:$0xf]
  %v48 = vld [vmem:[%s1 + $0x84] sm:$0xf]
  %v49 = vld [vmem:[%s1 + $0x88] sm:$0xf]
  %v50 = vld [vmem:[%s1 + $0x8c] sm:$0xf]
  %v51 = vld [vmem:[%s1 + $0x90] sm:$0xf]
  %v52 = vld [vmem:[%s1 + $0x94] sm:$0xf]
  %v53 = vld [vmem:[%s1 + $0x98] sm:$0xf]
  %v54 = vld [vmem:[%s1 + $0x9c] sm:$0xf]
  %v55 = vld [vmem:[%s1 + $0xa0] sm:$0xf]
  %v56 = vld [vmem:[%s1 + $0xa4] sm:$0xf]
  %v57 = vld [vmem:[%s1 + $0xa8] sm:$0xf]
  %v58 = vld [vmem:[%s1 + $0xac] sm:$0xf]
  %v59 = vld [vmem:[%s1 + $0xb0] sm:$0xf]
  %v60 = vld [vmem:[%s1 + $0xb4] sm:$0xf]
  %v61 = vld [vmem:[%s1 + $0xb8] sm:$0xf]
  %v62 = vld [vmem:[%s1 + $0xbc] sm:$0xf]
  %v63 = vld [vmem:[%s1 + $0xc0] sm:$0xf]
  %v64 = vld [vmem:[%s1 + $0xc4] sm:$0xf]
  %v65 = vld [vmem:[%s1 + $0xc8] sm:$0xf]
  %v66 = vld [vmem:[%s1 + $0xcc] sm:$0xf]
  %v67 = vld [vmem:[%s1 + $0xd0] sm:$0xf]
  %v68 = vld [vmem:[%s1 + $0xd4] sm:$0xf]
  %v69 = vld [vmem:[%s1 + $0xd8] sm:$0xf]
  %v70 = vld [vmem:[%s1 + $0xdc] sm:$0xf]
  %v71 = vld [vmem:[%s1 + $0xe0] sm:$0xf]
  %v72 = vld [vmem:[%s1 + $0xe4] sm:$0xf]
  %v73 = vld [vmem:[%s1 + $0xe8] sm:$0xf]
  %v74 = vld [vmem:[%s1 + $0xec] sm:$0xf]
  %v75 = vld [vmem:[%s1 + $0xf0] sm:$0xf]
  %v76 = vld [vmem:[%s1 + $0xf4] sm:$0xf]
  %v77 = vld [vmem:[%s1 + $0xf8] sm:$0xf]
  %v78 = vld [vmem:[%s1 + $0xfc] sm:$0xf]
  %v79 = vld [vmem:[%s1 + $0x100] sm:$0xf]
  %v80 = vld [vmem:[%s1 + $0x104] sm:$0xf]
  %v81 = vld [vmem:[%s1 + $0x108] sm:$0xf]
  %v82 = vld [vmem:[%s1 + $0x10c] sm:$0xf]
  %v83 = vld [vmem:[%s1 + $0x110] sm:$0xf]
  %v84 = vld [vmem:[%s1 + $0x114] sm:$0xf]
  %v85 = vld [vmem:[%s1 + $0x118] sm:$0xf]
  %v86 = vld [vmem:[%s1 + $0x11c] sm:$0xf]
  %v87 = vld [vmem:[%s1 + $0x120] sm:$0xf]
  %v88 = vld [vmem:[%s1 + $0x124] sm:$0xf]
  %v89 = vld [vmem:[%s1 + $0x128] sm:$0xf]
  %v90 = vld [vmem:[%s1 + $0x12c] sm:$0xf]
  %v91 = vld [vmem:[%s1 + $0x130] sm:$0xf]
  %v92 = vld [vmem:[%s1 + $0x134] sm:$0xf]
  %v93 = vld [vmem:[%s1 + $0x138] sm:$0xf]
  %v94 = vld [vmem:[%s1 + $0x13c] sm:$0xf]
  %v95 = vld [vmem:[%s1 + $0x140] sm:$0xf]
  %v96 = vld [vmem:[%s1 + $0x144] sm:$0xf]
  %v97 = vld [vmem:[%s1 + $0x148] sm:$0xf]
  %v98 = vld [vmem:[%s1 + $0x14c] sm:$0xf]
  %v99 = vld [vmem:[%s1 + $0x150] sm:$0xf]
  %v100 = vld [vmem:[%s1 + $0x154] sm:$0xf]
  %v101 = vld [vmem:[%s1 + $0x158] sm:$0xf]
  %v102 = vld [vmem:[%s1 + $0x15c] sm:$0xf]
  %v103 = vld [vmem:[%s1 + $0x160] sm:$0xf]
  %v104 = vld [vmem:[%s1 + $0x164] sm:$0xf]
  %v105 = vld [vmem:[%s1 + $0x168] sm:$0xf]
  %v106 = vld [vmem:[%s1 + $0x16c] sm:$0xf]
  %v107 = vld [vmem:[%s1 + $0x170] sm:$0xf]
  %v108 = vld [vmem:[%s1 + $0x174] sm:$0xf]
  %v109 = vld [vmem:[%s1 + $0x178] sm:$0xf]
  %v110 = vld [vmem:[%s1 + $0x17c] sm:$0xf]
  %v111 = vld [vmem:[%s1 + $0x180] sm:$0xf]
  %v112 = vld [vmem:[%s1 + $0x184] sm:$0xf]
  %v113 = vld [vmem:[%s1 + $0x188] sm:$0xf]
  %v114 = vld [vmem:[%s1 + $0x18c] sm:$0xf]
  %v115 = vld [vmem:[%s1 + $0x190] sm:$0xf]
  %v116 = vld [vmem:[%s1 + $0x194] sm:$0xf]
  %v117 = vld [vmem:[%s1 + $0x198] sm:$0xf]
  %v118 = vld [vmem:[%s1 + $0x19c] sm:$0xf]
  %v119 = vld [vmem:[%s1 + $0x1a0] sm:$0xf]
  %v120 = vld [vmem:[%s1 + $0x1a4] sm:$0xf]
  %v121 = vld [vmem:[%s1 + $0x1a8] sm:$0xf]
  %v122 = vld [vmem:[%s1 + $0x1ac] sm:$0xf]
  %v123 = vld [vmem:[%s1 + $0x1b0] sm:$0xf]
  %v124 = vld [vmem:[%s1 + $0x1b4] sm:$0xf]
  %v125 = vld [vmem:[%s1 + $0x1b8] sm:$0xf]
  %v126 = vld [vmem:[%s1 + $0x1bc] sm:$0xf]
  %v127 = vld [vmem:[%s1 + $0x1c0] sm:$0xf]
  %v128 = vld [vmem:[%s1 + $0x1c4] sm:$0xf]
  %v129 = vld [vmem:[%s1 + $0x1c8] sm:$0xf]
  %v130 = vld [vmem:[%s1 + $0x1cc] sm:$0xf]
  %v131 = vld [vmem:[%s1 + $0x1d0] sm:$0xf]
  %v132 = vld [vmem:[%s1 + $0x1d4] sm:$0xf]
  %v133 = vld [vmem:[%s1 + $0x1d8] sm:$0xf]
  %v134 = vld [vmem:[%s1 + $0x1dc] sm:$0xf]
  %v135 = vld [vmem:[%s1 + $0x1e0] sm:$0xf]
  %v136 = vld [vmem:[%s1 + $0x1e4] sm:$0xf]
  %v137 = vld [vmem:[%s1 + $0x1e8] sm:$0xf]
  %v138 = vld [vmem:[%s1 + $0x1ec] sm:$0xf]
  %v139 = vld [vmem:[%s1 + $0x1f0] sm:$0xf]
  %v140 = vld [vmem:[%s1 + $0x1f4] sm:$0xf]
  %v141 = vld [vmem:[%s1 + $0x1f8] sm:$0xf]
  %v142 = vld [vmem:[%s1 + $0x1fc] sm:$0xf]
  %v143 = vld [vmem:[%s1 + $0x200] sm:$0xf]
  %v144 = vld [vmem:[%s1 + $0x204] sm:$0xf]
  %v145 = vld [vmem:[%s1 + $0x208] sm:$0xf]
  %v146 = vld [vmem:[%s1 + $0x20c] sm:$0xf]
  %v147 = vld [vmem:[%s1 + $0x210] sm:$0xf]
  %v148 = vld [vmem:[%s1 + $0x214] sm:$0xf]
  %v149 = vld [vmem:[%s1 + $0x218] sm:$0xf]
  %v150 = vld [vmem:[%s1 + $0x21c] sm:$0xf]
  %v151 = vld [vmem:[%s1 + $0x220] sm:$0xf]
  %v152 = vld [vmem:[%s1 + $0x224] sm:$0xf]
  %v153 = vld [vmem:[%s1 + $0x228] sm:$0xf]
  %v154 = vld [vmem:[%s1 + $0x22c] sm:$0xf]
  %v155 = vld [vmem:[%s1 + $0x230] sm:$0xf]
  %v156 = vld [vmem:[%s1 + $0x234] sm:$0xf]
  %v157 = vld [vmem:[%s1 + $0x238] sm:$0xf]
  %v158 = vld [vmem:[%s1 + $0x23c] sm:$0xf]
  %v159 = vld [vmem:[%s1 + $0x240] sm:$0xf]
  %v160 = vld [vmem:[%s1 + $0x244] sm:$0xf]
  %v161 = vld [vmem:[%s1 + $0x248] sm:$0xf]
  %v162 = vld [vmem:[%s1 + $0x24c] sm:$0xf]
  %v163 = vld [vmem:[%s1 + $0x250] sm:$0xf]
  %v164 = vld [vmem:[%s1 + $0x254] sm:$0xf]
  %v165 = vld [vmem:[%s1 + $0x258] sm:$0xf]
  %v166 = vld [vmem:[%s1 + $0x25c] sm:$0xf]
  %v167 = vld [vmem:[%s1 + $0x260] sm:$0xf]
  %v168 = vld [vmem:[%s1 + $0x264] sm:$0xf]
  %v169 = vld [vmem:[%s1 + $0x268] sm:$0xf]
  %v170 = vld [vmem:[%s1 + $0x26c] sm:$0xf]
  %v171 = vld [vmem:[%s1 + $0x270] sm:$0xf]
  %v172 = vld [vmem:[%s1 + $0x274] sm:$0xf]
  %v173 = vld [vmem:[%s1 + $0x278] sm:$0xf]
  %v174 = vld [vmem:[%s1 + $0x27c] sm:$0xf]
  %v175 = vld [vmem:[%s1 + $0x280] sm:$0xf]
  %v176 = vld [vmem:[%s1 + $0x284] sm:$0xf]
  %v177 = vld [vmem:[%s1 + $0x288] sm:$0xf]
  %v178 = vld [vmem:[%s1 + $0x28c] sm:$0xf]
  %v179 = vld [vmem:[%s1 + $0x290] sm:$0xf]
  %v180 = vld [vmem:[%s1 + $0x294] sm:$0xf]
  %v181 = vld [vmem:[%s1 + $0x298] sm:$0xf]
  %v182 = vld [vmem:[%s1 + $0x29c] sm:$0xf]
  %v183 = vld [vmem:[%s1 + $0x2a0] sm:$0xf]
  %v184 = vld [vmem:[%s1 + $0x2a4] sm:$0xf]
  %v185 = vld [vmem:[%s1 + $0x2a8] sm:$0xf]
  %v186 = vld [vmem:[%s1 + $0x2ac] sm:$0xf]
  %v187 = vld [vmem:[%s1 + $0x2b0] sm:$0xf]
  %v188 = vld [vmem:[%s1 + $0x2b4] sm:$0xf]
  %v189 = vld [vmem:[%s1 + $0x2b8] sm:$0xf]
  %v190 = vld [vmem:[%s1 + $0x2bc] sm:$0xf]
  %v191 = vld [vmem:[%s1 + $0x2c0] sm:$0xf]
  %v192 = vld [vmem:[%s1 + $0x2c4] sm:$0xf]
  %v193 = vld [vmem:[%s1 + $0x2c8] sm:$0xf]
  %v194 = vld [vmem:[%s1 + $0x2cc] sm:$0xf]
  %v195 = vld [vmem:[%s1 + $0x2d0] sm:$0xf]
  %v196 = vld [vmem:[%s1 + $0x2d4] sm:$0xf]
  %v197 = vld [vmem:[%s1 + $0x2d8] sm:$0xf]
  %v198 = vld [vmem:[%s1 + $0x2dc] sm:$0xf]
  %v199 = vld [vmem:[%s1 + $0x2e0] sm:$0xf]
  %v200 = vld [vmem:[%s1 + $0x2e4] sm:$0xf]
  %v201 = vld [vmem:[%s1 + $0x2e8] sm:$0xf]
  %v202 = vld [vmem:[%s1 + $0x2ec] sm:$0xf]
  %v203 = vld [vmem:[%s1 + $0x2f0] sm:$0xf]
  %v204 = vld [vmem:[%s1 + $0x2f4] sm:$0xf]
  %v205 = vld [vmem:[%s1 + $0x2f8] sm:$0xf]
  %v206 = vld [vmem:[%s1 + $0x2fc] sm:$0xf]
  %v207 = vld [vmem:[%s1 + $0x300] sm:$0xf]
  %v208 = vld [vmem:[%s1 + $0x304] sm:$0xf]
  %v209 = vld [vmem:[%s1 + $0x308] sm:$0xf]
  %v210 = vld [vmem:[%s1 + $0x30c] sm:$0xf]
  %v211 = vld [vmem:[%s1 + $0x310] sm:$0xf]
  %v212 = vld [vmem:[%s1 + $0x314] sm:$0xf]
  %v213 = vld [vmem:[%s1 + $0x318] sm:$0xf]
  %v214 = vld [vmem:[%s1 + $0x31c] sm:$0xf]
  %v215 = vld [vmem:[%s0] sm:$0xff]
  %v216 = vld [vmem:[%s0 + $0x8] sm:$0xff]
  %v217 = vld [vmem:[%s0 + $0x10] sm:$0xff]
  %v218 = vld [vmem:[%s0 + $0x18] sm:$0xff]
  %v219 = vld [vmem:[%s0 + $0x20] sm:$0xff]
  %v220 = vld [vmem:[%s0 + $0x28] sm:$0xff]
  %v221 = vld [vmem:[%s0 + $0x30] sm:$0xf]
  %v222 = vld [vmem:[%s0 + $0x34] sm:$0xff]
  %v223 = vld [vmem:[%s0 + $0x3c] sm:$0xff]
  %v224 = vld [vmem:[%s0 + $0x44] sm:$0xff]
  %v225 = vld [vmem:[%s0 + $0x4c] sm:$0xff]
  %v226 = vld [vmem:[%s0 + $0x54] sm:$0xff]
  %v227 = vld [vmem:[%s0 + $0x5c] sm:$0xff]
  %v228 = vld [vmem:[%s0 + $0x64] sm:$0xf]
  %v229 = vld [vmem:[%s0 + $0x68] sm:$0xff]
  %v230 = vld [vmem:[%s0 + $0x70] sm:$0xff]
  %v231 = vld [vmem:[%s0 + $0x78] sm:$0xff]
  %v232 = vld [vmem:[%s0 + $0x80] sm:$0xff]
  %v233 = vld [vmem:[%s0 + $0x88] sm:$0xff]
  %v234 = vld [vmem:[%s0 + $0x90] sm:$0xff]
  %v235 = vld [vmem:[%s0 + $0x98] sm:$0xf]
  %v236 = vld [vmem:[%s0 + $0x9c] sm:$0xff]
  %v237 = vld [vmem:[%s0 + $0xa4] sm:$0xff]
  %v238 = vld [vmem:[%s0 + $0xac] sm:$0xff]
  %v239 = vld [vmem:[%s0 + $0xb4] sm:$0xff]
  %v240 = vld [vmem:[%s0 + $0xbc] sm:$0xff]
  %v241 = vld [vmem:[%s0 + $0xc4] sm:$0xff]
  %v242 = vld [vmem:[%s0 + $0xcc] sm:$0xf]
  %v243 = vld [vmem:[%s0 + $0xd0] sm:$0xff]
  %v244 = vld [vmem:[%s0 + $0xd8] sm:$0xff]
  %v245 = vld [vmem:[%s0 + $0xe0] sm:$0xff]
  %v246 = vld [vmem:[%s0 + $0xe8] sm:$0xff]
  %v247 = vld [vmem:[%s0 + $0xf0] sm:$0xff]
  %v248 = vld [vmem:[%s0 + $0xf8] sm:$0xff]
  %v249 = vld [vmem:[%s0 + $0x100] sm:$0xf]
  %v250 = vld [vmem:[%s0 + $0x104] sm:$0xff]
  %v251 = vld [vmem:[%s0 + $0x10c] sm:$0xff]
  %v252 = vld [vmem:[%s0 + $0x114] sm:$0xff]
  %v253 = vld [vmem:[%s0 + $0x11c] sm:$0xff]
  %v254 = vld [vmem:[%s0 + $0x124] sm:$0xff]
  %v255 = vld [vmem:[%s0 + $0x12c] sm:$0xff]
  %v256 = vld [vmem:[%s0 + $0x134] sm:$0xf]
  %v257 = vld [vmem:[%s0 + $0x138] sm:$0xff]
  %v258 = vld [vmem:[%s0 + $0x140] sm:$0xff]
  %v259 = vld [vmem:[%s0 + $0x148] sm:$0xff]
  %v260 = vld [vmem:[%s0 + $0x150] sm:$0xff]
  %v261 = vld [vmem:[%s0 + $0x158] sm:$0xff]
  %v262 = vld [vmem:[%s0 + $0x160] sm:$0xff]
  %v263 = vld [vmem:[%s0 + $0x168] sm:$0xf]
  %v264 = vld [vmem:[%s0 + $0x16c] sm:$0xff]
  %v265 = vld [vmem:[%s0 + $0x174] sm:$0xff]
  %v266 = vld [vmem:[%s0 + $0x17c] sm:$0xff]
  %v267 = vld [vmem:[%s0 + $0x184] sm:$0xff]
  %v268 = vld [vmem:[%s0 + $0x18c] sm:$0xff]
  %v269 = vld [vmem:[%s0 + $0x194] sm:$0xff]
  %v270 = vld [vmem:[%s0 + $0x19c] sm:$0xf]
  %v271 = vld [vmem:[%s0 + $0x1a0] sm:$0xff]
  %v272 = vld [vmem:[%s0 + $0x1a8] sm:$0xff]
  %v273 = vld [vmem:[%s0 + $0x1b0] sm:$0xff]
  %v274 = vld [vmem:[%s0 + $0x1b8] sm:$0xff]
  %v275 = vld [vmem:[%s0 + $0x1c0] sm:$0xff]
  %v276 = vld [vmem:[%s0 + $0x1c8] sm:$0xff]
  %v277 = vld [vmem:[%s0 + $0x1d0] sm:$0xf]
  %v278 = vld [vmem:[%s0 + $0x1d4] sm:$0xff]
  %v279 = vld [vmem:[%s0 + $0x1dc] sm:$0xff]
  %v280 = vld [vmem:[%s0 + $0x1e4] sm:$0xff]
  %v281 = vld [vmem:[%s0 + $0x1ec] sm:$0xff]
  %v282 = vld [vmem:[%s0 + $0x1f4] sm:$0xff]
  %v283 = vld [vmem:[%s0 + $0x1fc] sm:$0xff]
  %v284 = vld [vmem:[%s0 + $0x204] sm:$0xf]
  %v285 = vld [vmem:[%s0 + $0x208] sm:$0xff]
  %v286 = vld [vmem:[%s0 + $0x210] sm:$0xff]
  %v287 = vld [vmem:[%s0 + $0x218] sm:$0xff]
  %v288 = vld [vmem:[%s0 + $0x220] sm:$0xff]
  %v289 = vld [vmem:[%s0 + $0x228] sm:$0xff]
  %v290 = vld [vmem:[%s0 + $0x230] sm:$0xff]
  %v291 = vld [vmem:[%s0 + $0x238] sm:$0xf]
  %v292 = vld [vmem:[%s0 + $0x23c] sm:$0xff]
  %v293 = vld [vmem:[%s0 + $0x244] sm:$0xff]
  %v294 = vld [vmem:[%s0 + $0x24c] sm:$0xff]
  %v295 = vld [vmem:[%s0 + $0x254] sm:$0xff]
  %v296 = vld [vmem:[%s0 + $0x25c] sm:$0xff]
  %v297 = vld [vmem:[%s0 + $0x264] sm:$0xff]
  %v298 = vld [vmem:[%s0 + $0x26c] sm:$0xf]
  %v299 = vld [vmem:[%s0 + $0x270] sm:$0x33]
  %v300 = vld [vmem:[%s0 + $0x278] sm:$0x33]
  %v301 = vld [vmem:[%s0 + $0x280] sm:$0x33]
  %v302 = vld [vmem:[%s0 + $0x288] sm:$0x33]
  %v303 = vld [vmem:[%s0 + $0x290] sm:$0x33]
  %v304 = vld [vmem:[%s0 + $0x298] sm:$0x33]
  %v305 = vld [vmem:[%s0 + $0x2a0] sm:$0x3]
  %v397 = vunpack.c.l.b16 %v215
  %v398 = vunpack.c.h.b16 %v215
  %v399 = vunpack.c.l.b16 %v216
  %v400 = vunpack.c.h.b16 %v216
  %v401 = vunpack.c.l.b16 %v217
  %v402 = vunpack.c.h.b16 %v217
  %v403 = vunpack.c.l.b16 %v218
  %v404 = vunpack.c.h.b16 %v218
  %v405 = vunpack.c.l.b16 %v219
  %v406 = vunpack.c.h.b16 %v219
  %v407 = vunpack.c.l.b16 %v220
  %v408 = vunpack.c.h.b16 %v220
  %v409 = vunpack.c.l.b16 %v221
  %v410 = vunpack.c.l.b16 %v222
  %v411 = vunpack.c.h.b16 %v222
  %v412 = vunpack.c.l.b16 %v223
  %v413 = vunpack.c.h.b16 %v223
  %v414 = vunpack.c.l.b16 %v224
  %v415 = vunpack.c.h.b16 %v224
  %v416 = vunpack.c.l.b16 %v225
  %v417 = vunpack.c.h.b16 %v225
  %v418 = vunpack.c.l.b16 %v226
  %v419 = vunpack.c.h.b16 %v226
  %v420 = vunpack.c.l.b16 %v227
  %v421 = vunpack.c.h.b16 %v227
  %v422 = vunpack.c.l.b16 %v228
  %v423 = vunpack.c.l.b16 %v229
  %v424 = vunpack.c.h.b16 %v229
  %v425 = vunpack.c.l.b16 %v230
  %v426 = vunpack.c.h.b16 %v230
  %v427 = vunpack.c.l.b16 %v231
  %v428 = vunpack.c.h.b16 %v231
  %v429 = vunpack.c.l.b16 %v232
  %v430 = vunpack.c.h.b16 %v232
  %v431 = vunpack.c.l.b16 %v233
  %v432 = vunpack.c.h.b16 %v233
  %v433 = vunpack.c.l.b16 %v234
  %v434 = vunpack.c.h.b16 %v234
  %v435 = vunpack.c.l.b16 %v235
  %v436 = vunpack.c.l.b16 %v236
  %v437 = vunpack.c.h.b16 %v236
  %v438 = vunpack.c.l.b16 %v237
  %v439 = vunpack.c.h.b16 %v237
  %v440 = vunpack.c.l.b16 %v238
  %v441 = vunpack.c.h.b16 %v238
  %v442 = vunpack.c.l.b16 %v239
  %v443 = vunpack.c.h.b16 %v239
  %v444 = vunpack.c.l.b16 %v240
  %v445 = vunpack.c.h.b16 %v240
  %v446 = vunpack.c.l.b16 %v241
  %v447 = vunpack.c.h.b16 %v241
  %v448 = vunpack.c.l.b16 %v242
  %v449 = vunpack.c.l.b16 %v243
  %v450 = vunpack.c.h.b16 %v243
  %v451 = vunpack.c.l.b16 %v244
  %v452 = vunpack.c.h.b16 %v244
  %v453 = vunpack.c.l.b16 %v245
  %v454 = vunpack.c.h.b16 %v245
  %v455 = vunpack.c.l.b16 %v246
  %v456 = vunpack.c.h.b16 %v246
  %v457 = vunpack.c.l.b16 %v247
  %v458 = vunpack.c.h.b16 %v247
  %v459 = vunpack.c.l.b16 %v248
  %v460 = vunpack.c.h.b16 %v248
  %v461 = vunpack.c.l.b16 %v249
  %v462 = vunpack.c.l.b16 %v250
  %v463 = vunpack.c.h.b16 %v250
  %v464 = vunpack.c.l.b16 %v251
  %v465 = vunpack.c.h.b16 %v251
  %v466 = vunpack.c.l.b16 %v252
  %v467 = vunpack.c.h.b16 %v252
  %v468 = vunpack.c.l.b16 %v253
  %v469 = vunpack.c.h.b16 %v253
  %v470 = vunpack.c.l.b16 %v254
  %v471 = vunpack.c.h.b16 %v254
  %v472 = vunpack.c.l.b16 %v255
  %v473 = vunpack.c.h.b16 %v255
  %v474 = vunpack.c.l.b16 %v256
  %v475 = vunpack.c.l.b16 %v257
  %v476 = vunpack.c.h.b16 %v257
  %v477 = vunpack.c.l.b16 %v258
  %v478 = vunpack.c.h.b16 %v258
  %v479 = vunpack.c.l.b16 %v259
  %v480 = vunpack.c.h.b16 %v259
  %v481 = vunpack.c.l.b16 %v260
  %v482 = vunpack.c.h.b16 %v260
  %v483 = vunpack.c.l.b16 %v261
  %v484 = vunpack.c.h.b16 %v261
  %v485 = vunpack.c.l.b16 %v262
  %v486 = vunpack.c.h.b16 %v262
  %v487 = vunpack.c.l.b16 %v263
  %v488 = vunpack.c.l.b16 %v264
  %v489 = vunpack.c.h.b16 %v264
  %v490 = vunpack.c.l.b16 %v265
  %v491 = vunpack.c.h.b16 %v265
  %v492 = vunpack.c.l.b16 %v266
  %v493 = vunpack.c.h.b16 %v266
  %v494 = vunpack.c.l.b16 %v267
  %v495 = vunpack.c.h.b16 %v267
  %v496 = vunpack.c.l.b16 %v268
  %v497 = vunpack.c.h.b16 %v268
  %v498 = vunpack.c.l.b16 %v269
  %v499 = vunpack.c.h.b16 %v269
  %v500 = vunpack.c.l.b16 %v270
  %v501 = vunpack.c.l.b16 %v271
  %v502 = vunpack.c.h.b16 %v271
  %v503 = vunpack.c.l.b16 %v272
  %v504 = vunpack.c.h.b16 %v272
  %v505 = vunpack.c.l.b16 %v273
  %v506 = vunpack.c.h.b16 %v273
  %v507 = vunpack.c.l.b16 %v274
  %v508 = vunpack.c.h.b16 %v274
  %v509 = vunpack.c.l.b16 %v275
  %v510 = vunpack.c.h.b16 %v275
  %v511 = vunpack.c.l.b16 %v276
  %v512 = vunpack.c.h.b16 %v276
  %v513 = vunpack.c.l.b16 %v277
  %v514 = vunpack.c.l.b16 %v278
  %v515 = vunpack.c.h.b16 %v278
  %v516 = vunpack.c.l.b16 %v279
  %v517 = vunpack.c.h.b16 %v279
  %v518 = vunpack.c.l.b16 %v280
  %v519 = vunpack.c.h.b16 %v280
  %v520 = vunpack.c.l.b16 %v281
  %v521 = vunpack.c.h.b16 %v281
  %v522 = vunpack.c.l.b16 %v282
  %v523 = vunpack.c.h.b16 %v282
  %v524 = vunpack.c.l.b16 %v283
  %v525 = vunpack.c.h.b16 %v283
  %v526 = vunpack.c.l.b16 %v284
  %v527 = vunpack.c.l.b16 %v285
  %v528 = vunpack.c.h.b16 %v285
  %v529 = vunpack.c.l.b16 %v286
  %v530 = vunpack.c.h.b16 %v286
  %v531 = vunpack.c.l.b16 %v287
  %v532 = vunpack.c.h.b16 %v287
  %v533 = vunpack.c.l.b16 %v288
  %v534 = vunpack.c.h.b16 %v288
  %v535 = vunpack.c.l.b16 %v289
  %v536 = vunpack.c.h.b16 %v289
  %v537 = vunpack.c.l.b16 %v290
  %v538 = vunpack.c.h.b16 %v290
  %v539 = vunpack.c.l.b16 %v291
  %v540 = vunpack.c.l.b16 %v292
  %v541 = vunpack.c.h.b16 %v292
  %v542 = vunpack.c.l.b16 %v293
  %v543 = vunpack.c.h.b16 %v293
  %v544 = vunpack.c.l.b16 %v294
  %v545 = vunpack.c.h.b16 %v294
  %v546 = vunpack.c.l.b16 %v295
  %v547 = vunpack.c.h.b16 %v295
  %v548 = vunpack.c.l.b16 %v296
  %v549 = vunpack.c.h.b16 %v296
  %v550 = vunpack.c.l.b16 %v297
  %v551 = vunpack.c.h.b16 %v297
  %v552 = vunpack.c.l.b16 %v298
  %v553 = vunpack.c.l.b16 %v299
  %v554 = vunpack.c.h.b16 %v299
  %v555 = vunpack.c.l.b16 %v300
  %v556 = vunpack.c.h.b16 %v300
  %v557 = vunpack.c.l.b16 %v301
  %v558 = vunpack.c.h.b16 %v301
  %v559 = vunpack.c.l.b16 %v302
  %v560 = vunpack.c.h.b16 %v302
  %v561 = vunpack.c.l.b16 %v303
  %v562 = vunpack.c.h.b16 %v303
  %v563 = vunpack.c.l.b16 %v304
  %v564 = vunpack.c.h.b16 %v304
  %v565 = vunpack.c.l.b16 %v305
  %v566 = vpack.c.b16 %v410, %v397
  %v567 = vpack.c.b16 %v411, %v398
  %v568 = vpack.c.b16 %v412, %v399
  %v569 = vpack.c.b16 %v413, %v400
  %v570 = vpack.c.b16 %v414, %v401
  %v571 = vpack.c.b16 %v415, %v402
  %v572 = vpack.c.b16 %v416, %v403
  %v573 = vpack.c.b16 %v417, %v404
  %v574 = vpack.c.b16 %v418, %v405
  %v575 = vpack.c.b16 %v419, %v406
  %v576 = vpack.c.b16 %v420, %v407
  %v577 = vpack.c.b16 %v421, %v408
  %v578 = vpack.c.b16 %v422, %v409
  %v579 = vpack.c.b16 %v436, %v423
  %v580 = vpack.c.b16 %v437, %v424
  %v581 = vpack.c.b16 %v438, %v425
  %v582 = vpack.c.b16 %v439, %v426
  %v583 = vpack.c.b16 %v440, %v427
  %v584 = vpack.c.b16 %v441, %v428
  %v585 = vpack.c.b16 %v442, %v429
  %v586 = vpack.c.b16 %v443, %v430
  %v587 = vpack.c.b16 %v444, %v431
  %v588 = vpack.c.b16 %v445, %v432
  %v589 = vpack.c.b16 %v446, %v433
  %v590 = vpack.c.b16 %v447, %v434
  %v591 = vpack.c.b16 %v448, %v435
  %v592 = vpack.c.b16 %v462, %v449
  %v593 = vpack.c.b16 %v463, %v450
  %v594 = vpack.c.b16 %v464, %v451
  %v595 = vpack.c.b16 %v465, %v452
  %v596 = vpack.c.b16 %v466, %v453
  %v597 = vpack.c.b16 %v467, %v454
  %v598 = vpack.c.b16 %v468, %v455
  %v599 = vpack.c.b16 %v469, %v456
  %v600 = vpack.c.b16 %v470, %v457
  %v601 = vpack.c.b16 %v471, %v458
  %v602 = vpack.c.b16 %v472, %v459
  %v603 = vpack.c.b16 %v473, %v460
  %v604 = vpack.c.b16 %v474, %v461
  %v605 = vpack.c.b16 %v488, %v475
  %v606 = vpack.c.b16 %v489, %v476
  %v607 = vpack.c.b16 %v490, %v477
  %v608 = vpack.c.b16 %v491, %v478
  %v609 = vpack.c.b16 %v492, %v479
  %v610 = vpack.c.b16 %v493, %v480
  %v611 = vpack.c.b16 %v494, %v481
  %v612 = vpack.c.b16 %v495, %v482
  %v613 = vpack.c.b16 %v496, %v483
  %v614 = vpack.c.b16 %v497, %v484
  %v615 = vpack.c.b16 %v498, %v485
  %v616 = vpack.c.b16 %v499, %v486
  %v617 = vpack.c.b16 %v500, %v487
  %v618 = vpack.c.b16 %v514, %v501
  %v619 = vpack.c.b16 %v515, %v502
  %v620 = vpack.c.b16 %v516, %v503
  %v621 = vpack.c.b16 %v517, %v504
  %v622 = vpack.c.b16 %v518, %v505
  %v623 = vpack.c.b16 %v519, %v506
  %v624 = vpack.c.b16 %v520, %v507
  %v625 = vpack.c.b16 %v521, %v508
  %v626 = vpack.c.b16 %v522, %v509
  %v627 = vpack.c.b16 %v523, %v510
  %v628 = vpack.c.b16 %v524, %v511
  %v629 = vpack.c.b16 %v525, %v512
  %v630 = vpack.c.b16 %v526, %v513
  %v631 = vpack.c.b16 %v540, %v527
  %v632 = vpack.c.b16 %v541, %v528
  %v633 = vpack.c.b16 %v542, %v529
  %v634 = vpack.c.b16 %v543, %v530
  %v635 = vpack.c.b16 %v544, %v531
  %v636 = vpack.c.b16 %v545, %v532
  %v637 = vpack.c.b16 %v546, %v533
  %v638 = vpack.c.b16 %v547, %v534
  %v639 = vpack.c.b16 %v548, %v535
  %v640 = vpack.c.b16 %v549, %v536
  %v641 = vpack.c.b16 %v550, %v537
  %v642 = vpack.c.b16 %v551, %v538
  %v643 = vpack.c.b16 %v552, %v539
  %v644 = vpack.c.b16 %v553, %v553
  %v645 = vpack.c.b16 %v554, %v554
  %v646 = vpack.c.b16 %v555, %v555
  %v647 = vpack.c.b16 %v556, %v556
  %v648 = vpack.c.b16 %v557, %v557
  %v649 = vpack.c.b16 %v558, %v558
  %v650 = vpack.c.b16 %v559, %v559
  %v651 = vpack.c.b16 %v560, %v560
  %v652 = vpack.c.b16 %v561, %v561
  %v653 = vpack.c.b16 %v562, %v562
  %v654 = vpack.c.b16 %v563, %v563
  %v655 = vpack.c.b16 %v564, %v564
  %v656 = vpack.c.b16 %v565, %v565
  %v941 = vunpack.c.l.b16 %v15
  %v942 = vunpack.c.l.b16 %v16
  %v943 = vunpack.c.l.b16 %v17
  %v944 = vunpack.c.l.b16 %v18
  %v945 = vunpack.c.l.b16 %v19
  %v946 = vunpack.c.l.b16 %v20
  %v947 = vunpack.c.l.b16 %v21
  %v948 = vunpack.c.l.b16 %v22
  %v949 = vunpack.c.l.b16 %v23
  %v950 = vunpack.c.l.b16 %v24
  %v951 = vunpack.c.l.b16 %v25
  %v952 = vunpack.c.l.b16 %v26
  %v953 = vunpack.c.l.b16 %v27
  %v954 = vunpack.c.l.b16 %v28
  %v955 = vunpack.c.l.b16 %v29
  %v956 = vunpack.c.l.b16 %v30
  %v957 = vunpack.c.l.b16 %v31
  %v958 = vunpack.c.l.b16 %v32
  %v959 = vunpack.c.l.b16 %v33
  %v960 = vunpack.c.l.b16 %v34
  %v961 = vunpack.c.l.b16 %v35
  %v962 = vunpack.c.l.b16 %v36
  %v963 = vunpack.c.l.b16 %v37
  %v964 = vunpack.c.l.b16 %v38
  %v965 = vunpack.c.l.b16 %v39
  %v966 = vunpack.c.l.b16 %v40
  %v967 = vunpack.c.l.b16 %v41
  %v968 = vunpack.c.l.b16 %v42
  %v969 = vunpack.c.l.b16 %v43
  %v970 = vunpack.c.l.b16 %v44
  %v971 = vunpack.c.l.b16 %v45
  %v972 = vunpack.c.l.b16 %v46
  %v973 = vunpack.c.l.b16 %v47
  %v974 = vunpack.c.l.b16 %v48
  %v975 = vunpack.c.l.b16 %v49
  %v976 = vunpack.c.l.b16 %v50
  %v977 = vunpack.c.l.b16 %v51
  %v978 = vunpack.c.l.b16 %v52
  %v979 = vunpack.c.l.b16 %v53
  %v980 = vunpack.c.l.b16 %v54
  %v981 = vunpack.c.l.b16 %v55
  %v982 = vunpack.c.l.b16 %v56
  %v983 = vunpack.c.l.b16 %v57
  %v984 = vunpack.c.l.b16 %v58
  %v985 = vunpack.c.l.b16 %v59
  %v986 = vunpack.c.l.b16 %v60
  %v987 = vunpack.c.l.b16 %v61
  %v988 = vunpack.c.l.b16 %v62
  %v989 = vunpack.c.l.b16 %v63
  %v990 = vunpack.c.l.b16 %v64
  %v991 = vunpack.c.l.b16 %v65
  %v992 = vunpack.c.l.b16 %v66
  %v993 = vunpack.c.l.b16 %v67
  %v994 = vunpack.c.l.b16 %v68
  %v995 = vunpack.c.l.b16 %v69
  %v996 = vunpack.c.l.b16 %v70
  %v997 = vunpack.c.l.b16 %v71
  %v998 = vunpack.c.l.b16 %v72
  %v999 = vunpack.c.l.b16 %v73
  %v1000 = vunpack.c.l.b16 %v74
  %v1001 = vunpack.c.l.b16 %v75
  %v1002 = vunpack.c.l.b16 %v76
  %v1003 = vunpack.c.l.b16 %v77
  %v1004 = vunpack.c.l.b16 %v78
  %v1005 = vunpack.c.l.b16 %v79
  %v1006 = vunpack.c.l.b16 %v80
  %v1007 = vunpack.c.l.b16 %v81
  %v1008 = vunpack.c.l.b16 %v82
  %v1009 = vunpack.c.l.b16 %v83
  %v1010 = vunpack.c.l.b16 %v84
  %v1011 = vunpack.c.l.b16 %v85
  %v1012 = vunpack.c.l.b16 %v86
  %v1013 = vunpack.c.l.b16 %v87
  %v1014 = vunpack.c.l.b16 %v88
  %v1015 = vunpack.c.l.b16 %v89
  %v1016 = vunpack.c.l.b16 %v90
  %v1017 = vunpack.c.l.b16 %v91
  %v1018 = vunpack.c.l.b16 %v92
  %v1019 = vunpack.c.l.b16 %v93
  %v1020 = vunpack.c.l.b16 %v94
  %v1021 = vunpack.c.l.b16 %v95
  %v1022 = vunpack.c.l.b16 %v96
  %v1023 = vunpack.c.l.b16 %v97
  %v1024 = vunpack.c.l.b16 %v98
  %v1025 = vunpack.c.l.b16 %v99
  %v1026 = vunpack.c.l.b16 %v100
  %v1027 = vunpack.c.l.b16 %v101
  %v1028 = vunpack.c.l.b16 %v102
  %v1029 = vunpack.c.l.b16 %v103
  %v1030 = vunpack.c.l.b16 %v104
  %v1031 = vunpack.c.l.b16 %v105
  %v1032 = vunpack.c.l.b16 %v106
  %v1033 = vunpack.c.l.b16 %v107
  %v1034 = vunpack.c.l.b16 %v108
  %v1035 = vunpack.c.l.b16 %v109
  %v1036 = vunpack.c.l.b16 %v110
  %v1037 = vunpack.c.l.b16 %v111
  %v1038 = vunpack.c.l.b16 %v112
  %v1039 = vunpack.c.l.b16 %v113
  %v1040 = vunpack.c.l.b16 %v114
  %v1041 = vunpack.c.l.b16 %v115
  %v1042 = vunpack.c.l.b16 %v116
  %v1043 = vunpack.c.l.b16 %v117
  %v1044 = vunpack.c.l.b16 %v118
  %v1045 = vunpack.c.l.b16 %v119
  %v1046 = vunpack.c.l.b16 %v120
  %v1047 = vunpack.c.l.b16 %v121
  %v1048 = vunpack.c.l.b16 %v122
  %v1049 = vunpack.c.l.b16 %v123
  %v1050 = vunpack.c.l.b16 %v124
  %v1051 = vunpack.c.l.b16 %v125
  %v1052 = vunpack.c.l.b16 %v126
  %v1053 = vunpack.c.l.b16 %v127
  %v1054 = vunpack.c.l.b16 %v128
  %v1055 = vunpack.c.l.b16 %v129
  %v1056 = vunpack.c.l.b16 %v130
  %v1057 = vunpack.c.l.b16 %v131
  %v1058 = vunpack.c.l.b16 %v132
  %v1059 = vunpack.c.l.b16 %v133
  %v1060 = vunpack.c.l.b16 %v134
  %v1061 = vunpack.c.l.b16 %v135
  %v1062 = vunpack.c.l.b16 %v136
  %v1063 = vunpack.c.l.b16 %v137
  %v1064 = vunpack.c.l.b16 %v138
  %v1065 = vunpack.c.l.b16 %v139
  %v1066 = vunpack.c.l.b16 %v140
  %v1067 = vunpack.c.l.b16 %v141
  %v1068 = vunpack.c.l.b16 %v142
  %v1069 = vunpack.c.l.b16 %v143
  %v1070 = vunpack.c.l.b16 %v144
  %v1071 = vunpack.c.l.b16 %v145
  %v1072 = vunpack.c.l.b16 %v146
  %v1073 = vunpack.c.l.b16 %v147
  %v1074 = vunpack.c.l.b16 %v148
  %v1075 = vunpack.c.l.b16 %v149
  %v1076 = vunpack.c.l.b16 %v150
  %v1077 = vunpack.c.l.b16 %v151
  %v1078 = vunpack.c.l.b16 %v152
  %v1079 = vunpack.c.l.b16 %v153
  %v1080 = vunpack.c.l.b16 %v154
  %v1081 = vunpack.c.l.b16 %v155
  %v1082 = vunpack.c.l.b16 %v156
  %v1083 = vunpack.c.l.b16 %v157
  %v1084 = vunpack.c.l.b16 %v158
  %v1085 = vunpack.c.l.b16 %v159
  %v1086 = vunpack.c.l.b16 %v160
  %v1087 = vunpack.c.l.b16 %v161
  %v1088 = vunpack.c.l.b16 %v162
  %v1089 = vunpack.c.l.b16 %v163
  %v1090 = vunpack.c.l.b16 %v164
  %v1091 = vunpack.c.l.b16 %v165
  %v1092 = vunpack.c.l.b16 %v166
  %v1093 = vunpack.c.l.b16 %v167
  %v1094 = vunpack.c.l.b16 %v168
  %v1095 = vunpack.c.l.b16 %v169
  %v1096 = vunpack.c.l.b16 %v170
  %v1097 = vunpack.c.l.b16 %v171
  %v1098 = vunpack.c.l.b16 %v172
  %v1099 = vunpack.c.l.b16 %v173
  %v1100 = vunpack.c.l.b16 %v174
  %v1101 = vunpack.c.l.b16 %v175
  %v1102 = vunpack.c.l.b16 %v176
  %v1103 = vunpack.c.l.b16 %v177
  %v1104 = vunpack.c.l.b16 %v178
  %v1105 = vunpack.c.l.b16 %v179
  %v1106 = vunpack.c.l.b16 %v180
  %v1107 = vunpack.c.l.b16 %v181
  %v1108 = vunpack.c.l.b16 %v182
  %v1109 = vunpack.c.l.b16 %v183
  %v1110 = vunpack.c.l.b16 %v184
  %v1111 = vunpack.c.l.b16 %v185
  %v1112 = vunpack.c.l.b16 %v186
  %v1113 = vunpack.c.l.b16 %v187
  %v1114 = vunpack.c.l.b16 %v188
  %v1115 = vunpack.c.l.b16 %v189
  %v1116 = vunpack.c.l.b16 %v190
  %v1117 = vunpack.c.l.b16 %v191
  %v1118 = vunpack.c.l.b16 %v192
  %v1119 = vunpack.c.l.b16 %v193
  %v1120 = vunpack.c.l.b16 %v194
  %v1121 = vunpack.c.l.b16 %v195
  %v1122 = vunpack.c.l.b16 %v196
  %v1123 = vunpack.c.l.b16 %v197
  %v1124 = vunpack.c.l.b16 %v198
  %v1125 = vunpack.c.l.b16 %v199
  %v1126 = vunpack.c.l.b16 %v200
  %v1127 = vunpack.c.l.b16 %v201
  %v1128 = vunpack.c.l.b16 %v202
  %v1129 = vunpack.c.l.b16 %v203
  %v1130 = vunpack.c.l.b16 %v204
  %v1131 = vunpack.c.l.b16 %v205
  %v1132 = vunpack.c.l.b16 %v206
  %v1133 = vunpack.c.l.b16 %v207
  %v1134 = vunpack.c.l.b16 %v208
  %v1135 = vunpack.c.l.b16 %v209
  %v1136 = vunpack.c.l.b16 %v210
  %v1137 = vunpack.c.l.b16 %v211
  %v1138 = vunpack.c.l.b16 %v212
  %v1139 = vunpack.c.l.b16 %v213
  %v1140 = vunpack.c.l.b16 %v214
  %v1141 = vpack.c.b16 %v942, %v941
  %v1142 = vpack.c.b16 %v944, %v943
  %v1143 = vpack.c.b16 %v946, %v945
  %v1144 = vpack.c.b16 %v948, %v947
  %v1145 = vpack.c.b16 %v950, %v949
  %v1146 = vpack.c.b16 %v952, %v951
  %v1147 = vpack.c.b16 %v954, %v953
  %v1148 = vpack.c.b16 %v956, %v955
  %v1149 = vpack.c.b16 %v958, %v957
  %v1150 = vpack.c.b16 %v960, %v959
  %v1151 = vpack.c.b16 %v962, %v961
  %v1152 = vpack.c.b16 %v964, %v963
  %v1153 = vpack.c.b16 %v966, %v965
  %v1154 = vpack.c.b16 %v968, %v967
  %v1155 = vpack.c.b16 %v970, %v969
  %v1156 = vpack.c.b16 %v972, %v971
  %v1157 = vpack.c.b16 %v974, %v973
  %v1158 = vpack.c.b16 %v976, %v975
  %v1159 = vpack.c.b16 %v978, %v977
  %v1160 = vpack.c.b16 %v980, %v979
  %v1161 = vpack.c.b16 %v982, %v981
  %v1162 = vpack.c.b16 %v984, %v983
  %v1163 = vpack.c.b16 %v986, %v985
  %v1164 = vpack.c.b16 %v988, %v987
  %v1165 = vpack.c.b16 %v990, %v989
  %v1166 = vpack.c.b16 %v992, %v991
  %v1167 = vpack.c.b16 %v994, %v993
  %v1168 = vpack.c.b16 %v996, %v995
  %v1169 = vpack.c.b16 %v998, %v997
  %v1170 = vpack.c.b16 %v1000, %v999
  %v1171 = vpack.c.b16 %v1002, %v1001
  %v1172 = vpack.c.b16 %v1004, %v1003
  %v1173 = vpack.c.b16 %v1006, %v1005
  %v1174 = vpack.c.b16 %v1008, %v1007
  %v1175 = vpack.c.b16 %v1010, %v1009
  %v1176 = vpack.c.b16 %v1012, %v1011
  %v1177 = vpack.c.b16 %v1014, %v1013
  %v1178 = vpack.c.b16 %v1016, %v1015
  %v1179 = vpack.c.b16 %v1018, %v1017
  %v1180 = vpack.c.b16 %v1020, %v1019
  %v1181 = vpack.c.b16 %v1022, %v1021
  %v1182 = vpack.c.b16 %v1024, %v1023
  %v1183 = vpack.c.b16 %v1026, %v1025
  %v1184 = vpack.c.b16 %v1028, %v1027
  %v1185 = vpack.c.b16 %v1030, %v1029
  %v1186 = vpack.c.b16 %v1032, %v1031
  %v1187 = vpack.c.b16 %v1034, %v1033
  %v1188 = vpack.c.b16 %v1036, %v1035
  %v1189 = vpack.c.b16 %v1038, %v1037
  %v1190 = vpack.c.b16 %v1040, %v1039
  %v1191 = vpack.c.b16 %v1042, %v1041
  %v1192 = vpack.c.b16 %v1044, %v1043
  %v1193 = vpack.c.b16 %v1046, %v1045
  %v1194 = vpack.c.b16 %v1048, %v1047
  %v1195 = vpack.c.b16 %v1050, %v1049
  %v1196 = vpack.c.b16 %v1052, %v1051
  %v1197 = vpack.c.b16 %v1054, %v1053
  %v1198 = vpack.c.b16 %v1056, %v1055
  %v1199 = vpack.c.b16 %v1058, %v1057
  %v1200 = vpack.c.b16 %v1060, %v1059
  %v1201 = vpack.c.b16 %v1062, %v1061
  %v1202 = vpack.c.b16 %v1064, %v1063
  %v1203 = vpack.c.b16 %v1066, %v1065
  %v1204 = vpack.c.b16 %v1068, %v1067
  %v1205 = vpack.c.b16 %v1070, %v1069
  %v1206 = vpack.c.b16 %v1072, %v1071
  %v1207 = vpack.c.b16 %v1074, %v1073
  %v1208 = vpack.c.b16 %v1076, %v1075
  %v1209 = vpack.c.b16 %v1078, %v1077
  %v1210 = vpack.c.b16 %v1080, %v1079
  %v1211 = vpack.c.b16 %v1082, %v1081
  %v1212 = vpack.c.b16 %v1084, %v1083
  %v1213 = vpack.c.b16 %v1086, %v1085
  %v1214 = vpack.c.b16 %v1088, %v1087
  %v1215 = vpack.c.b16 %v1090, %v1089
  %v1216 = vpack.c.b16 %v1092, %v1091
  %v1217 = vpack.c.b16 %v1094, %v1093
  %v1218 = vpack.c.b16 %v1096, %v1095
  %v1219 = vpack.c.b16 %v1098, %v1097
  %v1220 = vpack.c.b16 %v1100, %v1099
  %v1221 = vpack.c.b16 %v1102, %v1101
  %v1222 = vpack.c.b16 %v1104, %v1103
  %v1223 = vpack.c.b16 %v1106, %v1105
  %v1224 = vpack.c.b16 %v1108, %v1107
  %v1225 = vpack.c.b16 %v1110, %v1109
  %v1226 = vpack.c.b16 %v1112, %v1111
  %v1227 = vpack.c.b16 %v1114, %v1113
  %v1228 = vpack.c.b16 %v1116, %v1115
  %v1229 = vpack.c.b16 %v1118, %v1117
  %v1230 = vpack.c.b16 %v1120, %v1119
  %v1231 = vpack.c.b16 %v1122, %v1121
  %v1232 = vpack.c.b16 %v1124, %v1123
  %v1233 = vpack.c.b16 %v1126, %v1125
  %v1234 = vpack.c.b16 %v1128, %v1127
  %v1235 = vpack.c.b16 %v1130, %v1129
  %v1236 = vpack.c.b16 %v1132, %v1131
  %v1237 = vpack.c.b16 %v1134, %v1133
  %v1238 = vpack.c.b16 %v1136, %v1135
  %v1239 = vpack.c.b16 %v1138, %v1137
  %v1240 = vpack.c.b16 %v1140, %v1139
  %vm1341 = vcmask 523264
  %v1343 = vsel %vm1341, %v578, 0
  %v1346 = vsel %vm1341, %v591, 0
  %v1349 = vsel %vm1341, %v604, 0
  %v1352 = vsel %vm1341, %v617, 0
  %v1355 = vsel %vm1341, %v630, 0
  %v1358 = vsel %vm1341, %v643, 0
  %v1361 = vsel %vm1341, %v656, 0
  %1363 = vmatprep.subr.bf16.mxu0 0
  %1364 = vmatpush1.bf16.msra.mxu0 %v1141
  %1365 = vmatprep.subr.bf16.mxu0 0
  %1366 = vmatpush1.bf16.msra.mxu0 %v1142
  %1367 = vmatprep.subr.bf16.mxu0 0
  %1368 = vmatpush1.bf16.msra.mxu0 %v1143
  %1369 = vmatprep.subr.bf16.mxu0 0
  %1370 = vmatpush1.bf16.msra.mxu0 %v1144
  %1371 = vmatprep.subr.bf16.mxu0 0
  %1372 = vmatpush1.bf16.msra.mxu0 %v1145
  %1373 = vmatprep.subr.bf16.mxu0 0
  %1374 = vmatpush1.bf16.msra.mxu0 %v1146
  %1375 = vmatprep.subr.bf16.mxu0 0
  %1376 = vmatpush1.bf16.msra.mxu0 %v1147
  %1377 = vmatprep.subr.bf16.mxu0 0
  %1378 = vmatpush1.bf16.msra.mxu0 %v1148
  %1379 = vmatprep.subr.bf16.mxu0 0
  %1380 = vmatpush1.bf16.msra.mxu0 %v1149
  %1381 = vmatprep.subr.bf16.mxu0 0
  %1382 = vmatpush1.bf16.msra.mxu0 %v1150
  %1383 = vmatprep.subr.bf16.mxu0 0
  %1384 = vmatpush1.bf16.msra.mxu0 %v1151
  %1385 = vmatprep.subr.bf16.mxu0 0
  %1386 = vmatpush1.bf16.msra.mxu0 %v1152
  %1387 = vmatprep.subr.bf16.mxu0 0
  %1388 = vmatpush1.bf16.msra.mxu0 %v1153
  %1389 = vmatprep.subr.bf16.mxu0 0
  %1390 = vmatpush1.bf16.msra.mxu0 %v1154
  %1391 = vmatprep.subr.bf16.mxu0 0
  %1392 = vmatpush1.bf16.msra.mxu0 %v1155
  %1393 = vmatprep.subr.bf16.mxu0 0
  %1394 = vmatpush1.bf16.msra.mxu0 %v1156
  %1395 = vmatprep.mubr.bf16.mxu0 %v567
  %1396 = vmatmul.mubr.bf16.gmra.mrb[0].mxu0 %v566
  %v1397 = vpop.f32.mrb[0].mxu0
  %v1398 = vadd.f32 0.0, %v1397
  %v1399 = vpop.f32.mrb[0].mxu0
  %v1400 = vpop.f32.mrb[0].mxu0
  %v1401 = vadd.f32 0.0, %v1400
  %v1402 = vpop.f32.mrb[0].mxu0
  %1403 = vmatprep.mubr.bf16.mxu0 %v580
  %1404 = vmatmul.mubr.bf16.gmra.mrb[0].mxu0 %v579
  %v1405 = vpop.f32.mrb[0].mxu0
  %v1406 = vadd.f32 0.0, %v1405
  %v1407 = vpop.f32.mrb[0].mxu0
  %v1408 = vpop.f32.mrb[0].mxu0
  %v1409 = vadd.f32 0.0, %v1408
  %v1410 = vpop.f32.mrb[0].mxu0
  %1411 = vmatprep.mubr.bf16.mxu0 %v593
  %1412 = vmatmul.mubr.bf16.gmra.mrb[0].mxu0 %v592
  %v1413 = vpop.f32.mrb[0].mxu0
  %v1414 = vadd.f32 0.0, %v1413
  %v1415 = vpop.f32.mrb[0].mxu0
  %v1416 = vpop.f32.mrb[0].mxu0
  %v1417 = vadd.f32 0.0, %v1416
  %v1418 = vpop.f32.mrb[0].mxu0
  %1419 = vmatprep.mubr.bf16.mxu0 %v606
  %1420 = vmatmul.mubr.bf16.gmra.mrb[0].mxu0 %v605
  %v1421 = vpop.f32.mrb[0].mxu0
  %v1422 = vadd.f32 0.0, %v1421
  %v1423 = vpop.f32.mrb[0].mxu0
  %v1424 = vpop.f32.mrb[0].mxu0
  %v1425 = vadd.f32 0.0, %v1424
  %v1426 = vpop.f32.mrb[0].mxu0
  %1427 = vmatprep.mubr.bf16.mxu0 %v619
  %1428 = vmatmul.mubr.bf16.gmra.mrb[0].mxu0 %v618
  %v1429 = vpop.f32.mrb[0].mxu0
  %v1430 = vadd.f32 0.0, %v1429
  %v1431 = vpop.f32.mrb[0].mxu0
  %v1432 = vpop.f32.mrb[0].mxu0
  %v1433 = vadd.f32 0.0, %v1432
  %v1434 = vpop.f32.mrb[0].mxu0
  %1435 = vmatprep.mubr.bf16.mxu0 %v632
  %1436 = vmatmul.mubr.bf16.gmra.mrb[0].mxu0 %v631
  %v1437 = vpop.f32.mrb[0].mxu0
  %v1438 = vadd.f32 0.0, %v1437
  %v1439 = vpop.f32.mrb[0].mxu0
  %v1440 = vpop.f32.mrb[0].mxu0
  %v1441 = vadd.f32 0.0, %v1440
  %v1442 = vpop.f32.mrb[0].mxu0
  %1443 = vmatprep.mubr.bf16.mxu0 %v645
  %1444 = vmatmul.mubr.bf16.gmra.mrb[0].mxu0 %v644
  %v1445 = vpop.f32.mrb[0].mxu0
  %v1446 = vadd.f32 0.0, %v1445
  %v1447 = vpop.f32.mrb[0].mxu0
  %v1448 = vpop.f32.mrb[0].mxu0
  %v1449 = vpop.f32.mrb[0].mxu0
  %1450 = vdwg.mxu0
  %1451 = vmatprep.subr.bf16.mxu0 0
  %1452 = vmatpush1.bf16.msra.mxu0 %v1157
  %1453 = vmatprep.subr.bf16.mxu0 0
  %1454 = vmatpush1.bf16.msra.mxu0 %v1158
  %1455 = vmatprep.subr.bf16.mxu0 0
  %1456 = vmatpush1.bf16.msra.mxu0 %v1159
  %1457 = vmatprep.subr.bf16.mxu0 0
  %1458 = vmatpush1.bf16.msra.mxu0 %v1160
  %1459 = vmatprep.subr.bf16.mxu0 0
  %1460 = vmatpush1.bf16.msra.mxu0 %v1161
  %1461 = vmatprep.subr.bf16.mxu0 0
  %1462 = vmatpush1.bf16.msra.mxu0 %v1162
  %1463 = vmatprep.subr.bf16.mxu0 0
  %1464 = vmatpush1.bf16.msra.mxu0 %v1163
  %1465 = vmatprep.subr.bf16.mxu0 0
  %1466 = vmatpush1.bf16.msra.mxu0 %v1164
  %1467 = vmatprep.subr.bf16.mxu0 0
  %1468 = vmatpush1.bf16.msra.mxu0 %v1165
  %1469 = vmatprep.subr.bf16.mxu0 0
  %1470 = vmatpush1.bf16.msra.mxu0 %v1166
  %1471 = vmatprep.subr.bf16.mxu0 0
  %1472 = vmatpush1.bf16.msra.mxu0 %v1167
  %1473 = vmatprep.subr.bf16.mxu0 0
  %1474 = vmatpush1.bf16.msra.mxu0 %v1168
  %1475 = vmatprep.subr.bf16.mxu0 0
  %1476 = vmatpush1.bf16.msra.mxu0 %v1169
  %1477 = vmatprep.subr.bf16.mxu0 0
  %1478 = vmatpush1.bf16.msra.mxu0 %v1170
  %1479 = vmatprep.subr.bf16.mxu0 0
  %1480 = vmatpush1.bf16.msra.mxu0 %v1171
  %1481 = vmatprep.subr.bf16.mxu0 0
  %1482 = vmatpush1.bf16.msra.mxu0 %v1172
  %1483 = vmatprep.mubr.bf16.mxu0 %v569
  %1484 = vmatmul.mubr.bf16.gmra.mrb[0].mxu0 %v568
  %v1485 = vpop.f32.mrb[0].mxu0
  %v1486 = vadd.f32 %v1398, %v1485
  %v1487 = vpop.f32.mrb[0].mxu0
  %v1488 = vpop.f32.mrb[0].mxu0
  %v1489 = vadd.f32 %v1401, %v1488
  %v1490 = vpop.f32.mrb[0].mxu0
  %1491 = vmatprep.mubr.bf16.mxu0 %v582
  %1492 = vmatmul.mubr.bf16.gmra.mrb[0].mxu0 %v581
  %v1493 = vpop.f32.mrb[0].mxu0
  %v1494 = vadd.f32 %v1406, %v1493
  %v1495 = vpop.f32.mrb[0].mxu0
  %v1496 = vpop.f32.mrb[0].mxu0
  %v1497 = vadd.f32 %v1409, %v1496
  %v1498 = vpop.f32.mrb[0].mxu0
  %1499 = vmatprep.mubr.bf16.mxu0 %v595
  %1500 = vmatmul.mubr.bf16.gmra.mrb[0].mxu0 %v594
  %v1501 = vpop.f32.mrb[0].mxu0
  %v1502 = vadd.f32 %v1414, %v1501
  %v1503 = vpop.f32.mrb[0].mxu0
  %v1504 = vpop.f32.mrb[0].mxu0
  %v1505 = vadd.f32 %v1417, %v1504
  %v1506 = vpop.f32.mrb[0].mxu0
  %1507 = vmatprep.mubr.bf16.mxu0 %v608
  %1508 = vmatmul.mubr.bf16.gmra.mrb[0].mxu0 %v607
  %v1509 = vpop.f32.mrb[0].mxu0
  %v1510 = vadd.f32 %v1422, %v1509
  %v1511 = vpop.f32.mrb[0].mxu0
  %v1512 = vpop.f32.mrb[0].mxu0
  %v1513 = vadd.f32 %v1425, %v1512
  %v1514 = vpop.f32.mrb[0].mxu0
  %1515 = vmatprep.mubr.bf16.mxu0 %v621
  %1516 = vmatmul.mubr.bf16.gmra.mrb[0].mxu0 %v620
  %v1517 = vpop.f32.mrb[0].mxu0
  %v1518 = vadd.f32 %v1430, %v1517
  %v1519 = vpop.f32.mrb[0].mxu0
  %v1520 = vpop.f32.mrb[0].mxu0
  %v1521 = vadd.f32 %v1433, %v1520
  %v1522 = vpop.f32.mrb[0].mxu0
  %1523 = vmatprep.mubr.bf16.mxu0 %v634
  %1524 = vmatmul.mubr.bf16.gmra.mrb[0].mxu0 %v633
  %v1525 = vpop.f32.mrb[0].mxu0
  %v1526 = vadd.f32 %v1438, %v1525
  %v1527 = vpop.f32.mrb[0].mxu0
  %v1528 = vpop.f32.mrb[0].mxu0
  %v1529 = vadd.f32 %v1441, %v1528
  %v1530 = vpop.f32.mrb[0].mxu0
  %1531 = vmatprep.mubr.bf16.mxu0 %v647
  %1532 = vmatmul.mubr.bf16.gmra.mrb[0].mxu0 %v646
  %v1533 = vpop.f32.mrb[0].mxu0
  %v1534 = vadd.f32 %v1446, %v1533
  %v1535 = vpop.f32.mrb[0].mxu0
  %v1536 = vpop.f32.mrb[0].mxu0
  %v1537 = vpop.f32.mrb[0].mxu0
  %1538 = vdwg.mxu0
  %1539 = vmatprep.subr.bf16.mxu0 0
  %1540 = vmatpush1.bf16.msra.mxu0 %v1173
  %1541 = vmatprep.subr.bf16.mxu0 0
  %1542 = vmatpush1.bf16.msra.mxu0 %v1174
  %1543 = vmatprep.subr.bf16.mxu0 0
  %1544 = vmatpush1.bf16.msra.mxu0 %v1175
  %1545 = vmatprep.subr.bf16.mxu0 0
  %1546 = vmatpush1.bf16.msra.mxu0 %v1176
  %1547 = vmatprep.subr.bf16.mxu0 0
  %1548 = vmatpush1.bf16.msra.mxu0 %v1177
  %1549 = vmatprep.subr.bf16.mxu0 0
  %1550 = vmatpush1.bf16.msra.mxu0 %v1178
  %1551 = vmatprep.subr.bf16.mxu0 0
  %1552 = vmatpush1.bf16.msra.mxu0 %v1179
  %1553 = vmatprep.subr.bf16.mxu0 0
  %1554 = vmatpush1.bf16.msra.mxu0 %v1180
  %1555 = vmatprep.subr.bf16.mxu0 0
  %1556 = vmatpush1.bf16.msra.mxu0 %v1181
  %1557 = vmatprep.subr.bf16.mxu0 0
  %1558 = vmatpush1.bf16.msra.mxu0 %v1182
  %1559 = vmatprep.subr.bf16.mxu0 0
  %1560 = vmatpush1.bf16.msra.mxu0 %v1183
  %1561 = vmatprep.subr.bf16.mxu0 0
  %1562 = vmatpush1.bf16.msra.mxu0 %v1184
  %1563 = vmatprep.subr.bf16.mxu0 0
  %1564 = vmatpush1.bf16.msra.mxu0 %v1185
  %1565 = vmatprep.subr.bf16.mxu0 0
  %1566 = vmatpush1.bf16.msra.mxu0 %v1186
  %1567 = vmatprep.subr.bf16.mxu0 0
  %1568 = vmatpush1.bf16.msra.mxu0 %v1187
  %1569 = vmatprep.subr.bf16.mxu0 0
  %1570 = vmatpush1.bf16.msra.mxu0 %v1188
  %1571 = vmatprep.mubr.bf16.mxu0 %v571
  %1572 = vmatmul.mubr.bf16.gmra.mrb[0].mxu0 %v570
  %v1573 = vpop.f32.mrb[0].mxu0
  %v1574 = vadd.f32 %v1486, %v1573
  %v1575 = vpop.f32.mrb[0].mxu0
  %v1576 = vpop.f32.mrb[0].mxu0
  %v1577 = vadd.f32 %v1489, %v1576
  %v1578 = vpop.f32.mrb[0].mxu0
  %1579 = vmatprep.mubr.bf16.mxu0 %v584
  %1580 = vmatmul.mubr.bf16.gmra.mrb[0].mxu0 %v583
  %v1581 = vpop.f32.mrb[0].mxu0
  %v1582 = vadd.f32 %v1494, %v1581
  %v1583 = vpop.f32.mrb[0].mxu0
  %v1584 = vpop.f32.mrb[0].mxu0
  %v1585 = vadd.f32 %v1497, %v1584
  %v1586 = vpop.f32.mrb[0].mxu0
  %1587 = vmatprep.mubr.bf16.mxu0 %v597
  %1588 = vmatmul.mubr.bf16.gmra.mrb[0].mxu0 %v596
  %v1589 = vpop.f32.mrb[0].mxu0
  %v1590 = vadd.f32 %v1502, %v1589
  %v1591 = vpop.f32.mrb[0].mxu0
  %v1592 = vpop.f32.mrb[0].mxu0
  %v1593 = vadd.f32 %v1505, %v1592
  %v1594 = vpop.f32.mrb[0].mxu0
  %1595 = vmatprep.mubr.bf16.mxu0 %v610
  %1596 = vmatmul.mubr.bf16.gmra.mrb[0].mxu0 %v609
  %v1597 = vpop.f32.mrb[0].mxu0
  %v1598 = vadd.f32 %v1510, %v1597
  %v1599 = vpop.f32.mrb[0].mxu0
  %v1600 = vpop.f32.mrb[0].mxu0
  %v1601 = vadd.f32 %v1513, %v1600
  %v1602 = vpop.f32.mrb[0].mxu0
  %1603 = vmatprep.mubr.bf16.mxu0 %v623
  %1604 = vmatmul.mubr.bf16.gmra.mrb[0].mxu0 %v622
  %v1605 = vpop.f32.mrb[0].mxu0
  %v1606 = vadd.f32 %v1518, %v1605
  %v1607 = vpop.f32.mrb[0].mxu0
  %v1608 = vpop.f32.mrb[0].mxu0
  %v1609 = vadd.f32 %v1521, %v1608
  %v1610 = vpop.f32.mrb[0].mxu0
  %1611 = vmatprep.mubr.bf16.mxu0 %v636
  %1612 = vmatmul.mubr.bf16.gmra.mrb[0].mxu0 %v635
  %v1613 = vpop.f32.mrb[0].mxu0
  %v1614 = vadd.f32 %v1526, %v1613
  %v1615 = vpop.f32.mrb[0].mxu0
  %v1616 = vpop.f32.mrb[0].mxu0
  %v1617 = vadd.f32 %v1529, %v1616
  %v1618 = vpop.f32.mrb[0].mxu0
  %1619 = vmatprep.mubr.bf16.mxu0 %v649
  %1620 = vmatmul.mubr.bf16.gmra.mrb[0].mxu0 %v648
  %v1621 = vpop.f32.mrb[0].mxu0
  %v1622 = vadd.f32 %v1534, %v1621
  %v1623 = vpop.f32.mrb[0].mxu0
  %v1624 = vpop.f32.mrb[0].mxu0
  %v1625 = vpop.f32.mrb[0].mxu0
  %1626 = vdwg.mxu0
  %1627 = vmatprep.subr.bf16.mxu0 0
  %1628 = vmatpush1.bf16.msra.mxu0 %v1189
  %1629 = vmatprep.subr.bf16.mxu0 0
  %1630 = vmatpush1.bf16.msra.mxu0 %v1190
  %1631 = vmatprep.subr.bf16.mxu0 0
  %1632 = vmatpush1.bf16.msra.mxu0 %v1191
  %1633 = vmatprep.subr.bf16.mxu0 0
  %1634 = vmatpush1.bf16.msra.mxu0 %v1192
  %1635 = vmatprep.subr.bf16.mxu0 0
  %1636 = vmatpush1.bf16.msra.mxu0 %v1193
  %1637 = vmatprep.subr.bf16.mxu0 0
  %1638 = vmatpush1.bf16.msra.mxu0 %v1194
  %1639 = vmatprep.subr.bf16.mxu0 0
  %1640 = vmatpush1.bf16.msra.mxu0 %v1195
  %1641 = vmatprep.subr.bf16.mxu0 0
  %1642 = vmatpush1.bf16.msra.mxu0 %v1196
  %1643 = vmatprep.subr.bf16.mxu0 0
  %1644 = vmatpush1.bf16.msra.mxu0 %v1197
  %1645 = vmatprep.subr.bf16.mxu0 0
  %1646 = vmatpush1.bf16.msra.mxu0 %v1198
  %1647 = vmatprep.subr.bf16.mxu0 0
  %1648 = vmatpush1.bf16.msra.mxu0 %v1199
  %1649 = vmatprep.subr.bf16.mxu0 0
  %1650 = vmatpush1.bf16.msra.mxu0 %v1200
  %1651 = vmatprep.subr.bf16.mxu0 0
  %1652 = vmatpush1.bf16.msra.mxu0 %v1201
  %1653 = vmatprep.subr.bf16.mxu0 0
  %1654 = vmatpush1.bf16.msra.mxu0 %v1202
  %1655 = vmatprep.subr.bf16.mxu0 0
  %1656 = vmatpush1.bf16.msra.mxu0 %v1203
  %1657 = vmatprep.subr.bf16.mxu0 0
  %1658 = vmatpush1.bf16.msra.mxu0 %v1204
  %1659 = vmatprep.mubr.bf16.mxu0 %v573
  %1660 = vmatmul.mubr.bf16.gmra.mrb[0].mxu0 %v572
  %v1661 = vpop.f32.mrb[0].mxu0
  %v1662 = vadd.f32 %v1574, %v1661
  %v1663 = vpop.f32.mrb[0].mxu0
  %v1664 = vpop.f32.mrb[0].mxu0
  %v1665 = vadd.f32 %v1577, %v1664
  %v1666 = vpop.f32.mrb[0].mxu0
  %1667 = vmatprep.mubr.bf16.mxu0 %v586
  %1668 = vmatmul.mubr.bf16.gmra.mrb[0].mxu0 %v585
  %v1669 = vpop.f32.mrb[0].mxu0
  %v1670 = vadd.f32 %v1582, %v1669
  %v1671 = vpop.f32.mrb[0].mxu0
  %v1672 = vpop.f32.mrb[0].mxu0
  %v1673 = vadd.f32 %v1585, %v1672
  %v1674 = vpop.f32.mrb[0].mxu0
  %1675 = vmatprep.mubr.bf16.mxu0 %v599
  %1676 = vmatmul.mubr.bf16.gmra.mrb[0].mxu0 %v598
  %v1677 = vpop.f32.mrb[0].mxu0
  %v1678 = vadd.f32 %v1590, %v1677
  %v1679 = vpop.f32.mrb[0].mxu0
  %v1680 = vpop.f32.mrb[0].mxu0
  %v1681 = vadd.f32 %v1593, %v1680
  %v1682 = vpop.f32.mrb[0].mxu0
  %1683 = vmatprep.mubr.bf16.mxu0 %v612
  %1684 = vmatmul.mubr.bf16.gmra.mrb[0].mxu0 %v611
  %v1685 = vpop.f32.mrb[0].mxu0
  %v1686 = vadd.f32 %v1598, %v1685
  %v1687 = vpop.f32.mrb[0].mxu0
  %v1688 = vpop.f32.mrb[0].mxu0
  %v1689 = vadd.f32 %v1601, %v1688
  %v1690 = vpop.f32.mrb[0].mxu0
  %1691 = vmatprep.mubr.bf16.mxu0 %v625
  %1692 = vmatmul.mubr.bf16.gmra.mrb[0].mxu0 %v624
  %v1693 = vpop.f32.mrb[0].mxu0
  %v1694 = vadd.f32 %v1606, %v1693
  %v1695 = vpop.f32.mrb[0].mxu0
  %v1696 = vpop.f32.mrb[0].mxu0
  %v1697 = vadd.f32 %v1609, %v1696
  %v1698 = vpop.f32.mrb[0].mxu0
  %1699 = vmatprep.mubr.bf16.mxu0 %v638
  %1700 = vmatmul.mubr.bf16.gmra.mrb[0].mxu0 %v637
  %v1701 = vpop.f32.mrb[0].mxu0
  %v1702 = vadd.f32 %v1614, %v1701
  %v1703 = vpop.f32.mrb[0].mxu0
  %v1704 = vpop.f32.mrb[0].mxu0
  %v1705 = vadd.f32 %v1617, %v1704
  %v1706 = vpop.f32.mrb[0].mxu0
  %1707 = vmatprep.mubr.bf16.mxu0 %v651
  %1708 = vmatmul.mubr.bf16.gmra.mrb[0].mxu0 %v650
  %v1709 = vpop.f32.mrb[0].mxu0
  %v1710 = vadd.f32 %v1622, %v1709
  %v1711 = vpop.f32.mrb[0].mxu0
  %v1712 = vpop.f32.mrb[0].mxu0
  %v1713 = vpop.f32.mrb[0].mxu0
  %1714 = vdwg.mxu0
  %1715 = vmatprep.subr.bf16.mxu0 0
  %1716 = vmatpush1.bf16.msra.mxu0 %v1205
  %1717 = vmatprep.subr.bf16.mxu0 0
  %1718 = vmatpush1.bf16.msra.mxu0 %v1206
  %1719 = vmatprep.subr.bf16.mxu0 0
  %1720 = vmatpush1.bf16.msra.mxu0 %v1207
  %1721 = vmatprep.subr.bf16.mxu0 0
  %1722 = vmatpush1.bf16.msra.mxu0 %v1208
  %1723 = vmatprep.subr.bf16.mxu0 0
  %1724 = vmatpush1.bf16.msra.mxu0 %v1209
  %1725 = vmatprep.subr.bf16.mxu0 0
  %1726 = vmatpush1.bf16.msra.mxu0 %v1210
  %1727 = vmatprep.subr.bf16.mxu0 0
  %1728 = vmatpush1.bf16.msra.mxu0 %v1211
  %1729 = vmatprep.subr.bf16.mxu0 0
  %1730 = vmatpush1.bf16.msra.mxu0 %v1212
  %1731 = vmatprep.subr.bf16.mxu0 0
  %1732 = vmatpush1.bf16.msra.mxu0 %v1213
  %1733 = vmatprep.subr.bf16.mxu0 0
  %1734 = vmatpush1.bf16.msra.mxu0 %v1214
  %1735 = vmatprep.subr.bf16.mxu0 0
  %1736 = vmatpush1.bf16.msra.mxu0 %v1215
  %1737 = vmatprep.subr.bf16.mxu0 0
  %1738 = vmatpush1.bf16.msra.mxu0 %v1216
  %1739 = vmatprep.subr.bf16.mxu0 0
  %1740 = vmatpush1.bf16.msra.mxu0 %v1217
  %1741 = vmatprep.subr.bf16.mxu0 0
  %1742 = vmatpush1.bf16.msra.mxu0 %v1218
  %1743 = vmatprep.subr.bf16.mxu0 0
  %1744 = vmatpush1.bf16.msra.mxu0 %v1219
  %1745 = vmatprep.subr.bf16.mxu0 0
  %1746 = vmatpush1.bf16.msra.mxu0 %v1220
  %1747 = vmatprep.mubr.bf16.mxu0 %v575
  %1748 = vmatmul.mubr.bf16.gmra.mrb[0].mxu0 %v574
  %v1749 = vpop.f32.mrb[0].mxu0
  %v1750 = vadd.f32 %v1662, %v1749
  %v1751 = vpop.f32.mrb[0].mxu0
  %v1752 = vpop.f32.mrb[0].mxu0
  %v1753 = vadd.f32 %v1665, %v1752
  %v1754 = vpop.f32.mrb[0].mxu0
  %1755 = vmatprep.mubr.bf16.mxu0 %v588
  %1756 = vmatmul.mubr.bf16.gmra.mrb[0].mxu0 %v587
  %v1757 = vpop.f32.mrb[0].mxu0
  %v1758 = vadd.f32 %v1670, %v1757
  %v1759 = vpop.f32.mrb[0].mxu0
  %v1760 = vpop.f32.mrb[0].mxu0
  %v1761 = vadd.f32 %v1673, %v1760
  %v1762 = vpop.f32.mrb[0].mxu0
  %1763 = vmatprep.mubr.bf16.mxu0 %v601
  %1764 = vmatmul.mubr.bf16.gmra.mrb[0].mxu0 %v600
  %v1765 = vpop.f32.mrb[0].mxu0
  %v1766 = vadd.f32 %v1678, %v1765
  %v1767 = vpop.f32.mrb[0].mxu0
  %v1768 = vpop.f32.mrb[0].mxu0
  %v1769 = vadd.f32 %v1681, %v1768
  %v1770 = vpop.f32.mrb[0].mxu0
  %1771 = vmatprep.mubr.bf16.mxu0 %v614
  %1772 = vmatmul.mubr.bf16.gmra.mrb[0].mxu0 %v613
  %v1773 = vpop.f32.mrb[0].mxu0
  %v1774 = vadd.f32 %v1686, %v1773
  %v1775 = vpop.f32.mrb[0].mxu0
  %v1776 = vpop.f32.mrb[0].mxu0
  %v1777 = vadd.f32 %v1689, %v1776
  %v1778 = vpop.f32.mrb[0].mxu0
  %1779 = vmatprep.mubr.bf16.mxu0 %v627
  %1780 = vmatmul.mubr.bf16.gmra.mrb[0].mxu0 %v626
  %v1781 = vpop.f32.mrb[0].mxu0
  %v1782 = vadd.f32 %v1694, %v1781
  %v1783 = vpop.f32.mrb[0].mxu0
  %v1784 = vpop.f32.mrb[0].mxu0
  %v1785 = vadd.f32 %v1697, %v1784
  %v1786 = vpop.f32.mrb[0].mxu0
  %1787 = vmatprep.mubr.bf16.mxu0 %v640
  %1788 = vmatmul.mubr.bf16.gmra.mrb[0].mxu0 %v639
  %v1789 = vpop.f32.mrb[0].mxu0
  %v1790 = vadd.f32 %v1702, %v1789
  %v1791 = vpop.f32.mrb[0].mxu0
  %v1792 = vpop.f32.mrb[0].mxu0
  %v1793 = vadd.f32 %v1705, %v1792
  %v1794 = vpop.f32.mrb[0].mxu0
  %1795 = vmatprep.mubr.bf16.mxu0 %v653
  %1796 = vmatmul.mubr.bf16.gmra.mrb[0].mxu0 %v652
  %v1797 = vpop.f32.mrb[0].mxu0
  %v1798 = vadd.f32 %v1710, %v1797
  %v1799 = vpop.f32.mrb[0].mxu0
  %v1800 = vpop.f32.mrb[0].mxu0
  %v1801 = vpop.f32.mrb[0].mxu0
  %1802 = vdwg.mxu0
  %1803 = vmatprep.subr.bf16.mxu0 0
  %1804 = vmatpush1.bf16.msra.mxu0 %v1221
  %1805 = vmatprep.subr.bf16.mxu0 0
  %1806 = vmatpush1.bf16.msra.mxu0 %v1222
  %1807 = vmatprep.subr.bf16.mxu0 0
  %1808 = vmatpush1.bf16.msra.mxu0 %v1223
  %1809 = vmatprep.subr.bf16.mxu0 0
  %1810 = vmatpush1.bf16.msra.mxu0 %v1224
  %1811 = vmatprep.subr.bf16.mxu0 0
  %1812 = vmatpush1.bf16.msra.mxu0 %v1225
  %1813 = vmatprep.subr.bf16.mxu0 0
  %1814 = vmatpush1.bf16.msra.mxu0 %v1226
  %1815 = vmatprep.subr.bf16.mxu0 0
  %1816 = vmatpush1.bf16.msra.mxu0 %v1227
  %1817 = vmatprep.subr.bf16.mxu0 0
  %1818 = vmatpush1.bf16.msra.mxu0 %v1228
  %1819 = vmatprep.subr.bf16.mxu0 0
  %1820 = vmatpush1.bf16.msra.mxu0 %v1229
  %1821 = vmatprep.subr.bf16.mxu0 0
  %1822 = vmatpush1.bf16.msra.mxu0 %v1230
  %1823 = vmatprep.subr.bf16.mxu0 0
  %1824 = vmatpush1.bf16.msra.mxu0 %v1231
  %1825 = vmatprep.subr.bf16.mxu0 0
  %1826 = vmatpush1.bf16.msra.mxu0 %v1232
  %1827 = vmatprep.subr.bf16.mxu0 0
  %1828 = vmatpush1.bf16.msra.mxu0 %v1233
  %1829 = vmatprep.subr.bf16.mxu0 0
  %1830 = vmatpush1.bf16.msra.mxu0 %v1234
  %1831 = vmatprep.subr.bf16.mxu0 0
  %1832 = vmatpush1.bf16.msra.mxu0 %v1235
  %1833 = vmatprep.subr.bf16.mxu0 0
  %1834 = vmatpush1.bf16.msra.mxu0 %v1236
  %1835 = vmatprep.mubr.bf16.mxu0 %v577
  %1836 = vmatmul.mubr.bf16.gmra.mrb[0].mxu0 %v576
  %v1837 = vpop.f32.mrb[0].mxu0
  %v1838 = vadd.f32 %v1750, %v1837
  %v1839 = vpop.f32.mrb[0].mxu0
  %v1840 = vpop.f32.mrb[0].mxu0
  %v1841 = vadd.f32 %v1753, %v1840
  %v1842 = vpop.f32.mrb[0].mxu0
  %1843 = vmatprep.mubr.bf16.mxu0 %v590
  %1844 = vmatmul.mubr.bf16.gmra.mrb[0].mxu0 %v589
  %v1845 = vpop.f32.mrb[0].mxu0
  %v1846 = vadd.f32 %v1758, %v1845
  %v1847 = vpop.f32.mrb[0].mxu0
  %v1848 = vpop.f32.mrb[0].mxu0
  %v1849 = vadd.f32 %v1761, %v1848
  %v1850 = vpop.f32.mrb[0].mxu0
  %1851 = vmatprep.mubr.bf16.mxu0 %v603
  %1852 = vmatmul.mubr.bf16.gmra.mrb[0].mxu0 %v602
  %v1853 = vpop.f32.mrb[0].mxu0
  %v1854 = vadd.f32 %v1766, %v1853
  %v1855 = vpop.f32.mrb[0].mxu0
  %v1856 = vpop.f32.mrb[0].mxu0
  %v1857 = vadd.f32 %v1769, %v1856
  %v1858 = vpop.f32.mrb[0].mxu0
  %1859 = vmatprep.mubr.bf16.mxu0 %v616
  %1860 = vmatmul.mubr.bf16.gmra.mrb[0].mxu0 %v615
  %v1861 = vpop.f32.mrb[0].mxu0
  %v1862 = vadd.f32 %v1774, %v1861
  %v1863 = vpop.f32.mrb[0].mxu0
  %v1864 = vpop.f32.mrb[0].mxu0
  %v1865 = vadd.f32 %v1777, %v1864
  %v1866 = vpop.f32.mrb[0].mxu0
  %1867 = vmatprep.mubr.bf16.mxu0 %v629
  %1868 = vmatmul.mubr.bf16.gmra.mrb[0].mxu0 %v628
  %v1869 = vpop.f32.mrb[0].mxu0
  %v1870 = vadd.f32 %v1782, %v1869
  %v1871 = vpop.f32.mrb[0].mxu0
  %v1872 = vpop.f32.mrb[0].mxu0
  %v1873 = vadd.f32 %v1785, %v1872
  %v1874 = vpop.f32.mrb[0].mxu0
  %1875 = vmatprep.mubr.bf16.mxu0 %v642
  %1876 = vmatmul.mubr.bf16.gmra.mrb[0].mxu0 %v641
  %v1877 = vpop.f32.mrb[0].mxu0
  %v1878 = vadd.f32 %v1790, %v1877
  %v1879 = vpop.f32.mrb[0].mxu0
  %v1880 = vpop.f32.mrb[0].mxu0
  %v1881 = vadd.f32 %v1793, %v1880
  %v1882 = vpop.f32.mrb[0].mxu0
  %1883 = vmatprep.mubr.bf16.mxu0 %v655
  %1884 = vmatmul.mubr.bf16.gmra.mrb[0].mxu0 %v654
  %v1885 = vpop.f32.mrb[0].mxu0
  %v1886 = vadd.f32 %v1798, %v1885
  %v1887 = vpop.f32.mrb[0].mxu0
  %v1888 = vpop.f32.mrb[0].mxu0
  %v1889 = vpop.f32.mrb[0].mxu0
  %1890 = vdwg.mxu0
  %1891 = vmatprep.subr.bf16.mxu0 0
  %1892 = vmatpush1.bf16.msra.mxu0 %v1237
  %1893 = vmatprep.subr.bf16.mxu0 0
  %1894 = vmatpush1.bf16.msra.mxu0 %v1238
  %1895 = vmatprep.subr.bf16.mxu0 0
  %1896 = vmatpush1.bf16.msra.mxu0 %v1239
  %1897 = vmatprep.subr.bf16.mxu0 0
  %1898 = vmatpush1.bf16.msra.mxu0 %v1240
  %1899 = vmatprep.subr.bf16.mxu0 0
  %1900 = vmatpush1.bf16.msra.mxu0 0
  %1901 = vmatprep.subr.bf16.mxu0 0
  %1902 = vmatpush1.bf16.msra.mxu0 0
  %1903 = vmatprep.subr.bf16.mxu0 0
  %1904 = vmatpush1.bf16.msra.mxu0 0
  %1905 = vmatprep.subr.bf16.mxu0 0
  %1906 = vmatpush1.bf16.msra.mxu0 0
  %1907 = vmatprep.subr.bf16.mxu0 0
  %1908 = vmatpush1.bf16.msra.mxu0 0
  %1909 = vmatprep.subr.bf16.mxu0 0
  %1910 = vmatpush1.bf16.msra.mxu0 0
  %1911 = vmatprep.subr.bf16.mxu0 0
  %1912 = vmatpush1.bf16.msra.mxu0 0
  %1913 = vmatprep.subr.bf16.mxu0 0
  %1914 = vmatpush1.bf16.msra.mxu0 0
  %1915 = vmatprep.subr.bf16.mxu0 0
  %1916 = vmatpush1.bf16.msra.mxu0 0
  %1917 = vmatprep.subr.bf16.mxu0 0
  %1918 = vmatpush1.bf16.msra.mxu0 0
  %1919 = vmatprep.subr.bf16.mxu0 0
  %1920 = vmatpush1.bf16.msra.mxu0 0
  %1921 = vmatprep.subr.bf16.mxu0 0
  %1922 = vmatpush1.bf16.msra.mxu0 0
  %1923 = vmatprep.mubr.bf16.mxu0 0
  %1924 = vmatmul.mubr.bf16.gmra.mrb[0].mxu0 %v1343
  %v1925 = vpop.f32.mrb[0].mxu0
  %v1926 = vadd.f32 %v1838, %v1925
  %v1927 = vpop.f32.mrb[0].mxu0
  %v1928 = vpop.f32.mrb[0].mxu0
  %v1929 = vadd.f32 %v1841, %v1928
  %v1930 = vpop.f32.mrb[0].mxu0
  %1931 = vmatprep.mubr.bf16.mxu0 0
  %1932 = vmatmul.mubr.bf16.gmra.mrb[0].mxu0 %v1346
  %v1933 = vpop.f32.mrb[0].mxu0
  %v1934 = vadd.f32 %v1846, %v1933
  %v1935 = vpop.f32.mrb[0].mxu0
  %v1936 = vpop.f32.mrb[0].mxu0
  %v1937 = vadd.f32 %v1849, %v1936
  %v1938 = vpop.f32.mrb[0].mxu0
  %1939 = vmatprep.mubr.bf16.mxu0 0
  %1940 = vmatmul.mubr.bf16.gmra.mrb[0].mxu0 %v1349
  %v1941 = vpop.f32.mrb[0].mxu0
  %v1942 = vadd.f32 %v1854, %v1941
  %v1943 = vpop.f32.mrb[0].mxu0
  %v1944 = vpop.f32.mrb[0].mxu0
  %v1945 = vadd.f32 %v1857, %v1944
  %v1946 = vpop.f32.mrb[0].mxu0
  %1947 = vmatprep.mubr.bf16.mxu0 0
  %1948 = vmatmul.mubr.bf16.gmra.mrb[0].mxu0 %v1352
  %v1949 = vpop.f32.mrb[0].mxu0
  %v1950 = vadd.f32 %v1862, %v1949
  %v1951 = vpop.f32.mrb[0].mxu0
  %v1952 = vpop.f32.mrb[0].mxu0
  %v1953 = vadd.f32 %v1865, %v1952
  %v1954 = vpop.f32.mrb[0].mxu0
  %1955 = vmatprep.mubr.bf16.mxu0 0
  %1956 = vmatmul.mubr.bf16.gmra.mrb[0].mxu0 %v1355
  %v1957 = vpop.f32.mrb[0].mxu0
  %v1958 = vadd.f32 %v1870, %v1957
  %v1959 = vpop.f32.mrb[0].mxu0
  %v1960 = vpop.f32.mrb[0].mxu0
  %v1961 = vadd.f32 %v1873, %v1960
  %v1962 = vpop.f32.mrb[0].mxu0
  %1963 = vmatprep.mubr.bf16.mxu0 0
  %1964 = vmatmul.mubr.bf16.gmra.mrb[0].mxu0 %v1358
  %v1965 = vpop.f32.mrb[0].mxu0
  %v1966 = vadd.f32 %v1878, %v1965
  %v1967 = vpop.f32.mrb[0].mxu0
  %v1968 = vpop.f32.mrb[0].mxu0
  %v1969 = vadd.f32 %v1881, %v1968
  %v1970 = vpop.f32.mrb[0].mxu0
  %1971 = vmatprep.mubr.bf16.mxu0 0
  %1972 = vmatmul.mubr.bf16.gmra.mrb[0].mxu0 %v1361
  %v1973 = vpop.f32.mrb[0].mxu0
  %v1974 = vadd.f32 %v1886, %v1973
  %v1975 = vpop.f32.mrb[0].mxu0
  %v1976 = vpop.f32.mrb[0].mxu0
  %v1977 = vpop.f32.mrb[0].mxu0
  %1978 = vdwg.mxu0
  %s1979 = scalar_lea.vmem %s0, 676
  %v1980 = vld [vmem:[%s1979] sm:$0xff]
  %v1981 = vld [vmem:[%s1979 + $0x8] sm:$0xff]
  %v1982 = vld [vmem:[%s1979 + $0x10] sm:$0xff]
  %v1983 = vld [vmem:[%s1979 + $0x18] sm:$0xff]
  %v1984 = vld [vmem:[%s1979 + $0x20] sm:$0xff]
  %v1985 = vld [vmem:[%s1979 + $0x28] sm:$0xff]
  %v1986 = vld [vmem:[%s1979 + $0x30] sm:$0xf]
  %v1987 = vld [vmem:[%s1979 + $0x34] sm:$0xff]
  %v1988 = vld [vmem:[%s1979 + $0x3c] sm:$0xff]
  %v1989 = vld [vmem:[%s1979 + $0x44] sm:$0xff]
  %v1990 = vld [vmem:[%s1979 + $0x4c] sm:$0xff]
  %v1991 = vld [vmem:[%s1979 + $0x54] sm:$0xff]
  %v1992 = vld [vmem:[%s1979 + $0x5c] sm:$0xff]
  %v1993 = vld [vmem:[%s1979 + $0x64] sm:$0xf]
  %v1994 = vld [vmem:[%s1979 + $0x68] sm:$0xff]
  %v1995 = vld [vmem:[%s1979 + $0x70] sm:$0xff]
  %v1996 = vld [vmem:[%s1979 + $0x78] sm:$0xff]
  %v1997 = vld [vmem:[%s1979 + $0x80] sm:$0xff]
  %v1998 = vld [vmem:[%s1979 + $0x88] sm:$0xff]
  %v1999 = vld [vmem:[%s1979 + $0x90] sm:$0xff]
  %v2000 = vld [vmem:[%s1979 + $0x98] sm:$0xf]
  %v2001 = vld [vmem:[%s1979 + $0x9c] sm:$0xff]
  %v2002 = vld [vmem:[%s1979 + $0xa4] sm:$0xff]
  %v2003 = vld [vmem:[%s1979 + $0xac] sm:$0xff]
  %v2004 = vld [vmem:[%s1979 + $0xb4] sm:$0xff]
  %v2005 = vld [vmem:[%s1979 + $0xbc] sm:$0xff]
  %v2006 = vld [vmem:[%s1979 + $0xc4] sm:$0xff]
  %v2007 = vld [vmem:[%s1979 + $0xcc] sm:$0xf]
  %v2008 = vld [vmem:[%s1979 + $0xd0] sm:$0xff]
  %v2009 = vld [vmem:[%s1979 + $0xd8] sm:$0xff]
  %v2010 = vld [vmem:[%s1979 + $0xe0] sm:$0xff]
  %v2011 = vld [vmem:[%s1979 + $0xe8] sm:$0xff]
  %v2012 = vld [vmem:[%s1979 + $0xf0] sm:$0xff]
  %v2013 = vld [vmem:[%s1979 + $0xf8] sm:$0xff]
  %v2014 = vld [vmem:[%s1979 + $0x100] sm:$0xf]
  %v2015 = vld [vmem:[%s1979 + $0x104] sm:$0xff]
  %v2016 = vld [vmem:[%s1979 + $0x10c] sm:$0xff]
  %v2017 = vld [vmem:[%s1979 + $0x114] sm:$0xff]
  %v2018 = vld [vmem:[%s1979 + $0x11c] sm:$0xff]
  %v2019 = vld [vmem:[%s1979 + $0x124] sm:$0xff]
  %v2020 = vld [vmem:[%s1979 + $0x12c] sm:$0xff]
  %v2021 = vld [vmem:[%s1979 + $0x134] sm:$0xf]
  %v2022 = vld [vmem:[%s1979 + $0x138] sm:$0xff]
  %v2023 = vld [vmem:[%s1979 + $0x140] sm:$0xff]
  %v2024 = vld [vmem:[%s1979 + $0x148] sm:$0xff]
  %v2025 = vld [vmem:[%s1979 + $0x150] sm:$0xff]
  %v2026 = vld [vmem:[%s1979 + $0x158] sm:$0xff]
  %v2027 = vld [vmem:[%s1979 + $0x160] sm:$0xff]
  %v2028 = vld [vmem:[%s1979 + $0x168] sm:$0xf]
  %v2029 = vld [vmem:[%s1979 + $0x16c] sm:$0xff]
  %v2030 = vld [vmem:[%s1979 + $0x174] sm:$0xff]
  %v2031 = vld [vmem:[%s1979 + $0x17c] sm:$0xff]
  %v2032 = vld [vmem:[%s1979 + $0x184] sm:$0xff]
  %v2033 = vld [vmem:[%s1979 + $0x18c] sm:$0xff]
  %v2034 = vld [vmem:[%s1979 + $0x194] sm:$0xff]
  %v2035 = vld [vmem:[%s1979 + $0x19c] sm:$0xf]
  %v2036 = vld [vmem:[%s1979 + $0x1a0] sm:$0xff]
  %v2037 = vld [vmem:[%s1979 + $0x1a8] sm:$0xff]
  %v2038 = vld [vmem:[%s1979 + $0x1b0] sm:$0xff]
  %v2039 = vld [vmem:[%s1979 + $0x1b8] sm:$0xff]
  %v2040 = vld [vmem:[%s1979 + $0x1c0] sm:$0xff]
  %v2041 = vld [vmem:[%s1979 + $0x1c8] sm:$0xff]
  %v2042 = vld [vmem:[%s1979 + $0x1d0] sm:$0xf]
  %v2043 = vld [vmem:[%s1979 + $0x1d4] sm:$0xff]
  %v2044 = vld [vmem:[%s1979 + $0x1dc] sm:$0xff]
  %v2045 = vld [vmem:[%s1979 + $0x1e4] sm:$0xff]
  %v2046 = vld [vmem:[%s1979 + $0x1ec] sm:$0xff]
  %v2047 = vld [vmem:[%s1979 + $0x1f4] sm:$0xff]
  %v2048 = vld [vmem:[%s1979 + $0x1fc] sm:$0xff]
  %v2049 = vld [vmem:[%s1979 + $0x204] sm:$0xf]
  %v2050 = vld [vmem:[%s1979 + $0x208] sm:$0xff]
  %v2051 = vld [vmem:[%s1979 + $0x210] sm:$0xff]
  %v2052 = vld [vmem:[%s1979 + $0x218] sm:$0xff]
  %v2053 = vld [vmem:[%s1979 + $0x220] sm:$0xff]
  %v2054 = vld [vmem:[%s1979 + $0x228] sm:$0xff]
  %v2055 = vld [vmem:[%s1979 + $0x230] sm:$0xff]
  %v2056 = vld [vmem:[%s1979 + $0x238] sm:$0xf]
  %v2057 = vld [vmem:[%s1979 + $0x23c] sm:$0xff]
  %v2058 = vld [vmem:[%s1979 + $0x244] sm:$0xff]
  %v2059 = vld [vmem:[%s1979 + $0x24c] sm:$0xff]
  %v2060 = vld [vmem:[%s1979 + $0x254] sm:$0xff]
  %v2061 = vld [vmem:[%s1979 + $0x25c] sm:$0xff]
  %v2062 = vld [vmem:[%s1979 + $0x264] sm:$0xff]
  %v2063 = vld [vmem:[%s1979 + $0x26c] sm:$0xf]
  %v2064 = vld [vmem:[%s1979 + $0x270] sm:$0x33]
  %v2065 = vld [vmem:[%s1979 + $0x278] sm:$0x33]
  %v2066 = vld [vmem:[%s1979 + $0x280] sm:$0x33]
  %v2067 = vld [vmem:[%s1979 + $0x288] sm:$0x33]
  %v2068 = vld [vmem:[%s1979 + $0x290] sm:$0x33]
  %v2069 = vld [vmem:[%s1979 + $0x298] sm:$0x33]
  %v2070 = vld [vmem:[%s1979 + $0x2a0] sm:$0x3]
  %v2162 = vunpack.c.l.b16 %v1980
  %v2163 = vunpack.c.h.b16 %v1980
  %v2164 = vunpack.c.l.b16 %v1981
  %v2165 = vunpack.c.h.b16 %v1981
  %v2166 = vunpack.c.l.b16 %v1982
  %v2167 = vunpack.c.h.b16 %v1982
  %v2168 = vunpack.c.l.b16 %v1983
  %v2169 = vunpack.c.h.b16 %v1983
  %v2170 = vunpack.c.l.b16 %v1984
  %v2171 = vunpack.c.h.b16 %v1984
  %v2172 = vunpack.c.l.b16 %v1985
  %v2173 = vunpack.c.h.b16 %v1985
  %v2174 = vunpack.c.l.b16 %v1986
  %v2175 = vunpack.c.l.b16 %v1987
  %v2176 = vunpack.c.h.b16 %v1987
  %v2177 = vunpack.c.l.b16 %v1988
  %v2178 = vunpack.c.h.b16 %v1988
  %v2179 = vunpack.c.l.b16 %v1989
  %v2180 = vunpack.c.h.b16 %v1989
  %v2181 = vunpack.c.l.b16 %v1990
  %v2182 = vunpack.c.h.b16 %v1990
  %v2183 = vunpack.c.l.b16 %v1991
  %v2184 = vunpack.c.h.b16 %v1991
  %v2185 = vunpack.c.l.b16 %v1992
  %v2186 = vunpack.c.h.b16 %v1992
  %v2187 = vunpack.c.l.b16 %v1993
  %v2188 = vunpack.c.l.b16 %v1994
  %v2189 = vunpack.c.h.b16 %v1994
  %v2190 = vunpack.c.l.b16 %v1995
  %v2191 = vunpack.c.h.b16 %v1995
  %v2192 = vunpack.c.l.b16 %v1996
  %v2193 = vunpack.c.h.b16 %v1996
  %v2194 = vunpack.c.l.b16 %v1997
  %v2195 = vunpack.c.h.b16 %v1997
  %v2196 = vunpack.c.l.b16 %v1998
  %v2197 = vunpack.c.h.b16 %v1998
  %v2198 = vunpack.c.l.b16 %v1999
  %v2199 = vunpack.c.h.b16 %v1999
  %v2200 = vunpack.c.l.b16 %v2000
  %v2201 = vunpack.c.l.b16 %v2001
  %v2202 = vunpack.c.h.b16 %v2001
  %v2203 = vunpack.c.l.b16 %v2002
  %v2204 = vunpack.c.h.b16 %v2002
  %v2205 = vunpack.c.l.b16 %v2003
  %v2206 = vunpack.c.h.b16 %v2003
  %v2207 = vunpack.c.l.b16 %v2004
  %v2208 = vunpack.c.h.b16 %v2004
  %v2209 = vunpack.c.l.b16 %v2005
  %v2210 = vunpack.c.h.b16 %v2005
  %v2211 = vunpack.c.l.b16 %v2006
  %v2212 = vunpack.c.h.b16 %v2006
  %v2213 = vunpack.c.l.b16 %v2007
  %v2214 = vunpack.c.l.b16 %v2008
  %v2215 = vunpack.c.h.b16 %v2008
  %v2216 = vunpack.c.l.b16 %v2009
  %v2217 = vunpack.c.h.b16 %v2009
  %v2218 = vunpack.c.l.b16 %v2010
  %v2219 = vunpack.c.h.b16 %v2010
  %v2220 = vunpack.c.l.b16 %v2011
  %v2221 = vunpack.c.h.b16 %v2011
  %v2222 = vunpack.c.l.b16 %v2012
  %v2223 = vunpack.c.h.b16 %v2012
  %v2224 = vunpack.c.l.b16 %v2013
  %v2225 = vunpack.c.h.b16 %v2013
  %v2226 = vunpack.c.l.b16 %v2014
  %v2227 = vunpack.c.l.b16 %v2015
  %v2228 = vunpack.c.h.b16 %v2015
  %v2229 = vunpack.c.l.b16 %v2016
  %v2230 = vunpack.c.h.b16 %v2016
  %v2231 = vunpack.c.l.b16 %v2017
  %v2232 = vunpack.c.h.b16 %v2017
  %v2233 = vunpack.c.l.b16 %v2018
  %v2234 = vunpack.c.h.b16 %v2018
  %v2235 = vunpack.c.l.b16 %v2019
  %v2236 = vunpack.c.h.b16 %v2019
  %v2237 = vunpack.c.l.b16 %v2020
  %v2238 = vunpack.c.h.b16 %v2020
  %v2239 = vunpack.c.l.b16 %v2021
  %v2240 = vunpack.c.l.b16 %v2022
  %v2241 = vunpack.c.h.b16 %v2022
  %v2242 = vunpack.c.l.b16 %v2023
  %v2243 = vunpack.c.h.b16 %v2023
  %v2244 = vunpack.c.l.b16 %v2024
  %v2245 = vunpack.c.h.b16 %v2024
  %v2246 = vunpack.c.l.b16 %v2025
  %v2247 = vunpack.c.h.b16 %v2025
  %v2248 = vunpack.c.l.b16 %v2026
  %v2249 = vunpack.c.h.b16 %v2026
  %v2250 = vunpack.c.l.b16 %v2027
  %v2251 = vunpack.c.h.b16 %v2027
  %v2252 = vunpack.c.l.b16 %v2028
  %v2253 = vunpack.c.l.b16 %v2029
  %v2254 = vunpack.c.h.b16 %v2029
  %v2255 = vunpack.c.l.b16 %v2030
  %v2256 = vunpack.c.h.b16 %v2030
  %v2257 = vunpack.c.l.b16 %v2031
  %v2258 = vunpack.c.h.b16 %v2031
  %v2259 = vunpack.c.l.b16 %v2032
  %v2260 = vunpack.c.h.b16 %v2032
  %v2261 = vunpack.c.l.b16 %v2033
  %v2262 = vunpack.c.h.b16 %v2033
  %v2263 = vunpack.c.l.b16 %v2034
  %v2264 = vunpack.c.h.b16 %v2034
  %v2265 = vunpack.c.l.b16 %v2035
  %v2266 = vunpack.c.l.b16 %v2036
  %v2267 = vunpack.c.h.b16 %v2036
  %v2268 = vunpack.c.l.b16 %v2037
  %v2269 = vunpack.c.h.b16 %v2037
  %v2270 = vunpack.c.l.b16 %v2038
  %v2271 = vunpack.c.h.b16 %v2038
  %v2272 = vunpack.c.l.b16 %v2039
  %v2273 = vunpack.c.h.b16 %v2039
  %v2274 = vunpack.c.l.b16 %v2040
  %v2275 = vunpack.c.h.b16 %v2040
  %v2276 = vunpack.c.l.b16 %v2041
  %v2277 = vunpack.c.h.b16 %v2041
  %v2278 = vunpack.c.l.b16 %v2042
  %v2279 = vunpack.c.l.b16 %v2043
  %v2280 = vunpack.c.h.b16 %v2043
  %v2281 = vunpack.c.l.b16 %v2044
  %v2282 = vunpack.c.h.b16 %v2044
  %v2283 = vunpack.c.l.b16 %v2045
  %v2284 = vunpack.c.h.b16 %v2045
  %v2285 = vunpack.c.l.b16 %v2046
  %v2286 = vunpack.c.h.b16 %v2046
  %v2287 = vunpack.c.l.b16 %v2047
  %v2288 = vunpack.c.h.b16 %v2047
  %v2289 = vunpack.c.l.b16 %v2048
  %v2290 = vunpack.c.h.b16 %v2048
  %v2291 = vunpack.c.l.b16 %v2049
  %v2292 = vunpack.c.l.b16 %v2050
  %v2293 = vunpack.c.h.b16 %v2050
  %v2294 = vunpack.c.l.b16 %v2051
  %v2295 = vunpack.c.h.b16 %v2051
  %v2296 = vunpack.c.l.b16 %v2052
  %v2297 = vunpack.c.h.b16 %v2052
  %v2298 = vunpack.c.l.b16 %v2053
  %v2299 = vunpack.c.h.b16 %v2053
  %v2300 = vunpack.c.l.b16 %v2054
  %v2301 = vunpack.c.h.b16 %v2054
  %v2302 = vunpack.c.l.b16 %v2055
  %v2303 = vunpack.c.h.b16 %v2055
  %v2304 = vunpack.c.l.b16 %v2056
  %v2305 = vunpack.c.l.b16 %v2057
  %v2306 = vunpack.c.h.b16 %v2057
  %v2307 = vunpack.c.l.b16 %v2058
  %v2308 = vunpack.c.h.b16 %v2058
  %v2309 = vunpack.c.l.b16 %v2059
  %v2310 = vunpack.c.h.b16 %v2059
  %v2311 = vunpack.c.l.b16 %v2060
  %v2312 = vunpack.c.h.b16 %v2060
  %v2313 = vunpack.c.l.b16 %v2061
  %v2314 = vunpack.c.h.b16 %v2061
  %v2315 = vunpack.c.l.b16 %v2062
  %v2316 = vunpack.c.h.b16 %v2062
  %v2317 = vunpack.c.l.b16 %v2063
  %v2318 = vunpack.c.l.b16 %v2064
  %v2319 = vunpack.c.h.b16 %v2064
  %v2320 = vunpack.c.l.b16 %v2065
  %v2321 = vunpack.c.h.b16 %v2065
  %v2322 = vunpack.c.l.b16 %v2066
  %v2323 = vunpack.c.h.b16 %v2066
  %v2324 = vunpack.c.l.b16 %v2067
  %v2325 = vunpack.c.h.b16 %v2067
  %v2326 = vunpack.c.l.b16 %v2068
  %v2327 = vunpack.c.h.b16 %v2068
  %v2328 = vunpack.c.l.b16 %v2069
  %v2329 = vunpack.c.h.b16 %v2069
  %v2330 = vunpack.c.l.b16 %v2070
  %v2331 = vpack.c.b16 %v2175, %v2162
  %v2332 = vpack.c.b16 %v2176, %v2163
  %v2333 = vpack.c.b16 %v2177, %v2164
  %v2334 = vpack.c.b16 %v2178, %v2165
  %v2335 = vpack.c.b16 %v2179, %v2166
  %v2336 = vpack.c.b16 %v2180, %v2167
  %v2337 = vpack.c.b16 %v2181, %v2168
  %v2338 = vpack.c.b16 %v2182, %v2169
  %v2339 = vpack.c.b16 %v2183, %v2170
  %v2340 = vpack.c.b16 %v2184, %v2171
  %v2341 = vpack.c.b16 %v2185, %v2172
  %v2342 = vpack.c.b16 %v2186, %v2173
  %v2343 = vpack.c.b16 %v2187, %v2174
  %v2344 = vpack.c.b16 %v2201, %v2188
  %v2345 = vpack.c.b16 %v2202, %v2189
  %v2346 = vpack.c.b16 %v2203, %v2190
  %v2347 = vpack.c.b16 %v2204, %v2191
  %v2348 = vpack.c.b16 %v2205, %v2192
  %v2349 = vpack.c.b16 %v2206, %v2193
  %v2350 = vpack.c.b16 %v2207, %v2194
  %v2351 = vpack.c.b16 %v2208, %v2195
  %v2352 = vpack.c.b16 %v2209, %v2196
  %v2353 = vpack.c.b16 %v2210, %v2197
  %v2354 = vpack.c.b16 %v2211, %v2198
  %v2355 = vpack.c.b16 %v2212, %v2199
  %v2356 = vpack.c.b16 %v2213, %v2200
  %v2357 = vpack.c.b16 %v2227, %v2214
  %v2358 = vpack.c.b16 %v2228, %v2215
  %v2359 = vpack.c.b16 %v2229, %v2216
  %v2360 = vpack.c.b16 %v2230, %v2217
  %v2361 = vpack.c.b16 %v2231, %v2218
  %v2362 = vpack.c.b16 %v2232, %v2219
  %v2363 = vpack.c.b16 %v2233, %v2220
  %v2364 = vpack.c.b16 %v2234, %v2221
  %v2365 = vpack.c.b16 %v2235, %v2222
  %v2366 = vpack.c.b16 %v2236, %v2223
  %v2367 = vpack.c.b16 %v2237, %v2224
  %v2368 = vpack.c.b16 %v2238, %v2225
  %v2369 = vpack.c.b16 %v2239, %v2226
  %v2370 = vpack.c.b16 %v2253, %v2240
  %v2371 = vpack.c.b16 %v2254, %v2241
  %v2372 = vpack.c.b16 %v2255, %v2242
  %v2373 = vpack.c.b16 %v2256, %v2243
  %v2374 = vpack.c.b16 %v2257, %v2244
  %v2375 = vpack.c.b16 %v2258, %v2245
  %v2376 = vpack.c.b16 %v2259, %v2246
  %v2377 = vpack.c.b16 %v2260, %v2247
  %v2378 = vpack.c.b16 %v2261, %v2248
  %v2379 = vpack.c.b16 %v2262, %v2249
  %v2380 = vpack.c.b16 %v2263, %v2250
  %v2381 = vpack.c.b16 %v2264, %v2251
  %v2382 = vpack.c.b16 %v2265, %v2252
  %v2383 = vpack.c.b16 %v2279, %v2266
  %v2384 = vpack.c.b16 %v2280, %v2267
  %v2385 = vpack.c.b16 %v2281, %v2268
  %v2386 = vpack.c.b16 %v2282, %v2269
  %v2387 = vpack.c.b16 %v2283, %v2270
  %v2388 = vpack.c.b16 %v2284, %v2271
  %v2389 = vpack.c.b16 %v2285, %v2272
  %v2390 = vpack.c.b16 %v2286, %v2273
  %v2391 = vpack.c.b16 %v2287, %v2274
  %v2392 = vpack.c.b16 %v2288, %v2275
  %v2393 = vpack.c.b16 %v2289, %v2276
  %v2394 = vpack.c.b16 %v2290, %v2277
  %v2395 = vpack.c.b16 %v2291, %v2278
  %v2396 = vpack.c.b16 %v2305, %v2292
  %v2397 = vpack.c.b16 %v2306, %v2293
  %v2398 = vpack.c.b16 %v2307, %v2294
  %v2399 = vpack.c.b16 %v2308, %v2295
  %v2400 = vpack.c.b16 %v2309, %v2296
  %v2401 = vpack.c.b16 %v2310, %v2297
  %v2402 = vpack.c.b16 %v2311, %v2298
  %v2403 = vpack.c.b16 %v2312, %v2299
  %v2404 = vpack.c.b16 %v2313, %v2300
  %v2405 = vpack.c.b16 %v2314, %v2301
  %v2406 = vpack.c.b16 %v2315, %v2302
  %v2407 = vpack.c.b16 %v2316, %v2303
  %v2408 = vpack.c.b16 %v2317, %v2304
  %v2409 = vpack.c.b16 %v2318, %v2318
  %v2410 = vpack.c.b16 %v2319, %v2319
  %v2411 = vpack.c.b16 %v2320, %v2320
  %v2412 = vpack.c.b16 %v2321, %v2321
  %v2413 = vpack.c.b16 %v2322, %v2322
  %v2414 = vpack.c.b16 %v2323, %v2323
  %v2415 = vpack.c.b16 %v2324, %v2324
  %v2416 = vpack.c.b16 %v2325, %v2325
  %v2417 = vpack.c.b16 %v2326, %v2326
  %v2418 = vpack.c.b16 %v2327, %v2327
  %v2419 = vpack.c.b16 %v2328, %v2328
  %v2420 = vpack.c.b16 %v2329, %v2329
  %v2421 = vpack.c.b16 %v2330, %v2330
  %v2507 = vsel %vm1341, %v2343, 0
  %v2510 = vsel %vm1341, %v2356, 0
  %v2513 = vsel %vm1341, %v2369, 0
  %v2516 = vsel %vm1341, %v2382, 0
  %v2519 = vsel %vm1341, %v2395, 0
  %v2522 = vsel %vm1341, %v2408, 0
  %v2525 = vsel %vm1341, %v2421, 0
  %2527 = vmatprep.subr.bf16.mxu0 0
  %2528 = vmatpush1.bf16.msra.mxu0 %v1141
  %2529 = vmatprep.subr.bf16.mxu0 0
  %2530 = vmatpush1.bf16.msra.mxu0 %v1142
  %2531 = vmatprep.subr.bf16.mxu0 0
  %2532 = vmatpush1.bf16.msra.mxu0 %v1143
  %2533 = vmatprep.subr.bf16.mxu0 0
  %2534 = vmatpush1.bf16.msra.mxu0 %v1144
  %2535 = vmatprep.subr.bf16.mxu0 0
  %2536 = vmatpush1.bf16.msra.mxu0 %v1145
  %2537 = vmatprep.subr.bf16.mxu0 0
  %2538 = vmatpush1.bf16.msra.mxu0 %v1146
  %2539 = vmatprep.subr.bf16.mxu0 0
  %2540 = vmatpush1.bf16.msra.mxu0 %v1147
  %2541 = vmatprep.subr.bf16.mxu0 0
  %2542 = vmatpush1.bf16.msra.mxu0 %v1148
  %2543 = vmatprep.subr.bf16.mxu0 0
  %2544 = vmatpush1.bf16.msra.mxu0 %v1149
  %2545 = vmatprep.subr.bf16.mxu0 0
  %2546 = vmatpush1.bf16.msra.mxu0 %v1150
  %2547 = vmatprep.subr.bf16.mxu0 0
  %2548 = vmatpush1.bf16.msra.mxu0 %v1151
  %2549 = vmatprep.subr.bf16.mxu0 0
  %2550 = vmatpush1.bf16.msra.mxu0 %v1152
  %2551 = vmatprep.subr.bf16.mxu0 0
  %2552 = vmatpush1.bf16.msra.mxu0 %v1153
  %2553 = vmatprep.subr.bf16.mxu0 0
  %2554 = vmatpush1.bf16.msra.mxu0 %v1154
  %2555 = vmatprep.subr.bf16.mxu0 0
  %2556 = vmatpush1.bf16.msra.mxu0 %v1155
  %2557 = vmatprep.subr.bf16.mxu0 0
  %2558 = vmatpush1.bf16.msra.mxu0 %v1156
  %2559 = vmatprep.mubr.bf16.mxu0 %v2332
  %2560 = vmatmul.mubr.bf16.gmra.mrb[0].mxu0 %v2331
  %v2561 = vpop.f32.mrb[0].mxu0
  %v2562 = vadd.f32 0.0, %v2561
  %v2563 = vpop.f32.mrb[0].mxu0
  %v2564 = vpop.f32.mrb[0].mxu0
  %v2565 = vadd.f32 0.0, %v2564
  %v2566 = vpop.f32.mrb[0].mxu0
  %2567 = vmatprep.mubr.bf16.mxu0 %v2345
  %2568 = vmatmul.mubr.bf16.gmra.mrb[0].mxu0 %v2344
  %v2569 = vpop.f32.mrb[0].mxu0
  %v2570 = vadd.f32 0.0, %v2569
  %v2571 = vpop.f32.mrb[0].mxu0
  %v2572 = vpop.f32.mrb[0].mxu0
  %v2573 = vadd.f32 0.0, %v2572
  %v2574 = vpop.f32.mrb[0].mxu0
  %2575 = vmatprep.mubr.bf16.mxu0 %v2358
  %2576 = vmatmul.mubr.bf16.gmra.mrb[0].mxu0 %v2357
  %v2577 = vpop.f32.mrb[0].mxu0
  %v2578 = vadd.f32 0.0, %v2577
  %v2579 = vpop.f32.mrb[0].mxu0
  %v2580 = vpop.f32.mrb[0].mxu0
  %v2581 = vadd.f32 0.0, %v2580
  %v2582 = vpop.f32.mrb[0].mxu0
  %2583 = vmatprep.mubr.bf16.mxu0 %v2371
  %2584 = vmatmul.mubr.bf16.gmra.mrb[0].mxu0 %v2370
  %v2585 = vpop.f32.mrb[0].mxu0
  %v2586 = vadd.f32 0.0, %v2585
  %v2587 = vpop.f32.mrb[0].mxu0
  %v2588 = vpop.f32.mrb[0].mxu0
  %v2589 = vadd.f32 0.0, %v2588
  %v2590 = vpop.f32.mrb[0].mxu0
  %2591 = vmatprep.mubr.bf16.mxu0 %v2384
  %2592 = vmatmul.mubr.bf16.gmra.mrb[0].mxu0 %v2383
  %v2593 = vpop.f32.mrb[0].mxu0
  %v2594 = vadd.f32 0.0, %v2593
  %v2595 = vpop.f32.mrb[0].mxu0
  %v2596 = vpop.f32.mrb[0].mxu0
  %v2597 = vadd.f32 0.0, %v2596
  %v2598 = vpop.f32.mrb[0].mxu0
  %2599 = vmatprep.mubr.bf16.mxu0 %v2397
  %2600 = vmatmul.mubr.bf16.gmra.mrb[0].mxu0 %v2396
  %v2601 = vpop.f32.mrb[0].mxu0
  %v2602 = vadd.f32 0.0, %v2601
  %v2603 = vpop.f32.mrb[0].mxu0
  %v2604 = vpop.f32.mrb[0].mxu0
  %v2605 = vadd.f32 0.0, %v2604
  %v2606 = vpop.f32.mrb[0].mxu0
  %2607 = vmatprep.mubr.bf16.mxu0 %v2410
  %2608 = vmatmul.mubr.bf16.gmra.mrb[0].mxu0 %v2409
  %v2609 = vpop.f32.mrb[0].mxu0
  %v2610 = vadd.f32 0.0, %v2609
  %v2611 = vpop.f32.mrb[0].mxu0
  %v2612 = vpop.f32.mrb[0].mxu0
  %v2613 = vpop.f32.mrb[0].mxu0
  %2614 = vdwg.mxu0
  %2615 = vmatprep.subr.bf16.mxu0 0
  %2616 = vmatpush1.bf16.msra.mxu0 %v1157
  %2617 = vmatprep.subr.bf16.mxu0 0
  %2618 = vmatpush1.bf16.msra.mxu0 %v1158
  %2619 = vmatprep.subr.bf16.mxu0 0
  %2620 = vmatpush1.bf16.msra.mxu0 %v1159
  %2621 = vmatprep.subr.bf16.mxu0 0
  %2622 = vmatpush1.bf16.msra.mxu0 %v1160
  %2623 = vmatprep.subr.bf16.mxu0 0
  %2624 = vmatpush1.bf16.msra.mxu0 %v1161
  %2625 = vmatprep.subr.bf16.mxu0 0
  %2626 = vmatpush1.bf16.msra.mxu0 %v1162
  %2627 = vmatprep.subr.bf16.mxu0 0
  %2628 = vmatpush1.bf16.msra.mxu0 %v1163
  %2629 = vmatprep.subr.bf16.mxu0 0
  %2630 = vmatpush1.bf16.msra.mxu0 %v1164
  %2631 = vmatprep.subr.bf16.mxu0 0
  %2632 = vmatpush1.bf16.msra.mxu0 %v1165
  %2633 = vmatprep.subr.bf16.mxu0 0
  %2634 = vmatpush1.bf16.msra.mxu0 %v1166
  %2635 = vmatprep.subr.bf16.mxu0 0
  %2636 = vmatpush1.bf16.msra.mxu0 %v1167
  %2637 = vmatprep.subr.bf16.mxu0 0
  %2638 = vmatpush1.bf16.msra.mxu0 %v1168
  %2639 = vmatprep.subr.bf16.mxu0 0
  %2640 = vmatpush1.bf16.msra.mxu0 %v1169
  %2641 = vmatprep.subr.bf16.mxu0 0
  %2642 = vmatpush1.bf16.msra.mxu0 %v1170
  %2643 = vmatprep.subr.bf16.mxu0 0
  %2644 = vmatpush1.bf16.msra.mxu0 %v1171
  %2645 = vmatprep.subr.bf16.mxu0 0
  %2646 = vmatpush1.bf16.msra.mxu0 %v1172
  %2647 = vmatprep.mubr.bf16.mxu0 %v2334
  %2648 = vmatmul.mubr.bf16.gmra.mrb[0].mxu0 %v2333
  %v2649 = vpop.f32.mrb[0].mxu0
  %v2650 = vadd.f32 %v2562, %v2649
  %v2651 = vpop.f32.mrb[0].mxu0
  %v2652 = vpop.f32.mrb[0].mxu0
  %v2653 = vadd.f32 %v2565, %v2652
  %v2654 = vpop.f32.mrb[0].mxu0
  %2655 = vmatprep.mubr.bf16.mxu0 %v2347
  %2656 = vmatmul.mubr.bf16.gmra.mrb[0].mxu0 %v2346
  %v2657 = vpop.f32.mrb[0].mxu0
  %v2658 = vadd.f32 %v2570, %v2657
  %v2659 = vpop.f32.mrb[0].mxu0
  %v2660 = vpop.f32.mrb[0].mxu0
  %v2661 = vadd.f32 %v2573, %v2660
  %v2662 = vpop.f32.mrb[0].mxu0
  %2663 = vmatprep.mubr.bf16.mxu0 %v2360
  %2664 = vmatmul.mubr.bf16.gmra.mrb[0].mxu0 %v2359
  %v2665 = vpop.f32.mrb[0].mxu0
  %v2666 = vadd.f32 %v2578, %v2665
  %v2667 = vpop.f32.mrb[0].mxu0
  %v2668 = vpop.f32.mrb[0].mxu0
  %v2669 = vadd.f32 %v2581, %v2668
  %v2670 = vpop.f32.mrb[0].mxu0
  %2671 = vmatprep.mubr.bf16.mxu0 %v2373
  %2672 = vmatmul.mubr.bf16.gmra.mrb[0].mxu0 %v2372
  %v2673 = vpop.f32.mrb[0].mxu0
  %v2674 = vadd.f32 %v2586, %v2673
  %v2675 = vpop.f32.mrb[0].mxu0
  %v2676 = vpop.f32.mrb[0].mxu0
  %v2677 = vadd.f32 %v2589, %v2676
  %v2678 = vpop.f32.mrb[0].mxu0
  %2679 = vmatprep.mubr.bf16.mxu0 %v2386
  %2680 = vmatmul.mubr.bf16.gmra.mrb[0].mxu0 %v2385
  %v2681 = vpop.f32.mrb[0].mxu0
  %v2682 = vadd.f32 %v2594, %v2681
  %v2683 = vpop.f32.mrb[0].mxu0
  %v2684 = vpop.f32.mrb[0].mxu0
  %v2685 = vadd.f32 %v2597, %v2684
  %v2686 = vpop.f32.mrb[0].mxu0
  %2687 = vmatprep.mubr.bf16.mxu0 %v2399
  %2688 = vmatmul.mubr.bf16.gmra.mrb[0].mxu0 %v2398
  %v2689 = vpop.f32.mrb[0].mxu0
  %v2690 = vadd.f32 %v2602, %v2689
  %v2691 = vpop.f32.mrb[0].mxu0
  %v2692 = vpop.f32.mrb[0].mxu0
  %v2693 = vadd.f32 %v2605, %v2692
  %v2694 = vpop.f32.mrb[0].mxu0
  %2695 = vmatprep.mubr.bf16.mxu0 %v2412
  %2696 = vmatmul.mubr.bf16.gmra.mrb[0].mxu0 %v2411
  %v2697 = vpop.f32.mrb[0].mxu0
  %v2698 = vadd.f32 %v2610, %v2697
  %v2699 = vpop.f32.mrb[0].mxu0
  %v2700 = vpop.f32.mrb[0].mxu0
  %v2701 = vpop.f32.mrb[0].mxu0
  %2702 = vdwg.mxu0
  %2703 = vmatprep.subr.bf16.mxu0 0
  %2704 = vmatpush1.bf16.msra.mxu0 %v1173
  %2705 = vmatprep.subr.bf16.mxu0 0
  %2706 = vmatpush1.bf16.msra.mxu0 %v1174
  %2707 = vmatprep.subr.bf16.mxu0 0
  %2708 = vmatpush1.bf16.msra.mxu0 %v1175
  %2709 = vmatprep.subr.bf16.mxu0 0
  %2710 = vmatpush1.bf16.msra.mxu0 %v1176
  %2711 = vmatprep.subr.bf16.mxu0 0
  %2712 = vmatpush1.bf16.msra.mxu0 %v1177
  %2713 = vmatprep.subr.bf16.mxu0 0
  %2714 = vmatpush1.bf16.msra.mxu0 %v1178
  %2715 = vmatprep.subr.bf16.mxu0 0
  %2716 = vmatpush1.bf16.msra.mxu0 %v1179
  %2717 = vmatprep.subr.bf16.mxu0 0
  %2718 = vmatpush1.bf16.msra.mxu0 %v1180
  %2719 = vmatprep.subr.bf16.mxu0 0
  %2720 = vmatpush1.bf16.msra.mxu0 %v1181
  %2721 = vmatprep.subr.bf16.mxu0 0
  %2722 = vmatpush1.bf16.msra.mxu0 %v1182
  %2723 = vmatprep.subr.bf16.mxu0 0
  %2724 = vmatpush1.bf16.msra.mxu0 %v1183
  %2725 = vmatprep.subr.bf16.mxu0 0
  %2726 = vmatpush1.bf16.msra.mxu0 %v1184
  %2727 = vmatprep.subr.bf16.mxu0 0
  %2728 = vmatpush1.bf16.msra.mxu0 %v1185
  %2729 = vmatprep.subr.bf16.mxu0 0
  %2730 = vmatpush1.bf16.msra.mxu0 %v1186
  %2731 = vmatprep.subr.bf16.mxu0 0
  %2732 = vmatpush1.bf16.msra.mxu0 %v1187
  %2733 = vmatprep.subr.bf16.mxu0 0
  %2734 = vmatpush1.bf16.msra.mxu0 %v1188
  %2735 = vmatprep.mubr.bf16.mxu0 %v2336
  %2736 = vmatmul.mubr.bf16.gmra.mrb[0].mxu0 %v2335
  %v2737 = vpop.f32.mrb[0].mxu0
  %v2738 = vadd.f32 %v2650, %v2737
  %v2739 = vpop.f32.mrb[0].mxu0
  %v2740 = vpop.f32.mrb[0].mxu0
  %v2741 = vadd.f32 %v2653, %v2740
  %v2742 = vpop.f32.mrb[0].mxu0
  %2743 = vmatprep.mubr.bf16.mxu0 %v2349
  %2744 = vmatmul.mubr.bf16.gmra.mrb[0].mxu0 %v2348
  %v2745 = vpop.f32.mrb[0].mxu0
  %v2746 = vadd.f32 %v2658, %v2745
  %v2747 = vpop.f32.mrb[0].mxu0
  %v2748 = vpop.f32.mrb[0].mxu0
  %v2749 = vadd.f32 %v2661, %v2748
  %v2750 = vpop.f32.mrb[0].mxu0
  %2751 = vmatprep.mubr.bf16.mxu0 %v2362
  %2752 = vmatmul.mubr.bf16.gmra.mrb[0].mxu0 %v2361
  %v2753 = vpop.f32.mrb[0].mxu0
  %v2754 = vadd.f32 %v2666, %v2753
  %v2755 = vpop.f32.mrb[0].mxu0
  %v2756 = vpop.f32.mrb[0].mxu0
  %v2757 = vadd.f32 %v2669, %v2756
  %v2758 = vpop.f32.mrb[0].mxu0
  %2759 = vmatprep.mubr.bf16.mxu0 %v2375
  %2760 = vmatmul.mubr.bf16.gmra.mrb[0].mxu0 %v2374
  %v2761 = vpop.f32.mrb[0].mxu0
  %v2762 = vadd.f32 %v2674, %v2761
  %v2763 = vpop.f32.mrb[0].mxu0
  %v2764 = vpop.f32.mrb[0].mxu0
  %v2765 = vadd.f32 %v2677, %v2764
  %v2766 = vpop.f32.mrb[0].mxu0
  %2767 = vmatprep.mubr.bf16.mxu0 %v2388
  %2768 = vmatmul.mubr.bf16.gmra.mrb[0].mxu0 %v2387
  %v2769 = vpop.f32.mrb[0].mxu0
  %v2770 = vadd.f32 %v2682, %v2769
  %v2771 = vpop.f32.mrb[0].mxu0
  %v2772 = vpop.f32.mrb[0].mxu0
  %v2773 = vadd.f32 %v2685, %v2772
  %v2774 = vpop.f32.mrb[0].mxu0
  %2775 = vmatprep.mubr.bf16.mxu0 %v2401
  %2776 = vmatmul.mubr.bf16.gmra.mrb[0].mxu0 %v2400
  %v2777 = vpop.f32.mrb[0].mxu0
  %v2778 = vadd.f32 %v2690, %v2777
  %v2779 = vpop.f32.mrb[0].mxu0
  %v2780 = vpop.f32.mrb[0].mxu0
  %v2781 = vadd.f32 %v2693, %v2780
  %v2782 = vpop.f32.mrb[0].mxu0
  %2783 = vmatprep.mubr.bf16.mxu0 %v2414
  %2784 = vmatmul.mubr.bf16.gmra.mrb[0].mxu0 %v2413
  %v2785 = vpop.f32.mrb[0].mxu0
  %v2786 = vadd.f32 %v2698, %v2785
  %v2787 = vpop.f32.mrb[0].mxu0
  %v2788 = vpop.f32.mrb[0].mxu0
  %v2789 = vpop.f32.mrb[0].mxu0
  %2790 = vdwg.mxu0
  %2791 = vmatprep.subr.bf16.mxu0 0
  %2792 = vmatpush1.bf16.msra.mxu0 %v1189
  %2793 = vmatprep.subr.bf16.mxu0 0
  %2794 = vmatpush1.bf16.msra.mxu0 %v1190
  %2795 = vmatprep.subr.bf16.mxu0 0
  %2796 = vmatpush1.bf16.msra.mxu0 %v1191
  %2797 = vmatprep.subr.bf16.mxu0 0
  %2798 = vmatpush1.bf16.msra.mxu0 %v1192
  %2799 = vmatprep.subr.bf16.mxu0 0
  %2800 = vmatpush1.bf16.msra.mxu0 %v1193
  %2801 = vmatprep.subr.bf16.mxu0 0
  %2802 = vmatpush1.bf16.msra.mxu0 %v1194
  %2803 = vmatprep.subr.bf16.mxu0 0
  %2804 = vmatpush1.bf16.msra.mxu0 %v1195
  %2805 = vmatprep.subr.bf16.mxu0 0
  %2806 = vmatpush1.bf16.msra.mxu0 %v1196
  %2807 = vmatprep.subr.bf16.mxu0 0
  %2808 = vmatpush1.bf16.msra.mxu0 %v1197
  %2809 = vmatprep.subr.bf16.mxu0 0
  %2810 = vmatpush1.bf16.msra.mxu0 %v1198
  %2811 = vmatprep.subr.bf16.mxu0 0
  %2812 = vmatpush1.bf16.msra.mxu0 %v1199
  %2813 = vmatprep.subr.bf16.mxu0 0
  %2814 = vmatpush1.bf16.msra.mxu0 %v1200
  %2815 = vmatprep.subr.bf16.mxu0 0
  %2816 = vmatpush1.bf16.msra.mxu0 %v1201
  %2817 = vmatprep.subr.bf16.mxu0 0
  %2818 = vmatpush1.bf16.msra.mxu0 %v1202
  %2819 = vmatprep.subr.bf16.mxu0 0
  %2820 = vmatpush1.bf16.msra.mxu0 %v1203
  %2821 = vmatprep.subr.bf16.mxu0 0
  %2822 = vmatpush1.bf16.msra.mxu0 %v1204
  %2823 = vmatprep.mubr.bf16.mxu0 %v2338
  %2824 = vmatmul.mubr.bf16.gmra.mrb[0].mxu0 %v2337
  %v2825 = vpop.f32.mrb[0].mxu0
  %v2826 = vadd.f32 %v2738, %v2825
  %v2827 = vpop.f32.mrb[0].mxu0
  %v2828 = vpop.f32.mrb[0].mxu0
  %v2829 = vadd.f32 %v2741, %v2828
  %v2830 = vpop.f32.mrb[0].mxu0
  %2831 = vmatprep.mubr.bf16.mxu0 %v2351
  %2832 = vmatmul.mubr.bf16.gmra.mrb[0].mxu0 %v2350
  %v2833 = vpop.f32.mrb[0].mxu0
  %v2834 = vadd.f32 %v2746, %v2833
  %v2835 = vpop.f32.mrb[0].mxu0
  %v2836 = vpop.f32.mrb[0].mxu0
  %v2837 = vadd.f32 %v2749, %v2836
  %v2838 = vpop.f32.mrb[0].mxu0
  %2839 = vmatprep.mubr.bf16.mxu0 %v2364
  %2840 = vmatmul.mubr.bf16.gmra.mrb[0].mxu0 %v2363
  %v2841 = vpop.f32.mrb[0].mxu0
  %v2842 = vadd.f32 %v2754, %v2841
  %v2843 = vpop.f32.mrb[0].mxu0
  %v2844 = vpop.f32.mrb[0].mxu0
  %v2845 = vadd.f32 %v2757, %v2844
  %v2846 = vpop.f32.mrb[0].mxu0
  %2847 = vmatprep.mubr.bf16.mxu0 %v2377
  %2848 = vmatmul.mubr.bf16.gmra.mrb[0].mxu0 %v2376
  %v2849 = vpop.f32.mrb[0].mxu0
  %v2850 = vadd.f32 %v2762, %v2849
  %v2851 = vpop.f32.mrb[0].mxu0
  %v2852 = vpop.f32.mrb[0].mxu0
  %v2853 = vadd.f32 %v2765, %v2852
  %v2854 = vpop.f32.mrb[0].mxu0
  %2855 = vmatprep.mubr.bf16.mxu0 %v2390
  %2856 = vmatmul.mubr.bf16.gmra.mrb[0].mxu0 %v2389
  %v2857 = vpop.f32.mrb[0].mxu0
  %v2858 = vadd.f32 %v2770, %v2857
  %v2859 = vpop.f32.mrb[0].mxu0
  %v2860 = vpop.f32.mrb[0].mxu0
  %v2861 = vadd.f32 %v2773, %v2860
  %v2862 = vpop.f32.mrb[0].mxu0
  %2863 = vmatprep.mubr.bf16.mxu0 %v2403
  %2864 = vmatmul.mubr.bf16.gmra.mrb[0].mxu0 %v2402
  %v2865 = vpop.f32.mrb[0].mxu0
  %v2866 = vadd.f32 %v2778, %v2865
  %v2867 = vpop.f32.mrb[0].mxu0
  %v2868 = vpop.f32.mrb[0].mxu0
  %v2869 = vadd.f32 %v2781, %v2868
  %v2870 = vpop.f32.mrb[0].mxu0
  %2871 = vmatprep.mubr.bf16.mxu0 %v2416
  %2872 = vmatmul.mubr.bf16.gmra.mrb[0].mxu0 %v2415
  %v2873 = vpop.f32.mrb[0].mxu0
  %v2874 = vadd.f32 %v2786, %v2873
  %v2875 = vpop.f32.mrb[0].mxu0
  %v2876 = vpop.f32.mrb[0].mxu0
  %v2877 = vpop.f32.mrb[0].mxu0
  %2878 = vdwg.mxu0
  %2879 = vmatprep.subr.bf16.mxu0 0
  %2880 = vmatpush1.bf16.msra.mxu0 %v1205
  %2881 = vmatprep.subr.bf16.mxu0 0
  %2882 = vmatpush1.bf16.msra.mxu0 %v1206
  %2883 = vmatprep.subr.bf16.mxu0 0
  %2884 = vmatpush1.bf16.msra.mxu0 %v1207
  %2885 = vmatprep.subr.bf16.mxu0 0
  %2886 = vmatpush1.bf16.msra.mxu0 %v1208
  %2887 = vmatprep.subr.bf16.mxu0 0
  %2888 = vmatpush1.bf16.msra.mxu0 %v1209
  %2889 = vmatprep.subr.bf16.mxu0 0
  %2890 = vmatpush1.bf16.msra.mxu0 %v1210
  %2891 = vmatprep.subr.bf16.mxu0 0
  %2892 = vmatpush1.bf16.msra.mxu0 %v1211
  %2893 = vmatprep.subr.bf16.mxu0 0
  %2894 = vmatpush1.bf16.msra.mxu0 %v1212
  %2895 = vmatprep.subr.bf16.mxu0 0
  %2896 = vmatpush1.bf16.msra.mxu0 %v1213
  %2897 = vmatprep.subr.bf16.mxu0 0
  %2898 = vmatpush1.bf16.msra.mxu0 %v1214
  %2899 = vmatprep.subr.bf16.mxu0 0
  %2900 = vmatpush1.bf16.msra.mxu0 %v1215
  %2901 = vmatprep.subr.bf16.mxu0 0
  %2902 = vmatpush1.bf16.msra.mxu0 %v1216
  %2903 = vmatprep.subr.bf16.mxu0 0
  %2904 = vmatpush1.bf16.msra.mxu0 %v1217
  %2905 = vmatprep.subr.bf16.mxu0 0
  %2906 = vmatpush1.bf16.msra.mxu0 %v1218
  %2907 = vmatprep.subr.bf16.mxu0 0
  %2908 = vmatpush1.bf16.msra.mxu0 %v1219
  %2909 = vmatprep.subr.bf16.mxu0 0
  %2910 = vmatpush1.bf16.msra.mxu0 %v1220
  %2911 = vmatprep.mubr.bf16.mxu0 %v2340
  %2912 = vmatmul.mubr.bf16.gmra.mrb[0].mxu0 %v2339
  %v2913 = vpop.f32.mrb[0].mxu0
  %v2914 = vadd.f32 %v2826, %v2913
  %v2915 = vpop.f32.mrb[0].mxu0
  %v2916 = vpop.f32.mrb[0].mxu0
  %v2917 = vadd.f32 %v2829, %v2916
  %v2918 = vpop.f32.mrb[0].mxu0
  %2919 = vmatprep.mubr.bf16.mxu0 %v2353
  %2920 = vmatmul.mubr.bf16.gmra.mrb[0].mxu0 %v2352
  %v2921 = vpop.f32.mrb[0].mxu0
  %v2922 = vadd.f32 %v2834, %v2921
  %v2923 = vpop.f32.mrb[0].mxu0
  %v2924 = vpop.f32.mrb[0].mxu0
  %v2925 = vadd.f32 %v2837, %v2924
  %v2926 = vpop.f32.mrb[0].mxu0
  %2927 = vmatprep.mubr.bf16.mxu0 %v2366
  %2928 = vmatmul.mubr.bf16.gmra.mrb[0].mxu0 %v2365
  %v2929 = vpop.f32.mrb[0].mxu0
  %v2930 = vadd.f32 %v2842, %v2929
  %v2931 = vpop.f32.mrb[0].mxu0
  %v2932 = vpop.f32.mrb[0].mxu0
  %v2933 = vadd.f32 %v2845, %v2932
  %v2934 = vpop.f32.mrb[0].mxu0
  %2935 = vmatprep.mubr.bf16.mxu0 %v2379
  %2936 = vmatmul.mubr.bf16.gmra.mrb[0].mxu0 %v2378
  %v2937 = vpop.f32.mrb[0].mxu0
  %v2938 = vadd.f32 %v2850, %v2937
  %v2939 = vpop.f32.mrb[0].mxu0
  %v2940 = vpop.f32.mrb[0].mxu0
  %v2941 = vadd.f32 %v2853, %v2940
  %v2942 = vpop.f32.mrb[0].mxu0
  %2943 = vmatprep.mubr.bf16.mxu0 %v2392
  %2944 = vmatmul.mubr.bf16.gmra.mrb[0].mxu0 %v2391
  %v2945 = vpop.f32.mrb[0].mxu0
  %v2946 = vadd.f32 %v2858, %v2945
  %v2947 = vpop.f32.mrb[0].mxu0
  %v2948 = vpop.f32.mrb[0].mxu0
  %v2949 = vadd.f32 %v2861, %v2948
  %v2950 = vpop.f32.mrb[0].mxu0
  %2951 = vmatprep.mubr.bf16.mxu0 %v2405
  %2952 = vmatmul.mubr.bf16.gmra.mrb[0].mxu0 %v2404
  %v2953 = vpop.f32.mrb[0].mxu0
  %v2954 = vadd.f32 %v2866, %v2953
  %v2955 = vpop.f32.mrb[0].mxu0
  %v2956 = vpop.f32.mrb[0].mxu0
  %v2957 = vadd.f32 %v2869, %v2956
  %v2958 = vpop.f32.mrb[0].mxu0
  %2959 = vmatprep.mubr.bf16.mxu0 %v2418
  %2960 = vmatmul.mubr.bf16.gmra.mrb[0].mxu0 %v2417
  %v2961 = vpop.f32.mrb[0].mxu0
  %v2962 = vadd.f32 %v2874, %v2961
  %v2963 = vpop.f32.mrb[0].mxu0
  %v2964 = vpop.f32.mrb[0].mxu0
  %v2965 = vpop.f32.mrb[0].mxu0
  %2966 = vdwg.mxu0
  %2967 = vmatprep.subr.bf16.mxu0 0
  %2968 = vmatpush1.bf16.msra.mxu0 %v1221
  %2969 = vmatprep.subr.bf16.mxu0 0
  %2970 = vmatpush1.bf16.msra.mxu0 %v1222
  %2971 = vmatprep.subr.bf16.mxu0 0
  %2972 = vmatpush1.bf16.msra.mxu0 %v1223
  %2973 = vmatprep.subr.bf16.mxu0 0
  %2974 = vmatpush1.bf16.msra.mxu0 %v1224
  %2975 = vmatprep.subr.bf16.mxu0 0
  %2976 = vmatpush1.bf16.msra.mxu0 %v1225
  %2977 = vmatprep.subr.bf16.mxu0 0
  %2978 = vmatpush1.bf16.msra.mxu0 %v1226
  %2979 = vmatprep.subr.bf16.mxu0 0
  %2980 = vmatpush1.bf16.msra.mxu0 %v1227
  %2981 = vmatprep.subr.bf16.mxu0 0
  %2982 = vmatpush1.bf16.msra.mxu0 %v1228
  %2983 = vmatprep.subr.bf16.mxu0 0
  %2984 = vmatpush1.bf16.msra.mxu0 %v1229
  %2985 = vmatprep.subr.bf16.mxu0 0
  %2986 = vmatpush1.bf16.msra.mxu0 %v1230
  %2987 = vmatprep.subr.bf16.mxu0 0
  %2988 = vmatpush1.bf16.msra.mxu0 %v1231
  %2989 = vmatprep.subr.bf16.mxu0 0
  %2990 = vmatpush1.bf16.msra.mxu0 %v1232
  %2991 = vmatprep.subr.bf16.mxu0 0
  %2992 = vmatpush1.bf16.msra.mxu0 %v1233
  %2993 = vmatprep.subr.bf16.mxu0 0
  %2994 = vmatpush1.bf16.msra.mxu0 %v1234
  %2995 = vmatprep.subr.bf16.mxu0 0
  %2996 = vmatpush1.bf16.msra.mxu0 %v1235
  %2997 = vmatprep.subr.bf16.mxu0 0
  %2998 = vmatpush1.bf16.msra.mxu0 %v1236
  %2999 = vmatprep.mubr.bf16.mxu0 %v2342
  %3000 = vmatmul.mubr.bf16.gmra.mrb[0].mxu0 %v2341
  %v3001 = vpop.f32.mrb[0].mxu0
  %v3002 = vadd.f32 %v2914, %v3001
  %v3003 = vpop.f32.mrb[0].mxu0
  %v3004 = vpop.f32.mrb[0].mxu0
  %v3005 = vadd.f32 %v2917, %v3004
  %v3006 = vpop.f32.mrb[0].mxu0
  %3007 = vmatprep.mubr.bf16.mxu0 %v2355
  %3008 = vmatmul.mubr.bf16.gmra.mrb[0].mxu0 %v2354
  %v3009 = vpop.f32.mrb[0].mxu0
  %v3010 = vadd.f32 %v2922, %v3009
  %v3011 = vpop.f32.mrb[0].mxu0
  %v3012 = vpop.f32.mrb[0].mxu0
  %v3013 = vadd.f32 %v2925, %v3012
  %v3014 = vpop.f32.mrb[0].mxu0
  %3015 = vmatprep.mubr.bf16.mxu0 %v2368
  %3016 = vmatmul.mubr.bf16.gmra.mrb[0].mxu0 %v2367
  %v3017 = vpop.f32.mrb[0].mxu0
  %v3018 = vadd.f32 %v2930, %v3017
  %v3019 = vpop.f32.mrb[0].mxu0
  %v3020 = vpop.f32.mrb[0].mxu0
  %v3021 = vadd.f32 %v2933, %v3020
  %v3022 = vpop.f32.mrb[0].mxu0
  %3023 = vmatprep.mubr.bf16.mxu0 %v2381
  %3024 = vmatmul.mubr.bf16.gmra.mrb[0].mxu0 %v2380
  %v3025 = vpop.f32.mrb[0].mxu0
  %v3026 = vadd.f32 %v2938, %v3025
  %v3027 = vpop.f32.mrb[0].mxu0
  %v3028 = vpop.f32.mrb[0].mxu0
  %v3029 = vadd.f32 %v2941, %v3028
  %v3030 = vpop.f32.mrb[0].mxu0
  %3031 = vmatprep.mubr.bf16.mxu0 %v2394
  %3032 = vmatmul.mubr.bf16.gmra.mrb[0].mxu0 %v2393
  %v3033 = vpop.f32.mrb[0].mxu0
  %v3034 = vadd.f32 %v2946, %v3033
  %v3035 = vpop.f32.mrb[0].mxu0
  %v3036 = vpop.f32.mrb[0].mxu0
  %v3037 = vadd.f32 %v2949, %v3036
  %v3038 = vpop.f32.mrb[0].mxu0
  %3039 = vmatprep.mubr.bf16.mxu0 %v2407
  %3040 = vmatmul.mubr.bf16.gmra.mrb[0].mxu0 %v2406
  %v3041 = vpop.f32.mrb[0].mxu0
  %v3042 = vadd.f32 %v2954, %v3041
  %v3043 = vpop.f32.mrb[0].mxu0
  %v3044 = vpop.f32.mrb[0].mxu0
  %v3045 = vadd.f32 %v2957, %v3044
  %v3046 = vpop.f32.mrb[0].mxu0
  %3047 = vmatprep.mubr.bf16.mxu0 %v2420
  %3048 = vmatmul.mubr.bf16.gmra.mrb[0].mxu0 %v2419
  %v3049 = vpop.f32.mrb[0].mxu0
  %v3050 = vadd.f32 %v2962, %v3049
  %v3051 = vpop.f32.mrb[0].mxu0
  %v3052 = vpop.f32.mrb[0].mxu0
  %v3053 = vpop.f32.mrb[0].mxu0
  %3054 = vdwg.mxu0
  %3055 = vmatprep.subr.bf16.mxu0 0
  %3056 = vmatpush1.bf16.msra.mxu0 %v1237
  %3057 = vmatprep.subr.bf16.mxu0 0
  %3058 = vmatpush1.bf16.msra.mxu0 %v1238
  %3059 = vmatprep.subr.bf16.mxu0 0
  %3060 = vmatpush1.bf16.msra.mxu0 %v1239
  %3061 = vmatprep.subr.bf16.mxu0 0
  %3062 = vmatpush1.bf16.msra.mxu0 %v1240
  %3063 = vmatprep.subr.bf16.mxu0 0
  %3064 = vmatpush1.bf16.msra.mxu0 0
  %3065 = vmatprep.subr.bf16.mxu0 0
  %3066 = vmatpush1.bf16.msra.mxu0 0
  %3067 = vmatprep.subr.bf16.mxu0 0
  %3068 = vmatpush1.bf16.msra.mxu0 0
  %3069 = vmatprep.subr.bf16.mxu0 0
  %3070 = vmatpush1.bf16.msra.mxu0 0
  %3071 = vmatprep.subr.bf16.mxu0 0
  %3072 = vmatpush1.bf16.msra.mxu0 0
  %3073 = vmatprep.subr.bf16.mxu0 0
  %3074 = vmatpush1.bf16.msra.mxu0 0
  %3075 = vmatprep.subr.bf16.mxu0 0
  %3076 = vmatpush1.bf16.msra.mxu0 0
  %3077 = vmatprep.subr.bf16.mxu0 0
  %3078 = vmatpush1.bf16.msra.mxu0 0
  %3079 = vmatprep.subr.bf16.mxu0 0
  %3080 = vmatpush1.bf16.msra.mxu0 0
  %3081 = vmatprep.subr.bf16.mxu0 0
  %3082 = vmatpush1.bf16.msra.mxu0 0
  %3083 = vmatprep.subr.bf16.mxu0 0
  %3084 = vmatpush1.bf16.msra.mxu0 0
  %3085 = vmatprep.subr.bf16.mxu0 0
  %3086 = vmatpush1.bf16.msra.mxu0 0
  %3087 = vmatprep.mubr.bf16.mxu0 0
  %3088 = vmatmul.mubr.bf16.gmra.mrb[0].mxu0 %v2507
  %v3089 = vpop.f32.mrb[0].mxu0
  %v3090 = vadd.f32 %v3002, %v3089
  %v3091 = vpop.f32.mrb[0].mxu0
  %v3092 = vpop.f32.mrb[0].mxu0
  %v3093 = vadd.f32 %v3005, %v3092
  %v3094 = vpop.f32.mrb[0].mxu0
  %3095 = vmatprep.mubr.bf16.mxu0 0
  %3096 = vmatmul.mubr.bf16.gmra.mrb[0].mxu0 %v2510
  %v3097 = vpop.f32.mrb[0].mxu0
  %v3098 = vadd.f32 %v3010, %v3097
  %v3099 = vpop.f32.mrb[0].mxu0
  %v3100 = vpop.f32.mrb[0].mxu0
  %v3101 = vadd.f32 %v3013, %v3100
  %v3102 = vpop.f32.mrb[0].mxu0
  %3103 = vmatprep.mubr.bf16.mxu0 0
  %3104 = vmatmul.mubr.bf16.gmra.mrb[0].mxu0 %v2513
  %v3105 = vpop.f32.mrb[0].mxu0
  %v3106 = vadd.f32 %v3018, %v3105
  %v3107 = vpop.f32.mrb[0].mxu0
  %v3108 = vpop.f32.mrb[0].mxu0
  %v3109 = vadd.f32 %v3021, %v3108
  %v3110 = vpop.f32.mrb[0].mxu0
  %3111 = vmatprep.mubr.bf16.mxu0 0
  %3112 = vmatmul.mubr.bf16.gmra.mrb[0].mxu0 %v2516
  %v3113 = vpop.f32.mrb[0].mxu0
  %v3114 = vadd.f32 %v3026, %v3113
  %v3115 = vpop.f32.mrb[0].mxu0
  %v3116 = vpop.f32.mrb[0].mxu0
  %v3117 = vadd.f32 %v3029, %v3116
  %v3118 = vpop.f32.mrb[0].mxu0
  %3119 = vmatprep.mubr.bf16.mxu0 0
  %3120 = vmatmul.mubr.bf16.gmra.mrb[0].mxu0 %v2519
  %v3121 = vpop.f32.mrb[0].mxu0
  %v3122 = vadd.f32 %v3034, %v3121
  %v3123 = vpop.f32.mrb[0].mxu0
  %v3124 = vpop.f32.mrb[0].mxu0
  %v3125 = vadd.f32 %v3037, %v3124
  %v3126 = vpop.f32.mrb[0].mxu0
  %3127 = vmatprep.mubr.bf16.mxu0 0
  %3128 = vmatmul.mubr.bf16.gmra.mrb[0].mxu0 %v2522
  %v3129 = vpop.f32.mrb[0].mxu0
  %v3130 = vadd.f32 %v3042, %v3129
  %v3131 = vpop.f32.mrb[0].mxu0
  %v3132 = vpop.f32.mrb[0].mxu0
  %v3133 = vadd.f32 %v3045, %v3132
  %v3134 = vpop.f32.mrb[0].mxu0
  %3135 = vmatprep.mubr.bf16.mxu0 0
  %3136 = vmatmul.mubr.bf16.gmra.mrb[0].mxu0 %v2525
  %v3137 = vpop.f32.mrb[0].mxu0
  %v3138 = vadd.f32 %v3050, %v3137
  %v3139 = vpop.f32.mrb[0].mxu0
  %v3140 = vpop.f32.mrb[0].mxu0
  %v3141 = vpop.f32.mrb[0].mxu0
  %3142 = vdwg.mxu0
  %v3143 = vmax.f32 %v1926, %v3090
  %v3144 = vmax.f32 %v1929, %v3093
  %v3145 = vmax.f32 %v1934, %v3098
  %v3146 = vmax.f32 %v1937, %v3101
  %v3147 = vmax.f32 %v1942, %v3106
  %v3148 = vmax.f32 %v1945, %v3109
  %v3149 = vmax.f32 %v1950, %v3114
  %v3150 = vmax.f32 %v1953, %v3117
  %v3151 = vmax.f32 %v1958, %v3122
  %v3152 = vmax.f32 %v1961, %v3125
  %v3153 = vmax.f32 %v1966, %v3130
  %v3154 = vmax.f32 %v1969, %v3133
  %v3155 = vmax.f32 %v1974, %v3138
  %s3156 = scalar_lea.vmem %s0, 1352
  %v3157 = vld [vmem:[%s3156] sm:$0xff]
  %v3158 = vld [vmem:[%s3156 + $0x8] sm:$0xff]
  %v3159 = vld [vmem:[%s3156 + $0x10] sm:$0xff]
  %v3160 = vld [vmem:[%s3156 + $0x18] sm:$0xff]
  %v3161 = vld [vmem:[%s3156 + $0x20] sm:$0xff]
  %v3162 = vld [vmem:[%s3156 + $0x28] sm:$0xff]
  %v3163 = vld [vmem:[%s3156 + $0x30] sm:$0xf]
  %v3164 = vld [vmem:[%s3156 + $0x34] sm:$0xff]
  %v3165 = vld [vmem:[%s3156 + $0x3c] sm:$0xff]
  %v3166 = vld [vmem:[%s3156 + $0x44] sm:$0xff]
  %v3167 = vld [vmem:[%s3156 + $0x4c] sm:$0xff]
  %v3168 = vld [vmem:[%s3156 + $0x54] sm:$0xff]
  %v3169 = vld [vmem:[%s3156 + $0x5c] sm:$0xff]
  %v3170 = vld [vmem:[%s3156 + $0x64] sm:$0xf]
  %v3171 = vld [vmem:[%s3156 + $0x68] sm:$0xff]
  %v3172 = vld [vmem:[%s3156 + $0x70] sm:$0xff]
  %v3173 = vld [vmem:[%s3156 + $0x78] sm:$0xff]
  %v3174 = vld [vmem:[%s3156 + $0x80] sm:$0xff]
  %v3175 = vld [vmem:[%s3156 + $0x88] sm:$0xff]
  %v3176 = vld [vmem:[%s3156 + $0x90] sm:$0xff]
  %v3177 = vld [vmem:[%s3156 + $0x98] sm:$0xf]
  %v3178 = vld [vmem:[%s3156 + $0x9c] sm:$0xff]
  %v3179 = vld [vmem:[%s3156 + $0xa4] sm:$0xff]
  %v3180 = vld [vmem:[%s3156 + $0xac] sm:$0xff]
  %v3181 = vld [vmem:[%s3156 + $0xb4] sm:$0xff]
  %v3182 = vld [vmem:[%s3156 + $0xbc] sm:$0xff]
  %v3183 = vld [vmem:[%s3156 + $0xc4] sm:$0xff]
  %v3184 = vld [vmem:[%s3156 + $0xcc] sm:$0xf]
  %v3185 = vld [vmem:[%s3156 + $0xd0] sm:$0xff]
  %v3186 = vld [vmem:[%s3156 + $0xd8] sm:$0xff]
  %v3187 = vld [vmem:[%s3156 + $0xe0] sm:$0xff]
  %v3188 = vld [vmem:[%s3156 + $0xe8] sm:$0xff]
  %v3189 = vld [vmem:[%s3156 + $0xf0] sm:$0xff]
  %v3190 = vld [vmem:[%s3156 + $0xf8] sm:$0xff]
  %v3191 = vld [vmem:[%s3156 + $0x100] sm:$0xf]
  %v3192 = vld [vmem:[%s3156 + $0x104] sm:$0xff]
  %v3193 = vld [vmem:[%s3156 + $0x10c] sm:$0xff]
  %v3194 = vld [vmem:[%s3156 + $0x114] sm:$0xff]
  %v3195 = vld [vmem:[%s3156 + $0x11c] sm:$0xff]
  %v3196 = vld [vmem:[%s3156 + $0x124] sm:$0xff]
  %v3197 = vld [vmem:[%s3156 + $0x12c] sm:$0xff]
  %v3198 = vld [vmem:[%s3156 + $0x134] sm:$0xf]
  %v3199 = vld [vmem:[%s3156 + $0x138] sm:$0xff]
  %v3200 = vld [vmem:[%s3156 + $0x140] sm:$0xff]
  %v3201 = vld [vmem:[%s3156 + $0x148] sm:$0xff]
  %v3202 = vld [vmem:[%s3156 + $0x150] sm:$0xff]
  %v3203 = vld [vmem:[%s3156 + $0x158] sm:$0xff]
  %v3204 = vld [vmem:[%s3156 + $0x160] sm:$0xff]
  %v3205 = vld [vmem:[%s3156 + $0x168] sm:$0xf]
  %v3206 = vld [vmem:[%s3156 + $0x16c] sm:$0xff]
  %v3207 = vld [vmem:[%s3156 + $0x174] sm:$0xff]
  %v3208 = vld [vmem:[%s3156 + $0x17c] sm:$0xff]
  %v3209 = vld [vmem:[%s3156 + $0x184] sm:$0xff]
  %v3210 = vld [vmem:[%s3156 + $0x18c] sm:$0xff]
  %v3211 = vld [vmem:[%s3156 + $0x194] sm:$0xff]
  %v3212 = vld [vmem:[%s3156 + $0x19c] sm:$0xf]
  %v3213 = vld [vmem:[%s3156 + $0x1a0] sm:$0xff]
  %v3214 = vld [vmem:[%s3156 + $0x1a8] sm:$0xff]
  %v3215 = vld [vmem:[%s3156 + $0x1b0] sm:$0xff]
  %v3216 = vld [vmem:[%s3156 + $0x1b8] sm:$0xff]
  %v3217 = vld [vmem:[%s3156 + $0x1c0] sm:$0xff]
  %v3218 = vld [vmem:[%s3156 + $0x1c8] sm:$0xff]
  %v3219 = vld [vmem:[%s3156 + $0x1d0] sm:$0xf]
  %v3220 = vld [vmem:[%s3156 + $0x1d4] sm:$0xff]
  %v3221 = vld [vmem:[%s3156 + $0x1dc] sm:$0xff]
  %v3222 = vld [vmem:[%s3156 + $0x1e4] sm:$0xff]
  %v3223 = vld [vmem:[%s3156 + $0x1ec] sm:$0xff]
  %v3224 = vld [vmem:[%s3156 + $0x1f4] sm:$0xff]
  %v3225 = vld [vmem:[%s3156 + $0x1fc] sm:$0xff]
  %v3226 = vld [vmem:[%s3156 + $0x204] sm:$0xf]
  %v3227 = vld [vmem:[%s3156 + $0x208] sm:$0xff]
  %v3228 = vld [vmem:[%s3156 + $0x210] sm:$0xff]
  %v3229 = vld [vmem:[%s3156 + $0x218] sm:$0xff]
  %v3230 = vld [vmem:[%s3156 + $0x220] sm:$0xff]
  %v3231 = vld [vmem:[%s3156 + $0x228] sm:$0xff]
  %v3232 = vld [vmem:[%s3156 + $0x230] sm:$0xff]
  %v3233 = vld [vmem:[%s3156 + $0x238] sm:$0xf]
  %v3234 = vld [vmem:[%s3156 + $0x23c] sm:$0xff]
  %v3235 = vld [vmem:[%s3156 + $0x244] sm:$0xff]
  %v3236 = vld [vmem:[%s3156 + $0x24c] sm:$0xff]
  %v3237 = vld [vmem:[%s3156 + $0x254] sm:$0xff]
  %v3238 = vld [vmem:[%s3156 + $0x25c] sm:$0xff]
  %v3239 = vld [vmem:[%s3156 + $0x264] sm:$0xff]
  %v3240 = vld [vmem:[%s3156 + $0x26c] sm:$0xf]
  %v3241 = vld [vmem:[%s3156 + $0x270] sm:$0x33]
  %v3242 = vld [vmem:[%s3156 + $0x278] sm:$0x33]
  %v3243 = vld [vmem:[%s3156 + $0x280] sm:$0x33]
  %v3244 = vld [vmem:[%s3156 + $0x288] sm:$0x33]
  %v3245 = vld [vmem:[%s3156 + $0x290] sm:$0x33]
  %v3246 = vld [vmem:[%s3156 + $0x298] sm:$0x33]
  %v3247 = vld [vmem:[%s3156 + $0x2a0] sm:$0x3]
  %v3339 = vunpack.c.l.b16 %v3157
  %v3340 = vunpack.c.h.b16 %v3157
  %v3341 = vunpack.c.l.b16 %v3158
  %v3342 = vunpack.c.h.b16 %v3158
  %v3343 = vunpack.c.l.b16 %v3159
  %v3344 = vunpack.c.h.b16 %v3159
  %v3345 = vunpack.c.l.b16 %v3160
  %v3346 = vunpack.c.h.b16 %v3160
  %v3347 = vunpack.c.l.b16 %v3161
  %v3348 = vunpack.c.h.b16 %v3161
  %v3349 = vunpack.c.l.b16 %v3162
  %v3350 = vunpack.c.h.b16 %v3162
  %v3351 = vunpack.c.l.b16 %v3163
  %v3352 = vunpack.c.l.b16 %v3164
  %v3353 = vunpack.c.h.b16 %v3164
  %v3354 = vunpack.c.l.b16 %v3165
  %v3355 = vunpack.c.h.b16 %v3165
  %v3356 = vunpack.c.l.b16 %v3166
  %v3357 = vunpack.c.h.b16 %v3166
  %v3358 = vunpack.c.l.b16 %v3167
  %v3359 = vunpack.c.h.b16 %v3167
  %v3360 = vunpack.c.l.b16 %v3168
  %v3361 = vunpack.c.h.b16 %v3168
  %v3362 = vunpack.c.l.b16 %v3169
  %v3363 = vunpack.c.h.b16 %v3169
  %v3364 = vunpack.c.l.b16 %v3170
  %v3365 = vunpack.c.l.b16 %v3171
  %v3366 = vunpack.c.h.b16 %v3171
  %v3367 = vunpack.c.l.b16 %v3172
  %v3368 = vunpack.c.h.b16 %v3172
  %v3369 = vunpack.c.l.b16 %v3173
  %v3370 = vunpack.c.h.b16 %v3173
  %v3371 = vunpack.c.l.b16 %v3174
  %v3372 = vunpack.c.h.b16 %v3174
  %v3373 = vunpack.c.l.b16 %v3175
  %v3374 = vunpack.c.h.b16 %v3175
  %v3375 = vunpack.c.l.b16 %v3176
  %v3376 = vunpack.c.h.b16 %v3176
  %v3377 = vunpack.c.l.b16 %v3177
  %v3378 = vunpack.c.l.b16 %v3178
  %v3379 = vunpack.c.h.b16 %v3178
  %v3380 = vunpack.c.l.b16 %v3179
  %v3381 = vunpack.c.h.b16 %v3179
  %v3382 = vunpack.c.l.b16 %v3180
  %v3383 = vunpack.c.h.b16 %v3180
  %v3384 = vunpack.c.l.b16 %v3181
  %v3385 = vunpack.c.h.b16 %v3181
  %v3386 = vunpack.c.l.b16 %v3182
  %v3387 = vunpack.c.h.b16 %v3182
  %v3388 = vunpack.c.l.b16 %v3183
  %v3389 = vunpack.c.h.b16 %v3183
  %v3390 = vunpack.c.l.b16 %v3184
  %v3391 = vunpack.c.l.b16 %v3185
  %v3392 = vunpack.c.h.b16 %v3185
  %v3393 = vunpack.c.l.b16 %v3186
  %v3394 = vunpack.c.h.b16 %v3186
  %v3395 = vunpack.c.l.b16 %v3187
  %v3396 = vunpack.c.h.b16 %v3187
  %v3397 = vunpack.c.l.b16 %v3188
  %v3398 = vunpack.c.h.b16 %v3188
  %v3399 = vunpack.c.l.b16 %v3189
  %v3400 = vunpack.c.h.b16 %v3189
  %v3401 = vunpack.c.l.b16 %v3190
  %v3402 = vunpack.c.h.b16 %v3190
  %v3403 = vunpack.c.l.b16 %v3191
  %v3404 = vunpack.c.l.b16 %v3192
  %v3405 = vunpack.c.h.b16 %v3192
  %v3406 = vunpack.c.l.b16 %v3193
  %v3407 = vunpack.c.h.b16 %v3193
  %v3408 = vunpack.c.l.b16 %v3194
  %v3409 = vunpack.c.h.b16 %v3194
  %v3410 = vunpack.c.l.b16 %v3195
  %v3411 = vunpack.c.h.b16 %v3195
  %v3412 = vunpack.c.l.b16 %v3196
  %v3413 = vunpack.c.h.b16 %v3196
  %v3414 = vunpack.c.l.b16 %v3197
  %v3415 = vunpack.c.h.b16 %v3197
  %v3416 = vunpack.c.l.b16 %v3198
  %v3417 = vunpack.c.l.b16 %v3199
  %v3418 = vunpack.c.h.b16 %v3199
  %v3419 = vunpack.c.l.b16 %v3200
  %v3420 = vunpack.c.h.b16 %v3200
  %v3421 = vunpack.c.l.b16 %v3201
  %v3422 = vunpack.c.h.b16 %v3201
  %v3423 = vunpack.c.l.b16 %v3202
  %v3424 = vunpack.c.h.b16 %v3202
  %v3425 = vunpack.c.l.b16 %v3203
  %v3426 = vunpack.c.h.b16 %v3203
  %v3427 = vunpack.c.l.b16 %v3204
  %v3428 = vunpack.c.h.b16 %v3204
  %v3429 = vunpack.c.l.b16 %v3205
  %v3430 = vunpack.c.l.b16 %v3206
  %v3431 = vunpack.c.h.b16 %v3206
  %v3432 = vunpack.c.l.b16 %v3207
  %v3433 = vunpack.c.h.b16 %v3207
  %v3434 = vunpack.c.l.b16 %v3208
  %v3435 = vunpack.c.h.b16 %v3208
  %v3436 = vunpack.c.l.b16 %v3209
  %v3437 = vunpack.c.h.b16 %v3209
  %v3438 = vunpack.c.l.b16 %v3210
  %v3439 = vunpack.c.h.b16 %v3210
  %v3440 = vunpack.c.l.b16 %v3211
  %v3441 = vunpack.c.h.b16 %v3211
  %v3442 = vunpack.c.l.b16 %v3212
  %v3443 = vunpack.c.l.b16 %v3213
  %v3444 = vunpack.c.h.b16 %v3213
  %v3445 = vunpack.c.l.b16 %v3214
  %v3446 = vunpack.c.h.b16 %v3214
  %v3447 = vunpack.c.l.b16 %v3215
  %v3448 = vunpack.c.h.b16 %v3215
  %v3449 = vunpack.c.l.b16 %v3216
  %v3450 = vunpack.c.h.b16 %v3216
  %v3451 = vunpack.c.l.b16 %v3217
  %v3452 = vunpack.c.h.b16 %v3217
  %v3453 = vunpack.c.l.b16 %v3218
  %v3454 = vunpack.c.h.b16 %v3218
  %v3455 = vunpack.c.l.b16 %v3219
  %v3456 = vunpack.c.l.b16 %v3220
  %v3457 = vunpack.c.h.b16 %v3220
  %v3458 = vunpack.c.l.b16 %v3221
  %v3459 = vunpack.c.h.b16 %v3221
  %v3460 = vunpack.c.l.b16 %v3222
  %v3461 = vunpack.c.h.b16 %v3222
  %v3462 = vunpack.c.l.b16 %v3223
  %v3463 = vunpack.c.h.b16 %v3223
  %v3464 = vunpack.c.l.b16 %v3224
  %v3465 = vunpack.c.h.b16 %v3224
  %v3466 = vunpack.c.l.b16 %v3225
  %v3467 = vunpack.c.h.b16 %v3225
  %v3468 = vunpack.c.l.b16 %v3226
  %v3469 = vunpack.c.l.b16 %v3227
  %v3470 = vunpack.c.h.b16 %v3227
  %v3471 = vunpack.c.l.b16 %v3228
  %v3472 = vunpack.c.h.b16 %v3228
  %v3473 = vunpack.c.l.b16 %v3229
  %v3474 = vunpack.c.h.b16 %v3229
  %v3475 = vunpack.c.l.b16 %v3230
  %v3476 = vunpack.c.h.b16 %v3230
  %v3477 = vunpack.c.l.b16 %v3231
  %v3478 = vunpack.c.h.b16 %v3231
  %v3479 = vunpack.c.l.b16 %v3232
  %v3480 = vunpack.c.h.b16 %v3232
  %v3481 = vunpack.c.l.b16 %v3233
  %v3482 = vunpack.c.l.b16 %v3234
  %v3483 = vunpack.c.h.b16 %v3234
  %v3484 = vunpack.c.l.b16 %v3235
  %v3485 = vunpack.c.h.b16 %v3235
  %v3486 = vunpack.c.l.b16 %v3236
  %v3487 = vunpack.c.h.b16 %v3236
  %v3488 = vunpack.c.l.b16 %v3237
  %v3489 = vunpack.c.h.b16 %v3237
  %v3490 = vunpack.c.l.b16 %v3238
  %v3491 = vunpack.c.h.b16 %v3238
  %v3492 = vunpack.c.l.b16 %v3239
  %v3493 = vunpack.c.h.b16 %v3239
  %v3494 = vunpack.c.l.b16 %v3240
  %v3495 = vunpack.c.l.b16 %v3241
  %v3496 = vunpack.c.h.b16 %v3241
  %v3497 = vunpack.c.l.b16 %v3242
  %v3498 = vunpack.c.h.b16 %v3242
  %v3499 = vunpack.c.l.b16 %v3243
  %v3500 = vunpack.c.h.b16 %v3243
  %v3501 = vunpack.c.l.b16 %v3244
  %v3502 = vunpack.c.h.b16 %v3244
  %v3503 = vunpack.c.l.b16 %v3245
  %v3504 = vunpack.c.h.b16 %v3245
  %v3505 = vunpack.c.l.b16 %v3246
  %v3506 = vunpack.c.h.b16 %v3246
  %v3507 = vunpack.c.l.b16 %v3247
  %v3508 = vpack.c.b16 %v3352, %v3339
  %v3509 = vpack.c.b16 %v3353, %v3340
  %v3510 = vpack.c.b16 %v3354, %v3341
  %v3511 = vpack.c.b16 %v3355, %v3342
  %v3512 = vpack.c.b16 %v3356, %v3343
  %v3513 = vpack.c.b16 %v3357, %v3344
  %v3514 = vpack.c.b16 %v3358, %v3345
  %v3515 = vpack.c.b16 %v3359, %v3346
  %v3516 = vpack.c.b16 %v3360, %v3347
  %v3517 = vpack.c.b16 %v3361, %v3348
  %v3518 = vpack.c.b16 %v3362, %v3349
  %v3519 = vpack.c.b16 %v3363, %v3350
  %v3520 = vpack.c.b16 %v3364, %v3351
  %v3521 = vpack.c.b16 %v3378, %v3365
  %v3522 = vpack.c.b16 %v3379, %v3366
  %v3523 = vpack.c.b16 %v3380, %v3367
  %v3524 = vpack.c.b16 %v3381, %v3368
  %v3525 = vpack.c.b16 %v3382, %v3369
  %v3526 = vpack.c.b16 %v3383, %v3370
  %v3527 = vpack.c.b16 %v3384, %v3371
  %v3528 = vpack.c.b16 %v3385, %v3372
  %v3529 = vpack.c.b16 %v3386, %v3373
  %v3530 = vpack.c.b16 %v3387, %v3374
  %v3531 = vpack.c.b16 %v3388, %v3375
  %v3532 = vpack.c.b16 %v3389, %v3376
  %v3533 = vpack.c.b16 %v3390, %v3377
  %v3534 = vpack.c.b16 %v3404, %v3391
  %v3535 = vpack.c.b16 %v3405, %v3392
  %v3536 = vpack.c.b16 %v3406, %v3393
  %v3537 = vpack.c.b16 %v3407, %v3394
  %v3538 = vpack.c.b16 %v3408, %v3395
  %v3539 = vpack.c.b16 %v3409, %v3396
  %v3540 = vpack.c.b16 %v3410, %v3397
  %v3541 = vpack.c.b16 %v3411, %v3398
  %v3542 = vpack.c.b16 %v3412, %v3399
  %v3543 = vpack.c.b16 %v3413, %v3400
  %v3544 = vpack.c.b16 %v3414, %v3401
  %v3545 = vpack.c.b16 %v3415, %v3402
  %v3546 = vpack.c.b16 %v3416, %v3403
  %v3547 = vpack.c.b16 %v3430, %v3417
  %v3548 = vpack.c.b16 %v3431, %v3418
  %v3549 = vpack.c.b16 %v3432, %v3419
  %v3550 = vpack.c.b16 %v3433, %v3420
  %v3551 = vpack.c.b16 %v3434, %v3421
  %v3552 = vpack.c.b16 %v3435, %v3422
  %v3553 = vpack.c.b16 %v3436, %v3423
  %v3554 = vpack.c.b16 %v3437, %v3424
  %v3555 = vpack.c.b16 %v3438, %v3425
  %v3556 = vpack.c.b16 %v3439, %v3426
  %v3557 = vpack.c.b16 %v3440, %v3427
  %v3558 = vpack.c.b16 %v3441, %v3428
  %v3559 = vpack.c.b16 %v3442, %v3429
  %v3560 = vpack.c.b16 %v3456, %v3443
  %v3561 = vpack.c.b16 %v3457, %v3444
  %v3562 = vpack.c.b16 %v3458, %v3445
  %v3563 = vpack.c.b16 %v3459, %v3446
  %v3564 = vpack.c.b16 %v3460, %v3447
  %v3565 = vpack.c.b16 %v3461, %v3448
  %v3566 = vpack.c.b16 %v3462, %v3449
  %v3567 = vpack.c.b16 %v3463, %v3450
  %v3568 = vpack.c.b16 %v3464, %v3451
  %v3569 = vpack.c.b16 %v3465, %v3452
  %v3570 = vpack.c.b16 %v3466, %v3453
  %v3571 = vpack.c.b16 %v3467, %v3454
  %v3572 = vpack.c.b16 %v3468, %v3455
  %v3573 = vpack.c.b16 %v3482, %v3469
  %v3574 = vpack.c.b16 %v3483, %v3470
  %v3575 = vpack.c.b16 %v3484, %v3471
  %v3576 = vpack.c.b16 %v3485, %v3472
  %v3577 = vpack.c.b16 %v3486, %v3473
  %v3578 = vpack.c.b16 %v3487, %v3474
  %v3579 = vpack.c.b16 %v3488, %v3475
  %v3580 = vpack.c.b16 %v3489, %v3476
  %v3581 = vpack.c.b16 %v3490, %v3477
  %v3582 = vpack.c.b16 %v3491, %v3478
  %v3583 = vpack.c.b16 %v3492, %v3479
  %v3584 = vpack.c.b16 %v3493, %v3480
  %v3585 = vpack.c.b16 %v3494, %v3481
  %v3586 = vpack.c.b16 %v3495, %v3495
  %v3587 = vpack.c.b16 %v3496, %v3496
  %v3588 = vpack.c.b16 %v3497, %v3497
  %v3589 = vpack.c.b16 %v3498, %v3498
  %v3590 = vpack.c.b16 %v3499, %v3499
  %v3591 = vpack.c.b16 %v3500, %v3500
  %v3592 = vpack.c.b16 %v3501, %v3501
  %v3593 = vpack.c.b16 %v3502, %v3502
  %v3594 = vpack.c.b16 %v3503, %v3503
  %v3595 = vpack.c.b16 %v3504, %v3504
  %v3596 = vpack.c.b16 %v3505, %v3505
  %v3597 = vpack.c.b16 %v3506, %v3506
  %v3598 = vpack.c.b16 %v3507, %v3507
  %v3684 = vsel %vm1341, %v3520, 0
  %v3687 = vsel %vm1341, %v3533, 0
  %v3690 = vsel %vm1341, %v3546, 0
  %v3693 = vsel %vm1341, %v3559, 0
  %v3696 = vsel %vm1341, %v3572, 0
  %v3699 = vsel %vm1341, %v3585, 0
  %v3702 = vsel %vm1341, %v3598, 0
  %3704 = vmatprep.subr.bf16.mxu0 0
  %3705 = vmatpush1.bf16.msra.mxu0 %v1141
  %3706 = vmatprep.subr.bf16.mxu0 0
  %3707 = vmatpush1.bf16.msra.mxu0 %v1142
  %3708 = vmatprep.subr.bf16.mxu0 0
  %3709 = vmatpush1.bf16.msra.mxu0 %v1143
  %3710 = vmatprep.subr.bf16.mxu0 0
  %3711 = vmatpush1.bf16.msra.mxu0 %v1144
  %3712 = vmatprep.subr.bf16.mxu0 0
  %3713 = vmatpush1.bf16.msra.mxu0 %v1145
  %3714 = vmatprep.subr.bf16.mxu0 0
  %3715 = vmatpush1.bf16.msra.mxu0 %v1146
  %3716 = vmatprep.subr.bf16.mxu0 0
  %3717 = vmatpush1.bf16.msra.mxu0 %v1147
  %3718 = vmatprep.subr.bf16.mxu0 0
  %3719 = vmatpush1.bf16.msra.mxu0 %v1148
  %3720 = vmatprep.subr.bf16.mxu0 0
  %3721 = vmatpush1.bf16.msra.mxu0 %v1149
  %3722 = vmatprep.subr.bf16.mxu0 0
  %3723 = vmatpush1.bf16.msra.mxu0 %v1150
  %3724 = vmatprep.subr.bf16.mxu0 0
  %3725 = vmatpush1.bf16.msra.mxu0 %v1151
  %3726 = vmatprep.subr.bf16.mxu0 0
  %3727 = vmatpush1.bf16.msra.mxu0 %v1152
  %3728 = vmatprep.subr.bf16.mxu0 0
  %3729 = vmatpush1.bf16.msra.mxu0 %v1153
  %3730 = vmatprep.subr.bf16.mxu0 0
  %3731 = vmatpush1.bf16.msra.mxu0 %v1154
  %3732 = vmatprep.subr.bf16.mxu0 0
  %3733 = vmatpush1.bf16.msra.mxu0 %v1155
  %3734 = vmatprep.subr.bf16.mxu0 0
  %3735 = vmatpush1.bf16.msra.mxu0 %v1156
  %3736 = vmatprep.mubr.bf16.mxu0 %v3509
  %3737 = vmatmul.mubr.bf16.gmra.mrb[0].mxu0 %v3508
  %v3738 = vpop.f32.mrb[0].mxu0
  %v3739 = vadd.f32 0.0, %v3738
  %v3740 = vpop.f32.mrb[0].mxu0
  %v3741 = vpop.f32.mrb[0].mxu0
  %v3742 = vadd.f32 0.0, %v3741
  %v3743 = vpop.f32.mrb[0].mxu0
  %3744 = vmatprep.mubr.bf16.mxu0 %v3522
  %3745 = vmatmul.mubr.bf16.gmra.mrb[0].mxu0 %v3521
  %v3746 = vpop.f32.mrb[0].mxu0
  %v3747 = vadd.f32 0.0, %v3746
  %v3748 = vpop.f32.mrb[0].mxu0
  %v3749 = vpop.f32.mrb[0].mxu0
  %v3750 = vadd.f32 0.0, %v3749
  %v3751 = vpop.f32.mrb[0].mxu0
  %3752 = vmatprep.mubr.bf16.mxu0 %v3535
  %3753 = vmatmul.mubr.bf16.gmra.mrb[0].mxu0 %v3534
  %v3754 = vpop.f32.mrb[0].mxu0
  %v3755 = vadd.f32 0.0, %v3754
  %v3756 = vpop.f32.mrb[0].mxu0
  %v3757 = vpop.f32.mrb[0].mxu0
  %v3758 = vadd.f32 0.0, %v3757
  %v3759 = vpop.f32.mrb[0].mxu0
  %3760 = vmatprep.mubr.bf16.mxu0 %v3548
  %3761 = vmatmul.mubr.bf16.gmra.mrb[0].mxu0 %v3547
  %v3762 = vpop.f32.mrb[0].mxu0
  %v3763 = vadd.f32 0.0, %v3762
  %v3764 = vpop.f32.mrb[0].mxu0
  %v3765 = vpop.f32.mrb[0].mxu0
  %v3766 = vadd.f32 0.0, %v3765
  %v3767 = vpop.f32.mrb[0].mxu0
  %3768 = vmatprep.mubr.bf16.mxu0 %v3561
  %3769 = vmatmul.mubr.bf16.gmra.mrb[0].mxu0 %v3560
  %v3770 = vpop.f32.mrb[0].mxu0
  %v3771 = vadd.f32 0.0, %v3770
  %v3772 = vpop.f32.mrb[0].mxu0
  %v3773 = vpop.f32.mrb[0].mxu0
  %v3774 = vadd.f32 0.0, %v3773
  %v3775 = vpop.f32.mrb[0].mxu0
  %3776 = vmatprep.mubr.bf16.mxu0 %v3574
  %3777 = vmatmul.mubr.bf16.gmra.mrb[0].mxu0 %v3573
  %v3778 = vpop.f32.mrb[0].mxu0
  %v3779 = vadd.f32 0.0, %v3778
  %v3780 = vpop.f32.mrb[0].mxu0
  %v3781 = vpop.f32.mrb[0].mxu0
  %v3782 = vadd.f32 0.0, %v3781
  %v3783 = vpop.f32.mrb[0].mxu0
  %3784 = vmatprep.mubr.bf16.mxu0 %v3587
  %3785 = vmatmul.mubr.bf16.gmra.mrb[0].mxu0 %v3586
  %v3786 = vpop.f32.mrb[0].mxu0
  %v3787 = vadd.f32 0.0, %v3786
  %v3788 = vpop.f32.mrb[0].mxu0
  %v3789 = vpop.f32.mrb[0].mxu0
  %v3790 = vpop.f32.mrb[0].mxu0
  %3791 = vdwg.mxu0
  %3792 = vmatprep.subr.bf16.mxu0 0
  %3793 = vmatpush1.bf16.msra.mxu0 %v1157
  %3794 = vmatprep.subr.bf16.mxu0 0
  %3795 = vmatpush1.bf16.msra.mxu0 %v1158
  %3796 = vmatprep.subr.bf16.mxu0 0
  %3797 = vmatpush1.bf16.msra.mxu0 %v1159
  %3798 = vmatprep.subr.bf16.mxu0 0
  %3799 = vmatpush1.bf16.msra.mxu0 %v1160
  %3800 = vmatprep.subr.bf16.mxu0 0
  %3801 = vmatpush1.bf16.msra.mxu0 %v1161
  %3802 = vmatprep.subr.bf16.mxu0 0
  %3803 = vmatpush1.bf16.msra.mxu0 %v1162
  %3804 = vmatprep.subr.bf16.mxu0 0
  %3805 = vmatpush1.bf16.msra.mxu0 %v1163
  %3806 = vmatprep.subr.bf16.mxu0 0
  %3807 = vmatpush1.bf16.msra.mxu0 %v1164
  %3808 = vmatprep.subr.bf16.mxu0 0
  %3809 = vmatpush1.bf16.msra.mxu0 %v1165
  %3810 = vmatprep.subr.bf16.mxu0 0
  %3811 = vmatpush1.bf16.msra.mxu0 %v1166
  %3812 = vmatprep.subr.bf16.mxu0 0
  %3813 = vmatpush1.bf16.msra.mxu0 %v1167
  %3814 = vmatprep.subr.bf16.mxu0 0
  %3815 = vmatpush1.bf16.msra.mxu0 %v1168
  %3816 = vmatprep.subr.bf16.mxu0 0
  %3817 = vmatpush1.bf16.msra.mxu0 %v1169
  %3818 = vmatprep.subr.bf16.mxu0 0
  %3819 = vmatpush1.bf16.msra.mxu0 %v1170
  %3820 = vmatprep.subr.bf16.mxu0 0
  %3821 = vmatpush1.bf16.msra.mxu0 %v1171
  %3822 = vmatprep.subr.bf16.mxu0 0
  %3823 = vmatpush1.bf16.msra.mxu0 %v1172
  %3824 = vmatprep.mubr.bf16.mxu0 %v3511
  %3825 = vmatmul.mubr.bf16.gmra.mrb[0].mxu0 %v3510
  %v3826 = vpop.f32.mrb[0].mxu0
  %v3827 = vadd.f32 %v3739, %v3826
  %v3828 = vpop.f32.mrb[0].mxu0
  %v3829 = vpop.f32.mrb[0].mxu0
  %v3830 = vadd.f32 %v3742, %v3829
  %v3831 = vpop.f32.mrb[0].mxu0
  %3832 = vmatprep.mubr.bf16.mxu0 %v3524
  %3833 = vmatmul.mubr.bf16.gmra.mrb[0].mxu0 %v3523
  %v3834 = vpop.f32.mrb[0].mxu0
  %v3835 = vadd.f32 %v3747, %v3834
  %v3836 = vpop.f32.mrb[0].mxu0
  %v3837 = vpop.f32.mrb[0].mxu0
  %v3838 = vadd.f32 %v3750, %v3837
  %v3839 = vpop.f32.mrb[0].mxu0
  %3840 = vmatprep.mubr.bf16.mxu0 %v3537
  %3841 = vmatmul.mubr.bf16.gmra.mrb[0].mxu0 %v3536
  %v3842 = vpop.f32.mrb[0].mxu0
  %v3843 = vadd.f32 %v3755, %v3842
  %v3844 = vpop.f32.mrb[0].mxu0
  %v3845 = vpop.f32.mrb[0].mxu0
  %v3846 = vadd.f32 %v3758, %v3845
  %v3847 = vpop.f32.mrb[0].mxu0
  %3848 = vmatprep.mubr.bf16.mxu0 %v3550
  %3849 = vmatmul.mubr.bf16.gmra.mrb[0].mxu0 %v3549
  %v3850 = vpop.f32.mrb[0].mxu0
  %v3851 = vadd.f32 %v3763, %v3850
  %v3852 = vpop.f32.mrb[0].mxu0
  %v3853 = vpop.f32.mrb[0].mxu0
  %v3854 = vadd.f32 %v3766, %v3853
  %v3855 = vpop.f32.mrb[0].mxu0
  %3856 = vmatprep.mubr.bf16.mxu0 %v3563
  %3857 = vmatmul.mubr.bf16.gmra.mrb[0].mxu0 %v3562
  %v3858 = vpop.f32.mrb[0].mxu0
  %v3859 = vadd.f32 %v3771, %v3858
  %v3860 = vpop.f32.mrb[0].mxu0
  %v3861 = vpop.f32.mrb[0].mxu0
  %v3862 = vadd.f32 %v3774, %v3861
  %v3863 = vpop.f32.mrb[0].mxu0
  %3864 = vmatprep.mubr.bf16.mxu0 %v3576
  %3865 = vmatmul.mubr.bf16.gmra.mrb[0].mxu0 %v3575
  %v3866 = vpop.f32.mrb[0].mxu0
  %v3867 = vadd.f32 %v3779, %v3866
  %v3868 = vpop.f32.mrb[0].mxu0
  %v3869 = vpop.f32.mrb[0].mxu0
  %v3870 = vadd.f32 %v3782, %v3869
  %v3871 = vpop.f32.mrb[0].mxu0
  %3872 = vmatprep.mubr.bf16.mxu0 %v3589
  %3873 = vmatmul.mubr.bf16.gmra.mrb[0].mxu0 %v3588
  %v3874 = vpop.f32.mrb[0].mxu0
  %v3875 = vadd.f32 %v3787, %v3874
  %v3876 = vpop.f32.mrb[0].mxu0
  %v3877 = vpop.f32.mrb[0].mxu0
  %v3878 = vpop.f32.mrb[0].mxu0
  %3879 = vdwg.mxu0
  %3880 = vmatprep.subr.bf16.mxu0 0
  %3881 = vmatpush1.bf16.msra.mxu0 %v1173
  %3882 = vmatprep.subr.bf16.mxu0 0
  %3883 = vmatpush1.bf16.msra.mxu0 %v1174
  %3884 = vmatprep.subr.bf16.mxu0 0
  %3885 = vmatpush1.bf16.msra.mxu0 %v1175
  %3886 = vmatprep.subr.bf16.mxu0 0
  %3887 = vmatpush1.bf16.msra.mxu0 %v1176
  %3888 = vmatprep.subr.bf16.mxu0 0
  %3889 = vmatpush1.bf16.msra.mxu0 %v1177
  %3890 = vmatprep.subr.bf16.mxu0 0
  %3891 = vmatpush1.bf16.msra.mxu0 %v1178
  %3892 = vmatprep.subr.bf16.mxu0 0
  %3893 = vmatpush1.bf16.msra.mxu0 %v1179
  %3894 = vmatprep.subr.bf16.mxu0 0
  %3895 = vmatpush1.bf16.msra.mxu0 %v1180
  %3896 = vmatprep.subr.bf16.mxu0 0
  %3897 = vmatpush1.bf16.msra.mxu0 %v1181
  %3898 = vmatprep.subr.bf16.mxu0 0
  %3899 = vmatpush1.bf16.msra.mxu0 %v1182
  %3900 = vmatprep.subr.bf16.mxu0 0
  %3901 = vmatpush1.bf16.msra.mxu0 %v1183
  %3902 = vmatprep.subr.bf16.mxu0 0
  %3903 = vmatpush1.bf16.msra.mxu0 %v1184
  %3904 = vmatprep.subr.bf16.mxu0 0
  %3905 = vmatpush1.bf16.msra.mxu0 %v1185
  %3906 = vmatprep.subr.bf16.mxu0 0
  %3907 = vmatpush1.bf16.msra.mxu0 %v1186
  %3908 = vmatprep.subr.bf16.mxu0 0
  %3909 = vmatpush1.bf16.msra.mxu0 %v1187
  %3910 = vmatprep.subr.bf16.mxu0 0
  %3911 = vmatpush1.bf16.msra.mxu0 %v1188
  %3912 = vmatprep.mubr.bf16.mxu0 %v3513
  %3913 = vmatmul.mubr.bf16.gmra.mrb[0].mxu0 %v3512
  %v3914 = vpop.f32.mrb[0].mxu0
  %v3915 = vadd.f32 %v3827, %v3914
  %v3916 = vpop.f32.mrb[0].mxu0
  %v3917 = vpop.f32.mrb[0].mxu0
  %v3918 = vadd.f32 %v3830, %v3917
  %v3919 = vpop.f32.mrb[0].mxu0
  %3920 = vmatprep.mubr.bf16.mxu0 %v3526
  %3921 = vmatmul.mubr.bf16.gmra.mrb[0].mxu0 %v3525
  %v3922 = vpop.f32.mrb[0].mxu0
  %v3923 = vadd.f32 %v3835, %v3922
  %v3924 = vpop.f32.mrb[0].mxu0
  %v3925 = vpop.f32.mrb[0].mxu0
  %v3926 = vadd.f32 %v3838, %v3925
  %v3927 = vpop.f32.mrb[0].mxu0
  %3928 = vmatprep.mubr.bf16.mxu0 %v3539
  %3929 = vmatmul.mubr.bf16.gmra.mrb[0].mxu0 %v3538
  %v3930 = vpop.f32.mrb[0].mxu0
  %v3931 = vadd.f32 %v3843, %v3930
  %v3932 = vpop.f32.mrb[0].mxu0
  %v3933 = vpop.f32.mrb[0].mxu0
  %v3934 = vadd.f32 %v3846, %v3933
  %v3935 = vpop.f32.mrb[0].mxu0
  %3936 = vmatprep.mubr.bf16.mxu0 %v3552
  %3937 = vmatmul.mubr.bf16.gmra.mrb[0].mxu0 %v3551
  %v3938 = vpop.f32.mrb[0].mxu0
  %v3939 = vadd.f32 %v3851, %v3938
  %v3940 = vpop.f32.mrb[0].mxu0
  %v3941 = vpop.f32.mrb[0].mxu0
  %v3942 = vadd.f32 %v3854, %v3941
  %v3943 = vpop.f32.mrb[0].mxu0
  %3944 = vmatprep.mubr.bf16.mxu0 %v3565
  %3945 = vmatmul.mubr.bf16.gmra.mrb[0].mxu0 %v3564
  %v3946 = vpop.f32.mrb[0].mxu0
  %v3947 = vadd.f32 %v3859, %v3946
  %v3948 = vpop.f32.mrb[0].mxu0
  %v3949 = vpop.f32.mrb[0].mxu0
  %v3950 = vadd.f32 %v3862, %v3949
  %v3951 = vpop.f32.mrb[0].mxu0
  %3952 = vmatprep.mubr.bf16.mxu0 %v3578
  %3953 = vmatmul.mubr.bf16.gmra.mrb[0].mxu0 %v3577
  %v3954 = vpop.f32.mrb[0].mxu0
  %v3955 = vadd.f32 %v3867, %v3954
  %v3956 = vpop.f32.mrb[0].mxu0
  %v3957 = vpop.f32.mrb[0].mxu0
  %v3958 = vadd.f32 %v3870, %v3957
  %v3959 = vpop.f32.mrb[0].mxu0
  %3960 = vmatprep.mubr.bf16.mxu0 %v3591
  %3961 = vmatmul.mubr.bf16.gmra.mrb[0].mxu0 %v3590
  %v3962 = vpop.f32.mrb[0].mxu0
  %v3963 = vadd.f32 %v3875, %v3962
  %v3964 = vpop.f32.mrb[0].mxu0
  %v3965 = vpop.f32.mrb[0].mxu0
  %v3966 = vpop.f32.mrb[0].mxu0
  %3967 = vdwg.mxu0
  %3968 = vmatprep.subr.bf16.mxu0 0
  %3969 = vmatpush1.bf16.msra.mxu0 %v1189
  %3970 = vmatprep.subr.bf16.mxu0 0
  %3971 = vmatpush1.bf16.msra.mxu0 %v1190
  %3972 = vmatprep.subr.bf16.mxu0 0
  %3973 = vmatpush1.bf16.msra.mxu0 %v1191
  %3974 = vmatprep.subr.bf16.mxu0 0
  %3975 = vmatpush1.bf16.msra.mxu0 %v1192
  %3976 = vmatprep.subr.bf16.mxu0 0
  %3977 = vmatpush1.bf16.msra.mxu0 %v1193
  %3978 = vmatprep.subr.bf16.mxu0 0
  %3979 = vmatpush1.bf16.msra.mxu0 %v1194
  %3980 = vmatprep.subr.bf16.mxu0 0
  %3981 = vmatpush1.bf16.msra.mxu0 %v1195
  %3982 = vmatprep.subr.bf16.mxu0 0
  %3983 = vmatpush1.bf16.msra.mxu0 %v1196
  %3984 = vmatprep.subr.bf16.mxu0 0
  %3985 = vmatpush1.bf16.msra.mxu0 %v1197
  %3986 = vmatprep.subr.bf16.mxu0 0
  %3987 = vmatpush1.bf16.msra.mxu0 %v1198
  %3988 = vmatprep.subr.bf16.mxu0 0
  %3989 = vmatpush1.bf16.msra.mxu0 %v1199
  %3990 = vmatprep.subr.bf16.mxu0 0
  %3991 = vmatpush1.bf16.msra.mxu0 %v1200
  %3992 = vmatprep.subr.bf16.mxu0 0
  %3993 = vmatpush1.bf16.msra.mxu0 %v1201
  %3994 = vmatprep.subr.bf16.mxu0 0
  %3995 = vmatpush1.bf16.msra.mxu0 %v1202
  %3996 = vmatprep.subr.bf16.mxu0 0
  %3997 = vmatpush1.bf16.msra.mxu0 %v1203
  %3998 = vmatprep.subr.bf16.mxu0 0
  %3999 = vmatpush1.bf16.msra.mxu0 %v1204
  %4000 = vmatprep.mubr.bf16.mxu0 %v3515
  %4001 = vmatmul.mubr.bf16.gmra.mrb[0].mxu0 %v3514
  %v4002 = vpop.f32.mrb[0].mxu0
  %v4003 = vadd.f32 %v3915, %v4002
  %v4004 = vpop.f32.mrb[0].mxu0
  %v4005 = vpop.f32.mrb[0].mxu0
  %v4006 = vadd.f32 %v3918, %v4005
  %v4007 = vpop.f32.mrb[0].mxu0
  %4008 = vmatprep.mubr.bf16.mxu0 %v3528
  %4009 = vmatmul.mubr.bf16.gmra.mrb[0].mxu0 %v3527
  %v4010 = vpop.f32.mrb[0].mxu0
  %v4011 = vadd.f32 %v3923, %v4010
  %v4012 = vpop.f32.mrb[0].mxu0
  %v4013 = vpop.f32.mrb[0].mxu0
  %v4014 = vadd.f32 %v3926, %v4013
  %v4015 = vpop.f32.mrb[0].mxu0
  %4016 = vmatprep.mubr.bf16.mxu0 %v3541
  %4017 = vmatmul.mubr.bf16.gmra.mrb[0].mxu0 %v3540
  %v4018 = vpop.f32.mrb[0].mxu0
  %v4019 = vadd.f32 %v3931, %v4018
  %v4020 = vpop.f32.mrb[0].mxu0
  %v4021 = vpop.f32.mrb[0].mxu0
  %v4022 = vadd.f32 %v3934, %v4021
  %v4023 = vpop.f32.mrb[0].mxu0
  %4024 = vmatprep.mubr.bf16.mxu0 %v3554
  %4025 = vmatmul.mubr.bf16.gmra.mrb[0].mxu0 %v3553
  %v4026 = vpop.f32.mrb[0].mxu0
  %v4027 = vadd.f32 %v3939, %v4026
  %v4028 = vpop.f32.mrb[0].mxu0
  %v4029 = vpop.f32.mrb[0].mxu0
  %v4030 = vadd.f32 %v3942, %v4029
  %v4031 = vpop.f32.mrb[0].mxu0
  %4032 = vmatprep.mubr.bf16.mxu0 %v3567
  %4033 = vmatmul.mubr.bf16.gmra.mrb[0].mxu0 %v3566
  %v4034 = vpop.f32.mrb[0].mxu0
  %v4035 = vadd.f32 %v3947, %v4034
  %v4036 = vpop.f32.mrb[0].mxu0
  %v4037 = vpop.f32.mrb[0].mxu0
  %v4038 = vadd.f32 %v3950, %v4037
  %v4039 = vpop.f32.mrb[0].mxu0
  %4040 = vmatprep.mubr.bf16.mxu0 %v3580
  %4041 = vmatmul.mubr.bf16.gmra.mrb[0].mxu0 %v3579
  %v4042 = vpop.f32.mrb[0].mxu0
  %v4043 = vadd.f32 %v3955, %v4042
  %v4044 = vpop.f32.mrb[0].mxu0
  %v4045 = vpop.f32.mrb[0].mxu0
  %v4046 = vadd.f32 %v3958, %v4045
  %v4047 = vpop.f32.mrb[0].mxu0
  %4048 = vmatprep.mubr.bf16.mxu0 %v3593
  %4049 = vmatmul.mubr.bf16.gmra.mrb[0].mxu0 %v3592
  %v4050 = vpop.f32.mrb[0].mxu0
  %v4051 = vadd.f32 %v3963, %v4050
  %v4052 = vpop.f32.mrb[0].mxu0
  %v4053 = vpop.f32.mrb[0].mxu0
  %v4054 = vpop.f32.mrb[0].mxu0
  %4055 = vdwg.mxu0
  %4056 = vmatprep.subr.bf16.mxu0 0
  %4057 = vmatpush1.bf16.msra.mxu0 %v1205
  %4058 = vmatprep.subr.bf16.mxu0 0
  %4059 = vmatpush1.bf16.msra.mxu0 %v1206
  %4060 = vmatprep.subr.bf16.mxu0 0
  %4061 = vmatpush1.bf16.msra.mxu0 %v1207
  %4062 = vmatprep.subr.bf16.mxu0 0
  %4063 = vmatpush1.bf16.msra.mxu0 %v1208
  %4064 = vmatprep.subr.bf16.mxu0 0
  %4065 = vmatpush1.bf16.msra.mxu0 %v1209
  %4066 = vmatprep.subr.bf16.mxu0 0
  %4067 = vmatpush1.bf16.msra.mxu0 %v1210
  %4068 = vmatprep.subr.bf16.mxu0 0
  %4069 = vmatpush1.bf16.msra.mxu0 %v1211
  %4070 = vmatprep.subr.bf16.mxu0 0
  %4071 = vmatpush1.bf16.msra.mxu0 %v1212
  %4072 = vmatprep.subr.bf16.mxu0 0
  %4073 = vmatpush1.bf16.msra.mxu0 %v1213
  %4074 = vmatprep.subr.bf16.mxu0 0
  %4075 = vmatpush1.bf16.msra.mxu0 %v1214
  %4076 = vmatprep.subr.bf16.mxu0 0
  %4077 = vmatpush1.bf16.msra.mxu0 %v1215
  %4078 = vmatprep.subr.bf16.mxu0 0
  %4079 = vmatpush1.bf16.msra.mxu0 %v1216
  %4080 = vmatprep.subr.bf16.mxu0 0
  %4081 = vmatpush1.bf16.msra.mxu0 %v1217
  %4082 = vmatprep.subr.bf16.mxu0 0
  %4083 = vmatpush1.bf16.msra.mxu0 %v1218
  %4084 = vmatprep.subr.bf16.mxu0 0
  %4085 = vmatpush1.bf16.msra.mxu0 %v1219
  %4086 = vmatprep.subr.bf16.mxu0 0
  %4087 = vmatpush1.bf16.msra.mxu0 %v1220
  %4088 = vmatprep.mubr.bf16.mxu0 %v3517
  %4089 = vmatmul.mubr.bf16.gmra.mrb[0].mxu0 %v3516
  %v4090 = vpop.f32.mrb[0].mxu0
  %v4091 = vadd.f32 %v4003, %v4090
  %v4092 = vpop.f32.mrb[0].mxu0
  %v4093 = vpop.f32.mrb[0].mxu0
  %v4094 = vadd.f32 %v4006, %v4093
  %v4095 = vpop.f32.mrb[0].mxu0
  %4096 = vmatprep.mubr.bf16.mxu0 %v3530
  %4097 = vmatmul.mubr.bf16.gmra.mrb[0].mxu0 %v3529
  %v4098 = vpop.f32.mrb[0].mxu0
  %v4099 = vadd.f32 %v4011, %v4098
  %v4100 = vpop.f32.mrb[0].mxu0
  %v4101 = vpop.f32.mrb[0].mxu0
  %v4102 = vadd.f32 %v4014, %v4101
  %v4103 = vpop.f32.mrb[0].mxu0
  %4104 = vmatprep.mubr.bf16.mxu0 %v3543
  %4105 = vmatmul.mubr.bf16.gmra.mrb[0].mxu0 %v3542
  %v4106 = vpop.f32.mrb[0].mxu0
  %v4107 = vadd.f32 %v4019, %v4106
  %v4108 = vpop.f32.mrb[0].mxu0
  %v4109 = vpop.f32.mrb[0].mxu0
  %v4110 = vadd.f32 %v4022, %v4109
  %v4111 = vpop.f32.mrb[0].mxu0
  %4112 = vmatprep.mubr.bf16.mxu0 %v3556
  %4113 = vmatmul.mubr.bf16.gmra.mrb[0].mxu0 %v3555
  %v4114 = vpop.f32.mrb[0].mxu0
  %v4115 = vadd.f32 %v4027, %v4114
  %v4116 = vpop.f32.mrb[0].mxu0
  %v4117 = vpop.f32.mrb[0].mxu0
  %v4118 = vadd.f32 %v4030, %v4117
  %v4119 = vpop.f32.mrb[0].mxu0
  %4120 = vmatprep.mubr.bf16.mxu0 %v3569
  %4121 = vmatmul.mubr.bf16.gmra.mrb[0].mxu0 %v3568
  %v4122 = vpop.f32.mrb[0].mxu0
  %v4123 = vadd.f32 %v4035, %v4122
  %v4124 = vpop.f32.mrb[0].mxu0
  %v4125 = vpop.f32.mrb[0].mxu0
  %v4126 = vadd.f32 %v4038, %v4125
  %v4127 = vpop.f32.mrb[0].mxu0
  %4128 = vmatprep.mubr.bf16.mxu0 %v3582
  %4129 = vmatmul.mubr.bf16.gmra.mrb[0].mxu0 %v3581
  %v4130 = vpop.f32.mrb[0].mxu0
  %v4131 = vadd.f32 %v4043, %v4130
  %v4132 = vpop.f32.mrb[0].mxu0
  %v4133 = vpop.f32.mrb[0].mxu0
  %v4134 = vadd.f32 %v4046, %v4133
  %v4135 = vpop.f32.mrb[0].mxu0
  %4136 = vmatprep.mubr.bf16.mxu0 %v3595
  %4137 = vmatmul.mubr.bf16.gmra.mrb[0].mxu0 %v3594
  %v4138 = vpop.f32.mrb[0].mxu0
  %v4139 = vadd.f32 %v4051, %v4138
  %v4140 = vpop.f32.mrb[0].mxu0
  %v4141 = vpop.f32.mrb[0].mxu0
  %v4142 = vpop.f32.mrb[0].mxu0
  %4143 = vdwg.mxu0
  %4144 = vmatprep.subr.bf16.mxu0 0
  %4145 = vmatpush1.bf16.msra.mxu0 %v1221
  %4146 = vmatprep.subr.bf16.mxu0 0
  %4147 = vmatpush1.bf16.msra.mxu0 %v1222
  %4148 = vmatprep.subr.bf16.mxu0 0
  %4149 = vmatpush1.bf16.msra.mxu0 %v1223
  %4150 = vmatprep.subr.bf16.mxu0 0
  %4151 = vmatpush1.bf16.msra.mxu0 %v1224
  %4152 = vmatprep.subr.bf16.mxu0 0
  %4153 = vmatpush1.bf16.msra.mxu0 %v1225
  %4154 = vmatprep.subr.bf16.mxu0 0
  %4155 = vmatpush1.bf16.msra.mxu0 %v1226
  %4156 = vmatprep.subr.bf16.mxu0 0
  %4157 = vmatpush1.bf16.msra.mxu0 %v1227
  %4158 = vmatprep.subr.bf16.mxu0 0
  %4159 = vmatpush1.bf16.msra.mxu0 %v1228
  %4160 = vmatprep.subr.bf16.mxu0 0
  %4161 = vmatpush1.bf16.msra.mxu0 %v1229
  %4162 = vmatprep.subr.bf16.mxu0 0
  %4163 = vmatpush1.bf16.msra.mxu0 %v1230
  %4164 = vmatprep.subr.bf16.mxu0 0
  %4165 = vmatpush1.bf16.msra.mxu0 %v1231
  %4166 = vmatprep.subr.bf16.mxu0 0
  %4167 = vmatpush1.bf16.msra.mxu0 %v1232
  %4168 = vmatprep.subr.bf16.mxu0 0
  %4169 = vmatpush1.bf16.msra.mxu0 %v1233
  %4170 = vmatprep.subr.bf16.mxu0 0
  %4171 = vmatpush1.bf16.msra.mxu0 %v1234
  %4172 = vmatprep.subr.bf16.mxu0 0
  %4173 = vmatpush1.bf16.msra.mxu0 %v1235
  %4174 = vmatprep.subr.bf16.mxu0 0
  %4175 = vmatpush1.bf16.msra.mxu0 %v1236
  %4176 = vmatprep.mubr.bf16.mxu0 %v3519
  %4177 = vmatmul.mubr.bf16.gmra.mrb[0].mxu0 %v3518
  %v4178 = vpop.f32.mrb[0].mxu0
  %v4179 = vadd.f32 %v4091, %v4178
  %v4180 = vpop.f32.mrb[0].mxu0
  %v4181 = vpop.f32.mrb[0].mxu0
  %v4182 = vadd.f32 %v4094, %v4181
  %v4183 = vpop.f32.mrb[0].mxu0
  %4184 = vmatprep.mubr.bf16.mxu0 %v3532
  %4185 = vmatmul.mubr.bf16.gmra.mrb[0].mxu0 %v3531
  %v4186 = vpop.f32.mrb[0].mxu0
  %v4187 = vadd.f32 %v4099, %v4186
  %v4188 = vpop.f32.mrb[0].mxu0
  %v4189 = vpop.f32.mrb[0].mxu0
  %v4190 = vadd.f32 %v4102, %v4189
  %v4191 = vpop.f32.mrb[0].mxu0
  %4192 = vmatprep.mubr.bf16.mxu0 %v3545
  %4193 = vmatmul.mubr.bf16.gmra.mrb[0].mxu0 %v3544
  %v4194 = vpop.f32.mrb[0].mxu0
  %v4195 = vadd.f32 %v4107, %v4194
  %v4196 = vpop.f32.mrb[0].mxu0
  %v4197 = vpop.f32.mrb[0].mxu0
  %v4198 = vadd.f32 %v4110, %v4197
  %v4199 = vpop.f32.mrb[0].mxu0
  %4200 = vmatprep.mubr.bf16.mxu0 %v3558
  %4201 = vmatmul.mubr.bf16.gmra.mrb[0].mxu0 %v3557
  %v4202 = vpop.f32.mrb[0].mxu0
  %v4203 = vadd.f32 %v4115, %v4202
  %v4204 = vpop.f32.mrb[0].mxu0
  %v4205 = vpop.f32.mrb[0].mxu0
  %v4206 = vadd.f32 %v4118, %v4205
  %v4207 = vpop.f32.mrb[0].mxu0
  %4208 = vmatprep.mubr.bf16.mxu0 %v3571
  %4209 = vmatmul.mubr.bf16.gmra.mrb[0].mxu0 %v3570
  %v4210 = vpop.f32.mrb[0].mxu0
  %v4211 = vadd.f32 %v4123, %v4210
  %v4212 = vpop.f32.mrb[0].mxu0
  %v4213 = vpop.f32.mrb[0].mxu0
  %v4214 = vadd.f32 %v4126, %v4213
  %v4215 = vpop.f32.mrb[0].mxu0
  %4216 = vmatprep.mubr.bf16.mxu0 %v3584
  %4217 = vmatmul.mubr.bf16.gmra.mrb[0].mxu0 %v3583
  %v4218 = vpop.f32.mrb[0].mxu0
  %v4219 = vadd.f32 %v4131, %v4218
  %v4220 = vpop.f32.mrb[0].mxu0
  %v4221 = vpop.f32.mrb[0].mxu0
  %v4222 = vadd.f32 %v4134, %v4221
  %v4223 = vpop.f32.mrb[0].mxu0
  %4224 = vmatprep.mubr.bf16.mxu0 %v3597
  %4225 = vmatmul.mubr.bf16.gmra.mrb[0].mxu0 %v3596
  %v4226 = vpop.f32.mrb[0].mxu0
  %v4227 = vadd.f32 %v4139, %v4226
  %v4228 = vpop.f32.mrb[0].mxu0
  %v4229 = vpop.f32.mrb[0].mxu0
  %v4230 = vpop.f32.mrb[0].mxu0
  %4231 = vdwg.mxu0
  %4232 = vmatprep.subr.bf16.mxu0 0
  %4233 = vmatpush1.bf16.msra.mxu0 %v1237
  %4234 = vmatprep.subr.bf16.mxu0 0
  %4235 = vmatpush1.bf16.msra.mxu0 %v1238
  %4236 = vmatprep.subr.bf16.mxu0 0
  %4237 = vmatpush1.bf16.msra.mxu0 %v1239
  %4238 = vmatprep.subr.bf16.mxu0 0
  %4239 = vmatpush1.bf16.msra.mxu0 %v1240
  %4240 = vmatprep.subr.bf16.mxu0 0
  %4241 = vmatpush1.bf16.msra.mxu0 0
  %4242 = vmatprep.subr.bf16.mxu0 0
  %4243 = vmatpush1.bf16.msra.mxu0 0
  %4244 = vmatprep.subr.bf16.mxu0 0
  %4245 = vmatpush1.bf16.msra.mxu0 0
  %4246 = vmatprep.subr.bf16.mxu0 0
  %4247 = vmatpush1.bf16.msra.mxu0 0
  %4248 = vmatprep.subr.bf16.mxu0 0
  %4249 = vmatpush1.bf16.msra.mxu0 0
  %4250 = vmatprep.subr.bf16.mxu0 0
  %4251 = vmatpush1.bf16.msra.mxu0 0
  %4252 = vmatprep.subr.bf16.mxu0 0
  %4253 = vmatpush1.bf16.msra.mxu0 0
  %4254 = vmatprep.subr.bf16.mxu0 0
  %4255 = vmatpush1.bf16.msra.mxu0 0
  %4256 = vmatprep.subr.bf16.mxu0 0
  %4257 = vmatpush1.bf16.msra.mxu0 0
  %4258 = vmatprep.subr.bf16.mxu0 0
  %4259 = vmatpush1.bf16.msra.mxu0 0
  %4260 = vmatprep.subr.bf16.mxu0 0
  %4261 = vmatpush1.bf16.msra.mxu0 0
  %4262 = vmatprep.subr.bf16.mxu0 0
  %4263 = vmatpush1.bf16.msra.mxu0 0
  %4264 = vmatprep.mubr.bf16.mxu0 0
  %4265 = vmatmul.mubr.bf16.gmra.mrb[0].mxu0 %v3684
  %v4266 = vpop.f32.mrb[0].mxu0
  %v4267 = vadd.f32 %v4179, %v4266
  %v4268 = vpop.f32.mrb[0].mxu0
  %v4269 = vpop.f32.mrb[0].mxu0
  %v4270 = vadd.f32 %v4182, %v4269
  %v4271 = vpop.f32.mrb[0].mxu0
  %4272 = vmatprep.mubr.bf16.mxu0 0
  %4273 = vmatmul.mubr.bf16.gmra.mrb[0].mxu0 %v3687
  %v4274 = vpop.f32.mrb[0].mxu0
  %v4275 = vadd.f32 %v4187, %v4274
  %v4276 = vpop.f32.mrb[0].mxu0
  %v4277 = vpop.f32.mrb[0].mxu0
  %v4278 = vadd.f32 %v4190, %v4277
  %v4279 = vpop.f32.mrb[0].mxu0
  %4280 = vmatprep.mubr.bf16.mxu0 0
  %4281 = vmatmul.mubr.bf16.gmra.mrb[0].mxu0 %v3690
  %v4282 = vpop.f32.mrb[0].mxu0
  %v4283 = vadd.f32 %v4195, %v4282
  %v4284 = vpop.f32.mrb[0].mxu0
  %v4285 = vpop.f32.mrb[0].mxu0
  %v4286 = vadd.f32 %v4198, %v4285
  %v4287 = vpop.f32.mrb[0].mxu0
  %4288 = vmatprep.mubr.bf16.mxu0 0
  %4289 = vmatmul.mubr.bf16.gmra.mrb[0].mxu0 %v3693
  %v4290 = vpop.f32.mrb[0].mxu0
  %v4291 = vadd.f32 %v4203, %v4290
  %v4292 = vpop.f32.mrb[0].mxu0
  %v4293 = vpop.f32.mrb[0].mxu0
  %v4294 = vadd.f32 %v4206, %v4293
  %v4295 = vpop.f32.mrb[0].mxu0
  %4296 = vmatprep.mubr.bf16.mxu0 0
  %4297 = vmatmul.mubr.bf16.gmra.mrb[0].mxu0 %v3696
  %v4298 = vpop.f32.mrb[0].mxu0
  %v4299 = vadd.f32 %v4211, %v4298
  %v4300 = vpop.f32.mrb[0].mxu0
  %v4301 = vpop.f32.mrb[0].mxu0
  %v4302 = vadd.f32 %v4214, %v4301
  %v4303 = vpop.f32.mrb[0].mxu0
  %4304 = vmatprep.mubr.bf16.mxu0 0
  %4305 = vmatmul.mubr.bf16.gmra.mrb[0].mxu0 %v3699
  %v4306 = vpop.f32.mrb[0].mxu0
  %v4307 = vadd.f32 %v4219, %v4306
  %v4308 = vpop.f32.mrb[0].mxu0
  %v4309 = vpop.f32.mrb[0].mxu0
  %v4310 = vadd.f32 %v4222, %v4309
  %v4311 = vpop.f32.mrb[0].mxu0
  %4312 = vmatprep.mubr.bf16.mxu0 0
  %4313 = vmatmul.mubr.bf16.gmra.mrb[0].mxu0 %v3702
  %v4314 = vpop.f32.mrb[0].mxu0
  %v4315 = vadd.f32 %v4227, %v4314
  %v4316 = vpop.f32.mrb[0].mxu0
  %v4317 = vpop.f32.mrb[0].mxu0
  %v4318 = vpop.f32.mrb[0].mxu0
  %4319 = vdwg.mxu0
  %v4320 = vmax.f32 %v3143, %v4267
  %v4321 = vmax.f32 %v3144, %v4270
  %v4322 = vmax.f32 %v3145, %v4275
  %v4323 = vmax.f32 %v3146, %v4278
  %v4324 = vmax.f32 %v3147, %v4283
  %v4325 = vmax.f32 %v3148, %v4286
  %v4326 = vmax.f32 %v3149, %v4291
  %v4327 = vmax.f32 %v3150, %v4294
  %v4328 = vmax.f32 %v3151, %v4299
  %v4329 = vmax.f32 %v3152, %v4302
  %v4330 = vmax.f32 %v3153, %v4307
  %v4331 = vmax.f32 %v3154, %v4310
  %v4332 = vmax.f32 %v3155, %v4315
  %s4333 = scalar_lea.vmem %s0, 2028
  %v4334 = vld [vmem:[%s4333] sm:$0xff]
  %v4335 = vld [vmem:[%s4333 + $0x8] sm:$0xff]
  %v4336 = vld [vmem:[%s4333 + $0x10] sm:$0xff]
  %v4337 = vld [vmem:[%s4333 + $0x18] sm:$0xff]
  %v4338 = vld [vmem:[%s4333 + $0x20] sm:$0xff]
  %v4339 = vld [vmem:[%s4333 + $0x28] sm:$0xff]
  %v4340 = vld [vmem:[%s4333 + $0x30] sm:$0xf]
  %v4341 = vld [vmem:[%s4333 + $0x34] sm:$0xff]
  %v4342 = vld [vmem:[%s4333 + $0x3c] sm:$0xff]
  %v4343 = vld [vmem:[%s4333 + $0x44] sm:$0xff]
  %v4344 = vld [vmem:[%s4333 + $0x4c] sm:$0xff]
  %v4345 = vld [vmem:[%s4333 + $0x54] sm:$0xff]
  %v4346 = vld [vmem:[%s4333 + $0x5c] sm:$0xff]
  %v4347 = vld [vmem:[%s4333 + $0x64] sm:$0xf]
  %v4348 = vld [vmem:[%s4333 + $0x68] sm:$0xff]
  %v4349 = vld [vmem:[%s4333 + $0x70] sm:$0xff]
  %v4350 = vld [vmem:[%s4333 + $0x78] sm:$0xff]
  %v4351 = vld [vmem:[%s4333 + $0x80] sm:$0xff]
  %v4352 = vld [vmem:[%s4333 + $0x88] sm:$0xff]
  %v4353 = vld [vmem:[%s4333 + $0x90] sm:$0xff]
  %v4354 = vld [vmem:[%s4333 + $0x98] sm:$0xf]
  %v4355 = vld [vmem:[%s4333 + $0x9c] sm:$0xff]
  %v4356 = vld [vmem:[%s4333 + $0xa4] sm:$0xff]
  %v4357 = vld [vmem:[%s4333 + $0xac] sm:$0xff]
  %v4358 = vld [vmem:[%s4333 + $0xb4] sm:$0xff]
  %v4359 = vld [vmem:[%s4333 + $0xbc] sm:$0xff]
  %v4360 = vld [vmem:[%s4333 + $0xc4] sm:$0xff]
  %v4361 = vld [vmem:[%s4333 + $0xcc] sm:$0xf]
  %v4362 = vld [vmem:[%s4333 + $0xd0] sm:$0xff]
  %v4363 = vld [vmem:[%s4333 + $0xd8] sm:$0xff]
  %v4364 = vld [vmem:[%s4333 + $0xe0] sm:$0xff]
  %v4365 = vld [vmem:[%s4333 + $0xe8] sm:$0xff]
  %v4366 = vld [vmem:[%s4333 + $0xf0] sm:$0xff]
  %v4367 = vld [vmem:[%s4333 + $0xf8] sm:$0xff]
  %v4368 = vld [vmem:[%s4333 + $0x100] sm:$0xf]
  %v4369 = vld [vmem:[%s4333 + $0x104] sm:$0xff]
  %v4370 = vld [vmem:[%s4333 + $0x10c] sm:$0xff]
  %v4371 = vld [vmem:[%s4333 + $0x114] sm:$0xff]
  %v4372 = vld [vmem:[%s4333 + $0x11c] sm:$0xff]
  %v4373 = vld [vmem:[%s4333 + $0x124] sm:$0xff]
  %v4374 = vld [vmem:[%s4333 + $0x12c] sm:$0xff]
  %v4375 = vld [vmem:[%s4333 + $0x134] sm:$0xf]
  %v4376 = vld [vmem:[%s4333 + $0x138] sm:$0xff]
  %v4377 = vld [vmem:[%s4333 + $0x140] sm:$0xff]
  %v4378 = vld [vmem:[%s4333 + $0x148] sm:$0xff]
  %v4379 = vld [vmem:[%s4333 + $0x150] sm:$0xff]
  %v4380 = vld [vmem:[%s4333 + $0x158] sm:$0xff]
  %v4381 = vld [vmem:[%s4333 + $0x160] sm:$0xff]
  %v4382 = vld [vmem:[%s4333 + $0x168] sm:$0xf]
  %v4383 = vld [vmem:[%s4333 + $0x16c] sm:$0xff]
  %v4384 = vld [vmem:[%s4333 + $0x174] sm:$0xff]
  %v4385 = vld [vmem:[%s4333 + $0x17c] sm:$0xff]
  %v4386 = vld [vmem:[%s4333 + $0x184] sm:$0xff]
  %v4387 = vld [vmem:[%s4333 + $0x18c] sm:$0xff]
  %v4388 = vld [vmem:[%s4333 + $0x194] sm:$0xff]
  %v4389 = vld [vmem:[%s4333 + $0x19c] sm:$0xf]
  %v4390 = vld [vmem:[%s4333 + $0x1a0] sm:$0xff]
  %v4391 = vld [vmem:[%s4333 + $0x1a8] sm:$0xff]
  %v4392 = vld [vmem:[%s4333 + $0x1b0] sm:$0xff]
  %v4393 = vld [vmem:[%s4333 + $0x1b8] sm:$0xff]
  %v4394 = vld [vmem:[%s4333 + $0x1c0] sm:$0xff]
  %v4395 = vld [vmem:[%s4333 + $0x1c8] sm:$0xff]
  %v4396 = vld [vmem:[%s4333 + $0x1d0] sm:$0xf]
  %v4397 = vld [vmem:[%s4333 + $0x1d4] sm:$0xff]
  %v4398 = vld [vmem:[%s4333 + $0x1dc] sm:$0xff]
  %v4399 = vld [vmem:[%s4333 + $0x1e4] sm:$0xff]
  %v4400 = vld [vmem:[%s4333 + $0x1ec] sm:$0xff]
  %v4401 = vld [vmem:[%s4333 + $0x1f4] sm:$0xff]
  %v4402 = vld [vmem:[%s4333 + $0x1fc] sm:$0xff]
  %v4403 = vld [vmem:[%s4333 + $0x204] sm:$0xf]
  %v4404 = vld [vmem:[%s4333 + $0x208] sm:$0xff]
  %v4405 = vld [vmem:[%s4333 + $0x210] sm:$0xff]
  %v4406 = vld [vmem:[%s4333 + $0x218] sm:$0xff]
  %v4407 = vld [vmem:[%s4333 + $0x220] sm:$0xff]
  %v4408 = vld [vmem:[%s4333 + $0x228] sm:$0xff]
  %v4409 = vld [vmem:[%s4333 + $0x230] sm:$0xff]
  %v4410 = vld [vmem:[%s4333 + $0x238] sm:$0xf]
  %v4411 = vld [vmem:[%s4333 + $0x23c] sm:$0xff]
  %v4412 = vld [vmem:[%s4333 + $0x244] sm:$0xff]
  %v4413 = vld [vmem:[%s4333 + $0x24c] sm:$0xff]
  %v4414 = vld [vmem:[%s4333 + $0x254] sm:$0xff]
  %v4415 = vld [vmem:[%s4333 + $0x25c] sm:$0xff]
  %v4416 = vld [vmem:[%s4333 + $0x264] sm:$0xff]
  %v4417 = vld [vmem:[%s4333 + $0x26c] sm:$0xf]
  %v4418 = vld [vmem:[%s4333 + $0x270] sm:$0x33]
  %v4419 = vld [vmem:[%s4333 + $0x278] sm:$0x33]
  %v4420 = vld [vmem:[%s4333 + $0x280] sm:$0x33]
  %v4421 = vld [vmem:[%s4333 + $0x288] sm:$0x33]
  %v4422 = vld [vmem:[%s4333 + $0x290] sm:$0x33]
  %v4423 = vld [vmem:[%s4333 + $0x298] sm:$0x33]
  %v4424 = vld [vmem:[%s4333 + $0x2a0] sm:$0x3]
  %v4516 = vunpack.c.l.b16 %v4334
  %v4517 = vunpack.c.h.b16 %v4334
  %v4518 = vunpack.c.l.b16 %v4335
  %v4519 = vunpack.c.h.b16 %v4335
  %v4520 = vunpack.c.l.b16 %v4336
  %v4521 = vunpack.c.h.b16 %v4336
  %v4522 = vunpack.c.l.b16 %v4337
  %v4523 = vunpack.c.h.b16 %v4337
  %v4524 = vunpack.c.l.b16 %v4338
  %v4525 = vunpack.c.h.b16 %v4338
  %v4526 = vunpack.c.l.b16 %v4339
  %v4527 = vunpack.c.h.b16 %v4339
  %v4528 = vunpack.c.l.b16 %v4340
  %v4529 = vunpack.c.l.b16 %v4341
  %v4530 = vunpack.c.h.b16 %v4341
  %v4531 = vunpack.c.l.b16 %v4342
  %v4532 = vunpack.c.h.b16 %v4342
  %v4533 = vunpack.c.l.b16 %v4343
  %v4534 = vunpack.c.h.b16 %v4343
  %v4535 = vunpack.c.l.b16 %v4344
  %v4536 = vunpack.c.h.b16 %v4344
  %v4537 = vunpack.c.l.b16 %v4345
  %v4538 = vunpack.c.h.b16 %v4345
  %v4539 = vunpack.c.l.b16 %v4346
  %v4540 = vunpack.c.h.b16 %v4346
  %v4541 = vunpack.c.l.b16 %v4347
  %v4542 = vunpack.c.l.b16 %v4348
  %v4543 = vunpack.c.h.b16 %v4348
  %v4544 = vunpack.c.l.b16 %v4349
  %v4545 = vunpack.c.h.b16 %v4349
  %v4546 = vunpack.c.l.b16 %v4350
  %v4547 = vunpack.c.h.b16 %v4350
  %v4548 = vunpack.c.l.b16 %v4351
  %v4549 = vunpack.c.h.b16 %v4351
  %v4550 = vunpack.c.l.b16 %v4352
  %v4551 = vunpack.c.h.b16 %v4352
  %v4552 = vunpack.c.l.b16 %v4353
  %v4553 = vunpack.c.h.b16 %v4353
  %v4554 = vunpack.c.l.b16 %v4354
  %v4555 = vunpack.c.l.b16 %v4355
  %v4556 = vunpack.c.h.b16 %v4355
  %v4557 = vunpack.c.l.b16 %v4356
  %v4558 = vunpack.c.h.b16 %v4356
  %v4559 = vunpack.c.l.b16 %v4357
  %v4560 = vunpack.c.h.b16 %v4357
  %v4561 = vunpack.c.l.b16 %v4358
  %v4562 = vunpack.c.h.b16 %v4358
  %v4563 = vunpack.c.l.b16 %v4359
  %v4564 = vunpack.c.h.b16 %v4359
  %v4565 = vunpack.c.l.b16 %v4360
  %v4566 = vunpack.c.h.b16 %v4360
  %v4567 = vunpack.c.l.b16 %v4361
  %v4568 = vunpack.c.l.b16 %v4362
  %v4569 = vunpack.c.h.b16 %v4362
  %v4570 = vunpack.c.l.b16 %v4363
  %v4571 = vunpack.c.h.b16 %v4363
  %v4572 = vunpack.c.l.b16 %v4364
  %v4573 = vunpack.c.h.b16 %v4364
  %v4574 = vunpack.c.l.b16 %v4365
  %v4575 = vunpack.c.h.b16 %v4365
  %v4576 = vunpack.c.l.b16 %v4366
  %v4577 = vunpack.c.h.b16 %v4366
  %v4578 = vunpack.c.l.b16 %v4367
  %v4579 = vunpack.c.h.b16 %v4367
  %v4580 = vunpack.c.l.b16 %v4368
  %v4581 = vunpack.c.l.b16 %v4369
  %v4582 = vunpack.c.h.b16 %v4369
  %v4583 = vunpack.c.l.b16 %v4370
  %v4584 = vunpack.c.h.b16 %v4370
  %v4585 = vunpack.c.l.b16 %v4371
  %v4586 = vunpack.c.h.b16 %v4371
  %v4587 = vunpack.c.l.b16 %v4372
  %v4588 = vunpack.c.h.b16 %v4372
  %v4589 = vunpack.c.l.b16 %v4373
  %v4590 = vunpack.c.h.b16 %v4373
  %v4591 = vunpack.c.l.b16 %v4374
  %v4592 = vunpack.c.h.b16 %v4374
  %v4593 = vunpack.c.l.b16 %v4375
  %v4594 = vunpack.c.l.b16 %v4376
  %v4595 = vunpack.c.h.b16 %v4376
  %v4596 = vunpack.c.l.b16 %v4377
  %v4597 = vunpack.c.h.b16 %v4377
  %v4598 = vunpack.c.l.b16 %v4378
  %v4599 = vunpack.c.h.b16 %v4378
  %v4600 = vunpack.c.l.b16 %v4379
  %v4601 = vunpack.c.h.b16 %v4379
  %v4602 = vunpack.c.l.b16 %v4380
  %v4603 = vunpack.c.h.b16 %v4380
  %v4604 = vunpack.c.l.b16 %v4381
  %v4605 = vunpack.c.h.b16 %v4381
  %v4606 = vunpack.c.l.b16 %v4382
  %v4607 = vunpack.c.l.b16 %v4383
  %v4608 = vunpack.c.h.b16 %v4383
  %v4609 = vunpack.c.l.b16 %v4384
  %v4610 = vunpack.c.h.b16 %v4384
  %v4611 = vunpack.c.l.b16 %v4385
  %v4612 = vunpack.c.h.b16 %v4385
  %v4613 = vunpack.c.l.b16 %v4386
  %v4614 = vunpack.c.h.b16 %v4386
  %v4615 = vunpack.c.l.b16 %v4387
  %v4616 = vunpack.c.h.b16 %v4387
  %v4617 = vunpack.c.l.b16 %v4388
  %v4618 = vunpack.c.h.b16 %v4388
  %v4619 = vunpack.c.l.b16 %v4389
  %v4620 = vunpack.c.l.b16 %v4390
  %v4621 = vunpack.c.h.b16 %v4390
  %v4622 = vunpack.c.l.b16 %v4391
  %v4623 = vunpack.c.h.b16 %v4391
  %v4624 = vunpack.c.l.b16 %v4392
  %v4625 = vunpack.c.h.b16 %v4392
  %v4626 = vunpack.c.l.b16 %v4393
  %v4627 = vunpack.c.h.b16 %v4393
  %v4628 = vunpack.c.l.b16 %v4394
  %v4629 = vunpack.c.h.b16 %v4394
  %v4630 = vunpack.c.l.b16 %v4395
  %v4631 = vunpack.c.h.b16 %v4395
  %v4632 = vunpack.c.l.b16 %v4396
  %v4633 = vunpack.c.l.b16 %v4397
  %v4634 = vunpack.c.h.b16 %v4397
  %v4635 = vunpack.c.l.b16 %v4398
  %v4636 = vunpack.c.h.b16 %v4398
  %v4637 = vunpack.c.l.b16 %v4399
  %v4638 = vunpack.c.h.b16 %v4399
  %v4639 = vunpack.c.l.b16 %v4400
  %v4640 = vunpack.c.h.b16 %v4400
  %v4641 = vunpack.c.l.b16 %v4401
  %v4642 = vunpack.c.h.b16 %v4401
  %v4643 = vunpack.c.l.b16 %v4402
  %v4644 = vunpack.c.h.b16 %v4402
  %v4645 = vunpack.c.l.b16 %v4403
  %v4646 = vunpack.c.l.b16 %v4404
  %v4647 = vunpack.c.h.b16 %v4404
  %v4648 = vunpack.c.l.b16 %v4405
  %v4649 = vunpack.c.h.b16 %v4405
  %v4650 = vunpack.c.l.b16 %v4406
  %v4651 = vunpack.c.h.b16 %v4406
  %v4652 = vunpack.c.l.b16 %v4407
  %v4653 = vunpack.c.h.b16 %v4407
  %v4654 = vunpack.c.l.b16 %v4408
  %v4655 = vunpack.c.h.b16 %v4408
  %v4656 = vunpack.c.l.b16 %v4409
  %v4657 = vunpack.c.h.b16 %v4409
  %v4658 = vunpack.c.l.b16 %v4410
  %v4659 = vunpack.c.l.b16 %v4411
  %v4660 = vunpack.c.h.b16 %v4411
  %v4661 = vunpack.c.l.b16 %v4412
  %v4662 = vunpack.c.h.b16 %v4412
  %v4663 = vunpack.c.l.b16 %v4413
  %v4664 = vunpack.c.h.b16 %v4413
  %v4665 = vunpack.c.l.b16 %v4414
  %v4666 = vunpack.c.h.b16 %v4414
  %v4667 = vunpack.c.l.b16 %v4415
  %v4668 = vunpack.c.h.b16 %v4415
  %v4669 = vunpack.c.l.b16 %v4416
  %v4670 = vunpack.c.h.b16 %v4416
  %v4671 = vunpack.c.l.b16 %v4417
  %v4672 = vunpack.c.l.b16 %v4418
  %v4673 = vunpack.c.h.b16 %v4418
  %v4674 = vunpack.c.l.b16 %v4419
  %v4675 = vunpack.c.h.b16 %v4419
  %v4676 = vunpack.c.l.b16 %v4420
  %v4677 = vunpack.c.h.b16 %v4420
  %v4678 = vunpack.c.l.b16 %v4421
  %v4679 = vunpack.c.h.b16 %v4421
  %v4680 = vunpack.c.l.b16 %v4422
  %v4681 = vunpack.c.h.b16 %v4422
  %v4682 = vunpack.c.l.b16 %v4423
  %v4683 = vunpack.c.h.b16 %v4423
  %v4684 = vunpack.c.l.b16 %v4424
  %v4685 = vpack.c.b16 %v4529, %v4516
  %v4686 = vpack.c.b16 %v4530, %v4517
  %v4687 = vpack.c.b16 %v4531, %v4518
  %v4688 = vpack.c.b16 %v4532, %v4519
  %v4689 = vpack.c.b16 %v4533, %v4520
  %v4690 = vpack.c.b16 %v4534, %v4521
  %v4691 = vpack.c.b16 %v4535, %v4522
  %v4692 = vpack.c.b16 %v4536, %v4523
  %v4693 = vpack.c.b16 %v4537, %v4524
  %v4694 = vpack.c.b16 %v4538, %v4525
  %v4695 = vpack.c.b16 %v4539, %v4526
  %v4696 = vpack.c.b16 %v4540, %v4527
  %v4697 = vpack.c.b16 %v4541, %v4528
  %v4698 = vpack.c.b16 %v4555, %v4542
  %v4699 = vpack.c.b16 %v4556, %v4543
  %v4700 = vpack.c.b16 %v4557, %v4544
  %v4701 = vpack.c.b16 %v4558, %v4545
  %v4702 = vpack.c.b16 %v4559, %v4546
  %v4703 = vpack.c.b16 %v4560, %v4547
  %v4704 = vpack.c.b16 %v4561, %v4548
  %v4705 = vpack.c.b16 %v4562, %v4549
  %v4706 = vpack.c.b16 %v4563, %v4550
  %v4707 = vpack.c.b16 %v4564, %v4551
  %v4708 = vpack.c.b16 %v4565, %v4552
  %v4709 = vpack.c.b16 %v4566, %v4553
  %v4710 = vpack.c.b16 %v4567, %v4554
  %v4711 = vpack.c.b16 %v4581, %v4568
  %v4712 = vpack.c.b16 %v4582, %v4569
  %v4713 = vpack.c.b16 %v4583, %v4570
  %v4714 = vpack.c.b16 %v4584, %v4571
  %v4715 = vpack.c.b16 %v4585, %v4572
  %v4716 = vpack.c.b16 %v4586, %v4573
  %v4717 = vpack.c.b16 %v4587, %v4574
  %v4718 = vpack.c.b16 %v4588, %v4575
  %v4719 = vpack.c.b16 %v4589, %v4576
  %v4720 = vpack.c.b16 %v4590, %v4577
  %v4721 = vpack.c.b16 %v4591, %v4578
  %v4722 = vpack.c.b16 %v4592, %v4579
  %v4723 = vpack.c.b16 %v4593, %v4580
  %v4724 = vpack.c.b16 %v4607, %v4594
  %v4725 = vpack.c.b16 %v4608, %v4595
  %v4726 = vpack.c.b16 %v4609, %v4596
  %v4727 = vpack.c.b16 %v4610, %v4597
  %v4728 = vpack.c.b16 %v4611, %v4598
  %v4729 = vpack.c.b16 %v4612, %v4599
  %v4730 = vpack.c.b16 %v4613, %v4600
  %v4731 = vpack.c.b16 %v4614, %v4601
  %v4732 = vpack.c.b16 %v4615, %v4602
  %v4733 = vpack.c.b16 %v4616, %v4603
  %v4734 = vpack.c.b16 %v4617, %v4604
  %v4735 = vpack.c.b16 %v4618, %v4605
  %v4736 = vpack.c.b16 %v4619, %v4606
  %v4737 = vpack.c.b16 %v4633, %v4620
  %v4738 = vpack.c.b16 %v4634, %v4621
  %v4739 = vpack.c.b16 %v4635, %v4622
  %v4740 = vpack.c.b16 %v4636, %v4623
  %v4741 = vpack.c.b16 %v4637, %v4624
  %v4742 = vpack.c.b16 %v4638, %v4625
  %v4743 = vpack.c.b16 %v4639, %v4626
  %v4744 = vpack.c.b16 %v4640, %v4627
  %v4745 = vpack.c.b16 %v4641, %v4628
  %v4746 = vpack.c.b16 %v4642, %v4629
  %v4747 = vpack.c.b16 %v4643, %v4630
  %v4748 = vpack.c.b16 %v4644, %v4631
  %v4749 = vpack.c.b16 %v4645, %v4632
  %v4750 = vpack.c.b16 %v4659, %v4646
  %v4751 = vpack.c.b16 %v4660, %v4647
  %v4752 = vpack.c.b16 %v4661, %v4648
  %v4753 = vpack.c.b16 %v4662, %v4649
  %v4754 = vpack.c.b16 %v4663, %v4650
  %v4755 = vpack.c.b16 %v4664, %v4651
  %v4756 = vpack.c.b16 %v4665, %v4652
  %v4757 = vpack.c.b16 %v4666, %v4653
  %v4758 = vpack.c.b16 %v4667, %v4654
  %v4759 = vpack.c.b16 %v4668, %v4655
  %v4760 = vpack.c.b16 %v4669, %v4656
  %v4761 = vpack.c.b16 %v4670, %v4657
  %v4762 = vpack.c.b16 %v4671, %v4658
  %v4763 = vpack.c.b16 %v4672, %v4672
  %v4764 = vpack.c.b16 %v4673, %v4673
  %v4765 = vpack.c.b16 %v4674, %v4674
  %v4766 = vpack.c.b16 %v4675, %v4675
  %v4767 = vpack.c.b16 %v4676, %v4676
  %v4768 = vpack.c.b16 %v4677, %v4677
  %v4769 = vpack.c.b16 %v4678, %v4678
  %v4770 = vpack.c.b16 %v4679, %v4679
  %v4771 = vpack.c.b16 %v4680, %v4680
  %v4772 = vpack.c.b16 %v4681, %v4681
  %v4773 = vpack.c.b16 %v4682, %v4682
  %v4774 = vpack.c.b16 %v4683, %v4683
  %v4775 = vpack.c.b16 %v4684, %v4684
  %v4861 = vsel %vm1341, %v4697, 0
  %v4864 = vsel %vm1341, %v4710, 0
  %v4867 = vsel %vm1341, %v4723, 0
  %v4870 = vsel %vm1341, %v4736, 0
  %v4873 = vsel %vm1341, %v4749, 0
  %v4876 = vsel %vm1341, %v4762, 0
  %v4879 = vsel %vm1341, %v4775, 0
  %4881 = vmatprep.subr.bf16.mxu0 0
  %4882 = vmatpush1.bf16.msra.mxu0 %v1141
  %4883 = vmatprep.subr.bf16.mxu0 0
  %4884 = vmatpush1.bf16.msra.mxu0 %v1142
  %4885 = vmatprep.subr.bf16.mxu0 0
  %4886 = vmatpush1.bf16.msra.mxu0 %v1143
  %4887 = vmatprep.subr.bf16.mxu0 0
  %4888 = vmatpush1.bf16.msra.mxu0 %v1144
  %4889 = vmatprep.subr.bf16.mxu0 0
  %4890 = vmatpush1.bf16.msra.mxu0 %v1145
  %4891 = vmatprep.subr.bf16.mxu0 0
  %4892 = vmatpush1.bf16.msra.mxu0 %v1146
  %4893 = vmatprep.subr.bf16.mxu0 0
  %4894 = vmatpush1.bf16.msra.mxu0 %v1147
  %4895 = vmatprep.subr.bf16.mxu0 0
  %4896 = vmatpush1.bf16.msra.mxu0 %v1148
  %4897 = vmatprep.subr.bf16.mxu0 0
  %4898 = vmatpush1.bf16.msra.mxu0 %v1149
  %4899 = vmatprep.subr.bf16.mxu0 0
  %4900 = vmatpush1.bf16.msra.mxu0 %v1150
  %4901 = vmatprep.subr.bf16.mxu0 0
  %4902 = vmatpush1.bf16.msra.mxu0 %v1151
  %4903 = vmatprep.subr.bf16.mxu0 0
  %4904 = vmatpush1.bf16.msra.mxu0 %v1152
  %4905 = vmatprep.subr.bf16.mxu0 0
  %4906 = vmatpush1.bf16.msra.mxu0 %v1153
  %4907 = vmatprep.subr.bf16.mxu0 0
  %4908 = vmatpush1.bf16.msra.mxu0 %v1154
  %4909 = vmatprep.subr.bf16.mxu0 0
  %4910 = vmatpush1.bf16.msra.mxu0 %v1155
  %4911 = vmatprep.subr.bf16.mxu0 0
  %4912 = vmatpush1.bf16.msra.mxu0 %v1156
  %4913 = vmatprep.mubr.bf16.mxu0 %v4686
  %4914 = vmatmul.mubr.bf16.gmra.mrb[0].mxu0 %v4685
  %v4915 = vpop.f32.mrb[0].mxu0
  %v4916 = vadd.f32 0.0, %v4915
  %v4917 = vpop.f32.mrb[0].mxu0
  %v4918 = vpop.f32.mrb[0].mxu0
  %v4919 = vadd.f32 0.0, %v4918
  %v4920 = vpop.f32.mrb[0].mxu0
  %4921 = vmatprep.mubr.bf16.mxu0 %v4699
  %4922 = vmatmul.mubr.bf16.gmra.mrb[0].mxu0 %v4698
  %v4923 = vpop.f32.mrb[0].mxu0
  %v4924 = vadd.f32 0.0, %v4923
  %v4925 = vpop.f32.mrb[0].mxu0
  %v4926 = vpop.f32.mrb[0].mxu0
  %v4927 = vadd.f32 0.0, %v4926
  %v4928 = vpop.f32.mrb[0].mxu0
  %4929 = vmatprep.mubr.bf16.mxu0 %v4712
  %4930 = vmatmul.mubr.bf16.gmra.mrb[0].mxu0 %v4711
  %v4931 = vpop.f32.mrb[0].mxu0
  %v4932 = vadd.f32 0.0, %v4931
  %v4933 = vpop.f32.mrb[0].mxu0
  %v4934 = vpop.f32.mrb[0].mxu0
  %v4935 = vadd.f32 0.0, %v4934
  %v4936 = vpop.f32.mrb[0].mxu0
  %4937 = vmatprep.mubr.bf16.mxu0 %v4725
  %4938 = vmatmul.mubr.bf16.gmra.mrb[0].mxu0 %v4724
  %v4939 = vpop.f32.mrb[0].mxu0
  %v4940 = vadd.f32 0.0, %v4939
  %v4941 = vpop.f32.mrb[0].mxu0
  %v4942 = vpop.f32.mrb[0].mxu0
  %v4943 = vadd.f32 0.0, %v4942
  %v4944 = vpop.f32.mrb[0].mxu0
  %4945 = vmatprep.mubr.bf16.mxu0 %v4738
  %4946 = vmatmul.mubr.bf16.gmra.mrb[0].mxu0 %v4737
  %v4947 = vpop.f32.mrb[0].mxu0
  %v4948 = vadd.f32 0.0, %v4947
  %v4949 = vpop.f32.mrb[0].mxu0
  %v4950 = vpop.f32.mrb[0].mxu0
  %v4951 = vadd.f32 0.0, %v4950
  %v4952 = vpop.f32.mrb[0].mxu0
  %4953 = vmatprep.mubr.bf16.mxu0 %v4751
  %4954 = vmatmul.mubr.bf16.gmra.mrb[0].mxu0 %v4750
  %v4955 = vpop.f32.mrb[0].mxu0
  %v4956 = vadd.f32 0.0, %v4955
  %v4957 = vpop.f32.mrb[0].mxu0
  %v4958 = vpop.f32.mrb[0].mxu0
  %v4959 = vadd.f32 0.0, %v4958
  %v4960 = vpop.f32.mrb[0].mxu0
  %4961 = vmatprep.mubr.bf16.mxu0 %v4764
  %4962 = vmatmul.mubr.bf16.gmra.mrb[0].mxu0 %v4763
  %v4963 = vpop.f32.mrb[0].mxu0
  %v4964 = vadd.f32 0.0, %v4963
  %v4965 = vpop.f32.mrb[0].mxu0
  %v4966 = vpop.f32.mrb[0].mxu0
  %v4967 = vpop.f32.mrb[0].mxu0
  %4968 = vdwg.mxu0
  %4969 = vmatprep.subr.bf16.mxu0 0
  %4970 = vmatpush1.bf16.msra.mxu0 %v1157
  %4971 = vmatprep.subr.bf16.mxu0 0
  %4972 = vmatpush1.bf16.msra.mxu0 %v1158
  %4973 = vmatprep.subr.bf16.mxu0 0
  %4974 = vmatpush1.bf16.msra.mxu0 %v1159
  %4975 = vmatprep.subr.bf16.mxu0 0
  %4976 = vmatpush1.bf16.msra.mxu0 %v1160
  %4977 = vmatprep.subr.bf16.mxu0 0
  %4978 = vmatpush1.bf16.msra.mxu0 %v1161
  %4979 = vmatprep.subr.bf16.mxu0 0
  %4980 = vmatpush1.bf16.msra.mxu0 %v1162
  %4981 = vmatprep.subr.bf16.mxu0 0
  %4982 = vmatpush1.bf16.msra.mxu0 %v1163
  %4983 = vmatprep.subr.bf16.mxu0 0
  %4984 = vmatpush1.bf16.msra.mxu0 %v1164
  %4985 = vmatprep.subr.bf16.mxu0 0
  %4986 = vmatpush1.bf16.msra.mxu0 %v1165
  %4987 = vmatprep.subr.bf16.mxu0 0
  %4988 = vmatpush1.bf16.msra.mxu0 %v1166
  %4989 = vmatprep.subr.bf16.mxu0 0
  %4990 = vmatpush1.bf16.msra.mxu0 %v1167
  %4991 = vmatprep.subr.bf16.mxu0 0
  %4992 = vmatpush1.bf16.msra.mxu0 %v1168
  %4993 = vmatprep.subr.bf16.mxu0 0
  %4994 = vmatpush1.bf16.msra.mxu0 %v1169
  %4995 = vmatprep.subr.bf16.mxu0 0
  %4996 = vmatpush1.bf16.msra.mxu0 %v1170
  %4997 = vmatprep.subr.bf16.mxu0 0
  %4998 = vmatpush1.bf16.msra.mxu0 %v1171
  %4999 = vmatprep.subr.bf16.mxu0 0
  %5000 = vmatpush1.bf16.msra.mxu0 %v1172
  %5001 = vmatprep.mubr.bf16.mxu0 %v4688
  %5002 = vmatmul.mubr.bf16.gmra.mrb[0].mxu0 %v4687
  %v5003 = vpop.f32.mrb[0].mxu0
  %v5004 = vadd.f32 %v4916, %v5003
  %v5005 = vpop.f32.mrb[0].mxu0
  %v5006 = vpop.f32.mrb[0].mxu0
  %v5007 = vadd.f32 %v4919, %v5006
  %v5008 = vpop.f32.mrb[0].mxu0
  %5009 = vmatprep.mubr.bf16.mxu0 %v4701
  %5010 = vmatmul.mubr.bf16.gmra.mrb[0].mxu0 %v4700
  %v5011 = vpop.f32.mrb[0].mxu0
  %v5012 = vadd.f32 %v4924, %v5011
  %v5013 = vpop.f32.mrb[0].mxu0
  %v5014 = vpop.f32.mrb[0].mxu0
  %v5015 = vadd.f32 %v4927, %v5014
  %v5016 = vpop.f32.mrb[0].mxu0
  %5017 = vmatprep.mubr.bf16.mxu0 %v4714
  %5018 = vmatmul.mubr.bf16.gmra.mrb[0].mxu0 %v4713
  %v5019 = vpop.f32.mrb[0].mxu0
  %v5020 = vadd.f32 %v4932, %v5019
  %v5021 = vpop.f32.mrb[0].mxu0
  %v5022 = vpop.f32.mrb[0].mxu0
  %v5023 = vadd.f32 %v4935, %v5022
  %v5024 = vpop.f32.mrb[0].mxu0
  %5025 = vmatprep.mubr.bf16.mxu0 %v4727
  %5026 = vmatmul.mubr.bf16.gmra.mrb[0].mxu0 %v4726
  %v5027 = vpop.f32.mrb[0].mxu0
  %v5028 = vadd.f32 %v4940, %v5027
  %v5029 = vpop.f32.mrb[0].mxu0
  %v5030 = vpop.f32.mrb[0].mxu0
  %v5031 = vadd.f32 %v4943, %v5030
  %v5032 = vpop.f32.mrb[0].mxu0
  %5033 = vmatprep.mubr.bf16.mxu0 %v4740
  %5034 = vmatmul.mubr.bf16.gmra.mrb[0].mxu0 %v4739
  %v5035 = vpop.f32.mrb[0].mxu0
  %v5036 = vadd.f32 %v4948, %v5035
  %v5037 = vpop.f32.mrb[0].mxu0
  %v5038 = vpop.f32.mrb[0].mxu0
  %v5039 = vadd.f32 %v4951, %v5038
  %v5040 = vpop.f32.mrb[0].mxu0
  %5041 = vmatprep.mubr.bf16.mxu0 %v4753
  %5042 = vmatmul.mubr.bf16.gmra.mrb[0].mxu0 %v4752
  %v5043 = vpop.f32.mrb[0].mxu0
  %v5044 = vadd.f32 %v4956, %v5043
  %v5045 = vpop.f32.mrb[0].mxu0
  %v5046 = vpop.f32.mrb[0].mxu0
  %v5047 = vadd.f32 %v4959, %v5046
  %v5048 = vpop.f32.mrb[0].mxu0
  %5049 = vmatprep.mubr.bf16.mxu0 %v4766
  %5050 = vmatmul.mubr.bf16.gmra.mrb[0].mxu0 %v4765
  %v5051 = vpop.f32.mrb[0].mxu0
  %v5052 = vadd.f32 %v4964, %v5051
  %v5053 = vpop.f32.mrb[0].mxu0
  %v5054 = vpop.f32.mrb[0].mxu0
  %v5055 = vpop.f32.mrb[0].mxu0
  %5056 = vdwg.mxu0
  %5057 = vmatprep.subr.bf16.mxu0 0
  %5058 = vmatpush1.bf16.msra.mxu0 %v1173
  %5059 = vmatprep.subr.bf16.mxu0 0
  %5060 = vmatpush1.bf16.msra.mxu0 %v1174
  %5061 = vmatprep.subr.bf16.mxu0 0
  %5062 = vmatpush1.bf16.msra.mxu0 %v1175
  %5063 = vmatprep.subr.bf16.mxu0 0
  %5064 = vmatpush1.bf16.msra.mxu0 %v1176
  %5065 = vmatprep.subr.bf16.mxu0 0
  %5066 = vmatpush1.bf16.msra.mxu0 %v1177
  %5067 = vmatprep.subr.bf16.mxu0 0
  %5068 = vmatpush1.bf16.msra.mxu0 %v1178
  %5069 = vmatprep.subr.bf16.mxu0 0
  %5070 = vmatpush1.bf16.msra.mxu0 %v1179
  %5071 = vmatprep.subr.bf16.mxu0 0
  %5072 = vmatpush1.bf16.msra.mxu0 %v1180
  %5073 = vmatprep.subr.bf16.mxu0 0
  %5074 = vmatpush1.bf16.msra.mxu0 %v1181
  %5075 = vmatprep.subr.bf16.mxu0 0
  %5076 = vmatpush1.bf16.msra.mxu0 %v1182
  %5077 = vmatprep.subr.bf16.mxu0 0
  %5078 = vmatpush1.bf16.msra.mxu0 %v1183
  %5079 = vmatprep.subr.bf16.mxu0 0
  %5080 = vmatpush1.bf16.msra.mxu0 %v1184
  %5081 = vmatprep.subr.bf16.mxu0 0
  %5082 = vmatpush1.bf16.msra.mxu0 %v1185
  %5083 = vmatprep.subr.bf16.mxu0 0
  %5084 = vmatpush1.bf16.msra.mxu0 %v1186
  %5085 = vmatprep.subr.bf16.mxu0 0
  %5086 = vmatpush1.bf16.msra.mxu0 %v1187
  %5087 = vmatprep.subr.bf16.mxu0 0
  %5088 = vmatpush1.bf16.msra.mxu0 %v1188
  %5089 = vmatprep.mubr.bf16.mxu0 %v4690
  %5090 = vmatmul.mubr.bf16.gmra.mrb[0].mxu0 %v4689
  %v5091 = vpop.f32.mrb[0].mxu0
  %v5092 = vadd.f32 %v5004, %v5091
  %v5093 = vpop.f32.mrb[0].mxu0
  %v5094 = vpop.f32.mrb[0].mxu0
  %v5095 = vadd.f32 %v5007, %v5094
  %v5096 = vpop.f32.mrb[0].mxu0
  %5097 = vmatprep.mubr.bf16.mxu0 %v4703
  %5098 = vmatmul.mubr.bf16.gmra.mrb[0].mxu0 %v4702
  %v5099 = vpop.f32.mrb[0].mxu0
  %v5100 = vadd.f32 %v5012, %v5099
  %v5101 = vpop.f32.mrb[0].mxu0
  %v5102 = vpop.f32.mrb[0].mxu0
  %v5103 = vadd.f32 %v5015, %v5102
  %v5104 = vpop.f32.mrb[0].mxu0
  %5105 = vmatprep.mubr.bf16.mxu0 %v4716
  %5106 = vmatmul.mubr.bf16.gmra.mrb[0].mxu0 %v4715
  %v5107 = vpop.f32.mrb[0].mxu0
  %v5108 = vadd.f32 %v5020, %v5107
  %v5109 = vpop.f32.mrb[0].mxu0
  %v5110 = vpop.f32.mrb[0].mxu0
  %v5111 = vadd.f32 %v5023, %v5110
  %v5112 = vpop.f32.mrb[0].mxu0
  %5113 = vmatprep.mubr.bf16.mxu0 %v4729
  %5114 = vmatmul.mubr.bf16.gmra.mrb[0].mxu0 %v4728
  %v5115 = vpop.f32.mrb[0].mxu0
  %v5116 = vadd.f32 %v5028, %v5115
  %v5117 = vpop.f32.mrb[0].mxu0
  %v5118 = vpop.f32.mrb[0].mxu0
  %v5119 = vadd.f32 %v5031, %v5118
  %v5120 = vpop.f32.mrb[0].mxu0
  %5121 = vmatprep.mubr.bf16.mxu0 %v4742
  %5122 = vmatmul.mubr.bf16.gmra.mrb[0].mxu0 %v4741
  %v5123 = vpop.f32.mrb[0].mxu0
  %v5124 = vadd.f32 %v5036, %v5123
  %v5125 = vpop.f32.mrb[0].mxu0
  %v5126 = vpop.f32.mrb[0].mxu0
  %v5127 = vadd.f32 %v5039, %v5126
  %v5128 = vpop.f32.mrb[0].mxu0
  %5129 = vmatprep.mubr.bf16.mxu0 %v4755
  %5130 = vmatmul.mubr.bf16.gmra.mrb[0].mxu0 %v4754
  %v5131 = vpop.f32.mrb[0].mxu0
  %v5132 = vadd.f32 %v5044, %v5131
  %v5133 = vpop.f32.mrb[0].mxu0
  %v5134 = vpop.f32.mrb[0].mxu0
  %v5135 = vadd.f32 %v5047, %v5134
  %v5136 = vpop.f32.mrb[0].mxu0
  %5137 = vmatprep.mubr.bf16.mxu0 %v4768
  %5138 = vmatmul.mubr.bf16.gmra.mrb[0].mxu0 %v4767
  %v5139 = vpop.f32.mrb[0].mxu0
  %v5140 = vadd.f32 %v5052, %v5139
  %v5141 = vpop.f32.mrb[0].mxu0
  %v5142 = vpop.f32.mrb[0].mxu0
  %v5143 = vpop.f32.mrb[0].mxu0
  %5144 = vdwg.mxu0
  %5145 = vmatprep.subr.bf16.mxu0 0
  %5146 = vmatpush1.bf16.msra.mxu0 %v1189
  %5147 = vmatprep.subr.bf16.mxu0 0
  %5148 = vmatpush1.bf16.msra.mxu0 %v1190
  %5149 = vmatprep.subr.bf16.mxu0 0
  %5150 = vmatpush1.bf16.msra.mxu0 %v1191
  %5151 = vmatprep.subr.bf16.mxu0 0
  %5152 = vmatpush1.bf16.msra.mxu0 %v1192
  %5153 = vmatprep.subr.bf16.mxu0 0
  %5154 = vmatpush1.bf16.msra.mxu0 %v1193
  %5155 = vmatprep.subr.bf16.mxu0 0
  %5156 = vmatpush1.bf16.msra.mxu0 %v1194
  %5157 = vmatprep.subr.bf16.mxu0 0
  %5158 = vmatpush1.bf16.msra.mxu0 %v1195
  %5159 = vmatprep.subr.bf16.mxu0 0
  %5160 = vmatpush1.bf16.msra.mxu0 %v1196
  %5161 = vmatprep.subr.bf16.mxu0 0
  %5162 = vmatpush1.bf16.msra.mxu0 %v1197
  %5163 = vmatprep.subr.bf16.mxu0 0
  %5164 = vmatpush1.bf16.msra.mxu0 %v1198
  %5165 = vmatprep.subr.bf16.mxu0 0
  %5166 = vmatpush1.bf16.msra.mxu0 %v1199
  %5167 = vmatprep.subr.bf16.mxu0 0
  %5168 = vmatpush1.bf16.msra.mxu0 %v1200
  %5169 = vmatprep.subr.bf16.mxu0 0
  %5170 = vmatpush1.bf16.msra.mxu0 %v1201
  %5171 = vmatprep.subr.bf16.mxu0 0
  %5172 = vmatpush1.bf16.msra.mxu0 %v1202
  %5173 = vmatprep.subr.bf16.mxu0 0
  %5174 = vmatpush1.bf16.msra.mxu0 %v1203
  %5175 = vmatprep.subr.bf16.mxu0 0
  %5176 = vmatpush1.bf16.msra.mxu0 %v1204
  %5177 = vmatprep.mubr.bf16.mxu0 %v4692
  %5178 = vmatmul.mubr.bf16.gmra.mrb[0].mxu0 %v4691
  %v5179 = vpop.f32.mrb[0].mxu0
  %v5180 = vadd.f32 %v5092, %v5179
  %v5181 = vpop.f32.mrb[0].mxu0
  %v5182 = vpop.f32.mrb[0].mxu0
  %v5183 = vadd.f32 %v5095, %v5182
  %v5184 = vpop.f32.mrb[0].mxu0
  %5185 = vmatprep.mubr.bf16.mxu0 %v4705
  %5186 = vmatmul.mubr.bf16.gmra.mrb[0].mxu0 %v4704
  %v5187 = vpop.f32.mrb[0].mxu0
  %v5188 = vadd.f32 %v5100, %v5187
  %v5189 = vpop.f32.mrb[0].mxu0
  %v5190 = vpop.f32.mrb[0].mxu0
  %v5191 = vadd.f32 %v5103, %v5190
  %v5192 = vpop.f32.mrb[0].mxu0
  %5193 = vmatprep.mubr.bf16.mxu0 %v4718
  %5194 = vmatmul.mubr.bf16.gmra.mrb[0].mxu0 %v4717
  %v5195 = vpop.f32.mrb[0].mxu0
  %v5196 = vadd.f32 %v5108, %v5195
  %v5197 = vpop.f32.mrb[0].mxu0
  %v5198 = vpop.f32.mrb[0].mxu0
  %v5199 = vadd.f32 %v5111, %v5198
  %v5200 = vpop.f32.mrb[0].mxu0
  %5201 = vmatprep.mubr.bf16.mxu0 %v4731
  %5202 = vmatmul.mubr.bf16.gmra.mrb[0].mxu0 %v4730
  %v5203 = vpop.f32.mrb[0].mxu0
  %v5204 = vadd.f32 %v5116, %v5203
  %v5205 = vpop.f32.mrb[0].mxu0
  %v5206 = vpop.f32.mrb[0].mxu0
  %v5207 = vadd.f32 %v5119, %v5206
  %v5208 = vpop.f32.mrb[0].mxu0
  %5209 = vmatprep.mubr.bf16.mxu0 %v4744
  %5210 = vmatmul.mubr.bf16.gmra.mrb[0].mxu0 %v4743
  %v5211 = vpop.f32.mrb[0].mxu0
  %v5212 = vadd.f32 %v5124, %v5211
  %v5213 = vpop.f32.mrb[0].mxu0
  %v5214 = vpop.f32.mrb[0].mxu0
  %v5215 = vadd.f32 %v5127, %v5214
  %v5216 = vpop.f32.mrb[0].mxu0
  %5217 = vmatprep.mubr.bf16.mxu0 %v4757
  %5218 = vmatmul.mubr.bf16.gmra.mrb[0].mxu0 %v4756
  %v5219 = vpop.f32.mrb[0].mxu0
  %v5220 = vadd.f32 %v5132, %v5219
  %v5221 = vpop.f32.mrb[0].mxu0
  %v5222 = vpop.f32.mrb[0].mxu0
  %v5223 = vadd.f32 %v5135, %v5222
  %v5224 = vpop.f32.mrb[0].mxu0
  %5225 = vmatprep.mubr.bf16.mxu0 %v4770
  %5226 = vmatmul.mubr.bf16.gmra.mrb[0].mxu0 %v4769
  %v5227 = vpop.f32.mrb[0].mxu0
  %v5228 = vadd.f32 %v5140, %v5227
  %v5229 = vpop.f32.mrb[0].mxu0
  %v5230 = vpop.f32.mrb[0].mxu0
  %v5231 = vpop.f32.mrb[0].mxu0
  %5232 = vdwg.mxu0
  %5233 = vmatprep.subr.bf16.mxu0 0
  %5234 = vmatpush1.bf16.msra.mxu0 %v1205
  %5235 = vmatprep.subr.bf16.mxu0 0
  %5236 = vmatpush1.bf16.msra.mxu0 %v1206
  %5237 = vmatprep.subr.bf16.mxu0 0
  %5238 = vmatpush1.bf16.msra.mxu0 %v1207
  %5239 = vmatprep.subr.bf16.mxu0 0
  %5240 = vmatpush1.bf16.msra.mxu0 %v1208
  %5241 = vmatprep.subr.bf16.mxu0 0
  %5242 = vmatpush1.bf16.msra.mxu0 %v1209
  %5243 = vmatprep.subr.bf16.mxu0 0
  %5244 = vmatpush1.bf16.msra.mxu0 %v1210
  %5245 = vmatprep.subr.bf16.mxu0 0
  %5246 = vmatpush1.bf16.msra.mxu0 %v1211
  %5247 = vmatprep.subr.bf16.mxu0 0
  %5248 = vmatpush1.bf16.msra.mxu0 %v1212
  %5249 = vmatprep.subr.bf16.mxu0 0
  %5250 = vmatpush1.bf16.msra.mxu0 %v1213
  %5251 = vmatprep.subr.bf16.mxu0 0
  %5252 = vmatpush1.bf16.msra.mxu0 %v1214
  %5253 = vmatprep.subr.bf16.mxu0 0
  %5254 = vmatpush1.bf16.msra.mxu0 %v1215
  %5255 = vmatprep.subr.bf16.mxu0 0
  %5256 = vmatpush1.bf16.msra.mxu0 %v1216
  %5257 = vmatprep.subr.bf16.mxu0 0
  %5258 = vmatpush1.bf16.msra.mxu0 %v1217
  %5259 = vmatprep.subr.bf16.mxu0 0
  %5260 = vmatpush1.bf16.msra.mxu0 %v1218
  %5261 = vmatprep.subr.bf16.mxu0 0
  %5262 = vmatpush1.bf16.msra.mxu0 %v1219
  %5263 = vmatprep.subr.bf16.mxu0 0
  %5264 = vmatpush1.bf16.msra.mxu0 %v1220
  %5265 = vmatprep.mubr.bf16.mxu0 %v4694
  %5266 = vmatmul.mubr.bf16.gmra.mrb[0].mxu0 %v4693
  %v5267 = vpop.f32.mrb[0].mxu0
  %v5268 = vadd.f32 %v5180, %v5267
  %v5269 = vpop.f32.mrb[0].mxu0
  %v5270 = vpop.f32.mrb[0].mxu0
  %v5271 = vadd.f32 %v5183, %v5270
  %v5272 = vpop.f32.mrb[0].mxu0
  %5273 = vmatprep.mubr.bf16.mxu0 %v4707
  %5274 = vmatmul.mubr.bf16.gmra.mrb[0].mxu0 %v4706
  %v5275 = vpop.f32.mrb[0].mxu0
  %v5276 = vadd.f32 %v5188, %v5275
  %v5277 = vpop.f32.mrb[0].mxu0
  %v5278 = vpop.f32.mrb[0].mxu0
  %v5279 = vadd.f32 %v5191, %v5278
  %v5280 = vpop.f32.mrb[0].mxu0
  %5281 = vmatprep.mubr.bf16.mxu0 %v4720
  %5282 = vmatmul.mubr.bf16.gmra.mrb[0].mxu0 %v4719
  %v5283 = vpop.f32.mrb[0].mxu0
  %v5284 = vadd.f32 %v5196, %v5283
  %v5285 = vpop.f32.mrb[0].mxu0
  %v5286 = vpop.f32.mrb[0].mxu0
  %v5287 = vadd.f32 %v5199, %v5286
  %v5288 = vpop.f32.mrb[0].mxu0
  %5289 = vmatprep.mubr.bf16.mxu0 %v4733
  %5290 = vmatmul.mubr.bf16.gmra.mrb[0].mxu0 %v4732
  %v5291 = vpop.f32.mrb[0].mxu0
  %v5292 = vadd.f32 %v5204, %v5291
  %v5293 = vpop.f32.mrb[0].mxu0
  %v5294 = vpop.f32.mrb[0].mxu0
  %v5295 = vadd.f32 %v5207, %v5294
  %v5296 = vpop.f32.mrb[0].mxu0
  %5297 = vmatprep.mubr.bf16.mxu0 %v4746
  %5298 = vmatmul.mubr.bf16.gmra.mrb[0].mxu0 %v4745
  %v5299 = vpop.f32.mrb[0].mxu0
  %v5300 = vadd.f32 %v5212, %v5299
  %v5301 = vpop.f32.mrb[0].mxu0
  %v5302 = vpop.f32.mrb[0].mxu0
  %v5303 = vadd.f32 %v5215, %v5302
  %v5304 = vpop.f32.mrb[0].mxu0
  %5305 = vmatprep.mubr.bf16.mxu0 %v4759
  %5306 = vmatmul.mubr.bf16.gmra.mrb[0].mxu0 %v4758
  %v5307 = vpop.f32.mrb[0].mxu0
  %v5308 = vadd.f32 %v5220, %v5307
  %v5309 = vpop.f32.mrb[0].mxu0
  %v5310 = vpop.f32.mrb[0].mxu0
  %v5311 = vadd.f32 %v5223, %v5310
  %v5312 = vpop.f32.mrb[0].mxu0
  %5313 = vmatprep.mubr.bf16.mxu0 %v4772
  %5314 = vmatmul.mubr.bf16.gmra.mrb[0].mxu0 %v4771
  %v5315 = vpop.f32.mrb[0].mxu0
  %v5316 = vadd.f32 %v5228, %v5315
  %v5317 = vpop.f32.mrb[0].mxu0
  %v5318 = vpop.f32.mrb[0].mxu0
  %v5319 = vpop.f32.mrb[0].mxu0
  %5320 = vdwg.mxu0
  %5321 = vmatprep.subr.bf16.mxu0 0
  %5322 = vmatpush1.bf16.msra.mxu0 %v1221
  %5323 = vmatprep.subr.bf16.mxu0 0
  %5324 = vmatpush1.bf16.msra.mxu0 %v1222
  %5325 = vmatprep.subr.bf16.mxu0 0
  %5326 = vmatpush1.bf16.msra.mxu0 %v1223
  %5327 = vmatprep.subr.bf16.mxu0 0
  %5328 = vmatpush1.bf16.msra.mxu0 %v1224
  %5329 = vmatprep.subr.bf16.mxu0 0
  %5330 = vmatpush1.bf16.msra.mxu0 %v1225
  %5331 = vmatprep.subr.bf16.mxu0 0
  %5332 = vmatpush1.bf16.msra.mxu0 %v1226
  %5333 = vmatprep.subr.bf16.mxu0 0
  %5334 = vmatpush1.bf16.msra.mxu0 %v1227
  %5335 = vmatprep.subr.bf16.mxu0 0
  %5336 = vmatpush1.bf16.msra.mxu0 %v1228
  %5337 = vmatprep.subr.bf16.mxu0 0
  %5338 = vmatpush1.bf16.msra.mxu0 %v1229
  %5339 = vmatprep.subr.bf16.mxu0 0
  %5340 = vmatpush1.bf16.msra.mxu0 %v1230
  %5341 = vmatprep.subr.bf16.mxu0 0
  %5342 = vmatpush1.bf16.msra.mxu0 %v1231
  %5343 = vmatprep.subr.bf16.mxu0 0
  %5344 = vmatpush1.bf16.msra.mxu0 %v1232
  %5345 = vmatprep.subr.bf16.mxu0 0
  %5346 = vmatpush1.bf16.msra.mxu0 %v1233
  %5347 = vmatprep.subr.bf16.mxu0 0
  %5348 = vmatpush1.bf16.msra.mxu0 %v1234
  %5349 = vmatprep.subr.bf16.mxu0 0
  %5350 = vmatpush1.bf16.msra.mxu0 %v1235
  %5351 = vmatprep.subr.bf16.mxu0 0
  %5352 = vmatpush1.bf16.msra.mxu0 %v1236
  %5353 = vmatprep.mubr.bf16.mxu0 %v4696
  %5354 = vmatmul.mubr.bf16.gmra.mrb[0].mxu0 %v4695
  %v5355 = vpop.f32.mrb[0].mxu0
  %v5356 = vadd.f32 %v5268, %v5355
  %v5357 = vpop.f32.mrb[0].mxu0
  %v5358 = vpop.f32.mrb[0].mxu0
  %v5359 = vadd.f32 %v5271, %v5358
  %v5360 = vpop.f32.mrb[0].mxu0
  %5361 = vmatprep.mubr.bf16.mxu0 %v4709
  %5362 = vmatmul.mubr.bf16.gmra.mrb[0].mxu0 %v4708
  %v5363 = vpop.f32.mrb[0].mxu0
  %v5364 = vadd.f32 %v5276, %v5363
  %v5365 = vpop.f32.mrb[0].mxu0
  %v5366 = vpop.f32.mrb[0].mxu0
  %v5367 = vadd.f32 %v5279, %v5366
  %v5368 = vpop.f32.mrb[0].mxu0
  %5369 = vmatprep.mubr.bf16.mxu0 %v4722
  %5370 = vmatmul.mubr.bf16.gmra.mrb[0].mxu0 %v4721
  %v5371 = vpop.f32.mrb[0].mxu0
  %v5372 = vadd.f32 %v5284, %v5371
  %v5373 = vpop.f32.mrb[0].mxu0
  %v5374 = vpop.f32.mrb[0].mxu0
  %v5375 = vadd.f32 %v5287, %v5374
  %v5376 = vpop.f32.mrb[0].mxu0
  %5377 = vmatprep.mubr.bf16.mxu0 %v4735
  %5378 = vmatmul.mubr.bf16.gmra.mrb[0].mxu0 %v4734
  %v5379 = vpop.f32.mrb[0].mxu0
  %v5380 = vadd.f32 %v5292, %v5379
  %v5381 = vpop.f32.mrb[0].mxu0
  %v5382 = vpop.f32.mrb[0].mxu0
  %v5383 = vadd.f32 %v5295, %v5382
  %v5384 = vpop.f32.mrb[0].mxu0
  %5385 = vmatprep.mubr.bf16.mxu0 %v4748
  %5386 = vmatmul.mubr.bf16.gmra.mrb[0].mxu0 %v4747
  %v5387 = vpop.f32.mrb[0].mxu0
  %v5388 = vadd.f32 %v5300, %v5387
  %v5389 = vpop.f32.mrb[0].mxu0
  %v5390 = vpop.f32.mrb[0].mxu0
  %v5391 = vadd.f32 %v5303, %v5390
  %v5392 = vpop.f32.mrb[0].mxu0
  %5393 = vmatprep.mubr.bf16.mxu0 %v4761
  %5394 = vmatmul.mubr.bf16.gmra.mrb[0].mxu0 %v4760
  %v5395 = vpop.f32.mrb[0].mxu0
  %v5396 = vadd.f32 %v5308, %v5395
  %v5397 = vpop.f32.mrb[0].mxu0
  %v5398 = vpop.f32.mrb[0].mxu0
  %v5399 = vadd.f32 %v5311, %v5398
  %v5400 = vpop.f32.mrb[0].mxu0
  %5401 = vmatprep.mubr.bf16.mxu0 %v4774
  %5402 = vmatmul.mubr.bf16.gmra.mrb[0].mxu0 %v4773
  %v5403 = vpop.f32.mrb[0].mxu0
  %v5404 = vadd.f32 %v5316, %v5403
  %v5405 = vpop.f32.mrb[0].mxu0
  %v5406 = vpop.f32.mrb[0].mxu0
  %v5407 = vpop.f32.mrb[0].mxu0
  %5408 = vdwg.mxu0
  %5409 = vmatprep.subr.bf16.mxu0 0
  %5410 = vmatpush1.bf16.msra.mxu0 %v1237
  %5411 = vmatprep.subr.bf16.mxu0 0
  %5412 = vmatpush1.bf16.msra.mxu0 %v1238
  %5413 = vmatprep.subr.bf16.mxu0 0
  %5414 = vmatpush1.bf16.msra.mxu0 %v1239
  %5415 = vmatprep.subr.bf16.mxu0 0
  %5416 = vmatpush1.bf16.msra.mxu0 %v1240
  %5417 = vmatprep.subr.bf16.mxu0 0
  %5418 = vmatpush1.bf16.msra.mxu0 0
  %5419 = vmatprep.subr.bf16.mxu0 0
  %5420 = vmatpush1.bf16.msra.mxu0 0
  %5421 = vmatprep.subr.bf16.mxu0 0
  %5422 = vmatpush1.bf16.msra.mxu0 0
  %5423 = vmatprep.subr.bf16.mxu0 0
  %5424 = vmatpush1.bf16.msra.mxu0 0
  %5425 = vmatprep.subr.bf16.mxu0 0
  %5426 = vmatpush1.bf16.msra.mxu0 0
  %5427 = vmatprep.subr.bf16.mxu0 0
  %5428 = vmatpush1.bf16.msra.mxu0 0
  %5429 = vmatprep.subr.bf16.mxu0 0
  %5430 = vmatpush1.bf16.msra.mxu0 0
  %5431 = vmatprep.subr.bf16.mxu0 0
  %5432 = vmatpush1.bf16.msra.mxu0 0
  %5433 = vmatprep.subr.bf16.mxu0 0
  %5434 = vmatpush1.bf16.msra.mxu0 0
  %5435 = vmatprep.subr.bf16.mxu0 0
  %5436 = vmatpush1.bf16.msra.mxu0 0
  %5437 = vmatprep.subr.bf16.mxu0 0
  %5438 = vmatpush1.bf16.msra.mxu0 0
  %5439 = vmatprep.subr.bf16.mxu0 0
  %5440 = vmatpush1.bf16.msra.mxu0 0
  %5441 = vmatprep.mubr.bf16.mxu0 0
  %5442 = vmatmul.mubr.bf16.gmra.mrb[0].mxu0 %v4861
  %v5443 = vpop.f32.mrb[0].mxu0
  %v5444 = vadd.f32 %v5356, %v5443
  %v5445 = vpop.f32.mrb[0].mxu0
  %v5446 = vpop.f32.mrb[0].mxu0
  %v5447 = vadd.f32 %v5359, %v5446
  %v5448 = vpop.f32.mrb[0].mxu0
  %5449 = vmatprep.mubr.bf16.mxu0 0
  %5450 = vmatmul.mubr.bf16.gmra.mrb[0].mxu0 %v4864
  %v5451 = vpop.f32.mrb[0].mxu0
  %v5452 = vadd.f32 %v5364, %v5451
  %v5453 = vpop.f32.mrb[0].mxu0
  %v5454 = vpop.f32.mrb[0].mxu0
  %v5455 = vadd.f32 %v5367, %v5454
  %v5456 = vpop.f32.mrb[0].mxu0
  %5457 = vmatprep.mubr.bf16.mxu0 0
  %5458 = vmatmul.mubr.bf16.gmra.mrb[0].mxu0 %v4867
  %v5459 = vpop.f32.mrb[0].mxu0
  %v5460 = vadd.f32 %v5372, %v5459
  %v5461 = vpop.f32.mrb[0].mxu0
  %v5462 = vpop.f32.mrb[0].mxu0
  %v5463 = vadd.f32 %v5375, %v5462
  %v5464 = vpop.f32.mrb[0].mxu0
  %5465 = vmatprep.mubr.bf16.mxu0 0
  %5466 = vmatmul.mubr.bf16.gmra.mrb[0].mxu0 %v4870
  %v5467 = vpop.f32.mrb[0].mxu0
  %v5468 = vadd.f32 %v5380, %v5467
  %v5469 = vpop.f32.mrb[0].mxu0
  %v5470 = vpop.f32.mrb[0].mxu0
  %v5471 = vadd.f32 %v5383, %v5470
  %v5472 = vpop.f32.mrb[0].mxu0
  %5473 = vmatprep.mubr.bf16.mxu0 0
  %5474 = vmatmul.mubr.bf16.gmra.mrb[0].mxu0 %v4873
  %v5475 = vpop.f32.mrb[0].mxu0
  %v5476 = vadd.f32 %v5388, %v5475
  %v5477 = vpop.f32.mrb[0].mxu0
  %v5478 = vpop.f32.mrb[0].mxu0
  %v5479 = vadd.f32 %v5391, %v5478
  %v5480 = vpop.f32.mrb[0].mxu0
  %5481 = vmatprep.mubr.bf16.mxu0 0
  %5482 = vmatmul.mubr.bf16.gmra.mrb[0].mxu0 %v4876
  %v5483 = vpop.f32.mrb[0].mxu0
  %v5484 = vadd.f32 %v5396, %v5483
  %v5485 = vpop.f32.mrb[0].mxu0
  %v5486 = vpop.f32.mrb[0].mxu0
  %v5487 = vadd.f32 %v5399, %v5486
  %v5488 = vpop.f32.mrb[0].mxu0
  %5489 = vmatprep.mubr.bf16.mxu0 0
  %5490 = vmatmul.mubr.bf16.gmra.mrb[0].mxu0 %v4879
  %v5491 = vpop.f32.mrb[0].mxu0
  %v5492 = vadd.f32 %v5404, %v5491
  %v5493 = vpop.f32.mrb[0].mxu0
  %v5494 = vpop.f32.mrb[0].mxu0
  %v5495 = vpop.f32.mrb[0].mxu0
  %5496 = vdwg.mxu0
  %v5497 = vmax.f32 %v4320, %v5444
  %v5498 = vmax.f32 %v4321, %v5447
  %v5499 = vmax.f32 %v4322, %v5452
  %v5500 = vmax.f32 %v4323, %v5455
  %v5501 = vmax.f32 %v4324, %v5460
  %v5502 = vmax.f32 %v4325, %v5463
  %v5503 = vmax.f32 %v4326, %v5468
  %v5504 = vmax.f32 %v4327, %v5471
  %v5505 = vmax.f32 %v4328, %v5476
  %v5506 = vmax.f32 %v4329, %v5479
  %v5507 = vmax.f32 %v4330, %v5484
  %v5508 = vmax.f32 %v4331, %v5487
  %v5509 = vmax.f32 %v4332, %v5492
  %v5510 = vld [vmem:[%s2] sm:$0x1]
  %v5512 = vlaneseq
  %v5513 = vshrl.u32 %v5512, 7
  %v5514 = vsub.s32 0, %v5513
  %v5515 = vrot.slane %v5510, %v5514
  %v5517 = vadd.f32 %v5497, %v5515
  %v5518 = vadd.f32 %v5498, %v5515
  %v5519 = vadd.f32 %v5499, %v5515
  %v5520 = vadd.f32 %v5500, %v5515
  %v5521 = vadd.f32 %v5501, %v5515
  %v5522 = vadd.f32 %v5502, %v5515
  %v5523 = vadd.f32 %v5503, %v5515
  %v5524 = vadd.f32 %v5504, %v5515
  %v5525 = vadd.f32 %v5505, %v5515
  %v5526 = vadd.f32 %v5506, %v5515
  %v5527 = vadd.f32 %v5507, %v5515
  %v5528 = vadd.f32 %v5508, %v5515
  %v5529 = vadd.f32 %v5509, %v5515
  %v5530 = vmax.f32 %v5517, 0.0
  %v5531 = vmax.f32 %v5518, 0.0
  %v5532 = vmax.f32 %v5519, 0.0
  %v5533 = vmax.f32 %v5520, 0.0
  %v5534 = vmax.f32 %v5521, 0.0
  %v5535 = vmax.f32 %v5522, 0.0
  %v5536 = vmax.f32 %v5523, 0.0
  %v5537 = vmax.f32 %v5524, 0.0
  %v5538 = vmax.f32 %v5525, 0.0
  %v5539 = vmax.f32 %v5526, 0.0
  %v5540 = vmax.f32 %v5527, 0.0
  %v5541 = vmax.f32 %v5528, 0.0
  %v5542 = vmax.f32 %v5529, 0.0
  %v5543 = vpack.c.bf16 %v5531, %v5530
  %v5544 = vpack.c.bf16 %v5533, %v5532
  %v5545 = vpack.c.bf16 %v5535, %v5534
  %v5546 = vpack.c.bf16 %v5537, %v5536
  %v5547 = vpack.c.bf16 %v5539, %v5538
  %v5548 = vpack.c.bf16 %v5541, %v5540
  %v5549 = vpack.c.bf16 %v5542, %v5542
  %v5557 = vunpack.c.l.b16 %v5543
  %v5558 = vunpack.c.h.b16 %v5543
  %v5559 = vunpack.c.l.b16 %v5544
  %v5560 = vunpack.c.h.b16 %v5544
  %v5561 = vunpack.c.l.b16 %v5545
  %v5562 = vunpack.c.h.b16 %v5545
  %v5563 = vunpack.c.l.b16 %v5546
  %v5564 = vunpack.c.h.b16 %v5546
  %v5565 = vunpack.c.l.b16 %v5547
  %v5566 = vunpack.c.h.b16 %v5547
  %v5567 = vunpack.c.l.b16 %v5548
  %v5568 = vunpack.c.h.b16 %v5548
  %v5569 = vunpack.c.l.b16 %v5549
  %v5570 = vpack.c.b16 %v5557, %v5557
  %v5571 = vpack.c.b16 %v5558, %v5558
  %v5572 = vpack.c.b16 %v5559, %v5559
  %v5573 = vpack.c.b16 %v5560, %v5560
  %v5574 = vpack.c.b16 %v5561, %v5561
  %v5575 = vpack.c.b16 %v5562, %v5562
  %v5576 = vpack.c.b16 %v5563, %v5563
  %v5577 = vpack.c.b16 %v5564, %v5564
  %v5578 = vpack.c.b16 %v5565, %v5565
  %v5579 = vpack.c.b16 %v5566, %v5566
  %v5580 = vpack.c.b16 %v5567, %v5567
  %v5581 = vpack.c.b16 %v5568, %v5568
  %v5582 = vpack.c.b16 %v5569, %v5569
  %5596 = vst [vmem:[%s3] sm:$0xf] %v5570
  %5597 = vst [vmem:[%s3 + $0x4] sm:$0xf] %v5571
  %5598 = vst [vmem:[%s3 + $0x8] sm:$0xf] %v5572
  %5599 = vst [vmem:[%s3 + $0xc] sm:$0xf] %v5573
  %5600 = vst [vmem:[%s3 + $0x10] sm:$0xf] %v5574
  %5601 = vst [vmem:[%s3 + $0x14] sm:$0xf] %v5575
  %5602 = vst [vmem:[%s3 + $0x18] sm:$0xf] %v5576
  %5603 = vst [vmem:[%s3 + $0x1c] sm:$0xf] %v5577
  %5604 = vst [vmem:[%s3 + $0x20] sm:$0xf] %v5578
  %5605 = vst [vmem:[%s3 + $0x24] sm:$0xf] %v5579
  %5606 = vst [vmem:[%s3 + $0x28] sm:$0xf] %v5580
  %5607 = vst [vmem:[%s3 + $0x2c] sm:$0xf] %v5581
  %5608 = vst [vmem:[%s3 + $0x30] sm:$0x3] %v5582
  // Predicated region
  $region14: #{cnn_cifar_global_forward.4} parent=0 // pred_check
    _
  $region15: #{cnn_cifar_global_forward.4} parent=0 // pred_check_branch
    %5610 = sbr.rel (0) target = $region17
  $region16: #{cnn_cifar_global_forward.4} parent=0 // pred_region
    _
  $region17: #{cnn_cifar_global_forward.4} parent=0 // pred_fallthru
    _
  // Predicated region
  $region18: #{cnn_cifar_global_forward.4} parent=0 // pred_check
    _
  $region19: #{cnn_cifar_global_forward.4} parent=0 // pred_check_branch
    %5612 = sbr.rel (0) target = $region21
  $region20: #{cnn_cifar_global_forward.4} parent=0 // pred_region
    _
  $region21: #{cnn_cifar_global_forward.4} parent=0 // pred_fallthru
    _

</llo_original>
